<compile_context>
chip_gen: v7x
topology: tpu7x:2x2x1
jax: 0.10.0
libtpu: 0.0.40
codegen_flags: <defaults>
</compile_context>

<pallas_src>
import math
import jax
import jax.numpy as jnp
from jax.experimental import pallas as pl
from jax.experimental.pallas import tpu as pltpu

# ----------------------------- configuration --------------------------------
D_MODEL = 64          # d_model (divisible by 32 for GroupNorm(32, d_model))
N_HEADS = 4
HEAD_DIM = D_MODEL // N_HEADS
D_FF = 128
NUM_LAYERS = 2
NUM_FEATURE_LEVELS = 4        # level_embed rows (only first len(levels) used)
NUM_PROMPTS = 20              # refpoint_embed rows
QUERY_DIM = 4
GN_GROUPS = 32
GN_EPS = 1e-5
LN_EPS = 1e-5

# ---- bias / LayerNorm slab rows (slab shape (L, N_BVEC_ROWS, 128)) ----------
R_SA_OB, R_CA_OB, R_B1, R_B2 = 0, 1, 2, 3
R_LN_W, R_LN_B = 4, 8          # rows 4..7: LN gammas, 8..11: LN betas
N_BVEC_ROWS = 12


# ============================ Pallas kernel ==================================
def _make_fused_kernel(level_hws, hw_pad):
    """Returns the fused input_proj + GroupNorm + decoder-stack kernel."""
    hwt = int(sum(level_hws))

    def kernel(x_ref, wproj_ref, gnp_ref, gmat_ref, pos_ref, tgt_ref,
               wq_ref, wkT_ref, wvo_ref, w1_ref, w2_ref, bq_ref, bvec_ref,
               o_ref, memv_scr, memk_scr):
        B = tgt_ref.shape[0]
        f32 = jnp.float32
        bf16 = jnp.bfloat16

        # ---------- fused input_proj (1x1 conv) + GroupNorm(32, D) ----------
        # gnp rows: 0 = conv bias, 1 = GN gamma, 2 = GN beta (per level).
        if hw_pad > hwt:
            pad = jnp.zeros((B, hw_pad - hwt, D_MODEL), bf16)
            memv_scr[:, hwt:, :] = pad
            memk_scr[:, hwt:, :] = pad
        gmat = gmat_ref[...]
        off = 0
        for lvl, hw in enumerate(level_hws):
            x = x_ref[:, off:off + hw, :]                       # (B, hw, Cmax) bf16
            y = jnp.einsum("bsc,cd->bsd", x, wproj_ref[lvl],
                           preferred_element_type=f32)
            y = y + gnp_ref[lvl, 0:1, :]                        # conv bias
            # per-channel moments -> group moments via the averaging matrix
            mean_c = jnp.mean(y, axis=1, keepdims=True)         # (B, 1, D)
            msq_c = jnp.mean(y * y, axis=1, keepdims=True)
            gmean = jnp.einsum("bsd,de->bse", mean_c, gmat,
                               preferred_element_type=f32)
            gmsq = jnp.einsum("bsd,de->bse", msq_c, gmat,
                              preferred_element_type=f32)
            gvar = jnp.maximum(gmsq - gmean * gmean, 0.0)
            yn = (y - gmean) * jax.lax.rsqrt(gvar + GN_EPS)
            yn = yn * gnp_ref[lvl, 1:2, :] + gnp_ref[lvl, 2:3, :]
            memv_scr[:, off:off + hw, :] = yn.astype(bf16)
            memk_scr[:, off:off + hw, :] = (yn + pos_ref[off:off + hw, :]).astype(bf16)
            off += hw

        mem_v = memv_scr[...]                                   # (B, HWpad, D) bf16
        mem_k = memk_scr[...]                                   # memory + pos embed
        if hw_pad > hwt:
            key_mask = (jax.lax.broadcasted_iota(jnp.int32, (1, hw_pad), 1)
                        < hwt).astype(f32)                      # (1, HWpad)
        else:
            key_mask = None

        def row(l, r, n):                                       # (1, n) bias row
            return bvec_ref[l, r:r + 1, :n]

        def layer_norm(x, l, idx):
            g = row(l, R_LN_W + idx, D_MODEL)
            b = row(l, R_LN_B + idx, D_MODEL)
            mu = jnp.mean(x, axis=-1, keepdims=True)
            var = jnp.mean(jnp.square(x - mu), axis=-1, keepdims=True)
            return (x - mu) * jax.lax.rsqrt(var + LN_EPS) * g + b

        def attention(x_q, xk_bf, xv_bf, l, a, mask):
            """Multi-head attention, head-major / reassociated projections.

            x_q: (B, Sq, D) f32;  xk/xv: (B, Sk, D) bf16 (keys carry pos embed).
            Per head h:  s = (q_h @ Wk_h^T) @ xk^T,  out += (p @ xv) @ (Wv_h Wo_h).
            No (Sk, hd) K/V tensors, no head split/merge transposes.
            """
            xq_bf = x_q.astype(bf16)
            out = None
            for h in range(N_HEADS):
                i = (l * 2 + a) * N_HEADS + h                   # flat weight index
                q = jnp.einsum("bsd,de->bse", xq_bf, wq_ref[i],
                               preferred_element_type=f32) + bq_ref[i]
                qk = jnp.einsum("bse,ed->bsd", q.astype(bf16), wkT_ref[i],
                                preferred_element_type=f32)
                s = jnp.einsum("bqd,bkd->bqk", qk.astype(bf16), xk_bf,
                               preferred_element_type=f32)
                s = s - jnp.max(s, axis=-1, keepdims=True)
                p = jnp.exp(s)
                if mask is not None:
                    p = p * mask                                # zero padded keys
                p = p * pl.reciprocal(jnp.sum(p, axis=-1, keepdims=True),
                                      approx=True)
                pm = jnp.einsum("bqk,bkd->bqd", p.astype(bf16), xv_bf,
                                preferred_element_type=f32)
                oh = jnp.einsum("bqd,dn->bqn", pm.astype(bf16), wvo_ref[i],
                                preferred_element_type=f32)
                out = oh if out is None else out + oh
            return out

        # ------------------- fused decoder layer stack ----------------------
        t = tgt_ref[...]                                        # (B, nq, D) f32
        for l in range(NUM_LAYERS):                             # static unroll
            # self-attention (tgt_query_pos is None in the reference)
            t_bf = t.astype(bf16)
            sa = attention(t, t_bf, t_bf, l, 0, None) + row(l, R_SA_OB, D_MODEL)
            t = layer_norm(t + sa, l, 0)

            # cross-attention: keys carry the memory pos embed, values do not
            ca = attention(t, mem_k, mem_v, l, 1, key_mask) + row(l, R_CA_OB, D_MODEL)
            t = layer_norm(t + ca, l, 1)

            # FFN
            h1 = jnp.einsum("bsd,df->bsf", t.astype(bf16), w1_ref[l],
                            preferred_element_type=f32) + row(l, R_B1, D_FF)
            h1 = jnp.maximum(h1, 0.0)
            ff = jnp.einsum("bsf,fd->bsd", h1.astype(bf16), w2_ref[l],
                            preferred_element_type=f32) + row(l, R_B2, D_MODEL)
            t = layer_norm(t + ff, l, 2)

            # decoder-level self.norm: applied every layer AND fed forward,
            # exactly like the reference `output = self.norm(output)` loop.
            t = layer_norm(t, l, 3)

        o_ref[...] = t

    return kernel


# ============================== JAX glue =====================================
def position_embedding_sine(h, w, num_pos_feats, temperature=10000.0):
    """PositionEmbeddingSine(normalize=True), mask=None case. Returns (h, w, 2*npf)."""
    scale = 2.0 * math.pi
    eps = 1e-6
    ones = jnp.ones((h, w), jnp.float32)
    y_embed = jnp.cumsum(ones, axis=0)
    x_embed = jnp.cumsum(ones, axis=1)
    y_embed = y_embed / (y_embed[-1:, :] + eps) * scale
    x_embed = x_embed / (x_embed[:, -1:] + eps) * scale
    dim_t = jnp.arange(num_pos_feats)
    dim_t = temperature ** (2.0 * (dim_t // 2).astype(jnp.float32) / num_pos_feats)
    pos_x = x_embed[:, :, None] / dim_t
    pos_y = y_embed[:, :, None] / dim_t
    pos_x = jnp.stack([jnp.sin(pos_x[:, :, 0::2]), jnp.cos(pos_x[:, :, 1::2])],
                      axis=3).reshape(h, w, num_pos_feats)
    pos_y = jnp.stack([jnp.sin(pos_y[:, :, 0::2]), jnp.cos(pos_y[:, :, 1::2])],
                      axis=3).reshape(h, w, num_pos_feats)
    return jnp.concatenate([pos_y, pos_x], axis=-1)


def nearest_resize(mask, h, w):
    """F.interpolate(..., mode='nearest') for a (B, H, W) array."""
    B, H, W = mask.shape
    ri = jnp.floor(jnp.arange(h) * (H / h)).astype(jnp.int32)
    ci = jnp.floor(jnp.arange(w) * (W / w)).astype(jnp.int32)
    return mask[:, ri][:, :, ci]


def get_valid_ratio(mask):
    _, H, W = mask.shape
    valid_H = jnp.sum(~mask[:, :, 0], axis=1).astype(jnp.float32)
    valid_W = jnp.sum(~mask[:, 0, :], axis=1).astype(jnp.float32)
    return jnp.stack([valid_W / W, valid_H / H], axis=-1)


def transformer_decoder_forward(params, supp_features, supp_masks, target,
                                transformer_in_features):
    d = D_MODEL
    cmax = params["wproj"].shape[1]
    x_parts, pos_parts, masks, level_hws = [], [], [], []
    for idx, f in enumerate(transformer_in_features[::-1]):
        x = supp_features[f].astype(jnp.float32)                   # (B, C, H, W)
        B, C, H, W = x.shape
        # TODO(synk): NCHW -> (B, HW, C) relayout is done wrapper-side; at real
        # backbone sizes feed (B, C, HW) and contract the channel dim in-kernel.
        xt = jnp.transpose(x.reshape(B, C, H * W), (0, 2, 1))
        x_parts.append(jnp.pad(xt, ((0, 0), (0, 0), (0, cmax - C))))
        level_hws.append(H * W)
        pe = position_embedding_sine(H, W, d // 2).reshape(H * W, d)
        pos_parts.append(pe + params["level_embed"][idx][None, :])
        masks.append(nearest_resize(supp_masks.astype(jnp.float32), H, W).astype(bool))

    x_all = jnp.concatenate(x_parts, axis=1).astype(jnp.bfloat16)  # (B, HWt, Cmax)
    pos_all = jnp.concatenate(pos_parts, axis=0)                   # (HWt, D) f32
    hwt = int(sum(level_hws))
    hw_pad = max(128, -(-hwt // 128) * 128)                        # lane-dense keys

    # Reference-forward bookkeeping (computed but not consumed by the returned
    # output; XLA dead-code-eliminates it).
    mask_flatten = jnp.concatenate([m.reshape(m.shape[0], -1) for m in masks], axis=1)
    # NOTE: the reference computes memory_key_padding_mask but never passes it to
    # the decoder layer, so cross-attention is intentionally unmasked here.
    _memory_key_padding_mask = ~mask_flatten
    hw_sizes = jnp.asarray(level_hws, jnp.int32)
    _level_start_index = jnp.concatenate(
        [jnp.zeros((1,), jnp.int32), jnp.cumsum(hw_sizes)[:-1]])
    _valid_ratios = jnp.stack([get_valid_ratio(m) for m in masks], axis=1)
    _reference_points = jax.nn.sigmoid(
        jnp.repeat(params["refpoint_embed"][:, None, :], target.shape[0], axis=1))

    B, nq, _ = target.shape
    kernel = _make_fused_kernel(tuple(level_hws), hw_pad)
    return pl.pallas_call(
        kernel,
        out_shape=jax.ShapeDtypeStruct((B, nq, d), jnp.float32),
        scratch_shapes=[pltpu.VMEM((B, hw_pad, d), jnp.bfloat16),   # memory (values)
                        pltpu.VMEM((B, hw_pad, d), jnp.bfloat16)],  # memory + pos (keys)
    )(x_all, params["wproj"], params["gnp"], params["gmat"], pos_all, target,
      params["wq"], params["wkT"], params["wvo"], params["w1"], params["w2"],
      params["bq"], params["bvec"])


# ============================ parameter setup ================================
def xavier_uniform(key, shape, fan_in, fan_out):
    limit = math.sqrt(6.0 / (fan_in + fan_out))
    return jax.random.uniform(key, shape, jnp.float32, -limit, limit)


def make_params(key, in_channels_reversed):
    keys = iter(jax.random.split(key, 128))
    d, h, hd = D_MODEL, N_HEADS, HEAD_DIM
    scale = 1.0 / math.sqrt(hd)

    # ---- input projections (1x1 conv + GroupNorm), reversed level order -----
    cmax = max(in_channels_reversed)
    wproj, gnp = [], []
    for cin in in_channels_reversed:
        w = xavier_uniform(next(keys), (cin, d), cin, d)
        wproj.append(jnp.pad(w, ((0, cmax - cin), (0, 0))))        # zero-pad channels
        gnp.append(jnp.stack([jnp.zeros((d,)),                     # conv bias
                              jnp.ones((d,)),                      # GN gamma
                              jnp.zeros((d,))]))                   # GN beta
    wproj = jnp.stack(wproj).astype(jnp.bfloat16)                  # (nlvl, Cmax, D)
    gnp = jnp.stack(gnp).astype(jnp.float32)                       # (nlvl, 3, D)
    cg = d // GN_GROUPS
    gmat = (jnp.kron(jnp.eye(GN_GROUPS), jnp.ones((cg, cg))) / cg).astype(jnp.float32)

    # ---- head-major / reassociated attention weight packing -----------------
    def head_q(w):        # (d, d) -> (H, d, hd)
        return w.reshape(d, h, hd).transpose(1, 0, 2)

    def head_kT(w):       # (d, d) -> (H, hd, d)  == Wk_h^T
        return w.reshape(d, h, hd).transpose(1, 2, 0)

    def head_vo(wv, wo):  # fused per-head Wv_h @ Wo_h -> (H, d, d)
        wv_h = wv.reshape(d, h, hd).transpose(1, 0, 2)
        wo_h = wo.reshape(h, hd, d)
        return jnp.einsum("hde,hef->hdf", wv_h, wo_h)

    dec_g, dec_b = jnp.ones((d,)), jnp.zeros((d,))   # shared decoder-level norm

    wq_l, wkT_l, wvo_l, w1_l, w2_l, bq_l, bvec_l = [], [], [], [], [], [], []
    for _ in range(NUM_LAYERS):
        sa_q, sa_k, sa_v, sa_o, ca_q, ca_k, ca_v, ca_o = [
            xavier_uniform(next(keys), (d, d), d, d) for _ in range(8)]
        w1 = xavier_uniform(next(keys), (d, D_FF), d, D_FF)
        w2 = xavier_uniform(next(keys), (D_FF, d), D_FF, d)
        b1 = jax.random.uniform(next(keys), (D_FF,), jnp.float32,
                                -1.0 / math.sqrt(d), 1.0 / math.sqrt(d))
        b2 = jax.random.uniform(next(keys), (d,), jnp.float32,
                                -1.0 / math.sqrt(D_FF), 1.0 / math.sqrt(D_FF))
        # nn.MultiheadAttention init: in_proj / out_proj biases are zeros.
        # K-projection biases are softmax-invariant and dropped exactly;
        # V-projection biases are folded through Wo into the output bias below.
        sa_qb = sa_vb = sa_ob = jnp.zeros((d,))
        ca_qb = ca_vb = ca_ob = jnp.zeros((d,))

        wq_l.append(jnp.stack([head_q(sa_q * scale), head_q(ca_q * scale)]))
        wkT_l.append(jnp.stack([head_kT(sa_k), head_kT(ca_k)]))
        wvo_l.append(jnp.stack([head_vo(sa_v, sa_o), head_vo(ca_v, ca_o)]))
        w1_l.append(w1)
        w2_l.append(w2)
        bq_l.append(jnp.stack([(sa_qb * scale).reshape(h, 1, hd),
                               (ca_qb * scale).reshape(h, 1, hd)]))

        bvec = jnp.zeros((N_BVEC_ROWS, 128), jnp.float32)
        bvec = bvec.at[R_SA_OB, :d].set(sa_ob + sa_vb @ sa_o)   # fold V bias thru Wo
        bvec = bvec.at[R_CA_OB, :d].set(ca_ob + ca_vb @ ca_o)
        bvec = bvec.at[R_B1, :D_FF].set(b1)
        bvec = bvec.at[R_B2, :d].set(b2)
        bvec = bvec.at[R_LN_W:R_LN_W + 4, :d].set(
            jnp.stack([jnp.ones((d,))] * 3 + [dec_g]))
        bvec = bvec.at[R_LN_B:R_LN_B + 4, :d].set(
            jnp.stack([jnp.zeros((d,))] * 3 + [dec_b]))
        bvec_l.append(bvec)

    nflat = NUM_LAYERS * 2 * h        # flat (layer, sa/ca, head) leading axis
    return {
        "wproj": wproj,
        "gnp": gnp,
        "gmat": gmat,
        "level_embed": jax.random.normal(next(keys), (NUM_FEATURE_LEVELS, d), jnp.float32),
        "refpoint_embed": jax.random.normal(next(keys), (NUM_PROMPTS, QUERY_DIM), jnp.float32),
        "wq": jnp.stack(wq_l).reshape(nflat, d, hd).astype(jnp.bfloat16),
        "wkT": jnp.stack(wkT_l).reshape(nflat, hd, d).astype(jnp.bfloat16),
        "wvo": jnp.stack(wvo_l).reshape(nflat, d, d).astype(jnp.bfloat16),
        "w1": jnp.stack(w1_l).astype(jnp.bfloat16),               # (L, D, Dff)
        "w2": jnp.stack(w2_l).astype(jnp.bfloat16),               # (L, Dff, D)
        "bq": jnp.stack(bq_l).reshape(nflat, 1, hd).astype(jnp.float32),
        "bvec": jnp.stack(bvec_l).astype(jnp.float32),            # (L, 12, 128)
    }


# ================================= main ======================================
if __name__ == "__main__":
    key = jax.random.PRNGKey(0)
    k_feat4, k_feat5, k_tgt, k_params = jax.random.split(key, 4)

    B, nq = 2, 8
    # two feature levels (detectron2-style dict, NCHW)
    feature_spec = {"res4": (8, 8, 8), "res5": (16, 4, 4)}   # name: (C, H, W)
    transformer_in_features = ("res4", "res5")

    supp_features = {
        "res4": jax.random.normal(k_feat4, (B,) + feature_spec["res4"], jnp.float32),
        "res5": jax.random.normal(k_feat5, (B,) + feature_spec["res5"], jnp.float32),
    }
    # padding mask: True = padded region (right-most columns of sample 1)
    supp_masks = jnp.zeros((B, 16, 16), bool).at[1, :, 12:].set(True)
    target = jax.random.normal(k_tgt, (B, nq, D_MODEL), jnp.float32)

    # input_proj is built over the reversed channel list (matches the reference)
    in_channels_reversed = [feature_spec[f][0] for f in transformer_in_features][::-1]
    params = make_params(k_params, in_channels_reversed)

    fwd = jax.jit(lambda p, sf, sm, t: transformer_decoder_forward(
        p, sf, sm, t, transformer_in_features))
    out = jax.block_until_ready(fwd(params, supp_features, supp_masks, target))
    assert out.shape == (B, nq, D_MODEL), out.shape
    assert bool(jnp.all(jnp.isfinite(out)))
    print("KERNEL_OK")
</pallas_src>

<mosaic_0001>
module attributes {stable_mosaic.version = 11 : i64} {
  func.func @kernel(%arg0: memref<2x80x16xbf16, #tpu.memory_space<vmem>>, %arg1: memref<2x16x64xbf16, #tpu.memory_space<vmem>>, %arg2: memref<2x3x64xf32, #tpu.memory_space<vmem>>, %arg3: memref<64x64xf32, #tpu.memory_space<vmem>>, %arg4: memref<80x64xf32, #tpu.memory_space<vmem>>, %arg5: memref<2x8x64xf32, #tpu.memory_space<vmem>>, %arg6: memref<16x64x16xbf16, #tpu.memory_space<vmem>>, %arg7: memref<16x16x64xbf16, #tpu.memory_space<vmem>>, %arg8: memref<16x64x64xbf16, #tpu.memory_space<vmem>>, %arg9: memref<2x64x128xbf16, #tpu.memory_space<vmem>>, %arg10: memref<2x128x64xbf16, #tpu.memory_space<vmem>>, %arg11: memref<16x1x16xf32, #tpu.memory_space<vmem>>, %arg12: memref<2x12x128xf32, #tpu.memory_space<vmem>>, %arg13: memref<2x8x64xf32, #tpu.memory_space<vmem>>, %arg14: memref<2x128x64xbf16, #tpu.memory_space<vmem>>, %arg15: memref<2x128x64xbf16, #tpu.memory_space<vmem>>) attributes {dimension_semantics = [], scalar_prefetch = 0 : i64, scratch_operands = 2 : i64, tpu.core_type = #tpu.core_type<tc>} {
    %cst = arith.constant 0.000000e+00 : bf16
    %0 = vector.broadcast %cst : bf16 to vector<2x48x64xbf16>
    %c0 = arith.constant 0 : index
    %c80 = arith.constant 80 : index
    %c0_0 = arith.constant 0 : index
    %1 = vector.load %arg14[%c0, %c80, %c0_0] : memref<2x128x64xbf16, #tpu.memory_space<vmem>>, vector<2x48x64xbf16>
    tpu.vector_store %arg14[%c0, %c80, %c0_0], %0 {strides = array<i32>} : memref<2x128x64xbf16, #tpu.memory_space<vmem>>, vector<2x48x64xbf16>,
    %c0_1 = arith.constant 0 : index
    %c80_2 = arith.constant 80 : index
    %c0_3 = arith.constant 0 : index
    %2 = vector.load %arg15[%c0_1, %c80_2, %c0_3] : memref<2x128x64xbf16, #tpu.memory_space<vmem>>, vector<2x48x64xbf16>
    tpu.vector_store %arg15[%c0_1, %c80_2, %c0_3], %0 {strides = array<i32>} : memref<2x128x64xbf16, #tpu.memory_space<vmem>>, vector<2x48x64xbf16>,
    %c0_4 = arith.constant 0 : index
    %c0_5 = arith.constant 0 : index
    %3 = vector.load %arg3[%c0_4, %c0_5] : memref<64x64xf32, #tpu.memory_space<vmem>>, vector<64x64xf32>
    %c0_6 = arith.constant 0 : index
    %c0_7 = arith.constant 0 : index
    %c0_8 = arith.constant 0 : index
    %4 = vector.load %arg0[%c0_6, %c0_7, %c0_8] : memref<2x80x16xbf16, #tpu.memory_space<vmem>>, vector<2x16x16xbf16>
    %c0_9 = arith.constant 0 : index
    %c0_10 = arith.constant 0 : index
    %c0_11 = arith.constant 0 : index
    %5 = vector.load %arg1[%c0_9, %c0_10, %c0_11] : memref<2x16x64xbf16, #tpu.memory_space<vmem>>, vector<1x16x64xbf16>
    %6 = vector.shape_cast %5 : vector<1x16x64xbf16> to vector<16x64xbf16>
    "tpu.trace_start"() <{level = 10 : i32, message = "bsc,cd->bsd"}> : () -> ()
    %cst_12 = arith.constant dense<0.000000e+00> : vector<2x16x64xf32>
    %7 = tpu.matmul %4, %6, %cst_12 {dimension_numbers = #tpu.dot_dimension_numbers<[2], [0], [0, 1], [1], [0, 0, 0, 1, 1, 1], [], []>} : vector<2x16x16xbf16>, vector<16x64xbf16>, vector<2x16x64xf32> -> vector<2x16x64xf32>
    "tpu.trace_stop"() : () -> ()
    %c0_13 = arith.constant 0 : index
    %c0_14 = arith.constant 0 : index
    %c0_15 = arith.constant 0 : index
    %8 = vector.load %arg2[%c0_13, %c0_14, %c0_15] : memref<2x3x64xf32, #tpu.memory_space<vmem>>, vector<1x1x64xf32>
    %9 = vector.shape_cast %8 : vector<1x1x64xf32> to vector<1x64xf32>
    %10 = vector.shape_cast %9 : vector<1x64xf32> to vector<1x1x64xf32>
    %11 = vector.broadcast %10 : vector<1x1x64xf32> to vector<2x16x64xf32>
    %12 = arith.addf %7, %11 : vector<2x16x64xf32>
    %cst_16 = arith.constant dense<0.000000e+00> : vector<2x64xf32>
    %13 = vector.multi_reduction <add>, %12, %cst_16 [1] : vector<2x16x64xf32> to vector<2x64xf32>
    %14 = vector.shape_cast %13 : vector<2x64xf32> to vector<2x1x64xf32>
    %cst_17 = arith.constant 1.600000e+01 : f32
    %15 = vector.broadcast %cst_17 : f32 to vector<2x1x64xf32>
    %16 = arith.divf %14, %15 : vector<2x1x64xf32>
    %17 = arith.mulf %12, %12 : vector<2x16x64xf32>
    %cst_18 = arith.constant dense<0.000000e+00> : vector<2x64xf32>
    %18 = vector.multi_reduction <add>, %17, %cst_18 [1] : vector<2x16x64xf32> to vector<2x64xf32>
    %19 = vector.shape_cast %18 : vector<2x64xf32> to vector<2x1x64xf32>
    %cst_19 = arith.constant 1.600000e+01 : f32
    %20 = vector.broadcast %cst_19 : f32 to vector<2x1x64xf32>
    %21 = arith.divf %19, %20 : vector<2x1x64xf32>
    "tpu.trace_start"() <{level = 10 : i32, message = "bsd,de->bse"}> : () -> ()
    %cst_20 = arith.constant dense<0.000000e+00> : vector<2x1x64xf32>
    %22 = tpu.matmul %16, %3, %cst_20 {dimension_numbers = #tpu.dot_dimension_numbers<[2], [0], [0, 1], [1], [0, 0, 0, 1, 1, 1], [], []>} : vector<2x1x64xf32>, vector<64x64xf32>, vector<2x1x64xf32> -> vector<2x1x64xf32>
    %cst_21 = arith.constant dense<0.000000e+00> : vector<2x1x64xf32>
    %23 = tpu.matmul %21, %3, %cst_21 {dimension_numbers = #tpu.dot_dimension_numbers<[2], [0], [0, 1], [1], [0, 0, 0, 1, 1, 1], [], []>} : vector<2x1x64xf32>, vector<64x64xf32>, vector<2x1x64xf32> -> vector<2x1x64xf32>
    "tpu.trace_stop"() : () -> ()
    %24 = arith.mulf %22, %22 : vector<2x1x64xf32>
    %25 = arith.subf %23, %24 : vector<2x1x64xf32>
    %cst_22 = arith.constant 0.000000e+00 : f32
    %26 = vector.broadcast %cst_22 : f32 to vector<2x1x64xf32>
    %27 = arith.maximumf %25, %26 : vector<2x1x64xf32>
    %28 = vector.broadcast %22 : vector<2x1x64xf32> to vector<2x16x64xf32>
    %29 = arith.subf %12, %28 : vector<2x16x64xf32>
    %cst_23 = arith.constant 9.99999974E-6 : f32
    %30 = vector.broadcast %cst_23 : f32 to vector<2x1x64xf32>
    %31 = arith.addf %27, %30 : vector<2x1x64xf32>
    %32 = math.rsqrt %31 : vector<2x1x64xf32>
    %33 = vector.broadcast %32 : vector<2x1x64xf32> to vector<2x16x64xf32>
    %34 = arith.mulf %29, %33 : vector<2x16x64xf32>
    %c0_24 = arith.constant 0 : index
    %c1 = arith.constant 1 : index
    %c0_25 = arith.constant 0 : index
    %35 = vector.load %arg2[%c0_24, %c1, %c0_25] : memref<2x3x64xf32, #tpu.memory_space<vmem>>, vector<1x1x64xf32>
    %36 = vector.shape_cast %35 : vector<1x1x64xf32> to vector<1x64xf32>
    %37 = vector.shape_cast %36 : vector<1x64xf32> to vector<1x1x64xf32>
    %38 = vector.broadcast %37 : vector<1x1x64xf32> to vector<2x16x64xf32>
    %39 = arith.mulf %34, %38 : vector<2x16x64xf32>
    %c0_26 = arith.constant 0 : index
    %c2 = arith.constant 2 : index
    %c0_27 = arith.constant 0 : index
    %40 = vector.load %arg2[%c0_26, %c2, %c0_27] : memref<2x3x64xf32, #tpu.memory_space<vmem>>, vector<1x1x64xf32>
    %41 = vector.shape_cast %40 : vector<1x1x64xf32> to vector<1x64xf32>
    %42 = vector.shape_cast %41 : vector<1x64xf32> to vector<1x1x64xf32>
    %43 = vector.broadcast %42 : vector<1x1x64xf32> to vector<2x16x64xf32>
    %44 = arith.addf %39, %43 : vector<2x16x64xf32>
    %45 = arith.truncf %44 : vector<2x16x64xf32> to vector<2x16x64xbf16>
    %c0_28 = arith.constant 0 : index
    %c0_29 = arith.constant 0 : index
    %c0_30 = arith.constant 0 : index
    %46 = vector.load %arg14[%c0_28, %c0_29, %c0_30] : memref<2x128x64xbf16, #tpu.memory_space<vmem>>, vector<2x16x64xbf16>
    tpu.vector_store %arg14[%c0_28, %c0_29, %c0_30], %45 {strides = array<i32>} : memref<2x128x64xbf16, #tpu.memory_space<vmem>>, vector<2x16x64xbf16>,
    %c0_31 = arith.constant 0 : index
    %c0_32 = arith.constant 0 : index
    %47 = vector.load %arg4[%c0_31, %c0_32] : memref<80x64xf32, #tpu.memory_space<vmem>>, vector<16x64xf32>
    %48 = vector.shape_cast %47 : vector<16x64xf32> to vector<1x16x64xf32>
    %49 = vector.broadcast %48 : vector<1x16x64xf32> to vector<2x16x64xf32>
    %50 = arith.addf %44, %49 : vector<2x16x64xf32>
    %51 = arith.truncf %50 : vector<2x16x64xf32> to vector<2x16x64xbf16>
    %c0_33 = arith.constant 0 : index
    %c0_34 = arith.constant 0 : index
    %c0_35 = arith.constant 0 : index
    %52 = vector.load %arg15[%c0_33, %c0_34, %c0_35] : memref<2x128x64xbf16, #tpu.memory_space<vmem>>, vector<2x16x64xbf16>
    tpu.vector_store %arg15[%c0_33, %c0_34, %c0_35], %51 {strides = array<i32>} : memref<2x128x64xbf16, #tpu.memory_space<vmem>>, vector<2x16x64xbf16>,
    %c0_36 = arith.constant 0 : index
    %c16 = arith.constant 16 : index
    %c0_37 = arith.constant 0 : index
    %53 = vector.load %arg0[%c0_36, %c16, %c0_37] : memref<2x80x16xbf16, #tpu.memory_space<vmem>>, vector<2x64x16xbf16>
    %c1_38 = arith.constant 1 : index
    %c0_39 = arith.constant 0 : index
    %c0_40 = arith.constant 0 : index
    %54 = vector.load %arg1[%c1_38, %c0_39, %c0_40] : memref<2x16x64xbf16, #tpu.memory_space<vmem>>, vector<1x16x64xbf16>
    %55 = vector.shape_cast %54 : vector<1x16x64xbf16> to vector<16x64xbf16>
    "tpu.trace_start"() <{level = 10 : i32, message = "bsc,cd->bsd"}> : () -> ()
    %cst_41 = arith.constant dense<0.000000e+00> : vector<2x64x64xf32>
    %56 = tpu.matmul %53, %55, %cst_41 {dimension_numbers = #tpu.dot_dimension_numbers<[2], [0], [0, 1], [1], [0, 0, 0, 1, 1, 1], [], []>} : vector<2x64x16xbf16>, vector<16x64xbf16>, vector<2x64x64xf32> -> vector<2x64x64xf32>
    "tpu.trace_stop"() : () -> ()
    %c1_42 = arith.constant 1 : index
    %c0_43 = arith.constant 0 : index
    %c0_44 = arith.constant 0 : index
    %57 = vector.load %arg2[%c1_42, %c0_43, %c0_44] : memref<2x3x64xf32, #tpu.memory_space<vmem>>, vector<1x1x64xf32>
    %58 = vector.shape_cast %57 : vector<1x1x64xf32> to vector<1x64xf32>
    %59 = vector.shape_cast %58 : vector<1x64xf32> to vector<1x1x64xf32>
    %60 = vector.broadcast %59 : vector<1x1x64xf32> to vector<2x64x64xf32>
    %61 = arith.addf %56, %60 : vector<2x64x64xf32>
    %cst_45 = arith.constant dense<0.000000e+00> : vector<2x64xf32>
    %62 = vector.multi_reduction <add>, %61, %cst_45 [1] : vector<2x64x64xf32> to vector<2x64xf32>
    %63 = vector.shape_cast %62 : vector<2x64xf32> to vector<2x1x64xf32>
    %cst_46 = arith.constant 6.400000e+01 : f32
    %64 = vector.broadcast %cst_46 : f32 to vector<2x1x64xf32>
    %65 = arith.divf %63, %64 : vector<2x1x64xf32>
    %66 = arith.mulf %61, %61 : vector<2x64x64xf32>
    %cst_47 = arith.constant dense<0.000000e+00> : vector<2x64xf32>
    %67 = vector.multi_reduction <add>, %66, %cst_47 [1] : vector<2x64x64xf32> to vector<2x64xf32>
    %68 = vector.shape_cast %67 : vector<2x64xf32> to vector<2x1x64xf32>
    %cst_48 = arith.constant 6.400000e+01 : f32
    %69 = vector.broadcast %cst_48 : f32 to vector<2x1x64xf32>
    %70 = arith.divf %68, %69 : vector<2x1x64xf32>
    "tpu.trace_start"() <{level = 10 : i32, message = "bsd,de->bse"}> : () -> ()
    %cst_49 = arith.constant dense<0.000000e+00> : vector<2x1x64xf32>
    %71 = tpu.matmul %65, %3, %cst_49 {dimension_numbers = #tpu.dot_dimension_numbers<[2], [0], [0, 1], [1], [0, 0, 0, 1, 1, 1], [], []>} : vector<2x1x64xf32>, vector<64x64xf32>, vector<2x1x64xf32> -> vector<2x1x64xf32>
    %cst_50 = arith.constant dense<0.000000e+00> : vector<2x1x64xf32>
    %72 = tpu.matmul %70, %3, %cst_50 {dimension_numbers = #tpu.dot_dimension_numbers<[2], [0], [0, 1], [1], [0, 0, 0, 1, 1, 1], [], []>} : vector<2x1x64xf32>, vector<64x64xf32>, vector<2x1x64xf32> -> vector<2x1x64xf32>
    "tpu.trace_stop"() : () -> ()
    %73 = arith.mulf %71, %71 : vector<2x1x64xf32>
    %74 = arith.subf %72, %73 : vector<2x1x64xf32>
    %cst_51 = arith.constant 0.000000e+00 : f32
    %75 = vector.broadcast %cst_51 : f32 to vector<2x1x64xf32>
    %76 = arith.maximumf %74, %75 : vector<2x1x64xf32>
    %77 = vector.broadcast %71 : vector<2x1x64xf32> to vector<2x64x64xf32>
    %78 = arith.subf %61, %77 : vector<2x64x64xf32>
    %cst_52 = arith.constant 9.99999974E-6 : f32
    %79 = vector.broadcast %cst_52 : f32 to vector<2x1x64xf32>
    %80 = arith.addf %76, %79 : vector<2x1x64xf32>
    %81 = math.rsqrt %80 : vector<2x1x64xf32>
    %82 = vector.broadcast %81 : vector<2x1x64xf32> to vector<2x64x64xf32>
    %83 = arith.mulf %78, %82 : vector<2x64x64xf32>
    %c1_53 = arith.constant 1 : index
    %c1_54 = arith.constant 1 : index
    %c0_55 = arith.constant 0 : index
    %84 = vector.load %arg2[%c1_53, %c1_54, %c0_55] : memref<2x3x64xf32, #tpu.memory_space<vmem>>, vector<1x1x64xf32>
    %85 = vector.shape_cast %84 : vector<1x1x64xf32> to vector<1x64xf32>
    %86 = vector.shape_cast %85 : vector<1x64xf32> to vector<1x1x64xf32>
    %87 = vector.broadcast %86 : vector<1x1x64xf32> to vector<2x64x64xf32>
    %88 = arith.mulf %83, %87 : vector<2x64x64xf32>
    %c1_56 = arith.constant 1 : index
    %c2_57 = arith.constant 2 : index
    %c0_58 = arith.constant 0 : index
    %89 = vector.load %arg2[%c1_56, %c2_57, %c0_58] : memref<2x3x64xf32, #tpu.memory_space<vmem>>, vector<1x1x64xf32>
    %90 = vector.shape_cast %89 : vector<1x1x64xf32> to vector<1x64xf32>
    %91 = vector.shape_cast %90 : vector<1x64xf32> to vector<1x1x64xf32>
    %92 = vector.broadcast %91 : vector<1x1x64xf32> to vector<2x64x64xf32>
    %93 = arith.addf %88, %92 : vector<2x64x64xf32>
    %94 = arith.truncf %93 : vector<2x64x64xf32> to vector<2x64x64xbf16>
    %c0_59 = arith.constant 0 : index
    %c16_60 = arith.constant 16 : index
    %c0_61 = arith.constant 0 : index
    %95 = vector.load %arg14[%c0_59, %c16_60, %c0_61] : memref<2x128x64xbf16, #tpu.memory_space<vmem>>, vector<2x64x64xbf16>
    tpu.vector_store %arg14[%c0_59, %c16_60, %c0_61], %94 {strides = array<i32>} : memref<2x128x64xbf16, #tpu.memory_space<vmem>>, vector<2x64x64xbf16>,
    %c16_62 = arith.constant 16 : index
    %c0_63 = arith.constant 0 : index
    %96 = vector.load %arg4[%c16_62, %c0_63] : memref<80x64xf32, #tpu.memory_space<vmem>>, vector<64x64xf32>
    %97 = vector.shape_cast %96 : vector<64x64xf32> to vector<1x64x64xf32>
    %98 = vector.broadcast %97 : vector<1x64x64xf32> to vector<2x64x64xf32>
    %99 = arith.addf %93, %98 : vector<2x64x64xf32>
    %100 = arith.truncf %99 : vector<2x64x64xf32> to vector<2x64x64xbf16>
    %c0_64 = arith.constant 0 : index
    %c16_65 = arith.constant 16 : index
    %c0_66 = arith.constant 0 : index
    %101 = vector.load %arg15[%c0_64, %c16_65, %c0_66] : memref<2x128x64xbf16, #tpu.memory_space<vmem>>, vector<2x64x64xbf16>
    tpu.vector_store %arg15[%c0_64, %c16_65, %c0_66], %100 {strides = array<i32>} : memref<2x128x64xbf16, #tpu.memory_space<vmem>>, vector<2x64x64xbf16>,
    %c0_67 = arith.constant 0 : index
    %c0_68 = arith.constant 0 : index
    %c0_69 = arith.constant 0 : index
    %102 = vector.load %arg14[%c0_67, %c0_68, %c0_69] : memref<2x128x64xbf16, #tpu.memory_space<vmem>>, vector<2x128x64xbf16>
    %c0_70 = arith.constant 0 : index
    %c0_71 = arith.constant 0 : index
    %c0_72 = arith.constant 0 : index
    %103 = vector.load %arg15[%c0_70, %c0_71, %c0_72] : memref<2x128x64xbf16, #tpu.memory_space<vmem>>, vector<2x128x64xbf16>
    %104 = tpu.iota {dimensions = array<i32: 1>} : vector<1x128xi32>
    %c80_i32 = arith.constant 80 : i32
    %105 = vector.broadcast %c80_i32 : i32 to vector<1x128xi32>
    %106 = arith.cmpi slt, %104, %105 : vector<1x128xi32>
    %107 = arith.extui %106 : vector<1x128xi1> to vector<1x128xi32>
    %108 = arith.sitofp %107 : vector<1x128xi32> to vector<1x128xf32>
    %c0_73 = arith.constant 0 : index
    %c0_74 = arith.constant 0 : index
    %c0_75 = arith.constant 0 : index
    %109 = vector.load %arg5[%c0_73, %c0_74, %c0_75] : memref<2x8x64xf32, #tpu.memory_space<vmem>>, vector<2x8x64xf32>
    %110 = arith.truncf %109 : vector<2x8x64xf32> to vector<2x8x64xbf16>
    %111 = arith.truncf %109 : vector<2x8x64xf32> to vector<2x8x64xbf16>
    %c0_76 = arith.constant 0 : index
    %c0_77 = arith.constant 0 : index
    %c0_78 = arith.constant 0 : index
    %112 = vector.load %arg6[%c0_76, %c0_77, %c0_78] : memref<16x64x16xbf16, #tpu.memory_space<vmem>>, vector<1x64x16xbf16>
    %113 = vector.shape_cast %112 : vector<1x64x16xbf16> to vector<64x16xbf16>
    "tpu.trace_start"() <{level = 10 : i32, message = "bsd,de->bse"}> : () -> ()
    %cst_79 = arith.constant dense<0.000000e+00> : vector<2x8x16xf32>
    %114 = tpu.matmul %111, %113, %cst_79 {dimension_numbers = #tpu.dot_dimension_numbers<[2], [0], [0, 1], [1], [0, 0, 0, 1, 1, 1], [], []>} : vector<2x8x64xbf16>, vector<64x16xbf16>, vector<2x8x16xf32> -> vector<2x8x16xf32>
    "tpu.trace_stop"() : () -> ()
    %c0_80 = arith.constant 0 : index
    %c0_81 = arith.constant 0 : index
    %c0_82 = arith.constant 0 : index
    %115 = vector.load %arg11[%c0_80, %c0_81, %c0_82] : memref<16x1x16xf32, #tpu.memory_space<vmem>>, vector<1x1x16xf32>
    %116 = vector.shape_cast %115 : vector<1x1x16xf32> to vector<1x16xf32>
    %117 = vector.shape_cast %116 : vector<1x16xf32> to vector<1x1x16xf32>
    %118 = vector.broadcast %117 : vector<1x1x16xf32> to vector<2x8x16xf32>
    %119 = arith.addf %114, %118 : vector<2x8x16xf32>
    %120 = arith.truncf %119 : vector<2x8x16xf32> to vector<2x8x16xbf16>
    %c0_83 = arith.constant 0 : index
    %c0_84 = arith.constant 0 : index
    %c0_85 = arith.constant 0 : index
    %121 = vector.load %arg7[%c0_83, %c0_84, %c0_85] : memref<16x16x64xbf16, #tpu.memory_space<vmem>>, vector<1x16x64xbf16>
    %122 = vector.shape_cast %121 : vector<1x16x64xbf16> to vector<16x64xbf16>
    "tpu.trace_start"() <{level = 10 : i32, message = "bse,ed->bsd"}> : () -> ()
    %cst_86 = arith.constant dense<0.000000e+00> : vector<2x8x64xf32>
    %123 = tpu.matmul %120, %122, %cst_86 {dimension_numbers = #tpu.dot_dimension_numbers<[2], [0], [0, 1], [1], [0, 0, 0, 1, 1, 1], [], []>} : vector<2x8x16xbf16>, vector<16x64xbf16>, vector<2x8x64xf32> -> vector<2x8x64xf32>
    "tpu.trace_stop"() : () -> ()
    %124 = arith.truncf %123 : vector<2x8x64xf32> to vector<2x8x64xbf16>
    "tpu.trace_start"() <{level = 10 : i32, message = "bqd,bkd->bqk"}> : () -> ()
    %cst_87 = arith.constant dense<0.000000e+00> : vector<2x8x8xf32>
    %125 = tpu.matmul %124, %110, %cst_87 {dimension_numbers = #tpu.dot_dimension_numbers<[2], [2], [1], [1], [0, 0, 0, 1, 1, 1], [0], [0]>} : vector<2x8x64xbf16>, vector<2x8x64xbf16>, vector<2x8x8xf32> -> vector<2x8x8xf32>
    "tpu.trace_stop"() : () -> ()
    %cst_88 = arith.constant dense<0xFF800000> : vector<2x8xf32>
    %126 = vector.multi_reduction <maximumf>, %125, %cst_88 [2] : vector<2x8x8xf32> to vector<2x8xf32>
    %127 = vector.shape_cast %126 : vector<2x8xf32> to vector<2x8x1xf32>
    %128 = vector.broadcast %127 : vector<2x8x1xf32> to vector<2x8x8xf32>
    %129 = arith.subf %125, %128 : vector<2x8x8xf32>
    %130 = math.exp %129 : vector<2x8x8xf32>
    %cst_89 = arith.constant dense<0.000000e+00> : vector<2x8xf32>
    %131 = vector.multi_reduction <add>, %130, %cst_89 [2] : vector<2x8x8xf32> to vector<2x8xf32>
    %132 = vector.shape_cast %131 : vector<2x8xf32> to vector<2x8x1xf32>
    %133 = tpu.reciprocal %132 {approx = true} : vector<2x8x1xf32> -> vector<2x8x1xf32>
    %134 = vector.broadcast %133 : vector<2x8x1xf32> to vector<2x8x8xf32>
    %135 = arith.mulf %130, %134 : vector<2x8x8xf32>
    %136 = arith.truncf %135 : vector<2x8x8xf32> to vector<2x8x8xbf16>
    "tpu.trace_start"() <{level = 10 : i32, message = "bqk,bkd->bqd"}> : () -> ()
    %cst_90 = arith.constant dense<0.000000e+00> : vector<2x8x64xf32>
    %137 = tpu.matmul %136, %110, %cst_90 {dimension_numbers = #tpu.dot_dimension_numbers<[2], [1], [1], [2], [0, 0, 0, 1, 1, 2], [0], [0]>} : vector<2x8x8xbf16>, vector<2x8x64xbf16>, vector<2x8x64xf32> -> vector<2x8x64xf32>
    "tpu.trace_stop"() : () -> ()
    %138 = arith.truncf %137 : vector<2x8x64xf32> to vector<2x8x64xbf16>
    %c0_91 = arith.constant 0 : index
    %c0_92 = arith.constant 0 : index
    %c0_93 = arith.constant 0 : index
    %139 = vector.load %arg8[%c0_91, %c0_92, %c0_93] : memref<16x64x64xbf16, #tpu.memory_space<vmem>>, vector<1x64x64xbf16>
    %140 = vector.shape_cast %139 : vector<1x64x64xbf16> to vector<64x64xbf16>
    "tpu.trace_start"() <{level = 10 : i32, message = "bqd,dn->bqn"}> : () -> ()
    %cst_94 = arith.constant dense<0.000000e+00> : vector<2x8x64xf32>
    %141 = tpu.matmul %138, %140, %cst_94 {dimension_numbers = #tpu.dot_dimension_numbers<[2], [0], [0, 1], [1], [0, 0, 0, 1, 1, 1], [], []>} : vector<2x8x64xbf16>, vector<64x64xbf16>, vector<2x8x64xf32> -> vector<2x8x64xf32>
    "tpu.trace_stop"() : () -> ()
    %c1_95 = arith.constant 1 : index
    %c0_96 = arith.constant 0 : index
    %c0_97 = arith.constant 0 : index
    %142 = vector.load %arg6[%c1_95, %c0_96, %c0_97] : memref<16x64x16xbf16, #tpu.memory_space<vmem>>, vector<1x64x16xbf16>
    %143 = vector.shape_cast %142 : vector<1x64x16xbf16> to vector<64x16xbf16>
    "tpu.trace_start"() <{level = 10 : i32, message = "bsd,de->bse"}> : () -> ()
    %cst_98 = arith.constant dense<0.000000e+00> : vector<2x8x16xf32>
    %144 = tpu.matmul %111, %143, %cst_98 {dimension_numbers = #tpu.dot_dimension_numbers<[2], [0], [0, 1], [1], [0, 0, 0, 1, 1, 1], [], []>} : vector<2x8x64xbf16>, vector<64x16xbf16>, vector<2x8x16xf32> -> vector<2x8x16xf32>
    "tpu.trace_stop"() : () -> ()
    %c1_99 = arith.constant 1 : index
    %c0_100 = arith.constant 0 : index
    %c0_101 = arith.constant 0 : index
    %145 = vector.load %arg11[%c1_99, %c0_100, %c0_101] : memref<16x1x16xf32, #tpu.memory_space<vmem>>, vector<1x1x16xf32>
    %146 = vector.shape_cast %145 : vector<1x1x16xf32> to vector<1x16xf32>
    %147 = vector.shape_cast %146 : vector<1x16xf32> to vector<1x1x16xf32>
    %148 = vector.broadcast %147 : vector<1x1x16xf32> to vector<2x8x16xf32>
    %149 = arith.addf %144, %148 : vector<2x8x16xf32>
    %150 = arith.truncf %149 : vector<2x8x16xf32> to vector<2x8x16xbf16>
    %c1_102 = arith.constant 1 : index
    %c0_103 = arith.constant 0 : index
    %c0_104 = arith.constant 0 : index
    %151 = vector.load %arg7[%c1_102, %c0_103, %c0_104] : memref<16x16x64xbf16, #tpu.memory_space<vmem>>, vector<1x16x64xbf16>
    %152 = vector.shape_cast %151 : vector<1x16x64xbf16> to vector<16x64xbf16>
    "tpu.trace_start"() <{level = 10 : i32, message = "bse,ed->bsd"}> : () -> ()
    %cst_105 = arith.constant dense<0.000000e+00> : vector<2x8x64xf32>
    %153 = tpu.matmul %150, %152, %cst_105 {dimension_numbers = #tpu.dot_dimension_numbers<[2], [0], [0, 1], [1], [0, 0, 0, 1, 1, 1], [], []>} : vector<2x8x16xbf16>, vector<16x64xbf16>, vector<2x8x64xf32> -> vector<2x8x64xf32>
    "tpu.trace_stop"() : () -> ()
    %154 = arith.truncf %153 : vector<2x8x64xf32> to vector<2x8x64xbf16>
    "tpu.trace_start"() <{level = 10 : i32, message = "bqd,bkd->bqk"}> : () -> ()
    %cst_106 = arith.constant dense<0.000000e+00> : vector<2x8x8xf32>
    %155 = tpu.matmul %154, %110, %cst_106 {dimension_numbers = #tpu.dot_dimension_numbers<[2], [2], [1], [1], [0, 0, 0, 1, 1, 1], [0], [0]>} : vector<2x8x64xbf16>, vector<2x8x64xbf16>, vector<2x8x8xf32> -> vector<2x8x8xf32>
    "tpu.trace_stop"() : () -> ()
    %cst_107 = arith.constant dense<0xFF800000> : vector<2x8xf32>
    %156 = vector.multi_reduction <maximumf>, %155, %cst_107 [2] : vector<2x8x8xf32> to vector<2x8xf32>
    %157 = vector.shape_cast %156 : vector<2x8xf32> to vector<2x8x1xf32>
    %158 = vector.broadcast %157 : vector<2x8x1xf32> to vector<2x8x8xf32>
    %159 = arith.subf %155, %158 : vector<2x8x8xf32>
    %160 = math.exp %159 : vector<2x8x8xf32>
    %cst_108 = arith.constant dense<0.000000e+00> : vector<2x8xf32>
    %161 = vector.multi_reduction <add>, %160, %cst_108 [2] : vector<2x8x8xf32> to vector<2x8xf32>
    %162 = vector.shape_cast %161 : vector<2x8xf32> to vector<2x8x1xf32>
    %163 = tpu.reciprocal %162 {approx = true} : vector<2x8x1xf32> -> vector<2x8x1xf32>
    %164 = vector.broadcast %163 : vector<2x8x1xf32> to vector<2x8x8xf32>
    %165 = arith.mulf %160, %164 : vector<2x8x8xf32>
    %166 = arith.truncf %165 : vector<2x8x8xf32> to vector<2x8x8xbf16>
    "tpu.trace_start"() <{level = 10 : i32, message = "bqk,bkd->bqd"}> : () -> ()
    %cst_109 = arith.constant dense<0.000000e+00> : vector<2x8x64xf32>
    %167 = tpu.matmul %166, %110, %cst_109 {dimension_numbers = #tpu.dot_dimension_numbers<[2], [1], [1], [2], [0, 0, 0, 1, 1, 2], [0], [0]>} : vector<2x8x8xbf16>, vector<2x8x64xbf16>, vector<2x8x64xf32> -> vector<2x8x64xf32>
    "tpu.trace_stop"() : () -> ()
    %168 = arith.truncf %167 : vector<2x8x64xf32> to vector<2x8x64xbf16>
    %c1_110 = arith.constant 1 : index
    %c0_111 = arith.constant 0 : index
    %c0_112 = arith.constant 0 : index
    %169 = vector.load %arg8[%c1_110, %c0_111, %c0_112] : memref<16x64x64xbf16, #tpu.memory_space<vmem>>, vector<1x64x64xbf16>
    %170 = vector.shape_cast %169 : vector<1x64x64xbf16> to vector<64x64xbf16>
    "tpu.trace_start"() <{level = 10 : i32, message = "bqd,dn->bqn"}> : () -> ()
    %cst_113 = arith.constant dense<0.000000e+00> : vector<2x8x64xf32>
    %171 = tpu.matmul %168, %170, %cst_113 {dimension_numbers = #tpu.dot_dimension_numbers<[2], [0], [0, 1], [1], [0, 0, 0, 1, 1, 1], [], []>} : vector<2x8x64xbf16>, vector<64x64xbf16>, vector<2x8x64xf32> -> vector<2x8x64xf32>
    "tpu.trace_stop"() : () -> ()
    %172 = arith.addf %141, %171 : vector<2x8x64xf32>
    %c2_114 = arith.constant 2 : index
    %c0_115 = arith.constant 0 : index
    %c0_116 = arith.constant 0 : index
    %173 = vector.load %arg6[%c2_114, %c0_115, %c0_116] : memref<16x64x16xbf16, #tpu.memory_space<vmem>>, vector<1x64x16xbf16>
    %174 = vector.shape_cast %173 : vector<1x64x16xbf16> to vector<64x16xbf16>
    "tpu.trace_start"() <{level = 10 : i32, message = "bsd,de->bse"}> : () -> ()
    %cst_117 = arith.constant dense<0.000000e+00> : vector<2x8x16xf32>
    %175 = tpu.matmul %111, %174, %cst_117 {dimension_numbers = #tpu.dot_dimension_numbers<[2], [0], [0, 1], [1], [0, 0, 0, 1, 1, 1], [], []>} : vector<2x8x64xbf16>, vector<64x16xbf16>, vector<2x8x16xf32> -> vector<2x8x16xf32>
    "tpu.trace_stop"() : () -> ()
    %c2_118 = arith.constant 2 : index
    %c0_119 = arith.constant 0 : index
    %c0_120 = arith.constant 0 : index
    %176 = vector.load %arg11[%c2_118, %c0_119, %c0_120] : memref<16x1x16xf32, #tpu.memory_space<vmem>>, vector<1x1x16xf32>
    %177 = vector.shape_cast %176 : vector<1x1x16xf32> to vector<1x16xf32>
    %178 = vector.shape_cast %177 : vector<1x16xf32> to vector<1x1x16xf32>
    %179 = vector.broadcast %178 : vector<1x1x16xf32> to vector<2x8x16xf32>
    %180 = arith.addf %175, %179 : vector<2x8x16xf32>
    %181 = arith.truncf %180 : vector<2x8x16xf32> to vector<2x8x16xbf16>
    %c2_121 = arith.constant 2 : index
    %c0_122 = arith.constant 0 : index
    %c0_123 = arith.constant 0 : index
    %182 = vector.load %arg7[%c2_121, %c0_122, %c0_123] : memref<16x16x64xbf16, #tpu.memory_space<vmem>>, vector<1x16x64xbf16>
    %183 = vector.shape_cast %182 : vector<1x16x64xbf16> to vector<16x64xbf16>
    "tpu.trace_start"() <{level = 10 : i32, message = "bse,ed->bsd"}> : () -> ()
    %cst_124 = arith.constant dense<0.000000e+00> : vector<2x8x64xf32>
    %184 = tpu.matmul %181, %183, %cst_124 {dimension_numbers = #tpu.dot_dimension_numbers<[2], [0], [0, 1], [1], [0, 0, 0, 1, 1, 1], [], []>} : vector<2x8x16xbf16>, vector<16x64xbf16>, vector<2x8x64xf32> -> vector<2x8x64xf32>
    "tpu.trace_stop"() : () -> ()
    %185 = arith.truncf %184 : vector<2x8x64xf32> to vector<2x8x64xbf16>
    "tpu.trace_start"() <{level = 10 : i32, message = "bqd,bkd->bqk"}> : () -> ()
    %cst_125 = arith.constant dense<0.000000e+00> : vector<2x8x8xf32>
    %186 = tpu.matmul %185, %110, %cst_125 {dimension_numbers = #tpu.dot_dimension_numbers<[2], [2], [1], [1], [0, 0, 0, 1, 1, 1], [0], [0]>} : vector<2x8x64xbf16>, vector<2x8x64xbf16>, vector<2x8x8xf32> -> vector<2x8x8xf32>
    "tpu.trace_stop"() : () -> ()
    %cst_126 = arith.constant dense<0xFF800000> : vector<2x8xf32>
    %187 = vector.multi_reduction <maximumf>, %186, %cst_126 [2] : vector<2x8x8xf32> to vector<2x8xf32>
    %188 = vector.shape_cast %187 : vector<2x8xf32> to vector<2x8x1xf32>
    %189 = vector.broadcast %188 : vector<2x8x1xf32> to vector<2x8x8xf32>
    %190 = arith.subf %186, %189 : vector<2x8x8xf32>
    %191 = math.exp %190 : vector<2x8x8xf32>
    %cst_127 = arith.constant dense<0.000000e+00> : vector<2x8xf32>
    %192 = vector.multi_reduction <add>, %191, %cst_127 [2] : vector<2x8x8xf32> to vector<2x8xf32>
    %193 = vector.shape_cast %192 : vector<2x8xf32> to vector<2x8x1xf32>
    %194 = tpu.reciprocal %193 {approx = true} : vector<2x8x1xf32> -> vector<2x8x1xf32>
    %195 = vector.broadcast %194 : vector<2x8x1xf32> to vector<2x8x8xf32>
    %196 = arith.mulf %191, %195 : vector<2x8x8xf32>
    %197 = arith.truncf %196 : vector<2x8x8xf32> to vector<2x8x8xbf16>
    "tpu.trace_start"() <{level = 10 : i32, message = "bqk,bkd->bqd"}> : () -> ()
    %cst_128 = arith.constant dense<0.000000e+00> : vector<2x8x64xf32>
    %198 = tpu.matmul %197, %110, %cst_128 {dimension_numbers = #tpu.dot_dimension_numbers<[2], [1], [1], [2], [0, 0, 0, 1, 1, 2], [0], [0]>} : vector<2x8x8xbf16>, vector<2x8x64xbf16>, vector<2x8x64xf32> -> vector<2x8x64xf32>
    "tpu.trace_stop"() : () -> ()
    %199 = arith.truncf %198 : vector<2x8x64xf32> to vector<2x8x64xbf16>
    %c2_129 = arith.constant 2 : index
    %c0_130 = arith.constant 0 : index
    %c0_131 = arith.constant 0 : index
    %200 = vector.load %arg8[%c2_129, %c0_130, %c0_131] : memref<16x64x64xbf16, #tpu.memory_space<vmem>>, vector<1x64x64xbf16>
    %201 = vector.shape_cast %200 : vector<1x64x64xbf16> to vector<64x64xbf16>
    "tpu.trace_start"() <{level = 10 : i32, message = "bqd,dn->bqn"}> : () -> ()
    %cst_132 = arith.constant dense<0.000000e+00> : vector<2x8x64xf32>
    %202 = tpu.matmul %199, %201, %cst_132 {dimension_numbers = #tpu.dot_dimension_numbers<[2], [0], [0, 1], [1], [0, 0, 0, 1, 1, 1], [], []>} : vector<2x8x64xbf16>, vector<64x64xbf16>, vector<2x8x64xf32> -> vector<2x8x64xf32>
    "tpu.trace_stop"() : () -> ()
    %203 = arith.addf %172, %202 : vector<2x8x64xf32>
    %c3 = arith.constant 3 : index
    %c0_133 = arith.constant 0 : index
    %c0_134 = arith.constant 0 : index
    %204 = vector.load %arg6[%c3, %c0_133, %c0_134] : memref<16x64x16xbf16, #tpu.memory_space<vmem>>, vector<1x64x16xbf16>
    %205 = vector.shape_cast %204 : vector<1x64x16xbf16> to vector<64x16xbf16>
    "tpu.trace_start"() <{level = 10 : i32, message = "bsd,de->bse"}> : () -> ()
    %cst_135 = arith.constant dense<0.000000e+00> : vector<2x8x16xf32>
    %206 = tpu.matmul %111, %205, %cst_135 {dimension_numbers = #tpu.dot_dimension_numbers<[2], [0], [0, 1], [1], [0, 0, 0, 1, 1, 1], [], []>} : vector<2x8x64xbf16>, vector<64x16xbf16>, vector<2x8x16xf32> -> vector<2x8x16xf32>
    "tpu.trace_stop"() : () -> ()
    %c3_136 = arith.constant 3 : index
    %c0_137 = arith.constant 0 : index
    %c0_138 = arith.constant 0 : index
    %207 = vector.load %arg11[%c3_136, %c0_137, %c0_138] : memref<16x1x16xf32, #tpu.memory_space<vmem>>, vector<1x1x16xf32>
    %208 = vector.shape_cast %207 : vector<1x1x16xf32> to vector<1x16xf32>
    %209 = vector.shape_cast %208 : vector<1x16xf32> to vector<1x1x16xf32>
    %210 = vector.broadcast %209 : vector<1x1x16xf32> to vector<2x8x16xf32>
    %211 = arith.addf %206, %210 : vector<2x8x16xf32>
    %212 = arith.truncf %211 : vector<2x8x16xf32> to vector<2x8x16xbf16>
    %c3_139 = arith.constant 3 : index
    %c0_140 = arith.constant 0 : index
    %c0_141 = arith.constant 0 : index
    %213 = vector.load %arg7[%c3_139, %c0_140, %c0_141] : memref<16x16x64xbf16, #tpu.memory_space<vmem>>, vector<1x16x64xbf16>
    %214 = vector.shape_cast %213 : vector<1x16x64xbf16> to vector<16x64xbf16>
    "tpu.trace_start"() <{level = 10 : i32, message = "bse,ed->bsd"}> : () -> ()
    %cst_142 = arith.constant dense<0.000000e+00> : vector<2x8x64xf32>
    %215 = tpu.matmul %212, %214, %cst_142 {dimension_numbers = #tpu.dot_dimension_numbers<[2], [0], [0, 1], [1], [0, 0, 0, 1, 1, 1], [], []>} : vector<2x8x16xbf16>, vector<16x64xbf16>, vector<2x8x64xf32> -> vector<2x8x64xf32>
    "tpu.trace_stop"() : () -> ()
    %216 = arith.truncf %215 : vector<2x8x64xf32> to vector<2x8x64xbf16>
    "tpu.trace_start"() <{level = 10 : i32, message = "bqd,bkd->bqk"}> : () -> ()
    %cst_143 = arith.constant dense<0.000000e+00> : vector<2x8x8xf32>
    %217 = tpu.matmul %216, %110, %cst_143 {dimension_numbers = #tpu.dot_dimension_numbers<[2], [2], [1], [1], [0, 0, 0, 1, 1, 1], [0], [0]>} : vector<2x8x64xbf16>, vector<2x8x64xbf16>, vector<2x8x8xf32> -> vector<2x8x8xf32>
    "tpu.trace_stop"() : () -> ()
    %cst_144 = arith.constant dense<0xFF800000> : vector<2x8xf32>
    %218 = vector.multi_reduction <maximumf>, %217, %cst_144 [2] : vector<2x8x8xf32> to vector<2x8xf32>
    %219 = vector.shape_cast %218 : vector<2x8xf32> to vector<2x8x1xf32>
    %220 = vector.broadcast %219 : vector<2x8x1xf32> to vector<2x8x8xf32>
    %221 = arith.subf %217, %220 : vector<2x8x8xf32>
    %222 = math.exp %221 : vector<2x8x8xf32>
    %cst_145 = arith.constant dense<0.000000e+00> : vector<2x8xf32>
    %223 = vector.multi_reduction <add>, %222, %cst_145 [2] : vector<2x8x8xf32> to vector<2x8xf32>
    %224 = vector.shape_cast %223 : vector<2x8xf32> to vector<2x8x1xf32>
    %225 = tpu.reciprocal %224 {approx = true} : vector<2x8x1xf32> -> vector<2x8x1xf32>
    %226 = vector.broadcast %225 : vector<2x8x1xf32> to vector<2x8x8xf32>
    %227 = arith.mulf %222, %226 : vector<2x8x8xf32>
    %228 = arith.truncf %227 : vector<2x8x8xf32> to vector<2x8x8xbf16>
    "tpu.trace_start"() <{level = 10 : i32, message = "bqk,bkd->bqd"}> : () -> ()
    %cst_146 = arith.constant dense<0.000000e+00> : vector<2x8x64xf32>
    %229 = tpu.matmul %228, %110, %cst_146 {dimension_numbers = #tpu.dot_dimension_numbers<[2], [1], [1], [2], [0, 0, 0, 1, 1, 2], [0], [0]>} : vector<2x8x8xbf16>, vector<2x8x64xbf16>, vector<2x8x64xf32> -> vector<2x8x64xf32>
    "tpu.trace_stop"() : () -> ()
    %230 = arith.truncf %229 : vector<2x8x64xf32> to vector<2x8x64xbf16>
    %c3_147 = arith.constant 3 : index
    %c0_148 = arith.constant 0 : index
    %c0_149 = arith.constant 0 : index
    %231 = vector.load %arg8[%c3_147, %c0_148, %c0_149] : memref<16x64x64xbf16, #tpu.memory_space<vmem>>, vector<1x64x64xbf16>
    %232 = vector.shape_cast %231 : vector<1x64x64xbf16> to vector<64x64xbf16>
    "tpu.trace_start"() <{level = 10 : i32, message = "bqd,dn->bqn"}> : () -> ()
    %cst_150 = arith.constant dense<0.000000e+00> : vector<2x8x64xf32>
    %233 = tpu.matmul %230, %232, %cst_150 {dimension_numbers = #tpu.dot_dimension_numbers<[2], [0], [0, 1], [1], [0, 0, 0, 1, 1, 1], [], []>} : vector<2x8x64xbf16>, vector<64x64xbf16>, vector<2x8x64xf32> -> vector<2x8x64xf32>
    "tpu.trace_stop"() : () -> ()
    %234 = arith.addf %203, %233 : vector<2x8x64xf32>
    %c0_151 = arith.constant 0 : index
    %c0_152 = arith.constant 0 : index
    %c0_153 = arith.constant 0 : index
    %235 = vector.load %arg12[%c0_151, %c0_152, %c0_153] : memref<2x12x128xf32, #tpu.memory_space<vmem>>, vector<1x1x64xf32>
    %236 = vector.shape_cast %235 : vector<1x1x64xf32> to vector<1x64xf32>
    %237 = vector.shape_cast %236 : vector<1x64xf32> to vector<1x1x64xf32>
    %238 = vector.broadcast %237 : vector<1x1x64xf32> to vector<2x8x64xf32>
    %239 = arith.addf %234, %238 : vector<2x8x64xf32>
    %240 = arith.addf %109, %239 : vector<2x8x64xf32>
    %c0_154 = arith.constant 0 : index
    %c4 = arith.constant 4 : index
    %c0_155 = arith.constant 0 : index
    %241 = vector.load %arg12[%c0_154, %c4, %c0_155] : memref<2x12x128xf32, #tpu.memory_space<vmem>>, vector<1x1x64xf32>
    %242 = vector.shape_cast %241 : vector<1x1x64xf32> to vector<1x64xf32>
    %c0_156 = arith.constant 0 : index
    %c8 = arith.constant 8 : index
    %c0_157 = arith.constant 0 : index
    %243 = vector.load %arg12[%c0_156, %c8, %c0_157] : memref<2x12x128xf32, #tpu.memory_space<vmem>>, vector<1x1x64xf32>
    %244 = vector.shape_cast %243 : vector<1x1x64xf32> to vector<1x64xf32>
    %cst_158 = arith.constant dense<0.000000e+00> : vector<2x8xf32>
    %245 = vector.multi_reduction <add>, %240, %cst_158 [2] : vector<2x8x64xf32> to vector<2x8xf32>
    %246 = vector.shape_cast %245 : vector<2x8xf32> to vector<2x8x1xf32>
    %cst_159 = arith.constant 6.400000e+01 : f32
    %247 = vector.broadcast %cst_159 : f32 to vector<2x8x1xf32>
    %248 = arith.divf %246, %247 : vector<2x8x1xf32>
    %249 = vector.broadcast %248 : vector<2x8x1xf32> to vector<2x8x64xf32>
    %250 = arith.subf %240, %249 : vector<2x8x64xf32>
    %251 = arith.mulf %250, %250 : vector<2x8x64xf32>
    %cst_160 = arith.constant dense<0.000000e+00> : vector<2x8xf32>
    %252 = vector.multi_reduction <add>, %251, %cst_160 [2] : vector<2x8x64xf32> to vector<2x8xf32>
    %253 = vector.shape_cast %252 : vector<2x8xf32> to vector<2x8x1xf32>
    %cst_161 = arith.constant 6.400000e+01 : f32
    %254 = vector.broadcast %cst_161 : f32 to vector<2x8x1xf32>
    %255 = arith.divf %253, %254 : vector<2x8x1xf32>
    %256 = vector.broadcast %248 : vector<2x8x1xf32> to vector<2x8x64xf32>
    %257 = arith.subf %240, %256 : vector<2x8x64xf32>
    %cst_162 = arith.constant 9.99999974E-6 : f32
    %258 = vector.broadcast %cst_162 : f32 to vector<2x8x1xf32>
    %259 = arith.addf %255, %258 : vector<2x8x1xf32>
    %260 = math.rsqrt %259 : vector<2x8x1xf32>
    %261 = vector.broadcast %260 : vector<2x8x1xf32> to vector<2x8x64xf32>
    %262 = arith.mulf %257, %261 : vector<2x8x64xf32>
    %263 = vector.shape_cast %242 : vector<1x64xf32> to vector<1x1x64xf32>
    %264 = vector.broadcast %263 : vector<1x1x64xf32> to vector<2x8x64xf32>
    %265 = arith.mulf %262, %264 : vector<2x8x64xf32>
    %266 = vector.shape_cast %244 : vector<1x64xf32> to vector<1x1x64xf32>
    %267 = vector.broadcast %266 : vector<1x1x64xf32> to vector<2x8x64xf32>
    %268 = arith.addf %265, %267 : vector<2x8x64xf32>
    %269 = arith.truncf %268 : vector<2x8x64xf32> to vector<2x8x64xbf16>
    %c4_163 = arith.constant 4 : index
    %c0_164 = arith.constant 0 : index
    %c0_165 = arith.constant 0 : index
    %270 = vector.load %arg6[%c4_163, %c0_164, %c0_165] : memref<16x64x16xbf16, #tpu.memory_space<vmem>>, vector<1x64x16xbf16>
    %271 = vector.shape_cast %270 : vector<1x64x16xbf16> to vector<64x16xbf16>
    "tpu.trace_start"() <{level = 10 : i32, message = "bsd,de->bse"}> : () -> ()
    %cst_166 = arith.constant dense<0.000000e+00> : vector<2x8x16xf32>
    %272 = tpu.matmul %269, %271, %cst_166 {dimension_numbers = #tpu.dot_dimension_numbers<[2], [0], [0, 1], [1], [0, 0, 0, 1, 1, 1], [], []>} : vector<2x8x64xbf16>, vector<64x16xbf16>, vector<2x8x16xf32> -> vector<2x8x16xf32>
    "tpu.trace_stop"() : () -> ()
    %c4_167 = arith.constant 4 : index
    %c0_168 = arith.constant 0 : index
    %c0_169 = arith.constant 0 : index
    %273 = vector.load %arg11[%c4_167, %c0_168, %c0_169] : memref<16x1x16xf32, #tpu.memory_space<vmem>>, vector<1x1x16xf32>
    %274 = vector.shape_cast %273 : vector<1x1x16xf32> to vector<1x16xf32>
    %275 = vector.shape_cast %274 : vector<1x16xf32> to vector<1x1x16xf32>
    %276 = vector.broadcast %275 : vector<1x1x16xf32> to vector<2x8x16xf32>
    %277 = arith.addf %272, %276 : vector<2x8x16xf32>
    %278 = arith.truncf %277 : vector<2x8x16xf32> to vector<2x8x16xbf16>
    %c4_170 = arith.constant 4 : index
    %c0_171 = arith.constant 0 : index
    %c0_172 = arith.constant 0 : index
    %279 = vector.load %arg7[%c4_170, %c0_171, %c0_172] : memref<16x16x64xbf16, #tpu.memory_space<vmem>>, vector<1x16x64xbf16>
    %280 = vector.shape_cast %279 : vector<1x16x64xbf16> to vector<16x64xbf16>
    "tpu.trace_start"() <{level = 10 : i32, message = "bse,ed->bsd"}> : () -> ()
    %cst_173 = arith.constant dense<0.000000e+00> : vector<2x8x64xf32>
    %281 = tpu.matmul %278, %280, %cst_173 {dimension_numbers = #tpu.dot_dimension_numbers<[2], [0], [0, 1], [1], [0, 0, 0, 1, 1, 1], [], []>} : vector<2x8x16xbf16>, vector<16x64xbf16>, vector<2x8x64xf32> -> vector<2x8x64xf32>
    "tpu.trace_stop"() : () -> ()
    %282 = arith.truncf %281 : vector<2x8x64xf32> to vector<2x8x64xbf16>
    "tpu.trace_start"() <{level = 10 : i32, message = "bqd,bkd->bqk"}> : () -> ()
    %cst_174 = arith.constant dense<0.000000e+00> : vector<2x8x128xf32>
    %283 = tpu.matmul %282, %103, %cst_174 {dimension_numbers = #tpu.dot_dimension_numbers<[2], [2], [1], [1], [0, 0, 0, 1, 1, 1], [0], [0]>} : vector<2x8x64xbf16>, vector<2x128x64xbf16>, vector<2x8x128xf32> -> vector<2x8x128xf32>
    "tpu.trace_stop"() : () -> ()
    %cst_175 = arith.constant dense<0xFF800000> : vector<2x8xf32>
    %284 = vector.multi_reduction <maximumf>, %283, %cst_175 [2] : vector<2x8x128xf32> to vector<2x8xf32>
    %285 = vector.shape_cast %284 : vector<2x8xf32> to vector<2x8x1xf32>
    %286 = vector.broadcast %285 : vector<2x8x1xf32> to vector<2x8x128xf32>
    %287 = arith.subf %283, %286 : vector<2x8x128xf32>
    %288 = math.exp %287 : vector<2x8x128xf32>
    %289 = vector.shape_cast %108 : vector<1x128xf32> to vector<1x1x128xf32>
    %290 = vector.broadcast %289 : vector<1x1x128xf32> to vector<2x8x128xf32>
    %291 = arith.mulf %288, %290 : vector<2x8x128xf32>
    %cst_176 = arith.constant dense<0.000000e+00> : vector<2x8xf32>
    %292 = vector.multi_reduction <add>, %291, %cst_176 [2] : vector<2x8x128xf32> to vector<2x8xf32>
    %293 = vector.shape_cast %292 : vector<2x8xf32> to vector<2x8x1xf32>
    %294 = tpu.reciprocal %293 {approx = true} : vector<2x8x1xf32> -> vector<2x8x1xf32>
    %295 = vector.broadcast %294 : vector<2x8x1xf32> to vector<2x8x128xf32>
    %296 = arith.mulf %291, %295 : vector<2x8x128xf32>
    %297 = arith.truncf %296 : vector<2x8x128xf32> to vector<2x8x128xbf16>
    "tpu.trace_start"() <{level = 10 : i32, message = "bqk,bkd->bqd"}> : () -> ()
    %cst_177 = arith.constant dense<0.000000e+00> : vector<2x8x64xf32>
    %298 = tpu.matmul %297, %102, %cst_177 {dimension_numbers = #tpu.dot_dimension_numbers<[2], [1], [1], [2], [0, 0, 0, 1, 1, 2], [0], [0]>} : vector<2x8x128xbf16>, vector<2x128x64xbf16>, vector<2x8x64xf32> -> vector<2x8x64xf32>
    "tpu.trace_stop"() : () -> ()
    %299 = arith.truncf %298 : vector<2x8x64xf32> to vector<2x8x64xbf16>
    %c4_178 = arith.constant 4 : index
    %c0_179 = arith.constant 0 : index
    %c0_180 = arith.constant 0 : index
    %300 = vector.load %arg8[%c4_178, %c0_179, %c0_180] : memref<16x64x64xbf16, #tpu.memory_space<vmem>>, vector<1x64x64xbf16>
    %301 = vector.shape_cast %300 : vector<1x64x64xbf16> to vector<64x64xbf16>
    "tpu.trace_start"() <{level = 10 : i32, message = "bqd,dn->bqn"}> : () -> ()
    %cst_181 = arith.constant dense<0.000000e+00> : vector<2x8x64xf32>
    %302 = tpu.matmul %299, %301, %cst_181 {dimension_numbers = #tpu.dot_dimension_numbers<[2], [0], [0, 1], [1], [0, 0, 0, 1, 1, 1], [], []>} : vector<2x8x64xbf16>, vector<64x64xbf16>, vector<2x8x64xf32> -> vector<2x8x64xf32>
    "tpu.trace_stop"() : () -> ()
    %c5 = arith.constant 5 : index
    %c0_182 = arith.constant 0 : index
    %c0_183 = arith.constant 0 : index
    %303 = vector.load %arg6[%c5, %c0_182, %c0_183] : memref<16x64x16xbf16, #tpu.memory_space<vmem>>, vector<1x64x16xbf16>
    %304 = vector.shape_cast %303 : vector<1x64x16xbf16> to vector<64x16xbf16>
    "tpu.trace_start"() <{level = 10 : i32, message = "bsd,de->bse"}> : () -> ()
    %cst_184 = arith.constant dense<0.000000e+00> : vector<2x8x16xf32>
    %305 = tpu.matmul %269, %304, %cst_184 {dimension_numbers = #tpu.dot_dimension_numbers<[2], [0], [0, 1], [1], [0, 0, 0, 1, 1, 1], [], []>} : vector<2x8x64xbf16>, vector<64x16xbf16>, vector<2x8x16xf32> -> vector<2x8x16xf32>
    "tpu.trace_stop"() : () -> ()
    %c5_185 = arith.constant 5 : index
    %c0_186 = arith.constant 0 : index
    %c0_187 = arith.constant 0 : index
    %306 = vector.load %arg11[%c5_185, %c0_186, %c0_187] : memref<16x1x16xf32, #tpu.memory_space<vmem>>, vector<1x1x16xf32>
    %307 = vector.shape_cast %306 : vector<1x1x16xf32> to vector<1x16xf32>
    %308 = vector.shape_cast %307 : vector<1x16xf32> to vector<1x1x16xf32>
    %309 = vector.broadcast %308 : vector<1x1x16xf32> to vector<2x8x16xf32>
    %310 = arith.addf %305, %309 : vector<2x8x16xf32>
    %311 = arith.truncf %310 : vector<2x8x16xf32> to vector<2x8x16xbf16>
    %c5_188 = arith.constant 5 : index
    %c0_189 = arith.constant 0 : index
    %c0_190 = arith.constant 0 : index
    %312 = vector.load %arg7[%c5_188, %c0_189, %c0_190] : memref<16x16x64xbf16, #tpu.memory_space<vmem>>, vector<1x16x64xbf16>
    %313 = vector.shape_cast %312 : vector<1x16x64xbf16> to vector<16x64xbf16>
    "tpu.trace_start"() <{level = 10 : i32, message = "bse,ed->bsd"}> : () -> ()
    %cst_191 = arith.constant dense<0.000000e+00> : vector<2x8x64xf32>
    %314 = tpu.matmul %311, %313, %cst_191 {dimension_numbers = #tpu.dot_dimension_numbers<[2], [0], [0, 1], [1], [0, 0, 0, 1, 1, 1], [], []>} : vector<2x8x16xbf16>, vector<16x64xbf16>, vector<2x8x64xf32> -> vector<2x8x64xf32>
    "tpu.trace_stop"() : () -> ()
    %315 = arith.truncf %314 : vector<2x8x64xf32> to vector<2x8x64xbf16>
    "tpu.trace_start"() <{level = 10 : i32, message = "bqd,bkd->bqk"}> : () -> ()
    %cst_192 = arith.constant dense<0.000000e+00> : vector<2x8x128xf32>
    %316 = tpu.matmul %315, %103, %cst_192 {dimension_numbers = #tpu.dot_dimension_numbers<[2], [2], [1], [1], [0, 0, 0, 1, 1, 1], [0], [0]>} : vector<2x8x64xbf16>, vector<2x128x64xbf16>, vector<2x8x128xf32> -> vector<2x8x128xf32>
    "tpu.trace_stop"() : () -> ()
    %cst_193 = arith.constant dense<0xFF800000> : vector<2x8xf32>
    %317 = vector.multi_reduction <maximumf>, %316, %cst_193 [2] : vector<2x8x128xf32> to vector<2x8xf32>
    %318 = vector.shape_cast %317 : vector<2x8xf32> to vector<2x8x1xf32>
    %319 = vector.broadcast %318 : vector<2x8x1xf32> to vector<2x8x128xf32>
    %320 = arith.subf %316, %319 : vector<2x8x128xf32>
    %321 = math.exp %320 : vector<2x8x128xf32>
    %322 = vector.shape_cast %108 : vector<1x128xf32> to vector<1x1x128xf32>
    %323 = vector.broadcast %322 : vector<1x1x128xf32> to vector<2x8x128xf32>
    %324 = arith.mulf %321, %323 : vector<2x8x128xf32>
    %cst_194 = arith.constant dense<0.000000e+00> : vector<2x8xf32>
    %325 = vector.multi_reduction <add>, %324, %cst_194 [2] : vector<2x8x128xf32> to vector<2x8xf32>
    %326 = vector.shape_cast %325 : vector<2x8xf32> to vector<2x8x1xf32>
    %327 = tpu.reciprocal %326 {approx = true} : vector<2x8x1xf32> -> vector<2x8x1xf32>
    %328 = vector.broadcast %327 : vector<2x8x1xf32> to vector<2x8x128xf32>
    %329 = arith.mulf %324, %328 : vector<2x8x128xf32>
    %330 = arith.truncf %329 : vector<2x8x128xf32> to vector<2x8x128xbf16>
    "tpu.trace_start"() <{level = 10 : i32, message = "bqk,bkd->bqd"}> : () -> ()
    %cst_195 = arith.constant dense<0.000000e+00> : vector<2x8x64xf32>
    %331 = tpu.matmul %330, %102, %cst_195 {dimension_numbers = #tpu.dot_dimension_numbers<[2], [1], [1], [2], [0, 0, 0, 1, 1, 2], [0], [0]>} : vector<2x8x128xbf16>, vector<2x128x64xbf16>, vector<2x8x64xf32> -> vector<2x8x64xf32>
    "tpu.trace_stop"() : () -> ()
    %332 = arith.truncf %331 : vector<2x8x64xf32> to vector<2x8x64xbf16>
    %c5_196 = arith.constant 5 : index
    %c0_197 = arith.constant 0 : index
    %c0_198 = arith.constant 0 : index
    %333 = vector.load %arg8[%c5_196, %c0_197, %c0_198] : memref<16x64x64xbf16, #tpu.memory_space<vmem>>, vector<1x64x64xbf16>
    %334 = vector.shape_cast %333 : vector<1x64x64xbf16> to vector<64x64xbf16>
    "tpu.trace_start"() <{level = 10 : i32, message = "bqd,dn->bqn"}> : () -> ()
    %cst_199 = arith.constant dense<0.000000e+00> : vector<2x8x64xf32>
    %335 = tpu.matmul %332, %334, %cst_199 {dimension_numbers = #tpu.dot_dimension_numbers<[2], [0], [0, 1], [1], [0, 0, 0, 1, 1, 1], [], []>} : vector<2x8x64xbf16>, vector<64x64xbf16>, vector<2x8x64xf32> -> vector<2x8x64xf32>
    "tpu.trace_stop"() : () -> ()
    %336 = arith.addf %302, %335 : vector<2x8x64xf32>
    %c6 = arith.constant 6 : index
    %c0_200 = arith.constant 0 : index
    %c0_201 = arith.constant 0 : index
    %337 = vector.load %arg6[%c6, %c0_200, %c0_201] : memref<16x64x16xbf16, #tpu.memory_space<vmem>>, vector<1x64x16xbf16>
    %338 = vector.shape_cast %337 : vector<1x64x16xbf16> to vector<64x16xbf16>
    "tpu.trace_start"() <{level = 10 : i32, message = "bsd,de->bse"}> : () -> ()
    %cst_202 = arith.constant dense<0.000000e+00> : vector<2x8x16xf32>
    %339 = tpu.matmul %269, %338, %cst_202 {dimension_numbers = #tpu.dot_dimension_numbers<[2], [0], [0, 1], [1], [0, 0, 0, 1, 1, 1], [], []>} : vector<2x8x64xbf16>, vector<64x16xbf16>, vector<2x8x16xf32> -> vector<2x8x16xf32>
    "tpu.trace_stop"() : () -> ()
    %c6_203 = arith.constant 6 : index
    %c0_204 = arith.constant 0 : index
    %c0_205 = arith.constant 0 : index
    %340 = vector.load %arg11[%c6_203, %c0_204, %c0_205] : memref<16x1x16xf32, #tpu.memory_space<vmem>>, vector<1x1x16xf32>
    %341 = vector.shape_cast %340 : vector<1x1x16xf32> to vector<1x16xf32>
    %342 = vector.shape_cast %341 : vector<1x16xf32> to vector<1x1x16xf32>
    %343 = vector.broadcast %342 : vector<1x1x16xf32> to vector<2x8x16xf32>
    %344 = arith.addf %339, %343 : vector<2x8x16xf32>
    %345 = arith.truncf %344 : vector<2x8x16xf32> to vector<2x8x16xbf16>
    %c6_206 = arith.constant 6 : index
    %c0_207 = arith.constant 0 : index
    %c0_208 = arith.constant 0 : index
    %346 = vector.load %arg7[%c6_206, %c0_207, %c0_208] : memref<16x16x64xbf16, #tpu.memory_space<vmem>>, vector<1x16x64xbf16>
    %347 = vector.shape_cast %346 : vector<1x16x64xbf16> to vector<16x64xbf16>
    "tpu.trace_start"() <{level = 10 : i32, message = "bse,ed->bsd"}> : () -> ()
    %cst_209 = arith.constant dense<0.000000e+00> : vector<2x8x64xf32>
    %348 = tpu.matmul %345, %347, %cst_209 {dimension_numbers = #tpu.dot_dimension_numbers<[2], [0], [0, 1], [1], [0, 0, 0, 1, 1, 1], [], []>} : vector<2x8x16xbf16>, vector<16x64xbf16>, vector<2x8x64xf32> -> vector<2x8x64xf32>
    "tpu.trace_stop"() : () -> ()
    %349 = arith.truncf %348 : vector<2x8x64xf32> to vector<2x8x64xbf16>
    "tpu.trace_start"() <{level = 10 : i32, message = "bqd,bkd->bqk"}> : () -> ()
    %cst_210 = arith.constant dense<0.000000e+00> : vector<2x8x128xf32>
    %350 = tpu.matmul %349, %103, %cst_210 {dimension_numbers = #tpu.dot_dimension_numbers<[2], [2], [1], [1], [0, 0, 0, 1, 1, 1], [0], [0]>} : vector<2x8x64xbf16>, vector<2x128x64xbf16>, vector<2x8x128xf32> -> vector<2x8x128xf32>
    "tpu.trace_stop"() : () -> ()
    %cst_211 = arith.constant dense<0xFF800000> : vector<2x8xf32>
    %351 = vector.multi_reduction <maximumf>, %350, %cst_211 [2] : vector<2x8x128xf32> to vector<2x8xf32>
    %352 = vector.shape_cast %351 : vector<2x8xf32> to vector<2x8x1xf32>
    %353 = vector.broadcast %352 : vector<2x8x1xf32> to vector<2x8x128xf32>
    %354 = arith.subf %350, %353 : vector<2x8x128xf32>
    %355 = math.exp %354 : vector<2x8x128xf32>
    %356 = vector.shape_cast %108 : vector<1x128xf32> to vector<1x1x128xf32>
    %357 = vector.broadcast %356 : vector<1x1x128xf32> to vector<2x8x128xf32>
    %358 = arith.mulf %355, %357 : vector<2x8x128xf32>
    %cst_212 = arith.constant dense<0.000000e+00> : vector<2x8xf32>
    %359 = vector.multi_reduction <add>, %358, %cst_212 [2] : vector<2x8x128xf32> to vector<2x8xf32>
    %360 = vector.shape_cast %359 : vector<2x8xf32> to vector<2x8x1xf32>
    %361 = tpu.reciprocal %360 {approx = true} : vector<2x8x1xf32> -> vector<2x8x1xf32>
    %362 = vector.broadcast %361 : vector<2x8x1xf32> to vector<2x8x128xf32>
    %363 = arith.mulf %358, %362 : vector<2x8x128xf32>
    %364 = arith.truncf %363 : vector<2x8x128xf32> to vector<2x8x128xbf16>
    "tpu.trace_start"() <{level = 10 : i32, message = "bqk,bkd->bqd"}> : () -> ()
    %cst_213 = arith.constant dense<0.000000e+00> : vector<2x8x64xf32>
    %365 = tpu.matmul %364, %102, %cst_213 {dimension_numbers = #tpu.dot_dimension_numbers<[2], [1], [1], [2], [0, 0, 0, 1, 1, 2], [0], [0]>} : vector<2x8x128xbf16>, vector<2x128x64xbf16>, vector<2x8x64xf32> -> vector<2x8x64xf32>
    "tpu.trace_stop"() : () -> ()
    %366 = arith.truncf %365 : vector<2x8x64xf32> to vector<2x8x64xbf16>
    %c6_214 = arith.constant 6 : index
    %c0_215 = arith.constant 0 : index
    %c0_216 = arith.constant 0 : index
    %367 = vector.load %arg8[%c6_214, %c0_215, %c0_216] : memref<16x64x64xbf16, #tpu.memory_space<vmem>>, vector<1x64x64xbf16>
    %368 = vector.shape_cast %367 : vector<1x64x64xbf16> to vector<64x64xbf16>
    "tpu.trace_start"() <{level = 10 : i32, message = "bqd,dn->bqn"}> : () -> ()
    %cst_217 = arith.constant dense<0.000000e+00> : vector<2x8x64xf32>
    %369 = tpu.matmul %366, %368, %cst_217 {dimension_numbers = #tpu.dot_dimension_numbers<[2], [0], [0, 1], [1], [0, 0, 0, 1, 1, 1], [], []>} : vector<2x8x64xbf16>, vector<64x64xbf16>, vector<2x8x64xf32> -> vector<2x8x64xf32>
    "tpu.trace_stop"() : () -> ()
    %370 = arith.addf %336, %369 : vector<2x8x64xf32>
    %c7 = arith.constant 7 : index
    %c0_218 = arith.constant 0 : index
    %c0_219 = arith.constant 0 : index
    %371 = vector.load %arg6[%c7, %c0_218, %c0_219] : memref<16x64x16xbf16, #tpu.memory_space<vmem>>, vector<1x64x16xbf16>
    %372 = vector.shape_cast %371 : vector<1x64x16xbf16> to vector<64x16xbf16>
    "tpu.trace_start"() <{level = 10 : i32, message = "bsd,de->bse"}> : () -> ()
    %cst_220 = arith.constant dense<0.000000e+00> : vector<2x8x16xf32>
    %373 = tpu.matmul %269, %372, %cst_220 {dimension_numbers = #tpu.dot_dimension_numbers<[2], [0], [0, 1], [1], [0, 0, 0, 1, 1, 1], [], []>} : vector<2x8x64xbf16>, vector<64x16xbf16>, vector<2x8x16xf32> -> vector<2x8x16xf32>
    "tpu.trace_stop"() : () -> ()
    %c7_221 = arith.constant 7 : index
    %c0_222 = arith.constant 0 : index
    %c0_223 = arith.constant 0 : index
    %374 = vector.load %arg11[%c7_221, %c0_222, %c0_223] : memref<16x1x16xf32, #tpu.memory_space<vmem>>, vector<1x1x16xf32>
    %375 = vector.shape_cast %374 : vector<1x1x16xf32> to vector<1x16xf32>
    %376 = vector.shape_cast %375 : vector<1x16xf32> to vector<1x1x16xf32>
    %377 = vector.broadcast %376 : vector<1x1x16xf32> to vector<2x8x16xf32>
    %378 = arith.addf %373, %377 : vector<2x8x16xf32>
    %379 = arith.truncf %378 : vector<2x8x16xf32> to vector<2x8x16xbf16>
    %c7_224 = arith.constant 7 : index
    %c0_225 = arith.constant 0 : index
    %c0_226 = arith.constant 0 : index
    %380 = vector.load %arg7[%c7_224, %c0_225, %c0_226] : memref<16x16x64xbf16, #tpu.memory_space<vmem>>, vector<1x16x64xbf16>
    %381 = vector.shape_cast %380 : vector<1x16x64xbf16> to vector<16x64xbf16>
    "tpu.trace_start"() <{level = 10 : i32, message = "bse,ed->bsd"}> : () -> ()
    %cst_227 = arith.constant dense<0.000000e+00> : vector<2x8x64xf32>
    %382 = tpu.matmul %379, %381, %cst_227 {dimension_numbers = #tpu.dot_dimension_numbers<[2], [0], [0, 1], [1], [0, 0, 0, 1, 1, 1], [], []>} : vector<2x8x16xbf16>, vector<16x64xbf16>, vector<2x8x64xf32> -> vector<2x8x64xf32>
    "tpu.trace_stop"() : () -> ()
    %383 = arith.truncf %382 : vector<2x8x64xf32> to vector<2x8x64xbf16>
    "tpu.trace_start"() <{level = 10 : i32, message = "bqd,bkd->bqk"}> : () -> ()
    %cst_228 = arith.constant dense<0.000000e+00> : vector<2x8x128xf32>
    %384 = tpu.matmul %383, %103, %cst_228 {dimension_numbers = #tpu.dot_dimension_numbers<[2], [2], [1], [1], [0, 0, 0, 1, 1, 1], [0], [0]>} : vector<2x8x64xbf16>, vector<2x128x64xbf16>, vector<2x8x128xf32> -> vector<2x8x128xf32>
    "tpu.trace_stop"() : () -> ()
    %cst_229 = arith.constant dense<0xFF800000> : vector<2x8xf32>
    %385 = vector.multi_reduction <maximumf>, %384, %cst_229 [2] : vector<2x8x128xf32> to vector<2x8xf32>
    %386 = vector.shape_cast %385 : vector<2x8xf32> to vector<2x8x1xf32>
    %387 = vector.broadcast %386 : vector<2x8x1xf32> to vector<2x8x128xf32>
    %388 = arith.subf %384, %387 : vector<2x8x128xf32>
    %389 = math.exp %388 : vector<2x8x128xf32>
    %390 = vector.shape_cast %108 : vector<1x128xf32> to vector<1x1x128xf32>
    %391 = vector.broadcast %390 : vector<1x1x128xf32> to vector<2x8x128xf32>
    %392 = arith.mulf %389, %391 : vector<2x8x128xf32>
    %cst_230 = arith.constant dense<0.000000e+00> : vector<2x8xf32>
    %393 = vector.multi_reduction <add>, %392, %cst_230 [2] : vector<2x8x128xf32> to vector<2x8xf32>
    %394 = vector.shape_cast %393 : vector<2x8xf32> to vector<2x8x1xf32>
    %395 = tpu.reciprocal %394 {approx = true} : vector<2x8x1xf32> -> vector<2x8x1xf32>
    %396 = vector.broadcast %395 : vector<2x8x1xf32> to vector<2x8x128xf32>
    %397 = arith.mulf %392, %396 : vector<2x8x128xf32>
    %398 = arith.truncf %397 : vector<2x8x128xf32> to vector<2x8x128xbf16>
    "tpu.trace_start"() <{level = 10 : i32, message = "bqk,bkd->bqd"}> : () -> ()
    %cst_231 = arith.constant dense<0.000000e+00> : vector<2x8x64xf32>
    %399 = tpu.matmul %398, %102, %cst_231 {dimension_numbers = #tpu.dot_dimension_numbers<[2], [1], [1], [2], [0, 0, 0, 1, 1, 2], [0], [0]>} : vector<2x8x128xbf16>, vector<2x128x64xbf16>, vector<2x8x64xf32> -> vector<2x8x64xf32>
    "tpu.trace_stop"() : () -> ()
    %400 = arith.truncf %399 : vector<2x8x64xf32> to vector<2x8x64xbf16>
    %c7_232 = arith.constant 7 : index
    %c0_233 = arith.constant 0 : index
    %c0_234 = arith.constant 0 : index
    %401 = vector.load %arg8[%c7_232, %c0_233, %c0_234] : memref<16x64x64xbf16, #tpu.memory_space<vmem>>, vector<1x64x64xbf16>
    %402 = vector.shape_cast %401 : vector<1x64x64xbf16> to vector<64x64xbf16>
    "tpu.trace_start"() <{level = 10 : i32, message = "bqd,dn->bqn"}> : () -> ()
    %cst_235 = arith.constant dense<0.000000e+00> : vector<2x8x64xf32>
    %403 = tpu.matmul %400, %402, %cst_235 {dimension_numbers = #tpu.dot_dimension_numbers<[2], [0], [0, 1], [1], [0, 0, 0, 1, 1, 1], [], []>} : vector<2x8x64xbf16>, vector<64x64xbf16>, vector<2x8x64xf32> -> vector<2x8x64xf32>
    "tpu.trace_stop"() : () -> ()
    %404 = arith.addf %370, %403 : vector<2x8x64xf32>
    %c0_236 = arith.constant 0 : index
    %c1_237 = arith.constant 1 : index
    %c0_238 = arith.constant 0 : index
    %405 = vector.load %arg12[%c0_236, %c1_237, %c0_238] : memref<2x12x128xf32, #tpu.memory_space<vmem>>, vector<1x1x64xf32>
    %406 = vector.shape_cast %405 : vector<1x1x64xf32> to vector<1x64xf32>
    %407 = vector.shape_cast %406 : vector<1x64xf32> to vector<1x1x64xf32>
    %408 = vector.broadcast %407 : vector<1x1x64xf32> to vector<2x8x64xf32>
    %409 = arith.addf %404, %408 : vector<2x8x64xf32>
    %410 = arith.addf %268, %409 : vector<2x8x64xf32>
    %c0_239 = arith.constant 0 : index
    %c5_240 = arith.constant 5 : index
    %c0_241 = arith.constant 0 : index
    %411 = vector.load %arg12[%c0_239, %c5_240, %c0_241] : memref<2x12x128xf32, #tpu.memory_space<vmem>>, vector<1x1x64xf32>
    %412 = vector.shape_cast %411 : vector<1x1x64xf32> to vector<1x64xf32>
    %c0_242 = arith.constant 0 : index
    %c9 = arith.constant 9 : index
    %c0_243 = arith.constant 0 : index
    %413 = vector.load %arg12[%c0_242, %c9, %c0_243] : memref<2x12x128xf32, #tpu.memory_space<vmem>>, vector<1x1x64xf32>
    %414 = vector.shape_cast %413 : vector<1x1x64xf32> to vector<1x64xf32>
    %cst_244 = arith.constant dense<0.000000e+00> : vector<2x8xf32>
    %415 = vector.multi_reduction <add>, %410, %cst_244 [2] : vector<2x8x64xf32> to vector<2x8xf32>
    %416 = vector.shape_cast %415 : vector<2x8xf32> to vector<2x8x1xf32>
    %cst_245 = arith.constant 6.400000e+01 : f32
    %417 = vector.broadcast %cst_245 : f32 to vector<2x8x1xf32>
    %418 = arith.divf %416, %417 : vector<2x8x1xf32>
    %419 = vector.broadcast %418 : vector<2x8x1xf32> to vector<2x8x64xf32>
    %420 = arith.subf %410, %419 : vector<2x8x64xf32>
    %421 = arith.mulf %420, %420 : vector<2x8x64xf32>
    %cst_246 = arith.constant dense<0.000000e+00> : vector<2x8xf32>
    %422 = vector.multi_reduction <add>, %421, %cst_246 [2] : vector<2x8x64xf32> to vector<2x8xf32>
    %423 = vector.shape_cast %422 : vector<2x8xf32> to vector<2x8x1xf32>
    %cst_247 = arith.constant 6.400000e+01 : f32
    %424 = vector.broadcast %cst_247 : f32 to vector<2x8x1xf32>
    %425 = arith.divf %423, %424 : vector<2x8x1xf32>
    %426 = vector.broadcast %418 : vector<2x8x1xf32> to vector<2x8x64xf32>
    %427 = arith.subf %410, %426 : vector<2x8x64xf32>
    %cst_248 = arith.constant 9.99999974E-6 : f32
    %428 = vector.broadcast %cst_248 : f32 to vector<2x8x1xf32>
    %429 = arith.addf %425, %428 : vector<2x8x1xf32>
    %430 = math.rsqrt %429 : vector<2x8x1xf32>
    %431 = vector.broadcast %430 : vector<2x8x1xf32> to vector<2x8x64xf32>
    %432 = arith.mulf %427, %431 : vector<2x8x64xf32>
    %433 = vector.shape_cast %412 : vector<1x64xf32> to vector<1x1x64xf32>
    %434 = vector.broadcast %433 : vector<1x1x64xf32> to vector<2x8x64xf32>
    %435 = arith.mulf %432, %434 : vector<2x8x64xf32>
    %436 = vector.shape_cast %414 : vector<1x64xf32> to vector<1x1x64xf32>
    %437 = vector.broadcast %436 : vector<1x1x64xf32> to vector<2x8x64xf32>
    %438 = arith.addf %435, %437 : vector<2x8x64xf32>
    %439 = arith.truncf %438 : vector<2x8x64xf32> to vector<2x8x64xbf16>
    %c0_249 = arith.constant 0 : index
    %c0_250 = arith.constant 0 : index
    %c0_251 = arith.constant 0 : index
    %440 = vector.load %arg9[%c0_249, %c0_250, %c0_251] : memref<2x64x128xbf16, #tpu.memory_space<vmem>>, vector<1x64x128xbf16>
    %441 = vector.shape_cast %440 : vector<1x64x128xbf16> to vector<64x128xbf16>
    "tpu.trace_start"() <{level = 10 : i32, message = "bsd,df->bsf"}> : () -> ()
    %cst_252 = arith.constant dense<0.000000e+00> : vector<2x8x128xf32>
    %442 = tpu.matmul %439, %441, %cst_252 {dimension_numbers = #tpu.dot_dimension_numbers<[2], [0], [0, 1], [1], [0, 0, 0, 1, 1, 1], [], []>} : vector<2x8x64xbf16>, vector<64x128xbf16>, vector<2x8x128xf32> -> vector<2x8x128xf32>
    "tpu.trace_stop"() : () -> ()
    %c0_253 = arith.constant 0 : index
    %c2_254 = arith.constant 2 : index
    %c0_255 = arith.constant 0 : index
    %443 = vector.load %arg12[%c0_253, %c2_254, %c0_255] : memref<2x12x128xf32, #tpu.memory_space<vmem>>, vector<1x1x128xf32>
    %444 = vector.shape_cast %443 : vector<1x1x128xf32> to vector<1x128xf32>
    %445 = vector.shape_cast %444 : vector<1x128xf32> to vector<1x1x128xf32>
    %446 = vector.broadcast %445 : vector<1x1x128xf32> to vector<2x8x128xf32>
    %447 = arith.addf %442, %446 : vector<2x8x128xf32>
    %cst_256 = arith.constant 0.000000e+00 : f32
    %448 = vector.broadcast %cst_256 : f32 to vector<2x8x128xf32>
    %449 = arith.maximumf %447, %448 : vector<2x8x128xf32>
    %450 = arith.truncf %449 : vector<2x8x128xf32> to vector<2x8x128xbf16>
    %c0_257 = arith.constant 0 : index
    %c0_258 = arith.constant 0 : index
    %c0_259 = arith.constant 0 : index
    %451 = vector.load %arg10[%c0_257, %c0_258, %c0_259] : memref<2x128x64xbf16, #tpu.memory_space<vmem>>, vector<1x128x64xbf16>
    %452 = vector.shape_cast %451 : vector<1x128x64xbf16> to vector<128x64xbf16>
    "tpu.trace_start"() <{level = 10 : i32, message = "bsf,fd->bsd"}> : () -> ()
    %cst_260 = arith.constant dense<0.000000e+00> : vector<2x8x64xf32>
    %453 = tpu.matmul %450, %452, %cst_260 {dimension_numbers = #tpu.dot_dimension_numbers<[2], [0], [0, 1], [1], [0, 0, 0, 1, 1, 1], [], []>} : vector<2x8x128xbf16>, vector<128x64xbf16>, vector<2x8x64xf32> -> vector<2x8x64xf32>
    "tpu.trace_stop"() : () -> ()
    %c0_261 = arith.constant 0 : index
    %c3_262 = arith.constant 3 : index
    %c0_263 = arith.constant 0 : index
    %454 = vector.load %arg12[%c0_261, %c3_262, %c0_263] : memref<2x12x128xf32, #tpu.memory_space<vmem>>, vector<1x1x64xf32>
    %455 = vector.shape_cast %454 : vector<1x1x64xf32> to vector<1x64xf32>
    %456 = vector.shape_cast %455 : vector<1x64xf32> to vector<1x1x64xf32>
    %457 = vector.broadcast %456 : vector<1x1x64xf32> to vector<2x8x64xf32>
    %458 = arith.addf %453, %457 : vector<2x8x64xf32>
    %459 = arith.addf %438, %458 : vector<2x8x64xf32>
    %c0_264 = arith.constant 0 : index
    %c6_265 = arith.constant 6 : index
    %c0_266 = arith.constant 0 : index
    %460 = vector.load %arg12[%c0_264, %c6_265, %c0_266] : memref<2x12x128xf32, #tpu.memory_space<vmem>>, vector<1x1x64xf32>
    %461 = vector.shape_cast %460 : vector<1x1x64xf32> to vector<1x64xf32>
    %c0_267 = arith.constant 0 : index
    %c10 = arith.constant 10 : index
    %c0_268 = arith.constant 0 : index
    %462 = vector.load %arg12[%c0_267, %c10, %c0_268] : memref<2x12x128xf32, #tpu.memory_space<vmem>>, vector<1x1x64xf32>
    %463 = vector.shape_cast %462 : vector<1x1x64xf32> to vector<1x64xf32>
    %cst_269 = arith.constant dense<0.000000e+00> : vector<2x8xf32>
    %464 = vector.multi_reduction <add>, %459, %cst_269 [2] : vector<2x8x64xf32> to vector<2x8xf32>
    %465 = vector.shape_cast %464 : vector<2x8xf32> to vector<2x8x1xf32>
    %cst_270 = arith.constant 6.400000e+01 : f32
    %466 = vector.broadcast %cst_270 : f32 to vector<2x8x1xf32>
    %467 = arith.divf %465, %466 : vector<2x8x1xf32>
    %468 = vector.broadcast %467 : vector<2x8x1xf32> to vector<2x8x64xf32>
    %469 = arith.subf %459, %468 : vector<2x8x64xf32>
    %470 = arith.mulf %469, %469 : vector<2x8x64xf32>
    %cst_271 = arith.constant dense<0.000000e+00> : vector<2x8xf32>
    %471 = vector.multi_reduction <add>, %470, %cst_271 [2] : vector<2x8x64xf32> to vector<2x8xf32>
    %472 = vector.shape_cast %471 : vector<2x8xf32> to vector<2x8x1xf32>
    %cst_272 = arith.constant 6.400000e+01 : f32
    %473 = vector.broadcast %cst_272 : f32 to vector<2x8x1xf32>
    %474 = arith.divf %472, %473 : vector<2x8x1xf32>
    %475 = vector.broadcast %467 : vector<2x8x1xf32> to vector<2x8x64xf32>
    %476 = arith.subf %459, %475 : vector<2x8x64xf32>
    %cst_273 = arith.constant 9.99999974E-6 : f32
    %477 = vector.broadcast %cst_273 : f32 to vector<2x8x1xf32>
    %478 = arith.addf %474, %477 : vector<2x8x1xf32>
    %479 = math.rsqrt %478 : vector<2x8x1xf32>
    %480 = vector.broadcast %479 : vector<2x8x1xf32> to vector<2x8x64xf32>
    %481 = arith.mulf %476, %480 : vector<2x8x64xf32>
    %482 = vector.shape_cast %461 : vector<1x64xf32> to vector<1x1x64xf32>
    %483 = vector.broadcast %482 : vector<1x1x64xf32> to vector<2x8x64xf32>
    %484 = arith.mulf %481, %483 : vector<2x8x64xf32>
    %485 = vector.shape_cast %463 : vector<1x64xf32> to vector<1x1x64xf32>
    %486 = vector.broadcast %485 : vector<1x1x64xf32> to vector<2x8x64xf32>
    %487 = arith.addf %484, %486 : vector<2x8x64xf32>
    %c0_274 = arith.constant 0 : index
    %c7_275 = arith.constant 7 : index
    %c0_276 = arith.constant 0 : index
    %488 = vector.load %arg12[%c0_274, %c7_275, %c0_276] : memref<2x12x128xf32, #tpu.memory_space<vmem>>, vector<1x1x64xf32>
    %489 = vector.shape_cast %488 : vector<1x1x64xf32> to vector<1x64xf32>
    %c0_277 = arith.constant 0 : index
    %c11 = arith.constant 11 : index
    %c0_278 = arith.constant 0 : index
    %490 = vector.load %arg12[%c0_277, %c11, %c0_278] : memref<2x12x128xf32, #tpu.memory_space<vmem>>, vector<1x1x64xf32>
    %491 = vector.shape_cast %490 : vector<1x1x64xf32> to vector<1x64xf32>
    %cst_279 = arith.constant dense<0.000000e+00> : vector<2x8xf32>
    %492 = vector.multi_reduction <add>, %487, %cst_279 [2] : vector<2x8x64xf32> to vector<2x8xf32>
    %493 = vector.shape_cast %492 : vector<2x8xf32> to vector<2x8x1xf32>
    %cst_280 = arith.constant 6.400000e+01 : f32
    %494 = vector.broadcast %cst_280 : f32 to vector<2x8x1xf32>
    %495 = arith.divf %493, %494 : vector<2x8x1xf32>
    %496 = vector.broadcast %495 : vector<2x8x1xf32> to vector<2x8x64xf32>
    %497 = arith.subf %487, %496 : vector<2x8x64xf32>
    %498 = arith.mulf %497, %497 : vector<2x8x64xf32>
    %cst_281 = arith.constant dense<0.000000e+00> : vector<2x8xf32>
    %499 = vector.multi_reduction <add>, %498, %cst_281 [2] : vector<2x8x64xf32> to vector<2x8xf32>
    %500 = vector.shape_cast %499 : vector<2x8xf32> to vector<2x8x1xf32>
    %cst_282 = arith.constant 6.400000e+01 : f32
    %501 = vector.broadcast %cst_282 : f32 to vector<2x8x1xf32>
    %502 = arith.divf %500, %501 : vector<2x8x1xf32>
    %503 = vector.broadcast %495 : vector<2x8x1xf32> to vector<2x8x64xf32>
    %504 = arith.subf %487, %503 : vector<2x8x64xf32>
    %cst_283 = arith.constant 9.99999974E-6 : f32
    %505 = vector.broadcast %cst_283 : f32 to vector<2x8x1xf32>
    %506 = arith.addf %502, %505 : vector<2x8x1xf32>
    %507 = math.rsqrt %506 : vector<2x8x1xf32>
    %508 = vector.broadcast %507 : vector<2x8x1xf32> to vector<2x8x64xf32>
    %509 = arith.mulf %504, %508 : vector<2x8x64xf32>
    %510 = vector.shape_cast %489 : vector<1x64xf32> to vector<1x1x64xf32>
    %511 = vector.broadcast %510 : vector<1x1x64xf32> to vector<2x8x64xf32>
    %512 = arith.mulf %509, %511 : vector<2x8x64xf32>
    %513 = vector.shape_cast %491 : vector<1x64xf32> to vector<1x1x64xf32>
    %514 = vector.broadcast %513 : vector<1x1x64xf32> to vector<2x8x64xf32>
    %515 = arith.addf %512, %514 : vector<2x8x64xf32>
    %516 = arith.truncf %515 : vector<2x8x64xf32> to vector<2x8x64xbf16>
    %517 = arith.truncf %515 : vector<2x8x64xf32> to vector<2x8x64xbf16>
    %c8_284 = arith.constant 8 : index
    %c0_285 = arith.constant 0 : index
    %c0_286 = arith.constant 0 : index
    %518 = vector.load %arg6[%c8_284, %c0_285, %c0_286] : memref<16x64x16xbf16, #tpu.memory_space<vmem>>, vector<1x64x16xbf16>
    %519 = vector.shape_cast %518 : vector<1x64x16xbf16> to vector<64x16xbf16>
    "tpu.trace_start"() <{level = 10 : i32, message = "bsd,de->bse"}> : () -> ()
    %cst_287 = arith.constant dense<0.000000e+00> : vector<2x8x16xf32>
    %520 = tpu.matmul %517, %519, %cst_287 {dimension_numbers = #tpu.dot_dimension_numbers<[2], [0], [0, 1], [1], [0, 0, 0, 1, 1, 1], [], []>} : vector<2x8x64xbf16>, vector<64x16xbf16>, vector<2x8x16xf32> -> vector<2x8x16xf32>
    "tpu.trace_stop"() : () -> ()
    %c8_288 = arith.constant 8 : index
    %c0_289 = arith.constant 0 : index
    %c0_290 = arith.constant 0 : index
    %521 = vector.load %arg11[%c8_288, %c0_289, %c0_290] : memref<16x1x16xf32, #tpu.memory_space<vmem>>, vector<1x1x16xf32>
    %522 = vector.shape_cast %521 : vector<1x1x16xf32> to vector<1x16xf32>
    %523 = vector.shape_cast %522 : vector<1x16xf32> to vector<1x1x16xf32>
    %524 = vector.broadcast %523 : vector<1x1x16xf32> to vector<2x8x16xf32>
    %525 = arith.addf %520, %524 : vector<2x8x16xf32>
    %526 = arith.truncf %525 : vector<2x8x16xf32> to vector<2x8x16xbf16>
    %c8_291 = arith.constant 8 : index
    %c0_292 = arith.constant 0 : index
    %c0_293 = arith.constant 0 : index
    %527 = vector.load %arg7[%c8_291, %c0_292, %c0_293] : memref<16x16x64xbf16, #tpu.memory_space<vmem>>, vector<1x16x64xbf16>
    %528 = vector.shape_cast %527 : vector<1x16x64xbf16> to vector<16x64xbf16>
    "tpu.trace_start"() <{level = 10 : i32, message = "bse,ed->bsd"}> : () -> ()
    %cst_294 = arith.constant dense<0.000000e+00> : vector<2x8x64xf32>
    %529 = tpu.matmul %526, %528, %cst_294 {dimension_numbers = #tpu.dot_dimension_numbers<[2], [0], [0, 1], [1], [0, 0, 0, 1, 1, 1], [], []>} : vector<2x8x16xbf16>, vector<16x64xbf16>, vector<2x8x64xf32> -> vector<2x8x64xf32>
    "tpu.trace_stop"() : () -> ()
    %530 = arith.truncf %529 : vector<2x8x64xf32> to vector<2x8x64xbf16>
    "tpu.trace_start"() <{level = 10 : i32, message = "bqd,bkd->bqk"}> : () -> ()
    %cst_295 = arith.constant dense<0.000000e+00> : vector<2x8x8xf32>
    %531 = tpu.matmul %530, %516, %cst_295 {dimension_numbers = #tpu.dot_dimension_numbers<[2], [2], [1], [1], [0, 0, 0, 1, 1, 1], [0], [0]>} : vector<2x8x64xbf16>, vector<2x8x64xbf16>, vector<2x8x8xf32> -> vector<2x8x8xf32>
    "tpu.trace_stop"() : () -> ()
    %cst_296 = arith.constant dense<0xFF800000> : vector<2x8xf32>
    %532 = vector.multi_reduction <maximumf>, %531, %cst_296 [2] : vector<2x8x8xf32> to vector<2x8xf32>
    %533 = vector.shape_cast %532 : vector<2x8xf32> to vector<2x8x1xf32>
    %534 = vector.broadcast %533 : vector<2x8x1xf32> to vector<2x8x8xf32>
    %535 = arith.subf %531, %534 : vector<2x8x8xf32>
    %536 = math.exp %535 : vector<2x8x8xf32>
    %cst_297 = arith.constant dense<0.000000e+00> : vector<2x8xf32>
    %537 = vector.multi_reduction <add>, %536, %cst_297 [2] : vector<2x8x8xf32> to vector<2x8xf32>
    %538 = vector.shape_cast %537 : vector<2x8xf32> to vector<2x8x1xf32>
    %539 = tpu.reciprocal %538 {approx = true} : vector<2x8x1xf32> -> vector<2x8x1xf32>
    %540 = vector.broadcast %539 : vector<2x8x1xf32> to vector<2x8x8xf32>
    %541 = arith.mulf %536, %540 : vector<2x8x8xf32>
    %542 = arith.truncf %541 : vector<2x8x8xf32> to vector<2x8x8xbf16>
    "tpu.trace_start"() <{level = 10 : i32, message = "bqk,bkd->bqd"}> : () -> ()
    %cst_298 = arith.constant dense<0.000000e+00> : vector<2x8x64xf32>
    %543 = tpu.matmul %542, %516, %cst_298 {dimension_numbers = #tpu.dot_dimension_numbers<[2], [1], [1], [2], [0, 0, 0, 1, 1, 2], [0], [0]>} : vector<2x8x8xbf16>, vector<2x8x64xbf16>, vector<2x8x64xf32> -> vector<2x8x64xf32>
    "tpu.trace_stop"() : () -> ()
    %544 = arith.truncf %543 : vector<2x8x64xf32> to vector<2x8x64xbf16>
    %c8_299 = arith.constant 8 : index
    %c0_300 = arith.constant 0 : index
    %c0_301 = arith.constant 0 : index
    %545 = vector.load %arg8[%c8_299, %c0_300, %c0_301] : memref<16x64x64xbf16, #tpu.memory_space<vmem>>, vector<1x64x64xbf16>
    %546 = vector.shape_cast %545 : vector<1x64x64xbf16> to vector<64x64xbf16>
    "tpu.trace_start"() <{level = 10 : i32, message = "bqd,dn->bqn"}> : () -> ()
    %cst_302 = arith.constant dense<0.000000e+00> : vector<2x8x64xf32>
    %547 = tpu.matmul %544, %546, %cst_302 {dimension_numbers = #tpu.dot_dimension_numbers<[2], [0], [0, 1], [1], [0, 0, 0, 1, 1, 1], [], []>} : vector<2x8x64xbf16>, vector<64x64xbf16>, vector<2x8x64xf32> -> vector<2x8x64xf32>
    "tpu.trace_stop"() : () -> ()
    %c9_303 = arith.constant 9 : index
    %c0_304 = arith.constant 0 : index
    %c0_305 = arith.constant 0 : index
    %548 = vector.load %arg6[%c9_303, %c0_304, %c0_305] : memref<16x64x16xbf16, #tpu.memory_space<vmem>>, vector<1x64x16xbf16>
    %549 = vector.shape_cast %548 : vector<1x64x16xbf16> to vector<64x16xbf16>
    "tpu.trace_start"() <{level = 10 : i32, message = "bsd,de->bse"}> : () -> ()
    %cst_306 = arith.constant dense<0.000000e+00> : vector<2x8x16xf32>
    %550 = tpu.matmul %517, %549, %cst_306 {dimension_numbers = #tpu.dot_dimension_numbers<[2], [0], [0, 1], [1], [0, 0, 0, 1, 1, 1], [], []>} : vector<2x8x64xbf16>, vector<64x16xbf16>, vector<2x8x16xf32> -> vector<2x8x16xf32>
    "tpu.trace_stop"() : () -> ()
    %c9_307 = arith.constant 9 : index
    %c0_308 = arith.constant 0 : index
    %c0_309 = arith.constant 0 : index
    %551 = vector.load %arg11[%c9_307, %c0_308, %c0_309] : memref<16x1x16xf32, #tpu.memory_space<vmem>>, vector<1x1x16xf32>
    %552 = vector.shape_cast %551 : vector<1x1x16xf32> to vector<1x16xf32>
    %553 = vector.shape_cast %552 : vector<1x16xf32> to vector<1x1x16xf32>
    %554 = vector.broadcast %553 : vector<1x1x16xf32> to vector<2x8x16xf32>
    %555 = arith.addf %550, %554 : vector<2x8x16xf32>
    %556 = arith.truncf %555 : vector<2x8x16xf32> to vector<2x8x16xbf16>
    %c9_310 = arith.constant 9 : index
    %c0_311 = arith.constant 0 : index
    %c0_312 = arith.constant 0 : index
    %557 = vector.load %arg7[%c9_310, %c0_311, %c0_312] : memref<16x16x64xbf16, #tpu.memory_space<vmem>>, vector<1x16x64xbf16>
    %558 = vector.shape_cast %557 : vector<1x16x64xbf16> to vector<16x64xbf16>
    "tpu.trace_start"() <{level = 10 : i32, message = "bse,ed->bsd"}> : () -> ()
    %cst_313 = arith.constant dense<0.000000e+00> : vector<2x8x64xf32>
    %559 = tpu.matmul %556, %558, %cst_313 {dimension_numbers = #tpu.dot_dimension_numbers<[2], [0], [0, 1], [1], [0, 0, 0, 1, 1, 1], [], []>} : vector<2x8x16xbf16>, vector<16x64xbf16>, vector<2x8x64xf32> -> vector<2x8x64xf32>
    "tpu.trace_stop"() : () -> ()
    %560 = arith.truncf %559 : vector<2x8x64xf32> to vector<2x8x64xbf16>
    "tpu.trace_start"() <{level = 10 : i32, message = "bqd,bkd->bqk"}> : () -> ()
    %cst_314 = arith.constant dense<0.000000e+00> : vector<2x8x8xf32>
    %561 = tpu.matmul %560, %516, %cst_314 {dimension_numbers = #tpu.dot_dimension_numbers<[2], [2], [1], [1], [0, 0, 0, 1, 1, 1], [0], [0]>} : vector<2x8x64xbf16>, vector<2x8x64xbf16>, vector<2x8x8xf32> -> vector<2x8x8xf32>
    "tpu.trace_stop"() : () -> ()
    %cst_315 = arith.constant dense<0xFF800000> : vector<2x8xf32>
    %562 = vector.multi_reduction <maximumf>, %561, %cst_315 [2] : vector<2x8x8xf32> to vector<2x8xf32>
    %563 = vector.shape_cast %562 : vector<2x8xf32> to vector<2x8x1xf32>
    %564 = vector.broadcast %563 : vector<2x8x1xf32> to vector<2x8x8xf32>
    %565 = arith.subf %561, %564 : vector<2x8x8xf32>
    %566 = math.exp %565 : vector<2x8x8xf32>
    %cst_316 = arith.constant dense<0.000000e+00> : vector<2x8xf32>
    %567 = vector.multi_reduction <add>, %566, %cst_316 [2] : vector<2x8x8xf32> to vector<2x8xf32>
    %568 = vector.shape_cast %567 : vector<2x8xf32> to vector<2x8x1xf32>
    %569 = tpu.reciprocal %568 {approx = true} : vector<2x8x1xf32> -> vector<2x8x1xf32>
    %570 = vector.broadcast %569 : vector<2x8x1xf32> to vector<2x8x8xf32>
    %571 = arith.mulf %566, %570 : vector<2x8x8xf32>
    %572 = arith.truncf %571 : vector<2x8x8xf32> to vector<2x8x8xbf16>
    "tpu.trace_start"() <{level = 10 : i32, message = "bqk,bkd->bqd"}> : () -> ()
    %cst_317 = arith.constant dense<0.000000e+00> : vector<2x8x64xf32>
    %573 = tpu.matmul %572, %516, %cst_317 {dimension_numbers = #tpu.dot_dimension_numbers<[2], [1], [1], [2], [0, 0, 0, 1, 1, 2], [0], [0]>} : vector<2x8x8xbf16>, vector<2x8x64xbf16>, vector<2x8x64xf32> -> vector<2x8x64xf32>
    "tpu.trace_stop"() : () -> ()
    %574 = arith.truncf %573 : vector<2x8x64xf32> to vector<2x8x64xbf16>
    %c9_318 = arith.constant 9 : index
    %c0_319 = arith.constant 0 : index
    %c0_320 = arith.constant 0 : index
    %575 = vector.load %arg8[%c9_318, %c0_319, %c0_320] : memref<16x64x64xbf16, #tpu.memory_space<vmem>>, vector<1x64x64xbf16>
    %576 = vector.shape_cast %575 : vector<1x64x64xbf16> to vector<64x64xbf16>
    "tpu.trace_start"() <{level = 10 : i32, message = "bqd,dn->bqn"}> : () -> ()
    %cst_321 = arith.constant dense<0.000000e+00> : vector<2x8x64xf32>
    %577 = tpu.matmul %574, %576, %cst_321 {dimension_numbers = #tpu.dot_dimension_numbers<[2], [0], [0, 1], [1], [0, 0, 0, 1, 1, 1], [], []>} : vector<2x8x64xbf16>, vector<64x64xbf16>, vector<2x8x64xf32> -> vector<2x8x64xf32>
    "tpu.trace_stop"() : () -> ()
    %578 = arith.addf %547, %577 : vector<2x8x64xf32>
    %c10_322 = arith.constant 10 : index
    %c0_323 = arith.constant 0 : index
    %c0_324 = arith.constant 0 : index
    %579 = vector.load %arg6[%c10_322, %c0_323, %c0_324] : memref<16x64x16xbf16, #tpu.memory_space<vmem>>, vector<1x64x16xbf16>
    %580 = vector.shape_cast %579 : vector<1x64x16xbf16> to vector<64x16xbf16>
    "tpu.trace_start"() <{level = 10 : i32, message = "bsd,de->bse"}> : () -> ()
    %cst_325 = arith.constant dense<0.000000e+00> : vector<2x8x16xf32>
    %581 = tpu.matmul %517, %580, %cst_325 {dimension_numbers = #tpu.dot_dimension_numbers<[2], [0], [0, 1], [1], [0, 0, 0, 1, 1, 1], [], []>} : vector<2x8x64xbf16>, vector<64x16xbf16>, vector<2x8x16xf32> -> vector<2x8x16xf32>
    "tpu.trace_stop"() : () -> ()
    %c10_326 = arith.constant 10 : index
    %c0_327 = arith.constant 0 : index
    %c0_328 = arith.constant 0 : index
    %582 = vector.load %arg11[%c10_326, %c0_327, %c0_328] : memref<16x1x16xf32, #tpu.memory_space<vmem>>, vector<1x1x16xf32>
    %583 = vector.shape_cast %582 : vector<1x1x16xf32> to vector<1x16xf32>
    %584 = vector.shape_cast %583 : vector<1x16xf32> to vector<1x1x16xf32>
    %585 = vector.broadcast %584 : vector<1x1x16xf32> to vector<2x8x16xf32>
    %586 = arith.addf %581, %585 : vector<2x8x16xf32>
    %587 = arith.truncf %586 : vector<2x8x16xf32> to vector<2x8x16xbf16>
    %c10_329 = arith.constant 10 : index
    %c0_330 = arith.constant 0 : index
    %c0_331 = arith.constant 0 : index
    %588 = vector.load %arg7[%c10_329, %c0_330, %c0_331] : memref<16x16x64xbf16, #tpu.memory_space<vmem>>, vector<1x16x64xbf16>
    %589 = vector.shape_cast %588 : vector<1x16x64xbf16> to vector<16x64xbf16>
    "tpu.trace_start"() <{level = 10 : i32, message = "bse,ed->bsd"}> : () -> ()
    %cst_332 = arith.constant dense<0.000000e+00> : vector<2x8x64xf32>
    %590 = tpu.matmul %587, %589, %cst_332 {dimension_numbers = #tpu.dot_dimension_numbers<[2], [0], [0, 1], [1], [0, 0, 0, 1, 1, 1], [], []>} : vector<2x8x16xbf16>, vector<16x64xbf16>, vector<2x8x64xf32> -> vector<2x8x64xf32>
    "tpu.trace_stop"() : () -> ()
    %591 = arith.truncf %590 : vector<2x8x64xf32> to vector<2x8x64xbf16>
    "tpu.trace_start"() <{level = 10 : i32, message = "bqd,bkd->bqk"}> : () -> ()
    %cst_333 = arith.constant dense<0.000000e+00> : vector<2x8x8xf32>
    %592 = tpu.matmul %591, %516, %cst_333 {dimension_numbers = #tpu.dot_dimension_numbers<[2], [2], [1], [1], [0, 0, 0, 1, 1, 1], [0], [0]>} : vector<2x8x64xbf16>, vector<2x8x64xbf16>, vector<2x8x8xf32> -> vector<2x8x8xf32>
    "tpu.trace_stop"() : () -> ()
    %cst_334 = arith.constant dense<0xFF800000> : vector<2x8xf32>
    %593 = vector.multi_reduction <maximumf>, %592, %cst_334 [2] : vector<2x8x8xf32> to vector<2x8xf32>
    %594 = vector.shape_cast %593 : vector<2x8xf32> to vector<2x8x1xf32>
    %595 = vector.broadcast %594 : vector<2x8x1xf32> to vector<2x8x8xf32>
    %596 = arith.subf %592, %595 : vector<2x8x8xf32>
    %597 = math.exp %596 : vector<2x8x8xf32>
    %cst_335 = arith.constant dense<0.000000e+00> : vector<2x8xf32>
    %598 = vector.multi_reduction <add>, %597, %cst_335 [2] : vector<2x8x8xf32> to vector<2x8xf32>
    %599 = vector.shape_cast %598 : vector<2x8xf32> to vector<2x8x1xf32>
    %600 = tpu.reciprocal %599 {approx = true} : vector<2x8x1xf32> -> vector<2x8x1xf32>
    %601 = vector.broadcast %600 : vector<2x8x1xf32> to vector<2x8x8xf32>
    %602 = arith.mulf %597, %601 : vector<2x8x8xf32>
    %603 = arith.truncf %602 : vector<2x8x8xf32> to vector<2x8x8xbf16>
    "tpu.trace_start"() <{level = 10 : i32, message = "bqk,bkd->bqd"}> : () -> ()
    %cst_336 = arith.constant dense<0.000000e+00> : vector<2x8x64xf32>
    %604 = tpu.matmul %603, %516, %cst_336 {dimension_numbers = #tpu.dot_dimension_numbers<[2], [1], [1], [2], [0, 0, 0, 1, 1, 2], [0], [0]>} : vector<2x8x8xbf16>, vector<2x8x64xbf16>, vector<2x8x64xf32> -> vector<2x8x64xf32>
    "tpu.trace_stop"() : () -> ()
    %605 = arith.truncf %604 : vector<2x8x64xf32> to vector<2x8x64xbf16>
    %c10_337 = arith.constant 10 : index
    %c0_338 = arith.constant 0 : index
    %c0_339 = arith.constant 0 : index
    %606 = vector.load %arg8[%c10_337, %c0_338, %c0_339] : memref<16x64x64xbf16, #tpu.memory_space<vmem>>, vector<1x64x64xbf16>
    %607 = vector.shape_cast %606 : vector<1x64x64xbf16> to vector<64x64xbf16>
    "tpu.trace_start"() <{level = 10 : i32, message = "bqd,dn->bqn"}> : () -> ()
    %cst_340 = arith.constant dense<0.000000e+00> : vector<2x8x64xf32>
    %608 = tpu.matmul %605, %607, %cst_340 {dimension_numbers = #tpu.dot_dimension_numbers<[2], [0], [0, 1], [1], [0, 0, 0, 1, 1, 1], [], []>} : vector<2x8x64xbf16>, vector<64x64xbf16>, vector<2x8x64xf32> -> vector<2x8x64xf32>
    "tpu.trace_stop"() : () -> ()
    %609 = arith.addf %578, %608 : vector<2x8x64xf32>
    %c11_341 = arith.constant 11 : index
    %c0_342 = arith.constant 0 : index
    %c0_343 = arith.constant 0 : index
    %610 = vector.load %arg6[%c11_341, %c0_342, %c0_343] : memref<16x64x16xbf16, #tpu.memory_space<vmem>>, vector<1x64x16xbf16>
    %611 = vector.shape_cast %610 : vector<1x64x16xbf16> to vector<64x16xbf16>
    "tpu.trace_start"() <{level = 10 : i32, message = "bsd,de->bse"}> : () -> ()
    %cst_344 = arith.constant dense<0.000000e+00> : vector<2x8x16xf32>
    %612 = tpu.matmul %517, %611, %cst_344 {dimension_numbers = #tpu.dot_dimension_numbers<[2], [0], [0, 1], [1], [0, 0, 0, 1, 1, 1], [], []>} : vector<2x8x64xbf16>, vector<64x16xbf16>, vector<2x8x16xf32> -> vector<2x8x16xf32>
    "tpu.trace_stop"() : () -> ()
    %c11_345 = arith.constant 11 : index
    %c0_346 = arith.constant 0 : index
    %c0_347 = arith.constant 0 : index
    %613 = vector.load %arg11[%c11_345, %c0_346, %c0_347] : memref<16x1x16xf32, #tpu.memory_space<vmem>>, vector<1x1x16xf32>
    %614 = vector.shape_cast %613 : vector<1x1x16xf32> to vector<1x16xf32>
    %615 = vector.shape_cast %614 : vector<1x16xf32> to vector<1x1x16xf32>
    %616 = vector.broadcast %615 : vector<1x1x16xf32> to vector<2x8x16xf32>
    %617 = arith.addf %612, %616 : vector<2x8x16xf32>
    %618 = arith.truncf %617 : vector<2x8x16xf32> to vector<2x8x16xbf16>
    %c11_348 = arith.constant 11 : index
    %c0_349 = arith.constant 0 : index
    %c0_350 = arith.constant 0 : index
    %619 = vector.load %arg7[%c11_348, %c0_349, %c0_350] : memref<16x16x64xbf16, #tpu.memory_space<vmem>>, vector<1x16x64xbf16>
    %620 = vector.shape_cast %619 : vector<1x16x64xbf16> to vector<16x64xbf16>
    "tpu.trace_start"() <{level = 10 : i32, message = "bse,ed->bsd"}> : () -> ()
    %cst_351 = arith.constant dense<0.000000e+00> : vector<2x8x64xf32>
    %621 = tpu.matmul %618, %620, %cst_351 {dimension_numbers = #tpu.dot_dimension_numbers<[2], [0], [0, 1], [1], [0, 0, 0, 1, 1, 1], [], []>} : vector<2x8x16xbf16>, vector<16x64xbf16>, vector<2x8x64xf32> -> vector<2x8x64xf32>
    "tpu.trace_stop"() : () -> ()
    %622 = arith.truncf %621 : vector<2x8x64xf32> to vector<2x8x64xbf16>
    "tpu.trace_start"() <{level = 10 : i32, message = "bqd,bkd->bqk"}> : () -> ()
    %cst_352 = arith.constant dense<0.000000e+00> : vector<2x8x8xf32>
    %623 = tpu.matmul %622, %516, %cst_352 {dimension_numbers = #tpu.dot_dimension_numbers<[2], [2], [1], [1], [0, 0, 0, 1, 1, 1], [0], [0]>} : vector<2x8x64xbf16>, vector<2x8x64xbf16>, vector<2x8x8xf32> -> vector<2x8x8xf32>
    "tpu.trace_stop"() : () -> ()
    %cst_353 = arith.constant dense<0xFF800000> : vector<2x8xf32>
    %624 = vector.multi_reduction <maximumf>, %623, %cst_353 [2] : vector<2x8x8xf32> to vector<2x8xf32>
    %625 = vector.shape_cast %624 : vector<2x8xf32> to vector<2x8x1xf32>
    %626 = vector.broadcast %625 : vector<2x8x1xf32> to vector<2x8x8xf32>
    %627 = arith.subf %623, %626 : vector<2x8x8xf32>
    %628 = math.exp %627 : vector<2x8x8xf32>
    %cst_354 = arith.constant dense<0.000000e+00> : vector<2x8xf32>
    %629 = vector.multi_reduction <add>, %628, %cst_354 [2] : vector<2x8x8xf32> to vector<2x8xf32>
    %630 = vector.shape_cast %629 : vector<2x8xf32> to vector<2x8x1xf32>
    %631 = tpu.reciprocal %630 {approx = true} : vector<2x8x1xf32> -> vector<2x8x1xf32>
    %632 = vector.broadcast %631 : vector<2x8x1xf32> to vector<2x8x8xf32>
    %633 = arith.mulf %628, %632 : vector<2x8x8xf32>
    %634 = arith.truncf %633 : vector<2x8x8xf32> to vector<2x8x8xbf16>
    "tpu.trace_start"() <{level = 10 : i32, message = "bqk,bkd->bqd"}> : () -> ()
    %cst_355 = arith.constant dense<0.000000e+00> : vector<2x8x64xf32>
    %635 = tpu.matmul %634, %516, %cst_355 {dimension_numbers = #tpu.dot_dimension_numbers<[2], [1], [1], [2], [0, 0, 0, 1, 1, 2], [0], [0]>} : vector<2x8x8xbf16>, vector<2x8x64xbf16>, vector<2x8x64xf32> -> vector<2x8x64xf32>
    "tpu.trace_stop"() : () -> ()
    %636 = arith.truncf %635 : vector<2x8x64xf32> to vector<2x8x64xbf16>
    %c11_356 = arith.constant 11 : index
    %c0_357 = arith.constant 0 : index
    %c0_358 = arith.constant 0 : index
    %637 = vector.load %arg8[%c11_356, %c0_357, %c0_358] : memref<16x64x64xbf16, #tpu.memory_space<vmem>>, vector<1x64x64xbf16>
    %638 = vector.shape_cast %637 : vector<1x64x64xbf16> to vector<64x64xbf16>
    "tpu.trace_start"() <{level = 10 : i32, message = "bqd,dn->bqn"}> : () -> ()
    %cst_359 = arith.constant dense<0.000000e+00> : vector<2x8x64xf32>
    %639 = tpu.matmul %636, %638, %cst_359 {dimension_numbers = #tpu.dot_dimension_numbers<[2], [0], [0, 1], [1], [0, 0, 0, 1, 1, 1], [], []>} : vector<2x8x64xbf16>, vector<64x64xbf16>, vector<2x8x64xf32> -> vector<2x8x64xf32>
    "tpu.trace_stop"() : () -> ()
    %640 = arith.addf %609, %639 : vector<2x8x64xf32>
    %c1_360 = arith.constant 1 : index
    %c0_361 = arith.constant 0 : index
    %c0_362 = arith.constant 0 : index
    %641 = vector.load %arg12[%c1_360, %c0_361, %c0_362] : memref<2x12x128xf32, #tpu.memory_space<vmem>>, vector<1x1x64xf32>
    %642 = vector.shape_cast %641 : vector<1x1x64xf32> to vector<1x64xf32>
    %643 = vector.shape_cast %642 : vector<1x64xf32> to vector<1x1x64xf32>
    %644 = vector.broadcast %643 : vector<1x1x64xf32> to vector<2x8x64xf32>
    %645 = arith.addf %640, %644 : vector<2x8x64xf32>
    %646 = arith.addf %515, %645 : vector<2x8x64xf32>
    %c1_363 = arith.constant 1 : index
    %c4_364 = arith.constant 4 : index
    %c0_365 = arith.constant 0 : index
    %647 = vector.load %arg12[%c1_363, %c4_364, %c0_365] : memref<2x12x128xf32, #tpu.memory_space<vmem>>, vector<1x1x64xf32>
    %648 = vector.shape_cast %647 : vector<1x1x64xf32> to vector<1x64xf32>
    %c1_366 = arith.constant 1 : index
    %c8_367 = arith.constant 8 : index
    %c0_368 = arith.constant 0 : index
    %649 = vector.load %arg12[%c1_366, %c8_367, %c0_368] : memref<2x12x128xf32, #tpu.memory_space<vmem>>, vector<1x1x64xf32>
    %650 = vector.shape_cast %649 : vector<1x1x64xf32> to vector<1x64xf32>
    %cst_369 = arith.constant dense<0.000000e+00> : vector<2x8xf32>
    %651 = vector.multi_reduction <add>, %646, %cst_369 [2] : vector<2x8x64xf32> to vector<2x8xf32>
    %652 = vector.shape_cast %651 : vector<2x8xf32> to vector<2x8x1xf32>
    %cst_370 = arith.constant 6.400000e+01 : f32
    %653 = vector.broadcast %cst_370 : f32 to vector<2x8x1xf32>
    %654 = arith.divf %652, %653 : vector<2x8x1xf32>
    %655 = vector.broadcast %654 : vector<2x8x1xf32> to vector<2x8x64xf32>
    %656 = arith.subf %646, %655 : vector<2x8x64xf32>
    %657 = arith.mulf %656, %656 : vector<2x8x64xf32>
    %cst_371 = arith.constant dense<0.000000e+00> : vector<2x8xf32>
    %658 = vector.multi_reduction <add>, %657, %cst_371 [2] : vector<2x8x64xf32> to vector<2x8xf32>
    %659 = vector.shape_cast %658 : vector<2x8xf32> to vector<2x8x1xf32>
    %cst_372 = arith.constant 6.400000e+01 : f32
    %660 = vector.broadcast %cst_372 : f32 to vector<2x8x1xf32>
    %661 = arith.divf %659, %660 : vector<2x8x1xf32>
    %662 = vector.broadcast %654 : vector<2x8x1xf32> to vector<2x8x64xf32>
    %663 = arith.subf %646, %662 : vector<2x8x64xf32>
    %cst_373 = arith.constant 9.99999974E-6 : f32
    %664 = vector.broadcast %cst_373 : f32 to vector<2x8x1xf32>
    %665 = arith.addf %661, %664 : vector<2x8x1xf32>
    %666 = math.rsqrt %665 : vector<2x8x1xf32>
    %667 = vector.broadcast %666 : vector<2x8x1xf32> to vector<2x8x64xf32>
    %668 = arith.mulf %663, %667 : vector<2x8x64xf32>
    %669 = vector.shape_cast %648 : vector<1x64xf32> to vector<1x1x64xf32>
    %670 = vector.broadcast %669 : vector<1x1x64xf32> to vector<2x8x64xf32>
    %671 = arith.mulf %668, %670 : vector<2x8x64xf32>
    %672 = vector.shape_cast %650 : vector<1x64xf32> to vector<1x1x64xf32>
    %673 = vector.broadcast %672 : vector<1x1x64xf32> to vector<2x8x64xf32>
    %674 = arith.addf %671, %673 : vector<2x8x64xf32>
    %675 = arith.truncf %674 : vector<2x8x64xf32> to vector<2x8x64xbf16>
    %c12 = arith.constant 12 : index
    %c0_374 = arith.constant 0 : index
    %c0_375 = arith.constant 0 : index
    %676 = vector.load %arg6[%c12, %c0_374, %c0_375] : memref<16x64x16xbf16, #tpu.memory_space<vmem>>, vector<1x64x16xbf16>
    %677 = vector.shape_cast %676 : vector<1x64x16xbf16> to vector<64x16xbf16>
    "tpu.trace_start"() <{level = 10 : i32, message = "bsd,de->bse"}> : () -> ()
    %cst_376 = arith.constant dense<0.000000e+00> : vector<2x8x16xf32>
    %678 = tpu.matmul %675, %677, %cst_376 {dimension_numbers = #tpu.dot_dimension_numbers<[2], [0], [0, 1], [1], [0, 0, 0, 1, 1, 1], [], []>} : vector<2x8x64xbf16>, vector<64x16xbf16>, vector<2x8x16xf32> -> vector<2x8x16xf32>
    "tpu.trace_stop"() : () -> ()
    %c12_377 = arith.constant 12 : index
    %c0_378 = arith.constant 0 : index
    %c0_379 = arith.constant 0 : index
    %679 = vector.load %arg11[%c12_377, %c0_378, %c0_379] : memref<16x1x16xf32, #tpu.memory_space<vmem>>, vector<1x1x16xf32>
    %680 = vector.shape_cast %679 : vector<1x1x16xf32> to vector<1x16xf32>
    %681 = vector.shape_cast %680 : vector<1x16xf32> to vector<1x1x16xf32>
    %682 = vector.broadcast %681 : vector<1x1x16xf32> to vector<2x8x16xf32>
    %683 = arith.addf %678, %682 : vector<2x8x16xf32>
    %684 = arith.truncf %683 : vector<2x8x16xf32> to vector<2x8x16xbf16>
    %c12_380 = arith.constant 12 : index
    %c0_381 = arith.constant 0 : index
    %c0_382 = arith.constant 0 : index
    %685 = vector.load %arg7[%c12_380, %c0_381, %c0_382] : memref<16x16x64xbf16, #tpu.memory_space<vmem>>, vector<1x16x64xbf16>
    %686 = vector.shape_cast %685 : vector<1x16x64xbf16> to vector<16x64xbf16>
    "tpu.trace_start"() <{level = 10 : i32, message = "bse,ed->bsd"}> : () -> ()
    %cst_383 = arith.constant dense<0.000000e+00> : vector<2x8x64xf32>
    %687 = tpu.matmul %684, %686, %cst_383 {dimension_numbers = #tpu.dot_dimension_numbers<[2], [0], [0, 1], [1], [0, 0, 0, 1, 1, 1], [], []>} : vector<2x8x16xbf16>, vector<16x64xbf16>, vector<2x8x64xf32> -> vector<2x8x64xf32>
    "tpu.trace_stop"() : () -> ()
    %688 = arith.truncf %687 : vector<2x8x64xf32> to vector<2x8x64xbf16>
    "tpu.trace_start"() <{level = 10 : i32, message = "bqd,bkd->bqk"}> : () -> ()
    %cst_384 = arith.constant dense<0.000000e+00> : vector<2x8x128xf32>
    %689 = tpu.matmul %688, %103, %cst_384 {dimension_numbers = #tpu.dot_dimension_numbers<[2], [2], [1], [1], [0, 0, 0, 1, 1, 1], [0], [0]>} : vector<2x8x64xbf16>, vector<2x128x64xbf16>, vector<2x8x128xf32> -> vector<2x8x128xf32>
    "tpu.trace_stop"() : () -> ()
    %cst_385 = arith.constant dense<0xFF800000> : vector<2x8xf32>
    %690 = vector.multi_reduction <maximumf>, %689, %cst_385 [2] : vector<2x8x128xf32> to vector<2x8xf32>
    %691 = vector.shape_cast %690 : vector<2x8xf32> to vector<2x8x1xf32>
    %692 = vector.broadcast %691 : vector<2x8x1xf32> to vector<2x8x128xf32>
    %693 = arith.subf %689, %692 : vector<2x8x128xf32>
    %694 = math.exp %693 : vector<2x8x128xf32>
    %695 = vector.shape_cast %108 : vector<1x128xf32> to vector<1x1x128xf32>
    %696 = vector.broadcast %695 : vector<1x1x128xf32> to vector<2x8x128xf32>
    %697 = arith.mulf %694, %696 : vector<2x8x128xf32>
    %cst_386 = arith.constant dense<0.000000e+00> : vector<2x8xf32>
    %698 = vector.multi_reduction <add>, %697, %cst_386 [2] : vector<2x8x128xf32> to vector<2x8xf32>
    %699 = vector.shape_cast %698 : vector<2x8xf32> to vector<2x8x1xf32>
    %700 = tpu.reciprocal %699 {approx = true} : vector<2x8x1xf32> -> vector<2x8x1xf32>
    %701 = vector.broadcast %700 : vector<2x8x1xf32> to vector<2x8x128xf32>
    %702 = arith.mulf %697, %701 : vector<2x8x128xf32>
    %703 = arith.truncf %702 : vector<2x8x128xf32> to vector<2x8x128xbf16>
    "tpu.trace_start"() <{level = 10 : i32, message = "bqk,bkd->bqd"}> : () -> ()
    %cst_387 = arith.constant dense<0.000000e+00> : vector<2x8x64xf32>
    %704 = tpu.matmul %703, %102, %cst_387 {dimension_numbers = #tpu.dot_dimension_numbers<[2], [1], [1], [2], [0, 0, 0, 1, 1, 2], [0], [0]>} : vector<2x8x128xbf16>, vector<2x128x64xbf16>, vector<2x8x64xf32> -> vector<2x8x64xf32>
    "tpu.trace_stop"() : () -> ()
    %705 = arith.truncf %704 : vector<2x8x64xf32> to vector<2x8x64xbf16>
    %c12_388 = arith.constant 12 : index
    %c0_389 = arith.constant 0 : index
    %c0_390 = arith.constant 0 : index
    %706 = vector.load %arg8[%c12_388, %c0_389, %c0_390] : memref<16x64x64xbf16, #tpu.memory_space<vmem>>, vector<1x64x64xbf16>
    %707 = vector.shape_cast %706 : vector<1x64x64xbf16> to vector<64x64xbf16>
    "tpu.trace_start"() <{level = 10 : i32, message = "bqd,dn->bqn"}> : () -> ()
    %cst_391 = arith.constant dense<0.000000e+00> : vector<2x8x64xf32>
    %708 = tpu.matmul %705, %707, %cst_391 {dimension_numbers = #tpu.dot_dimension_numbers<[2], [0], [0, 1], [1], [0, 0, 0, 1, 1, 1], [], []>} : vector<2x8x64xbf16>, vector<64x64xbf16>, vector<2x8x64xf32> -> vector<2x8x64xf32>
    "tpu.trace_stop"() : () -> ()
    %c13 = arith.constant 13 : index
    %c0_392 = arith.constant 0 : index
    %c0_393 = arith.constant 0 : index
    %709 = vector.load %arg6[%c13, %c0_392, %c0_393] : memref<16x64x16xbf16, #tpu.memory_space<vmem>>, vector<1x64x16xbf16>
    %710 = vector.shape_cast %709 : vector<1x64x16xbf16> to vector<64x16xbf16>
    "tpu.trace_start"() <{level = 10 : i32, message = "bsd,de->bse"}> : () -> ()
    %cst_394 = arith.constant dense<0.000000e+00> : vector<2x8x16xf32>
    %711 = tpu.matmul %675, %710, %cst_394 {dimension_numbers = #tpu.dot_dimension_numbers<[2], [0], [0, 1], [1], [0, 0, 0, 1, 1, 1], [], []>} : vector<2x8x64xbf16>, vector<64x16xbf16>, vector<2x8x16xf32> -> vector<2x8x16xf32>
    "tpu.trace_stop"() : () -> ()
    %c13_395 = arith.constant 13 : index
    %c0_396 = arith.constant 0 : index
    %c0_397 = arith.constant 0 : index
    %712 = vector.load %arg11[%c13_395, %c0_396, %c0_397] : memref<16x1x16xf32, #tpu.memory_space<vmem>>, vector<1x1x16xf32>
    %713 = vector.shape_cast %712 : vector<1x1x16xf32> to vector<1x16xf32>
    %714 = vector.shape_cast %713 : vector<1x16xf32> to vector<1x1x16xf32>
    %715 = vector.broadcast %714 : vector<1x1x16xf32> to vector<2x8x16xf32>
    %716 = arith.addf %711, %715 : vector<2x8x16xf32>
    %717 = arith.truncf %716 : vector<2x8x16xf32> to vector<2x8x16xbf16>
    %c13_398 = arith.constant 13 : index
    %c0_399 = arith.constant 0 : index
    %c0_400 = arith.constant 0 : index
    %718 = vector.load %arg7[%c13_398, %c0_399, %c0_400] : memref<16x16x64xbf16, #tpu.memory_space<vmem>>, vector<1x16x64xbf16>
    %719 = vector.shape_cast %718 : vector<1x16x64xbf16> to vector<16x64xbf16>
    "tpu.trace_start"() <{level = 10 : i32, message = "bse,ed->bsd"}> : () -> ()
    %cst_401 = arith.constant dense<0.000000e+00> : vector<2x8x64xf32>
    %720 = tpu.matmul %717, %719, %cst_401 {dimension_numbers = #tpu.dot_dimension_numbers<[2], [0], [0, 1], [1], [0, 0, 0, 1, 1, 1], [], []>} : vector<2x8x16xbf16>, vector<16x64xbf16>, vector<2x8x64xf32> -> vector<2x8x64xf32>
    "tpu.trace_stop"() : () -> ()
    %721 = arith.truncf %720 : vector<2x8x64xf32> to vector<2x8x64xbf16>
    "tpu.trace_start"() <{level = 10 : i32, message = "bqd,bkd->bqk"}> : () -> ()
    %cst_402 = arith.constant dense<0.000000e+00> : vector<2x8x128xf32>
    %722 = tpu.matmul %721, %103, %cst_402 {dimension_numbers = #tpu.dot_dimension_numbers<[2], [2], [1], [1], [0, 0, 0, 1, 1, 1], [0], [0]>} : vector<2x8x64xbf16>, vector<2x128x64xbf16>, vector<2x8x128xf32> -> vector<2x8x128xf32>
    "tpu.trace_stop"() : () -> ()
    %cst_403 = arith.constant dense<0xFF800000> : vector<2x8xf32>
    %723 = vector.multi_reduction <maximumf>, %722, %cst_403 [2] : vector<2x8x128xf32> to vector<2x8xf32>
    %724 = vector.shape_cast %723 : vector<2x8xf32> to vector<2x8x1xf32>
    %725 = vector.broadcast %724 : vector<2x8x1xf32> to vector<2x8x128xf32>
    %726 = arith.subf %722, %725 : vector<2x8x128xf32>
    %727 = math.exp %726 : vector<2x8x128xf32>
    %728 = vector.shape_cast %108 : vector<1x128xf32> to vector<1x1x128xf32>
    %729 = vector.broadcast %728 : vector<1x1x128xf32> to vector<2x8x128xf32>
    %730 = arith.mulf %727, %729 : vector<2x8x128xf32>
    %cst_404 = arith.constant dense<0.000000e+00> : vector<2x8xf32>
    %731 = vector.multi_reduction <add>, %730, %cst_404 [2] : vector<2x8x128xf32> to vector<2x8xf32>
    %732 = vector.shape_cast %731 : vector<2x8xf32> to vector<2x8x1xf32>
    %733 = tpu.reciprocal %732 {approx = true} : vector<2x8x1xf32> -> vector<2x8x1xf32>
    %734 = vector.broadcast %733 : vector<2x8x1xf32> to vector<2x8x128xf32>
    %735 = arith.mulf %730, %734 : vector<2x8x128xf32>
    %736 = arith.truncf %735 : vector<2x8x128xf32> to vector<2x8x128xbf16>
    "tpu.trace_start"() <{level = 10 : i32, message = "bqk,bkd->bqd"}> : () -> ()
    %cst_405 = arith.constant dense<0.000000e+00> : vector<2x8x64xf32>
    %737 = tpu.matmul %736, %102, %cst_405 {dimension_numbers = #tpu.dot_dimension_numbers<[2], [1], [1], [2], [0, 0, 0, 1, 1, 2], [0], [0]>} : vector<2x8x128xbf16>, vector<2x128x64xbf16>, vector<2x8x64xf32> -> vector<2x8x64xf32>
    "tpu.trace_stop"() : () -> ()
    %738 = arith.truncf %737 : vector<2x8x64xf32> to vector<2x8x64xbf16>
    %c13_406 = arith.constant 13 : index
    %c0_407 = arith.constant 0 : index
    %c0_408 = arith.constant 0 : index
    %739 = vector.load %arg8[%c13_406, %c0_407, %c0_408] : memref<16x64x64xbf16, #tpu.memory_space<vmem>>, vector<1x64x64xbf16>
    %740 = vector.shape_cast %739 : vector<1x64x64xbf16> to vector<64x64xbf16>
    "tpu.trace_start"() <{level = 10 : i32, message = "bqd,dn->bqn"}> : () -> ()
    %cst_409 = arith.constant dense<0.000000e+00> : vector<2x8x64xf32>
    %741 = tpu.matmul %738, %740, %cst_409 {dimension_numbers = #tpu.dot_dimension_numbers<[2], [0], [0, 1], [1], [0, 0, 0, 1, 1, 1], [], []>} : vector<2x8x64xbf16>, vector<64x64xbf16>, vector<2x8x64xf32> -> vector<2x8x64xf32>
    "tpu.trace_stop"() : () -> ()
    %742 = arith.addf %708, %741 : vector<2x8x64xf32>
    %c14 = arith.constant 14 : index
    %c0_410 = arith.constant 0 : index
    %c0_411 = arith.constant 0 : index
    %743 = vector.load %arg6[%c14, %c0_410, %c0_411] : memref<16x64x16xbf16, #tpu.memory_space<vmem>>, vector<1x64x16xbf16>
    %744 = vector.shape_cast %743 : vector<1x64x16xbf16> to vector<64x16xbf16>
    "tpu.trace_start"() <{level = 10 : i32, message = "bsd,de->bse"}> : () -> ()
    %cst_412 = arith.constant dense<0.000000e+00> : vector<2x8x16xf32>
    %745 = tpu.matmul %675, %744, %cst_412 {dimension_numbers = #tpu.dot_dimension_numbers<[2], [0], [0, 1], [1], [0, 0, 0, 1, 1, 1], [], []>} : vector<2x8x64xbf16>, vector<64x16xbf16>, vector<2x8x16xf32> -> vector<2x8x16xf32>
    "tpu.trace_stop"() : () -> ()
    %c14_413 = arith.constant 14 : index
    %c0_414 = arith.constant 0 : index
    %c0_415 = arith.constant 0 : index
    %746 = vector.load %arg11[%c14_413, %c0_414, %c0_415] : memref<16x1x16xf32, #tpu.memory_space<vmem>>, vector<1x1x16xf32>
    %747 = vector.shape_cast %746 : vector<1x1x16xf32> to vector<1x16xf32>
    %748 = vector.shape_cast %747 : vector<1x16xf32> to vector<1x1x16xf32>
    %749 = vector.broadcast %748 : vector<1x1x16xf32> to vector<2x8x16xf32>
    %750 = arith.addf %745, %749 : vector<2x8x16xf32>
    %751 = arith.truncf %750 : vector<2x8x16xf32> to vector<2x8x16xbf16>
    %c14_416 = arith.constant 14 : index
    %c0_417 = arith.constant 0 : index
    %c0_418 = arith.constant 0 : index
    %752 = vector.load %arg7[%c14_416, %c0_417, %c0_418] : memref<16x16x64xbf16, #tpu.memory_space<vmem>>, vector<1x16x64xbf16>
    %753 = vector.shape_cast %752 : vector<1x16x64xbf16> to vector<16x64xbf16>
    "tpu.trace_start"() <{level = 10 : i32, message = "bse,ed->bsd"}> : () -> ()
    %cst_419 = arith.constant dense<0.000000e+00> : vector<2x8x64xf32>
    %754 = tpu.matmul %751, %753, %cst_419 {dimension_numbers = #tpu.dot_dimension_numbers<[2], [0], [0, 1], [1], [0, 0, 0, 1, 1, 1], [], []>} : vector<2x8x16xbf16>, vector<16x64xbf16>, vector<2x8x64xf32> -> vector<2x8x64xf32>
    "tpu.trace_stop"() : () -> ()
    %755 = arith.truncf %754 : vector<2x8x64xf32> to vector<2x8x64xbf16>
    "tpu.trace_start"() <{level = 10 : i32, message = "bqd,bkd->bqk"}> : () -> ()
    %cst_420 = arith.constant dense<0.000000e+00> : vector<2x8x128xf32>
    %756 = tpu.matmul %755, %103, %cst_420 {dimension_numbers = #tpu.dot_dimension_numbers<[2], [2], [1], [1], [0, 0, 0, 1, 1, 1], [0], [0]>} : vector<2x8x64xbf16>, vector<2x128x64xbf16>, vector<2x8x128xf32> -> vector<2x8x128xf32>
    "tpu.trace_stop"() : () -> ()
    %cst_421 = arith.constant dense<0xFF800000> : vector<2x8xf32>
    %757 = vector.multi_reduction <maximumf>, %756, %cst_421 [2] : vector<2x8x128xf32> to vector<2x8xf32>
    %758 = vector.shape_cast %757 : vector<2x8xf32> to vector<2x8x1xf32>
    %759 = vector.broadcast %758 : vector<2x8x1xf32> to vector<2x8x128xf32>
    %760 = arith.subf %756, %759 : vector<2x8x128xf32>
    %761 = math.exp %760 : vector<2x8x128xf32>
    %762 = vector.shape_cast %108 : vector<1x128xf32> to vector<1x1x128xf32>
    %763 = vector.broadcast %762 : vector<1x1x128xf32> to vector<2x8x128xf32>
    %764 = arith.mulf %761, %763 : vector<2x8x128xf32>
    %cst_422 = arith.constant dense<0.000000e+00> : vector<2x8xf32>
    %765 = vector.multi_reduction <add>, %764, %cst_422 [2] : vector<2x8x128xf32> to vector<2x8xf32>
    %766 = vector.shape_cast %765 : vector<2x8xf32> to vector<2x8x1xf32>
    %767 = tpu.reciprocal %766 {approx = true} : vector<2x8x1xf32> -> vector<2x8x1xf32>
    %768 = vector.broadcast %767 : vector<2x8x1xf32> to vector<2x8x128xf32>
    %769 = arith.mulf %764, %768 : vector<2x8x128xf32>
    %770 = arith.truncf %769 : vector<2x8x128xf32> to vector<2x8x128xbf16>
    "tpu.trace_start"() <{level = 10 : i32, message = "bqk,bkd->bqd"}> : () -> ()
    %cst_423 = arith.constant dense<0.000000e+00> : vector<2x8x64xf32>
    %771 = tpu.matmul %770, %102, %cst_423 {dimension_numbers = #tpu.dot_dimension_numbers<[2], [1], [1], [2], [0, 0, 0, 1, 1, 2], [0], [0]>} : vector<2x8x128xbf16>, vector<2x128x64xbf16>, vector<2x8x64xf32> -> vector<2x8x64xf32>
    "tpu.trace_stop"() : () -> ()
    %772 = arith.truncf %771 : vector<2x8x64xf32> to vector<2x8x64xbf16>
    %c14_424 = arith.constant 14 : index
    %c0_425 = arith.constant 0 : index
    %c0_426 = arith.constant 0 : index
    %773 = vector.load %arg8[%c14_424, %c0_425, %c0_426] : memref<16x64x64xbf16, #tpu.memory_space<vmem>>, vector<1x64x64xbf16>
    %774 = vector.shape_cast %773 : vector<1x64x64xbf16> to vector<64x64xbf16>
    "tpu.trace_start"() <{level = 10 : i32, message = "bqd,dn->bqn"}> : () -> ()
    %cst_427 = arith.constant dense<0.000000e+00> : vector<2x8x64xf32>
    %775 = tpu.matmul %772, %774, %cst_427 {dimension_numbers = #tpu.dot_dimension_numbers<[2], [0], [0, 1], [1], [0, 0, 0, 1, 1, 1], [], []>} : vector<2x8x64xbf16>, vector<64x64xbf16>, vector<2x8x64xf32> -> vector<2x8x64xf32>
    "tpu.trace_stop"() : () -> ()
    %776 = arith.addf %742, %775 : vector<2x8x64xf32>
    %c15 = arith.constant 15 : index
    %c0_428 = arith.constant 0 : index
    %c0_429 = arith.constant 0 : index
    %777 = vector.load %arg6[%c15, %c0_428, %c0_429] : memref<16x64x16xbf16, #tpu.memory_space<vmem>>, vector<1x64x16xbf16>
    %778 = vector.shape_cast %777 : vector<1x64x16xbf16> to vector<64x16xbf16>
    "tpu.trace_start"() <{level = 10 : i32, message = "bsd,de->bse"}> : () -> ()
    %cst_430 = arith.constant dense<0.000000e+00> : vector<2x8x16xf32>
    %779 = tpu.matmul %675, %778, %cst_430 {dimension_numbers = #tpu.dot_dimension_numbers<[2], [0], [0, 1], [1], [0, 0, 0, 1, 1, 1], [], []>} : vector<2x8x64xbf16>, vector<64x16xbf16>, vector<2x8x16xf32> -> vector<2x8x16xf32>
    "tpu.trace_stop"() : () -> ()
    %c15_431 = arith.constant 15 : index
    %c0_432 = arith.constant 0 : index
    %c0_433 = arith.constant 0 : index
    %780 = vector.load %arg11[%c15_431, %c0_432, %c0_433] : memref<16x1x16xf32, #tpu.memory_space<vmem>>, vector<1x1x16xf32>
    %781 = vector.shape_cast %780 : vector<1x1x16xf32> to vector<1x16xf32>
    %782 = vector.shape_cast %781 : vector<1x16xf32> to vector<1x1x16xf32>
    %783 = vector.broadcast %782 : vector<1x1x16xf32> to vector<2x8x16xf32>
    %784 = arith.addf %779, %783 : vector<2x8x16xf32>
    %785 = arith.truncf %784 : vector<2x8x16xf32> to vector<2x8x16xbf16>
    %c15_434 = arith.constant 15 : index
    %c0_435 = arith.constant 0 : index
    %c0_436 = arith.constant 0 : index
    %786 = vector.load %arg7[%c15_434, %c0_435, %c0_436] : memref<16x16x64xbf16, #tpu.memory_space<vmem>>, vector<1x16x64xbf16>
    %787 = vector.shape_cast %786 : vector<1x16x64xbf16> to vector<16x64xbf16>
    "tpu.trace_start"() <{level = 10 : i32, message = "bse,ed->bsd"}> : () -> ()
    %cst_437 = arith.constant dense<0.000000e+00> : vector<2x8x64xf32>
    %788 = tpu.matmul %785, %787, %cst_437 {dimension_numbers = #tpu.dot_dimension_numbers<[2], [0], [0, 1], [1], [0, 0, 0, 1, 1, 1], [], []>} : vector<2x8x16xbf16>, vector<16x64xbf16>, vector<2x8x64xf32> -> vector<2x8x64xf32>
    "tpu.trace_stop"() : () -> ()
    %789 = arith.truncf %788 : vector<2x8x64xf32> to vector<2x8x64xbf16>
    "tpu.trace_start"() <{level = 10 : i32, message = "bqd,bkd->bqk"}> : () -> ()
    %cst_438 = arith.constant dense<0.000000e+00> : vector<2x8x128xf32>
    %790 = tpu.matmul %789, %103, %cst_438 {dimension_numbers = #tpu.dot_dimension_numbers<[2], [2], [1], [1], [0, 0, 0, 1, 1, 1], [0], [0]>} : vector<2x8x64xbf16>, vector<2x128x64xbf16>, vector<2x8x128xf32> -> vector<2x8x128xf32>
    "tpu.trace_stop"() : () -> ()
    %cst_439 = arith.constant dense<0xFF800000> : vector<2x8xf32>
    %791 = vector.multi_reduction <maximumf>, %790, %cst_439 [2] : vector<2x8x128xf32> to vector<2x8xf32>
    %792 = vector.shape_cast %791 : vector<2x8xf32> to vector<2x8x1xf32>
    %793 = vector.broadcast %792 : vector<2x8x1xf32> to vector<2x8x128xf32>
    %794 = arith.subf %790, %793 : vector<2x8x128xf32>
    %795 = math.exp %794 : vector<2x8x128xf32>
    %796 = vector.shape_cast %108 : vector<1x128xf32> to vector<1x1x128xf32>
    %797 = vector.broadcast %796 : vector<1x1x128xf32> to vector<2x8x128xf32>
    %798 = arith.mulf %795, %797 : vector<2x8x128xf32>
    %cst_440 = arith.constant dense<0.000000e+00> : vector<2x8xf32>
    %799 = vector.multi_reduction <add>, %798, %cst_440 [2] : vector<2x8x128xf32> to vector<2x8xf32>
    %800 = vector.shape_cast %799 : vector<2x8xf32> to vector<2x8x1xf32>
    %801 = tpu.reciprocal %800 {approx = true} : vector<2x8x1xf32> -> vector<2x8x1xf32>
    %802 = vector.broadcast %801 : vector<2x8x1xf32> to vector<2x8x128xf32>
    %803 = arith.mulf %798, %802 : vector<2x8x128xf32>
    %804 = arith.truncf %803 : vector<2x8x128xf32> to vector<2x8x128xbf16>
    "tpu.trace_start"() <{level = 10 : i32, message = "bqk,bkd->bqd"}> : () -> ()
    %cst_441 = arith.constant dense<0.000000e+00> : vector<2x8x64xf32>
    %805 = tpu.matmul %804, %102, %cst_441 {dimension_numbers = #tpu.dot_dimension_numbers<[2], [1], [1], [2], [0, 0, 0, 1, 1, 2], [0], [0]>} : vector<2x8x128xbf16>, vector<2x128x64xbf16>, vector<2x8x64xf32> -> vector<2x8x64xf32>
    "tpu.trace_stop"() : () -> ()
    %806 = arith.truncf %805 : vector<2x8x64xf32> to vector<2x8x64xbf16>
    %c15_442 = arith.constant 15 : index
    %c0_443 = arith.constant 0 : index
    %c0_444 = arith.constant 0 : index
    %807 = vector.load %arg8[%c15_442, %c0_443, %c0_444] : memref<16x64x64xbf16, #tpu.memory_space<vmem>>, vector<1x64x64xbf16>
    %808 = vector.shape_cast %807 : vector<1x64x64xbf16> to vector<64x64xbf16>
    "tpu.trace_start"() <{level = 10 : i32, message = "bqd,dn->bqn"}> : () -> ()
    %cst_445 = arith.constant dense<0.000000e+00> : vector<2x8x64xf32>
    %809 = tpu.matmul %806, %808, %cst_445 {dimension_numbers = #tpu.dot_dimension_numbers<[2], [0], [0, 1], [1], [0, 0, 0, 1, 1, 1], [], []>} : vector<2x8x64xbf16>, vector<64x64xbf16>, vector<2x8x64xf32> -> vector<2x8x64xf32>
    "tpu.trace_stop"() : () -> ()
    %810 = arith.addf %776, %809 : vector<2x8x64xf32>
    %c1_446 = arith.constant 1 : index
    %c1_447 = arith.constant 1 : index
    %c0_448 = arith.constant 0 : index
    %811 = vector.load %arg12[%c1_446, %c1_447, %c0_448] : memref<2x12x128xf32, #tpu.memory_space<vmem>>, vector<1x1x64xf32>
    %812 = vector.shape_cast %811 : vector<1x1x64xf32> to vector<1x64xf32>
    %813 = vector.shape_cast %812 : vector<1x64xf32> to vector<1x1x64xf32>
    %814 = vector.broadcast %813 : vector<1x1x64xf32> to vector<2x8x64xf32>
    %815 = arith.addf %810, %814 : vector<2x8x64xf32>
    %816 = arith.addf %674, %815 : vector<2x8x64xf32>
    %c1_449 = arith.constant 1 : index
    %c5_450 = arith.constant 5 : index
    %c0_451 = arith.constant 0 : index
    %817 = vector.load %arg12[%c1_449, %c5_450, %c0_451] : memref<2x12x128xf32, #tpu.memory_space<vmem>>, vector<1x1x64xf32>
    %818 = vector.shape_cast %817 : vector<1x1x64xf32> to vector<1x64xf32>
    %c1_452 = arith.constant 1 : index
    %c9_453 = arith.constant 9 : index
    %c0_454 = arith.constant 0 : index
    %819 = vector.load %arg12[%c1_452, %c9_453, %c0_454] : memref<2x12x128xf32, #tpu.memory_space<vmem>>, vector<1x1x64xf32>
    %820 = vector.shape_cast %819 : vector<1x1x64xf32> to vector<1x64xf32>
    %cst_455 = arith.constant dense<0.000000e+00> : vector<2x8xf32>
    %821 = vector.multi_reduction <add>, %816, %cst_455 [2] : vector<2x8x64xf32> to vector<2x8xf32>
    %822 = vector.shape_cast %821 : vector<2x8xf32> to vector<2x8x1xf32>
    %cst_456 = arith.constant 6.400000e+01 : f32
    %823 = vector.broadcast %cst_456 : f32 to vector<2x8x1xf32>
    %824 = arith.divf %822, %823 : vector<2x8x1xf32>
    %825 = vector.broadcast %824 : vector<2x8x1xf32> to vector<2x8x64xf32>
    %826 = arith.subf %816, %825 : vector<2x8x64xf32>
    %827 = arith.mulf %826, %826 : vector<2x8x64xf32>
    %cst_457 = arith.constant dense<0.000000e+00> : vector<2x8xf32>
    %828 = vector.multi_reduction <add>, %827, %cst_457 [2] : vector<2x8x64xf32> to vector<2x8xf32>
    %829 = vector.shape_cast %828 : vector<2x8xf32> to vector<2x8x1xf32>
    %cst_458 = arith.constant 6.400000e+01 : f32
    %830 = vector.broadcast %cst_458 : f32 to vector<2x8x1xf32>
    %831 = arith.divf %829, %830 : vector<2x8x1xf32>
    %832 = vector.broadcast %824 : vector<2x8x1xf32> to vector<2x8x64xf32>
    %833 = arith.subf %816, %832 : vector<2x8x64xf32>
    %cst_459 = arith.constant 9.99999974E-6 : f32
    %834 = vector.broadcast %cst_459 : f32 to vector<2x8x1xf32>
    %835 = arith.addf %831, %834 : vector<2x8x1xf32>
    %836 = math.rsqrt %835 : vector<2x8x1xf32>
    %837 = vector.broadcast %836 : vector<2x8x1xf32> to vector<2x8x64xf32>
    %838 = arith.mulf %833, %837 : vector<2x8x64xf32>
    %839 = vector.shape_cast %818 : vector<1x64xf32> to vector<1x1x64xf32>
    %840 = vector.broadcast %839 : vector<1x1x64xf32> to vector<2x8x64xf32>
    %841 = arith.mulf %838, %840 : vector<2x8x64xf32>
    %842 = vector.shape_cast %820 : vector<1x64xf32> to vector<1x1x64xf32>
    %843 = vector.broadcast %842 : vector<1x1x64xf32> to vector<2x8x64xf32>
    %844 = arith.addf %841, %843 : vector<2x8x64xf32>
    %845 = arith.truncf %844 : vector<2x8x64xf32> to vector<2x8x64xbf16>
    %c1_460 = arith.constant 1 : index
    %c0_461 = arith.constant 0 : index
    %c0_462 = arith.constant 0 : index
    %846 = vector.load %arg9[%c1_460, %c0_461, %c0_462] : memref<2x64x128xbf16, #tpu.memory_space<vmem>>, vector<1x64x128xbf16>
    %847 = vector.shape_cast %846 : vector<1x64x128xbf16> to vector<64x128xbf16>
    "tpu.trace_start"() <{level = 10 : i32, message = "bsd,df->bsf"}> : () -> ()
    %cst_463 = arith.constant dense<0.000000e+00> : vector<2x8x128xf32>
    %848 = tpu.matmul %845, %847, %cst_463 {dimension_numbers = #tpu.dot_dimension_numbers<[2], [0], [0, 1], [1], [0, 0, 0, 1, 1, 1], [], []>} : vector<2x8x64xbf16>, vector<64x128xbf16>, vector<2x8x128xf32> -> vector<2x8x128xf32>
    "tpu.trace_stop"() : () -> ()
    %c1_464 = arith.constant 1 : index
    %c2_465 = arith.constant 2 : index
    %c0_466 = arith.constant 0 : index
    %849 = vector.load %arg12[%c1_464, %c2_465, %c0_466] : memref<2x12x128xf32, #tpu.memory_space<vmem>>, vector<1x1x128xf32>
    %850 = vector.shape_cast %849 : vector<1x1x128xf32> to vector<1x128xf32>
    %851 = vector.shape_cast %850 : vector<1x128xf32> to vector<1x1x128xf32>
    %852 = vector.broadcast %851 : vector<1x1x128xf32> to vector<2x8x128xf32>
    %853 = arith.addf %848, %852 : vector<2x8x128xf32>
    %cst_467 = arith.constant 0.000000e+00 : f32
    %854 = vector.broadcast %cst_467 : f32 to vector<2x8x128xf32>
    %855 = arith.maximumf %853, %854 : vector<2x8x128xf32>
    %856 = arith.truncf %855 : vector<2x8x128xf32> to vector<2x8x128xbf16>
    %c1_468 = arith.constant 1 : index
    %c0_469 = arith.constant 0 : index
    %c0_470 = arith.constant 0 : index
    %857 = vector.load %arg10[%c1_468, %c0_469, %c0_470] : memref<2x128x64xbf16, #tpu.memory_space<vmem>>, vector<1x128x64xbf16>
    %858 = vector.shape_cast %857 : vector<1x128x64xbf16> to vector<128x64xbf16>
    "tpu.trace_start"() <{level = 10 : i32, message = "bsf,fd->bsd"}> : () -> ()
    %cst_471 = arith.constant dense<0.000000e+00> : vector<2x8x64xf32>
    %859 = tpu.matmul %856, %858, %cst_471 {dimension_numbers = #tpu.dot_dimension_numbers<[2], [0], [0, 1], [1], [0, 0, 0, 1, 1, 1], [], []>} : vector<2x8x128xbf16>, vector<128x64xbf16>, vector<2x8x64xf32> -> vector<2x8x64xf32>
    "tpu.trace_stop"() : () -> ()
    %c1_472 = arith.constant 1 : index
    %c3_473 = arith.constant 3 : index
    %c0_474 = arith.constant 0 : index
    %860 = vector.load %arg12[%c1_472, %c3_473, %c0_474] : memref<2x12x128xf32, #tpu.memory_space<vmem>>, vector<1x1x64xf32>
    %861 = vector.shape_cast %860 : vector<1x1x64xf32> to vector<1x64xf32>
    %862 = vector.shape_cast %861 : vector<1x64xf32> to vector<1x1x64xf32>
    %863 = vector.broadcast %862 : vector<1x1x64xf32> to vector<2x8x64xf32>
    %864 = arith.addf %859, %863 : vector<2x8x64xf32>
    %865 = arith.addf %844, %864 : vector<2x8x64xf32>
    %c1_475 = arith.constant 1 : index
    %c6_476 = arith.constant 6 : index
    %c0_477 = arith.constant 0 : index
    %866 = vector.load %arg12[%c1_475, %c6_476, %c0_477] : memref<2x12x128xf32, #tpu.memory_space<vmem>>, vector<1x1x64xf32>
    %867 = vector.shape_cast %866 : vector<1x1x64xf32> to vector<1x64xf32>
    %c1_478 = arith.constant 1 : index
    %c10_479 = arith.constant 10 : index
    %c0_480 = arith.constant 0 : index
    %868 = vector.load %arg12[%c1_478, %c10_479, %c0_480] : memref<2x12x128xf32, #tpu.memory_space<vmem>>, vector<1x1x64xf32>
    %869 = vector.shape_cast %868 : vector<1x1x64xf32> to vector<1x64xf32>
    %cst_481 = arith.constant dense<0.000000e+00> : vector<2x8xf32>
    %870 = vector.multi_reduction <add>, %865, %cst_481 [2] : vector<2x8x64xf32> to vector<2x8xf32>
    %871 = vector.shape_cast %870 : vector<2x8xf32> to vector<2x8x1xf32>
    %cst_482 = arith.constant 6.400000e+01 : f32
    %872 = vector.broadcast %cst_482 : f32 to vector<2x8x1xf32>
    %873 = arith.divf %871, %872 : vector<2x8x1xf32>
    %874 = vector.broadcast %873 : vector<2x8x1xf32> to vector<2x8x64xf32>
    %875 = arith.subf %865, %874 : vector<2x8x64xf32>
    %876 = arith.mulf %875, %875 : vector<2x8x64xf32>
    %cst_483 = arith.constant dense<0.000000e+00> : vector<2x8xf32>
    %877 = vector.multi_reduction <add>, %876, %cst_483 [2] : vector<2x8x64xf32> to vector<2x8xf32>
    %878 = vector.shape_cast %877 : vector<2x8xf32> to vector<2x8x1xf32>
    %cst_484 = arith.constant 6.400000e+01 : f32
    %879 = vector.broadcast %cst_484 : f32 to vector<2x8x1xf32>
    %880 = arith.divf %878, %879 : vector<2x8x1xf32>
    %881 = vector.broadcast %873 : vector<2x8x1xf32> to vector<2x8x64xf32>
    %882 = arith.subf %865, %881 : vector<2x8x64xf32>
    %cst_485 = arith.constant 9.99999974E-6 : f32
    %883 = vector.broadcast %cst_485 : f32 to vector<2x8x1xf32>
    %884 = arith.addf %880, %883 : vector<2x8x1xf32>
    %885 = math.rsqrt %884 : vector<2x8x1xf32>
    %886 = vector.broadcast %885 : vector<2x8x1xf32> to vector<2x8x64xf32>
    %887 = arith.mulf %882, %886 : vector<2x8x64xf32>
    %888 = vector.shape_cast %867 : vector<1x64xf32> to vector<1x1x64xf32>
    %889 = vector.broadcast %888 : vector<1x1x64xf32> to vector<2x8x64xf32>
    %890 = arith.mulf %887, %889 : vector<2x8x64xf32>
    %891 = vector.shape_cast %869 : vector<1x64xf32> to vector<1x1x64xf32>
    %892 = vector.broadcast %891 : vector<1x1x64xf32> to vector<2x8x64xf32>
    %893 = arith.addf %890, %892 : vector<2x8x64xf32>
    %c1_486 = arith.constant 1 : index
    %c7_487 = arith.constant 7 : index
    %c0_488 = arith.constant 0 : index
    %894 = vector.load %arg12[%c1_486, %c7_487, %c0_488] : memref<2x12x128xf32, #tpu.memory_space<vmem>>, vector<1x1x64xf32>
    %895 = vector.shape_cast %894 : vector<1x1x64xf32> to vector<1x64xf32>
    %c1_489 = arith.constant 1 : index
    %c11_490 = arith.constant 11 : index
    %c0_491 = arith.constant 0 : index
    %896 = vector.load %arg12[%c1_489, %c11_490, %c0_491] : memref<2x12x128xf32, #tpu.memory_space<vmem>>, vector<1x1x64xf32>
    %897 = vector.shape_cast %896 : vector<1x1x64xf32> to vector<1x64xf32>
    %cst_492 = arith.constant dense<0.000000e+00> : vector<2x8xf32>
    %898 = vector.multi_reduction <add>, %893, %cst_492 [2] : vector<2x8x64xf32> to vector<2x8xf32>
    %899 = vector.shape_cast %898 : vector<2x8xf32> to vector<2x8x1xf32>
    %cst_493 = arith.constant 6.400000e+01 : f32
    %900 = vector.broadcast %cst_493 : f32 to vector<2x8x1xf32>
    %901 = arith.divf %899, %900 : vector<2x8x1xf32>
    %902 = vector.broadcast %901 : vector<2x8x1xf32> to vector<2x8x64xf32>
    %903 = arith.subf %893, %902 : vector<2x8x64xf32>
    %904 = arith.mulf %903, %903 : vector<2x8x64xf32>
    %cst_494 = arith.constant dense<0.000000e+00> : vector<2x8xf32>
    %905 = vector.multi_reduction <add>, %904, %cst_494 [2] : vector<2x8x64xf32> to vector<2x8xf32>
    %906 = vector.shape_cast %905 : vector<2x8xf32> to vector<2x8x1xf32>
    %cst_495 = arith.constant 6.400000e+01 : f32
    %907 = vector.broadcast %cst_495 : f32 to vector<2x8x1xf32>
    %908 = arith.divf %906, %907 : vector<2x8x1xf32>
    %909 = vector.broadcast %901 : vector<2x8x1xf32> to vector<2x8x64xf32>
    %910 = arith.subf %893, %909 : vector<2x8x64xf32>
    %cst_496 = arith.constant 9.99999974E-6 : f32
    %911 = vector.broadcast %cst_496 : f32 to vector<2x8x1xf32>
    %912 = arith.addf %908, %911 : vector<2x8x1xf32>
    %913 = math.rsqrt %912 : vector<2x8x1xf32>
    %914 = vector.broadcast %913 : vector<2x8x1xf32> to vector<2x8x64xf32>
    %915 = arith.mulf %910, %914 : vector<2x8x64xf32>
    %916 = vector.shape_cast %895 : vector<1x64xf32> to vector<1x1x64xf32>
    %917 = vector.broadcast %916 : vector<1x1x64xf32> to vector<2x8x64xf32>
    %918 = arith.mulf %915, %917 : vector<2x8x64xf32>
    %919 = vector.shape_cast %897 : vector<1x64xf32> to vector<1x1x64xf32>
    %920 = vector.broadcast %919 : vector<1x1x64xf32> to vector<2x8x64xf32>
    %921 = arith.addf %918, %920 : vector<2x8x64xf32>
    %c0_497 = arith.constant 0 : index
    %c0_498 = arith.constant 0 : index
    %c0_499 = arith.constant 0 : index
    %922 = vector.load %arg13[%c0_497, %c0_498, %c0_499] : memref<2x8x64xf32, #tpu.memory_space<vmem>>, vector<2x8x64xf32>
    tpu.vector_store %arg13[%c0_497, %c0_498, %c0_499], %921 {strides = array<i32>} : memref<2x8x64xf32, #tpu.memory_space<vmem>>, vector<2x8x64xf32>,
    return
  }
}

</mosaic_0001>

<llo_original>
// kernel: _lambda_.1
$region0: #{_lambda_.1}
  #allocation0 [shape = 'u32[]', space=smem, size = 0x4, offset = 0x4, fixed_abs, tag = 'smem constant byte address 0x4 - core index']
  #allocation1 [shape = 'u32[144,128]{1,0:T(1,128)}', space=vmem, size = 0x12000, scoped, tag = 'internal scratch']
  #allocation2 [shape = 'bf16[2,128,64]{2,1,0:T(16,128)(2,1)}', space=vmem, size = 0x10000, scoped, tag = 'scratch operand']
  #allocation3 [shape = 'bf16[2,128,64]{2,1,0:T(16,128)(2,1)}', space=vmem, size = 0x10000, scoped, tag = 'scratch operand']
  %s0 = inlined_call_operand.vmem [shape: bf16[2,80,16], index: 0, kind: input, shape index: {}]
  %s1 = inlined_call_operand.vmem [shape: bf16[2,16,64], index: 1, kind: input, shape index: {}]
  %s2 = inlined_call_operand.vmem [shape: f32[2,3,64], index: 2, kind: input, shape index: {}]
  %s3 = inlined_call_operand.vmem [shape: f32[64,64], index: 3, kind: input, shape index: {}]
  %s4 = inlined_call_operand.vmem [shape: f32[80,64], index: 4, kind: input, shape index: {}]
  %s5 = inlined_call_operand.vmem [shape: f32[2,8,64], index: 5, kind: input, shape index: {}]
  %s6 = inlined_call_operand.vmem [shape: bf16[16,64,16], index: 6, kind: input, shape index: {}]
  %s7 = inlined_call_operand.vmem [shape: bf16[16,16,64], index: 7, kind: input, shape index: {}]
  %s8 = inlined_call_operand.vmem [shape: bf16[16,64,64], index: 8, kind: input, shape index: {}]
  %s9 = inlined_call_operand.vmem [shape: bf16[2,64,128], index: 9, kind: input, shape index: {}]
  %s10 = inlined_call_operand.vmem [shape: bf16[2,128,64], index: 10, kind: input, shape index: {}]
  %s11 = inlined_call_operand.vmem [shape: f32[16,1,16], index: 11, kind: input, shape index: {}]
  %s12 = inlined_call_operand.vmem [shape: f32[2,12,128], index: 12, kind: input, shape index: {}]
  %s13 = inlined_call_operand.hbm [shape: f32[2,8,64], index: 13, kind: output, shape index: {}]
  %s14 = sld [smem:[#allocation0]]
  $region62: #{_lambda_.1} parent=0
    _
  %s16 = ssub.s32 1, %s14
  %s17 = scalar_select 0, %s16, %s14
  $region1: #{_lambda_.1} parent=0
    #allocation4 [shape = 'u8[8192]{0}', space=vmem, size = 0x2000, scoped, tag = 'output window, operand 0, single buffered']
    #allocation5 [shape = 's32[1]{0}', space=sflag, size = 0x4, scoped, tag = 'scoped memory for _lambda_.1']
    %18 = vsyncpa [#allocation5], 0
    // Predicated region
    $region2: #{_lambda_.1} parent=1 // pred_check
      _
    $region3: #{_lambda_.1} parent=1 // pred_check_branch
      %20 = sbr.rel (0) target = $region5
    $region4: #{_lambda_.1} parent=1 // pred_region
      _
    $region5: #{_lambda_.1} parent=1 // pred_fallthru
      _
    // Predicated region
    $region6: #{_lambda_.1} parent=1 // pred_check
      _
    $region7: #{_lambda_.1} parent=1 // pred_check_branch
      %22 = sbr.rel (0) target = $region9
    $region8: #{_lambda_.1} parent=1 // pred_region
      _
    $region9: #{_lambda_.1} parent=1 // pred_fallthru
      _
    // Predicated region
    $region10: #{_lambda_.1} parent=1 // pred_check
      _
    $region11: #{_lambda_.1} parent=1 // pred_check_branch
      %24 = sbr.rel (0) target = $region13
    $region12: #{_lambda_.1} parent=1 // pred_region
      _
    $region13: #{_lambda_.1} parent=1 // pred_fallthru
      _
    // Predicated region
    $region14: #{_lambda_.1} parent=1 // pred_check
      _
    $region15: #{_lambda_.1} parent=1 // pred_check_branch
      %26 = sbr.rel (0) target = $region17
    $region16: #{_lambda_.1} parent=1 // pred_region
      _
    $region17: #{_lambda_.1} parent=1 // pred_fallthru
      _
    // Predicated region
    $region18: #{_lambda_.1} parent=1 // pred_check
      _
    $region19: #{_lambda_.1} parent=1 // pred_check_branch
      %28 = sbr.rel (0) target = $region21
    $region20: #{_lambda_.1} parent=1 // pred_region
      _
    $region21: #{_lambda_.1} parent=1 // pred_fallthru
      _
    // Predicated region
    $region22: #{_lambda_.1} parent=1 // pred_check
      _
    $region23: #{_lambda_.1} parent=1 // pred_check_branch
      %30 = sbr.rel (0) target = $region25
    $region24: #{_lambda_.1} parent=1 // pred_region
      _
    $region25: #{_lambda_.1} parent=1 // pred_fallthru
      _
    // Predicated region
    $region26: #{_lambda_.1} parent=1 // pred_check
      _
    $region27: #{_lambda_.1} parent=1 // pred_check_branch
      %32 = sbr.rel (0) target = $region29
    $region28: #{_lambda_.1} parent=1 // pred_region
      _
    $region29: #{_lambda_.1} parent=1 // pred_fallthru
      _
    // Predicated region
    $region30: #{_lambda_.1} parent=1 // pred_check
      _
    $region31: #{_lambda_.1} parent=1 // pred_check_branch
      %34 = sbr.rel (0) target = $region33
    $region32: #{_lambda_.1} parent=1 // pred_region
      _
    $region33: #{_lambda_.1} parent=1 // pred_fallthru
      _
    // Predicated region
    $region34: #{_lambda_.1} parent=1 // pred_check
      _
    $region35: #{_lambda_.1} parent=1 // pred_check_branch
      %36 = sbr.rel (0) target = $region37
    $region36: #{_lambda_.1} parent=1 // pred_region
      _
    $region37: #{_lambda_.1} parent=1 // pred_fallthru
      _
    // Predicated region
    $region38: #{_lambda_.1} parent=1 // pred_check
      _
    $region39: #{_lambda_.1} parent=1 // pred_check_branch
      %38 = sbr.rel (0) target = $region41
    $region40: #{_lambda_.1} parent=1 // pred_region
      _
    $region41: #{_lambda_.1} parent=1 // pred_fallthru
      _
    // Predicated region
    $region42: #{_lambda_.1} parent=1 // pred_check
      _
    $region43: #{_lambda_.1} parent=1 // pred_check_branch
      %40 = sbr.rel (0) target = $region45
    $region44: #{_lambda_.1} parent=1 // pred_region
      _
    $region45: #{_lambda_.1} parent=1 // pred_fallthru
      _
    // Predicated region
    $region46: #{_lambda_.1} parent=1 // pred_check
      _
    $region47: #{_lambda_.1} parent=1 // pred_check_branch
      %42 = sbr.rel (0) target = $region49
    $region48: #{_lambda_.1} parent=1 // pred_region
      _
    $region49: #{_lambda_.1} parent=1 // pred_fallthru
      _
    // Predicated region
    $region50: #{_lambda_.1} parent=1 // pred_check
      _
    $region51: #{_lambda_.1} parent=1 // pred_check_branch
      %44 = sbr.rel (0) target = $region53
    $region52: #{_lambda_.1} parent=1 // pred_region
      _
    $region53: #{_lambda_.1} parent=1 // pred_fallthru
      _
    %vm46 = vcmask 523264
    %47 = vst.msk [vmem:[#allocation2 + $0x28] sm:$0xff] %vm46, 0
    %48 = vst.msk [vmem:[#allocation2 + $0x30] sm:$0xff] %vm46, 0
    %49 = vst.msk [vmem:[#allocation2 + $0x38] sm:$0xff] %vm46, 0
    %50 = vst.msk [vmem:[#allocation2 + $0x68] sm:$0xff] %vm46, 0
    %51 = vst.msk [vmem:[#allocation2 + $0x70] sm:$0xff] %vm46, 0
    %52 = vst.msk [vmem:[#allocation2 + $0x78] sm:$0xff] %vm46, 0
    %53 = vst.msk [vmem:[#allocation3 + $0x28] sm:$0xff] %vm46, 0
    %54 = vst.msk [vmem:[#allocation3 + $0x30] sm:$0xff] %vm46, 0
    %55 = vst.msk [vmem:[#allocation3 + $0x38] sm:$0xff] %vm46, 0
    %56 = vst.msk [vmem:[#allocation3 + $0x68] sm:$0xff] %vm46, 0
    %57 = vst.msk [vmem:[#allocation3 + $0x70] sm:$0xff] %vm46, 0
    %58 = vst.msk [vmem:[#allocation3 + $0x78] sm:$0xff] %vm46, 0
    %v59 = vld [vmem:[%s3] sm:$0xff]
    %v60 = vld [vmem:[%s3 + $0x8] sm:$0xff]
    %v61 = vld [vmem:[%s3 + $0x10] sm:$0xff]
    %v62 = vld [vmem:[%s3 + $0x18] sm:$0xff]
    %v63 = vld [vmem:[%s3 + $0x20] sm:$0xff]
    %v64 = vld [vmem:[%s3 + $0x28] sm:$0xff]
    %v65 = vld [vmem:[%s3 + $0x30] sm:$0xff]
    %v66 = vld [vmem:[%s3 + $0x38] sm:$0xff]
    %v67 = vld [vmem:[%s0] sm:$0xf]
    %v68 = vld [vmem:[%s0 + $0x4] sm:$0xf]
    %v69 = vld [vmem:[%s0 + $0x28] sm:$0xf]
    %v70 = vld [vmem:[%s0 + $0x2c] sm:$0xf]
    %v71 = vld [vmem:[%s1] sm:$0xf]
    %v72 = vld [vmem:[%s1 + $0x4] sm:$0xf]
    %v73 = vld [vmem:[%s2] sm:$0x1]
    %v74 = vlaneseq
    %v75 = vshrl.u32 %v74, 7
    %v76 = vsub.s32 0, %v75
    %v77 = vrot.slane %v73, %v76
    %v82 = vunpack.c.l.b16 %v67
    %v83 = vunpack.c.l.b16 %v68
    %v84 = vunpack.c.l.b16 %v69
    %v85 = vunpack.c.l.b16 %v70
    %v86 = vpack.c.b16 %v83, %v82
    %v87 = vpack.c.b16 %v85, %v84
    %v90 = vunpack.c.l.b16 %v71
    %v91 = vunpack.c.l.b16 %v72
    %v92 = vpack.c.b16 %v91, %v90
    %vm94 = vcmask 130048
    %v96 = vsel %vm94, %v86, 0
    %v99 = vsel %vm94, %v87, 0
    %101 = vmatprep.subr.bf16.mxu0 0
    %102 = vmatpush1.bf16.msra.mxu0 %v92
    %103 = vmatprep.subr.bf16.mxu0 0
    %104 = vmatpush1.bf16.msra.mxu0 0
    %105 = vmatprep.subr.bf16.mxu0 0
    %106 = vmatpush1.bf16.msra.mxu0 0
    %107 = vmatprep.subr.bf16.mxu0 0
    %108 = vmatpush1.bf16.msra.mxu0 0
    %109 = vmatprep.subr.bf16.mxu0 0
    %110 = vmatpush1.bf16.msra.mxu0 0
    %111 = vmatprep.subr.bf16.mxu0 0
    %112 = vmatpush1.bf16.msra.mxu0 0
    %113 = vmatprep.subr.bf16.mxu0 0
    %114 = vmatpush1.bf16.msra.mxu0 0
    %115 = vmatprep.subr.bf16.mxu0 0
    %116 = vmatpush1.bf16.msra.mxu0 0
    %117 = vmatprep.subr.bf16.mxu0 0
    %118 = vmatpush1.bf16.msra.mxu0 0
    %119 = vmatprep.subr.bf16.mxu0 0
    %120 = vmatpush1.bf16.msra.mxu0 0
    %121 = vmatprep.subr.bf16.mxu0 0
    %122 = vmatpush1.bf16.msra.mxu0 0
    %123 = vmatprep.subr.bf16.mxu0 0
    %124 = vmatpush1.bf16.msra.mxu0 0
    %125 = vmatprep.subr.bf16.mxu0 0
    %126 = vmatpush1.bf16.msra.mxu0 0
    %127 = vmatprep.subr.bf16.mxu0 0
    %128 = vmatpush1.bf16.msra.mxu0 0
    %129 = vmatprep.subr.bf16.mxu0 0
    %130 = vmatpush1.bf16.msra.mxu0 0
    %131 = vmatprep.subr.bf16.mxu0 0
    %132 = vmatpush1.bf16.msra.mxu0 0
    %133 = vmatprep.mubr.bf16.mxu0 0
    %134 = vmatmul.mubr.bf16.gmra.mrb[0].mxu0 %v96
    %v135 = vpop.f32.mrb[0].mxu0
    %v136 = vadd.f32 %v77, %v135
    %v137 = vpop.f32.mrb[0].mxu0
    %v138 = vpop.f32.mrb[0].mxu0
    %v139 = vadd.f32 %v77, %v138
    %v140 = vpop.f32.mrb[0].mxu0
    %141 = vmatprep.mubr.bf16.mxu0 0
    %142 = vmatmul.mubr.bf16.gmra.mrb[0].mxu0 %v99
    %v143 = vpop.f32.mrb[0].mxu0
    %v144 = vadd.f32 %v77, %v143
    %v145 = vpop.f32.mrb[0].mxu0
    %v146 = vpop.f32.mrb[0].mxu0
    %v147 = vadd.f32 %v77, %v146
    %v148 = vpop.f32.mrb[0].mxu0
    %149 = vdwg.mxu0
    %v150 = vsel %vm46, %v136, 0.0
    %v151 = vsel %vm46, %v139, 0.0
    %v152 = vadd.f32 %v150, %v151
    %v153 = vrot.slane %v152, 4
    %v154 = vadd.f32 %v152, %v153
    %v155 = vrot.slane %v154, 2
    %v156 = vadd.f32 %v154, %v155
    %v157 = vrot.slane %v156, 1
    %v158 = vadd.f32 %v156, %v157
    %v159 = vsel %vm46, %v144, 0.0
    %v160 = vsel %vm46, %v147, 0.0
    %v161 = vadd.f32 %v159, %v160
    %v162 = vrot.slane %v161, 4
    %v163 = vadd.f32 %v161, %v162
    %v164 = vrot.slane %v163, 2
    %v165 = vadd.f32 %v163, %v164
    %v166 = vrot.slane %v165, 1
    %v167 = vadd.f32 %v165, %v166
    %v168 = vrcp.pop 16.0
    %v169 = vmul.f32 %v158, %v168
    %v170 = vmul.f32 %v167, %v168
    %v171 = vmul.f32 %v136, %v136
    %v172 = vmul.f32 %v139, %v139
    %v173 = vmul.f32 %v144, %v144
    %v174 = vmul.f32 %v147, %v147
    %v175 = vsel %vm46, %v171, 0.0
    %v176 = vsel %vm46, %v172, 0.0
    %v177 = vadd.f32 %v175, %v176
    %v178 = vrot.slane %v177, 4
    %v179 = vadd.f32 %v177, %v178
    %v180 = vrot.slane %v179, 2
    %v181 = vadd.f32 %v179, %v180
    %v182 = vrot.slane %v181, 1
    %v183 = vadd.f32 %v181, %v182
    %v184 = vsel %vm46, %v173, 0.0
    %v185 = vsel %vm46, %v174, 0.0
    %v186 = vadd.f32 %v184, %v185
    %v187 = vrot.slane %v186, 4
    %v188 = vadd.f32 %v186, %v187
    %v189 = vrot.slane %v188, 2
    %v190 = vadd.f32 %v188, %v189
    %v191 = vrot.slane %v190, 1
    %v192 = vadd.f32 %v190, %v191
    %v193 = vmul.f32 %v183, %v168
    %v194 = vmul.f32 %v192, %v168
    %vm197 = vcmask 1041409
    %v198 = vsel %vm197, %v170, %v169
    %v199 = vsel %vm46, %v198, 0
    %201 = vmatprep.subr.mxu0 0.0
    %202 = vmatpush1.msra.mxu0 %v59
    %203 = vmatprep.subr.mxu0 0.0
    %204 = vmatpush1.msra.mxu0 %v60
    %205 = vmatprep.subr.mxu0 0.0
    %206 = vmatpush1.msra.mxu0 %v61
    %207 = vmatprep.subr.mxu0 0.0
    %208 = vmatpush1.msra.mxu0 %v62
    %209 = vmatprep.subr.mxu0 0.0
    %210 = vmatpush1.msra.mxu0 %v63
    %211 = vmatprep.subr.mxu0 0.0
    %212 = vmatpush1.msra.mxu0 %v64
    %213 = vmatprep.subr.mxu0 0.0
    %214 = vmatpush1.msra.mxu0 %v65
    %215 = vmatprep.subr.mxu0 0.0
    %216 = vmatpush1.msra.mxu0 %v66
    %217 = vmatprep.subr.mxu0 0.0
    %218 = vmatpush1.msra.mxu0 0.0
    %219 = vmatprep.subr.mxu0 0.0
    %220 = vmatpush1.msra.mxu0 0.0
    %221 = vmatprep.subr.mxu0 0.0
    %222 = vmatpush1.msra.mxu0 0.0
    %223 = vmatprep.subr.mxu0 0.0
    %224 = vmatpush1.msra.mxu0 0.0
    %225 = vmatprep.subr.mxu0 0.0
    %226 = vmatpush1.msra.mxu0 0.0
    %227 = vmatprep.subr.mxu0 0.0
    %228 = vmatpush1.msra.mxu0 0.0
    %229 = vmatprep.subr.mxu0 0.0
    %230 = vmatpush1.msra.mxu0 0.0
    %231 = vmatprep.subr.mxu0 0.0
    %232 = vmatpush1.msra.mxu0 0.0
    %233 = vmatprep.subr.mxu0 0.0
    %234 = vmatpush1.msra.mxu0 0.0
    %235 = vmatprep.subr.mxu0 0.0
    %236 = vmatpush1.msra.mxu0 0.0
    %237 = vmatprep.subr.mxu0 0.0
    %238 = vmatpush1.msra.mxu0 0.0
    %239 = vmatprep.subr.mxu0 0.0
    %240 = vmatpush1.msra.mxu0 0.0
    %241 = vmatprep.subr.mxu0 0.0
    %242 = vmatpush1.msra.mxu0 0.0
    %243 = vmatprep.subr.mxu0 0.0
    %244 = vmatpush1.msra.mxu0 0.0
    %245 = vmatprep.subr.mxu0 0.0
    %246 = vmatpush1.msra.mxu0 0.0
    %247 = vmatprep.subr.mxu0 0.0
    %248 = vmatpush1.msra.mxu0 0.0
    %249 = vmatprep.subr.mxu0 0.0
    %250 = vmatpush1.msra.mxu0 0.0
    %251 = vmatprep.subr.mxu0 0.0
    %252 = vmatpush1.msra.mxu0 0.0
    %253 = vmatprep.subr.mxu0 0.0
    %254 = vmatpush1.msra.mxu0 0.0
    %255 = vmatprep.subr.mxu0 0.0
    %256 = vmatpush1.msra.mxu0 0.0
    %257 = vmatprep.subr.mxu0 0.0
    %258 = vmatpush1.msra.mxu0 0.0
    %259 = vmatprep.subr.mxu0 0.0
    %260 = vmatpush1.msra.mxu0 0.0
    %261 = vmatprep.subr.mxu0 0.0
    %262 = vmatpush1.msra.mxu0 0.0
    %263 = vmatprep.subr.mxu0 0.0
    %264 = vmatpush1.msra.mxu0 0.0
    %265 = vmatprep.mubr.f32.mxu0 0.0
    %266 = vmatmul.mubr.f32.gmra.mrb[0].mxu0 %v199
    %v267 = vpop.f32.mrb[0].mxu0
    %v268 = vadd.f32 0.0, %v267
    %v269 = vpop.f32.mrb[0].mxu0
    %270 = vdwg.mxu0
    %v273 = vunpack.c.l.s4 1966171168
    %v274 = vunpack.c.0.s8 %v273
    %v275 = vlaneseq
    %v276 = vshrl.u32 %v275, 7
    %v277 = vsub.s32 %v274, %v276
    %v278 = vrot.slane %v268, %v277
    %v279 = vcombine.high %v278, %v278
    %v281 = vunpack.c.l.s4 1966171168
    %v282 = vunpack.c.0.s8 %v281
    %v283 = vlaneseq
    %v284 = vshrl.u32 %v283, 7
    %v285 = vsub.s32 %v282, %v284
    %v286 = vrot.slane %v278, %v285
    %v288 = vunpack.c.l.s4 1966171168
    %v289 = vunpack.c.0.s8 %v288
    %v290 = vlaneseq
    %v291 = vshrl.u32 %v290, 7
    %v292 = vsub.s32 %v289, %v291
    %v293 = vrot.slane %v279, %v292
    %v298 = vsel %vm197, %v194, %v193
    %v299 = vsel %vm46, %v298, 0
    %301 = vmatprep.subr.mxu0 0.0
    %302 = vmatpush1.msra.mxu0 %v59
    %303 = vmatprep.subr.mxu0 0.0
    %304 = vmatpush1.msra.mxu0 %v60
    %305 = vmatprep.subr.mxu0 0.0
    %306 = vmatpush1.msra.mxu0 %v61
    %307 = vmatprep.subr.mxu0 0.0
    %308 = vmatpush1.msra.mxu0 %v62
    %309 = vmatprep.subr.mxu0 0.0
    %310 = vmatpush1.msra.mxu0 %v63
    %311 = vmatprep.subr.mxu0 0.0
    %312 = vmatpush1.msra.mxu0 %v64
    %313 = vmatprep.subr.mxu0 0.0
    %314 = vmatpush1.msra.mxu0 %v65
    %315 = vmatprep.subr.mxu0 0.0
    %316 = vmatpush1.msra.mxu0 %v66
    %317 = vmatprep.subr.mxu0 0.0
    %318 = vmatpush1.msra.mxu0 0.0
    %319 = vmatprep.subr.mxu0 0.0
    %320 = vmatpush1.msra.mxu0 0.0
    %321 = vmatprep.subr.mxu0 0.0
    %322 = vmatpush1.msra.mxu0 0.0
    %323 = vmatprep.subr.mxu0 0.0
    %324 = vmatpush1.msra.mxu0 0.0
    %325 = vmatprep.subr.mxu0 0.0
    %326 = vmatpush1.msra.mxu0 0.0
    %327 = vmatprep.subr.mxu0 0.0
    %328 = vmatpush1.msra.mxu0 0.0
    %329 = vmatprep.subr.mxu0 0.0
    %330 = vmatpush1.msra.mxu0 0.0
    %331 = vmatprep.subr.mxu0 0.0
    %332 = vmatpush1.msra.mxu0 0.0
    %333 = vmatprep.subr.mxu0 0.0
    %334 = vmatpush1.msra.mxu0 0.0
    %335 = vmatprep.subr.mxu0 0.0
    %336 = vmatpush1.msra.mxu0 0.0
    %337 = vmatprep.subr.mxu0 0.0
    %338 = vmatpush1.msra.mxu0 0.0
    %339 = vmatprep.subr.mxu0 0.0
    %340 = vmatpush1.msra.mxu0 0.0
    %341 = vmatprep.subr.mxu0 0.0
    %342 = vmatpush1.msra.mxu0 0.0
    %343 = vmatprep.subr.mxu0 0.0
    %344 = vmatpush1.msra.mxu0 0.0
    %345 = vmatprep.subr.mxu0 0.0
    %346 = vmatpush1.msra.mxu0 0.0
    %347 = vmatprep.subr.mxu0 0.0
    %348 = vmatpush1.msra.mxu0 0.0
    %349 = vmatprep.subr.mxu0 0.0
    %350 = vmatpush1.msra.mxu0 0.0
    %351 = vmatprep.subr.mxu0 0.0
    %352 = vmatpush1.msra.mxu0 0.0
    %353 = vmatprep.subr.mxu0 0.0
    %354 = vmatpush1.msra.mxu0 0.0
    %355 = vmatprep.subr.mxu0 0.0
    %356 = vmatpush1.msra.mxu0 0.0
    %357 = vmatprep.subr.mxu0 0.0
    %358 = vmatpush1.msra.mxu0 0.0
    %359 = vmatprep.subr.mxu0 0.0
    %360 = vmatpush1.msra.mxu0 0.0
    %361 = vmatprep.subr.mxu0 0.0
    %362 = vmatpush1.msra.mxu0 0.0
    %363 = vmatprep.subr.mxu0 0.0
    %364 = vmatpush1.msra.mxu0 0.0
    %365 = vmatprep.mubr.f32.mxu0 0.0
    %366 = vmatmul.mubr.f32.gmra.mrb[0].mxu0 %v299
    %v367 = vpop.f32.mrb[0].mxu0
    %v368 = vadd.f32 0.0, %v367
    %v369 = vpop.f32.mrb[0].mxu0
    %370 = vdwg.mxu0
    %v373 = vunpack.c.l.s4 1966171168
    %v374 = vunpack.c.0.s8 %v373
    %v375 = vlaneseq
    %v376 = vshrl.u32 %v375, 7
    %v377 = vsub.s32 %v374, %v376
    %v378 = vrot.slane %v368, %v377
    %v379 = vcombine.high %v378, %v378
    %v381 = vunpack.c.l.s4 1966171168
    %v382 = vunpack.c.0.s8 %v381
    %v383 = vlaneseq
    %v384 = vshrl.u32 %v383, 7
    %v385 = vsub.s32 %v382, %v384
    %v386 = vrot.slane %v378, %v385
    %v388 = vunpack.c.l.s4 1966171168
    %v389 = vunpack.c.0.s8 %v388
    %v390 = vlaneseq
    %v391 = vshrl.u32 %v390, 7
    %v392 = vsub.s32 %v389, %v391
    %v393 = vrot.slane %v379, %v392
    %v396 = vmul.f32 %v286, %v286
    %v397 = vmul.f32 %v293, %v293
    %v398 = vsub.f32 %v386, %v396
    %v399 = vsub.f32 %v393, %v397
    %v400 = vmax.f32 %v398, 0.0
    %v401 = vmax.f32 %v399, 0.0
    %v402 = vlaneseq
    %v403 = vshrl.u32 %v402, 7
    %v404 = vsub.s32 0, %v403
    %v405 = vrot.slane %v286, %v404
    %v406 = vlaneseq
    %v407 = vshrl.u32 %v406, 7
    %v408 = vsub.s32 0, %v407
    %v409 = vrot.slane %v293, %v408
    %v412 = vsub.f32 %v136, %v405
    %v413 = vsub.f32 %v139, %v405
    %v414 = vsub.f32 %v144, %v409
    %v415 = vsub.f32 %v147, %v409
    %v416 = vadd.f32 %v400, 1e-05
    %v417 = vadd.f32 %v401, 1e-05
    %v418 = vrsqrt.pop %v416
    %v419 = vrsqrt.pop %v417
    %v422 = vlaneseq
    %v423 = vshrl.u32 %v422, 7
    %v424 = vsub.s32 0, %v423
    %v425 = vrot.slane %v418, %v424
    %v426 = vlaneseq
    %v427 = vshrl.u32 %v426, 7
    %v428 = vsub.s32 0, %v427
    %v429 = vrot.slane %v419, %v428
    %v432 = vmul.f32 %v412, %v425
    %v433 = vmul.f32 %v413, %v425
    %v434 = vmul.f32 %v414, %v429
    %v435 = vmul.f32 %v415, %v429
    %v436 = vld [vmem:[%s2 + $0x1] sm:$0x1]
    %v437 = vlaneseq
    %v438 = vshrl.u32 %v437, 7
    %v439 = vsub.s32 0, %v438
    %v440 = vrot.slane %v436, %v439
    %v441 = vmul.f32 %v432, %v440
    %v442 = vmul.f32 %v433, %v440
    %v443 = vmul.f32 %v434, %v440
    %v444 = vmul.f32 %v435, %v440
    %v445 = vld [vmem:[%s2 + $0x2] sm:$0x1]
    %v446 = vlaneseq
    %v447 = vshrl.u32 %v446, 7
    %v448 = vsub.s32 0, %v447
    %v449 = vrot.slane %v445, %v448
    %v450 = vadd.f32 %v441, %v449
    %v451 = vadd.f32 %v442, %v449
    %v452 = vadd.f32 %v443, %v449
    %v453 = vadd.f32 %v444, %v449
    %v454 = vpack.c.bf16 %v451, %v450
    %v455 = vpack.c.bf16 %v453, %v452
    %456 = vst.msk [vmem:[#allocation2] sm:$0xff] %vm46, %v454
    %457 = vst.msk [vmem:[#allocation2 + $0x40] sm:$0xff] %vm46, %v455
    %v458 = vld [vmem:[%s4] sm:$0xff]
    %v459 = vld [vmem:[%s4 + $0x8] sm:$0xff]
    %v460 = vadd.f32 %v450, %v458
    %v461 = vadd.f32 %v451, %v459
    %v462 = vadd.f32 %v452, %v458
    %v463 = vadd.f32 %v453, %v459
    %v464 = vpack.c.bf16 %v461, %v460
    %v465 = vpack.c.bf16 %v463, %v462
    %466 = vst.msk [vmem:[#allocation3] sm:$0xff] %vm46, %v464
    %467 = vst.msk [vmem:[#allocation3 + $0x40] sm:$0xff] %vm46, %v465
    %v468 = vld [vmem:[%s0 + $0x8] sm:$0xf]
    %v469 = vld [vmem:[%s0 + $0xc] sm:$0xf]
    %v470 = vld [vmem:[%s0 + $0x10] sm:$0xf]
    %v471 = vld [vmem:[%s0 + $0x14] sm:$0xf]
    %v472 = vld [vmem:[%s0 + $0x18] sm:$0xf]
    %v473 = vld [vmem:[%s0 + $0x1c] sm:$0xf]
    %v474 = vld [vmem:[%s0 + $0x20] sm:$0xf]
    %v475 = vld [vmem:[%s0 + $0x24] sm:$0xf]
    %v476 = vld [vmem:[%s0 + $0x30] sm:$0xf]
    %v477 = vld [vmem:[%s0 + $0x34] sm:$0xf]
    %v478 = vld [vmem:[%s0 + $0x38] sm:$0xf]
    %v479 = vld [vmem:[%s0 + $0x3c] sm:$0xf]
    %v480 = vld [vmem:[%s0 + $0x40] sm:$0xf]
    %v481 = vld [vmem:[%s0 + $0x44] sm:$0xf]
    %v482 = vld [vmem:[%s0 + $0x48] sm:$0xf]
    %v483 = vld [vmem:[%s0 + $0x4c] sm:$0xf]
    %s484 = scalar_lea.vmem %s1, 8
    %v485 = vld [vmem:[%s484] sm:$0xf]
    %v486 = vld [vmem:[%s484 + $0x4] sm:$0xf]
    %s487 = scalar_lea.vmem %s2, 4
    %v488 = vld [vmem:[%s487] sm:$0x1]
    %v489 = vlaneseq
    %v490 = vshrl.u32 %v489, 7
    %v491 = vsub.s32 0, %v490
    %v492 = vrot.slane %v488, %v491
    %v509 = vunpack.c.l.b16 %v468
    %v510 = vunpack.c.l.b16 %v469
    %v511 = vunpack.c.l.b16 %v470
    %v512 = vunpack.c.l.b16 %v471
    %v513 = vunpack.c.l.b16 %v472
    %v514 = vunpack.c.l.b16 %v473
    %v515 = vunpack.c.l.b16 %v474
    %v516 = vunpack.c.l.b16 %v475
    %v517 = vunpack.c.l.b16 %v476
    %v518 = vunpack.c.l.b16 %v477
    %v519 = vunpack.c.l.b16 %v478
    %v520 = vunpack.c.l.b16 %v479
    %v521 = vunpack.c.l.b16 %v480
    %v522 = vunpack.c.l.b16 %v481
    %v523 = vunpack.c.l.b16 %v482
    %v524 = vunpack.c.l.b16 %v483
    %v525 = vpack.c.b16 %v510, %v509
    %v526 = vpack.c.b16 %v512, %v511
    %v527 = vpack.c.b16 %v514, %v513
    %v528 = vpack.c.b16 %v516, %v515
    %v529 = vpack.c.b16 %v518, %v517
    %v530 = vpack.c.b16 %v520, %v519
    %v531 = vpack.c.b16 %v522, %v521
    %v532 = vpack.c.b16 %v524, %v523
    %v535 = vunpack.c.l.b16 %v485
    %v536 = vunpack.c.l.b16 %v486
    %v537 = vpack.c.b16 %v536, %v535
    %v540 = vsel %vm94, %v525, 0
    %v543 = vsel %vm94, %v526, 0
    %v546 = vsel %vm94, %v527, 0
    %v549 = vsel %vm94, %v528, 0
    %v552 = vsel %vm94, %v529, 0
    %v555 = vsel %vm94, %v530, 0
    %v558 = vsel %vm94, %v531, 0
    %v561 = vsel %vm94, %v532, 0
    %563 = vmatprep.subr.bf16.mxu0 0
    %564 = vmatpush1.bf16.msra.mxu0 %v537
    %565 = vmatprep.subr.bf16.mxu0 0
    %566 = vmatpush1.bf16.msra.mxu0 0
    %567 = vmatprep.subr.bf16.mxu0 0
    %568 = vmatpush1.bf16.msra.mxu0 0
    %569 = vmatprep.subr.bf16.mxu0 0
    %570 = vmatpush1.bf16.msra.mxu0 0
    %571 = vmatprep.subr.bf16.mxu0 0
    %572 = vmatpush1.bf16.msra.mxu0 0
    %573 = vmatprep.subr.bf16.mxu0 0
    %574 = vmatpush1.bf16.msra.mxu0 0
    %575 = vmatprep.subr.bf16.mxu0 0
    %576 = vmatpush1.bf16.msra.mxu0 0
    %577 = vmatprep.subr.bf16.mxu0 0
    %578 = vmatpush1.bf16.msra.mxu0 0
    %579 = vmatprep.subr.bf16.mxu0 0
    %580 = vmatpush1.bf16.msra.mxu0 0
    %581 = vmatprep.subr.bf16.mxu0 0
    %582 = vmatpush1.bf16.msra.mxu0 0
    %583 = vmatprep.subr.bf16.mxu0 0
    %584 = vmatpush1.bf16.msra.mxu0 0
    %585 = vmatprep.subr.bf16.mxu0 0
    %586 = vmatpush1.bf16.msra.mxu0 0
    %587 = vmatprep.subr.bf16.mxu0 0
    %588 = vmatpush1.bf16.msra.mxu0 0
    %589 = vmatprep.subr.bf16.mxu0 0
    %590 = vmatpush1.bf16.msra.mxu0 0
    %591 = vmatprep.subr.bf16.mxu0 0
    %592 = vmatpush1.bf16.msra.mxu0 0
    %593 = vmatprep.subr.bf16.mxu0 0
    %594 = vmatpush1.bf16.msra.mxu0 0
    %595 = vmatprep.mubr.bf16.mxu0 0
    %596 = vmatmul.mubr.bf16.gmra.mrb[0].mxu0 %v540
    %v597 = vpop.f32.mrb[0].mxu0
    %v598 = vadd.f32 %v492, %v597
    %v599 = vpop.f32.mrb[0].mxu0
    %v600 = vpop.f32.mrb[0].mxu0
    %v601 = vadd.f32 %v492, %v600
    %v602 = vpop.f32.mrb[0].mxu0
    %603 = vmatprep.mubr.bf16.mxu0 0
    %604 = vmatmul.mubr.bf16.gmra.mrb[0].mxu0 %v543
    %v605 = vpop.f32.mrb[0].mxu0
    %v606 = vadd.f32 %v492, %v605
    %v607 = vpop.f32.mrb[0].mxu0
    %v608 = vpop.f32.mrb[0].mxu0
    %v609 = vadd.f32 %v492, %v608
    %v610 = vpop.f32.mrb[0].mxu0
    %611 = vmatprep.mubr.bf16.mxu0 0
    %612 = vmatmul.mubr.bf16.gmra.mrb[0].mxu0 %v546
    %v613 = vpop.f32.mrb[0].mxu0
    %v614 = vadd.f32 %v492, %v613
    %v615 = vpop.f32.mrb[0].mxu0
    %v616 = vpop.f32.mrb[0].mxu0
    %v617 = vadd.f32 %v492, %v616
    %v618 = vpop.f32.mrb[0].mxu0
    %619 = vmatprep.mubr.bf16.mxu0 0
    %620 = vmatmul.mubr.bf16.gmra.mrb[0].mxu0 %v549
    %v621 = vpop.f32.mrb[0].mxu0
    %v622 = vadd.f32 %v492, %v621
    %v623 = vpop.f32.mrb[0].mxu0
    %v624 = vpop.f32.mrb[0].mxu0
    %v625 = vadd.f32 %v492, %v624
    %v626 = vpop.f32.mrb[0].mxu0
    %627 = vmatprep.mubr.bf16.mxu0 0
    %628 = vmatmul.mubr.bf16.gmra.mrb[0].mxu0 %v552
    %v629 = vpop.f32.mrb[0].mxu0
    %v630 = vadd.f32 %v492, %v629
    %v631 = vpop.f32.mrb[0].mxu0
    %v632 = vpop.f32.mrb[0].mxu0
    %v633 = vadd.f32 %v492, %v632
    %v634 = vpop.f32.mrb[0].mxu0
    %635 = vmatprep.mubr.bf16.mxu0 0
    %636 = vmatmul.mubr.bf16.gmra.mrb[0].mxu0 %v555
    %v637 = vpop.f32.mrb[0].mxu0
    %v638 = vadd.f32 %v492, %v637
    %v639 = vpop.f32.mrb[0].mxu0
    %v640 = vpop.f32.mrb[0].mxu0
    %v641 = vadd.f32 %v492, %v640
    %v642 = vpop.f32.mrb[0].mxu0
    %643 = vmatprep.mubr.bf16.mxu0 0
    %644 = vmatmul.mubr.bf16.gmra.mrb[0].mxu0 %v558
    %v645 = vpop.f32.mrb[0].mxu0
    %v646 = vadd.f32 %v492, %v645
    %v647 = vpop.f32.mrb[0].mxu0
    %v648 = vpop.f32.mrb[0].mxu0
    %v649 = vadd.f32 %v492, %v648
    %v650 = vpop.f32.mrb[0].mxu0
    %651 = vmatprep.mubr.bf16.mxu0 0
    %652 = vmatmul.mubr.bf16.gmra.mrb[0].mxu0 %v561
    %v653 = vpop.f32.mrb[0].mxu0
    %v654 = vadd.f32 %v492, %v653
    %v655 = vpop.f32.mrb[0].mxu0
    %v656 = vpop.f32.mrb[0].mxu0
    %v657 = vadd.f32 %v492, %v656
    %v658 = vpop.f32.mrb[0].mxu0
    %659 = vdwg.mxu0
    %v660 = vsel %vm46, %v598, 0.0
    %v661 = vsel %vm46, %v601, 0.0
    %v662 = vadd.f32 %v660, %v661
    %v663 = vsel %vm46, %v606, 0.0
    %v664 = vadd.f32 %v662, %v663
    %v665 = vsel %vm46, %v609, 0.0
    %v666 = vadd.f32 %v664, %v665
    %v667 = vsel %vm46, %v614, 0.0
    %v668 = vadd.f32 %v666, %v667
    %v669 = vsel %vm46, %v617, 0.0
    %v670 = vadd.f32 %v668, %v669
    %v671 = vsel %vm46, %v622, 0.0
    %v672 = vadd.f32 %v670, %v671
    %v673 = vsel %vm46, %v625, 0.0
    %v674 = vadd.f32 %v672, %v673
    %v675 = vrot.slane %v674, 4
    %v676 = vadd.f32 %v674, %v675
    %v677 = vrot.slane %v676, 2
    %v678 = vadd.f32 %v676, %v677
    %v679 = vrot.slane %v678, 1
    %v680 = vadd.f32 %v678, %v679
    %v681 = vsel %vm46, %v630, 0.0
    %v682 = vsel %vm46, %v633, 0.0
    %v683 = vadd.f32 %v681, %v682
    %v684 = vsel %vm46, %v638, 0.0
    %v685 = vadd.f32 %v683, %v684
    %v686 = vsel %vm46, %v641, 0.0
    %v687 = vadd.f32 %v685, %v686
    %v688 = vsel %vm46, %v646, 0.0
    %v689 = vadd.f32 %v687, %v688
    %v690 = vsel %vm46, %v649, 0.0
    %v691 = vadd.f32 %v689, %v690
    %v692 = vsel %vm46, %v654, 0.0
    %v693 = vadd.f32 %v691, %v692
    %v694 = vsel %vm46, %v657, 0.0
    %v695 = vadd.f32 %v693, %v694
    %v696 = vrot.slane %v695, 4
    %v697 = vadd.f32 %v695, %v696
    %v698 = vrot.slane %v697, 2
    %v699 = vadd.f32 %v697, %v698
    %v700 = vrot.slane %v699, 1
    %v701 = vadd.f32 %v699, %v700
    %v702 = vrcp.pop 64.0
    %v703 = vmul.f32 %v680, %v702
    %v704 = vmul.f32 %v701, %v702
    %v705 = vmul.f32 %v598, %v598
    %v706 = vmul.f32 %v601, %v601
    %v707 = vmul.f32 %v606, %v606
    %v708 = vmul.f32 %v609, %v609
    %v709 = vmul.f32 %v614, %v614
    %v710 = vmul.f32 %v617, %v617
    %v711 = vmul.f32 %v622, %v622
    %v712 = vmul.f32 %v625, %v625
    %v713 = vmul.f32 %v630, %v630
    %v714 = vmul.f32 %v633, %v633
    %v715 = vmul.f32 %v638, %v638
    %v716 = vmul.f32 %v641, %v641
    %v717 = vmul.f32 %v646, %v646
    %v718 = vmul.f32 %v649, %v649
    %v719 = vmul.f32 %v654, %v654
    %v720 = vmul.f32 %v657, %v657
    %v721 = vsel %vm46, %v705, 0.0
    %v722 = vsel %vm46, %v706, 0.0
    %v723 = vadd.f32 %v721, %v722
    %v724 = vsel %vm46, %v707, 0.0
    %v725 = vadd.f32 %v723, %v724
    %v726 = vsel %vm46, %v708, 0.0
    %v727 = vadd.f32 %v725, %v726
    %v728 = vsel %vm46, %v709, 0.0
    %v729 = vadd.f32 %v727, %v728
    %v730 = vsel %vm46, %v710, 0.0
    %v731 = vadd.f32 %v729, %v730
    %v732 = vsel %vm46, %v711, 0.0
    %v733 = vadd.f32 %v731, %v732
    %v734 = vsel %vm46, %v712, 0.0
    %v735 = vadd.f32 %v733, %v734
    %v736 = vrot.slane %v735, 4
    %v737 = vadd.f32 %v735, %v736
    %v738 = vrot.slane %v737, 2
    %v739 = vadd.f32 %v737, %v738
    %v740 = vrot.slane %v739, 1
    %v741 = vadd.f32 %v739, %v740
    %v742 = vsel %vm46, %v713, 0.0
    %v743 = vsel %vm46, %v714, 0.0
    %v744 = vadd.f32 %v742, %v743
    %v745 = vsel %vm46, %v715, 0.0
    %v746 = vadd.f32 %v744, %v745
    %v747 = vsel %vm46, %v716, 0.0
    %v748 = vadd.f32 %v746, %v747
    %v749 = vsel %vm46, %v717, 0.0
    %v750 = vadd.f32 %v748, %v749
    %v751 = vsel %vm46, %v718, 0.0
    %v752 = vadd.f32 %v750, %v751
    %v753 = vsel %vm46, %v719, 0.0
    %v754 = vadd.f32 %v752, %v753
    %v755 = vsel %vm46, %v720, 0.0
    %v756 = vadd.f32 %v754, %v755
    %v757 = vrot.slane %v756, 4
    %v758 = vadd.f32 %v756, %v757
    %v759 = vrot.slane %v758, 2
    %v760 = vadd.f32 %v758, %v759
    %v761 = vrot.slane %v760, 1
    %v762 = vadd.f32 %v760, %v761
    %v763 = vmul.f32 %v741, %v702
    %v764 = vmul.f32 %v762, %v702
    %v767 = vsel %vm197, %v704, %v703
    %v768 = vsel %vm46, %v767, 0
    %770 = vmatprep.subr.mxu0 0.0
    %771 = vmatpush1.msra.mxu0 %v59
    %772 = vmatprep.subr.mxu0 0.0
    %773 = vmatpush1.msra.mxu0 %v60
    %774 = vmatprep.subr.mxu0 0.0
    %775 = vmatpush1.msra.mxu0 %v61
    %776 = vmatprep.subr.mxu0 0.0
    %777 = vmatpush1.msra.mxu0 %v62
    %778 = vmatprep.subr.mxu0 0.0
    %779 = vmatpush1.msra.mxu0 %v63
    %780 = vmatprep.subr.mxu0 0.0
    %781 = vmatpush1.msra.mxu0 %v64
    %782 = vmatprep.subr.mxu0 0.0
    %783 = vmatpush1.msra.mxu0 %v65
    %784 = vmatprep.subr.mxu0 0.0
    %785 = vmatpush1.msra.mxu0 %v66
    %786 = vmatprep.subr.mxu0 0.0
    %787 = vmatpush1.msra.mxu0 0.0
    %788 = vmatprep.subr.mxu0 0.0
    %789 = vmatpush1.msra.mxu0 0.0
    %790 = vmatprep.subr.mxu0 0.0
    %791 = vmatpush1.msra.mxu0 0.0
    %792 = vmatprep.subr.mxu0 0.0
    %793 = vmatpush1.msra.mxu0 0.0
    %794 = vmatprep.subr.mxu0 0.0
    %795 = vmatpush1.msra.mxu0 0.0
    %796 = vmatprep.subr.mxu0 0.0
    %797 = vmatpush1.msra.mxu0 0.0
    %798 = vmatprep.subr.mxu0 0.0
    %799 = vmatpush1.msra.mxu0 0.0
    %800 = vmatprep.subr.mxu0 0.0
    %801 = vmatpush1.msra.mxu0 0.0
    %802 = vmatprep.subr.mxu0 0.0
    %803 = vmatpush1.msra.mxu0 0.0
    %804 = vmatprep.subr.mxu0 0.0
    %805 = vmatpush1.msra.mxu0 0.0
    %806 = vmatprep.subr.mxu0 0.0
    %807 = vmatpush1.msra.mxu0 0.0
    %808 = vmatprep.subr.mxu0 0.0
    %809 = vmatpush1.msra.mxu0 0.0
    %810 = vmatprep.subr.mxu0 0.0
    %811 = vmatpush1.msra.mxu0 0.0
    %812 = vmatprep.subr.mxu0 0.0
    %813 = vmatpush1.msra.mxu0 0.0
    %814 = vmatprep.subr.mxu0 0.0
    %815 = vmatpush1.msra.mxu0 0.0
    %816 = vmatprep.subr.mxu0 0.0
    %817 = vmatpush1.msra.mxu0 0.0
    %818 = vmatprep.subr.mxu0 0.0
    %819 = vmatpush1.msra.mxu0 0.0
    %820 = vmatprep.subr.mxu0 0.0
    %821 = vmatpush1.msra.mxu0 0.0
    %822 = vmatprep.subr.mxu0 0.0
    %823 = vmatpush1.msra.mxu0 0.0
    %824 = vmatprep.subr.mxu0 0.0
    %825 = vmatpush1.msra.mxu0 0.0
    %826 = vmatprep.subr.mxu0 0.0
    %827 = vmatpush1.msra.mxu0 0.0
    %828 = vmatprep.subr.mxu0 0.0
    %829 = vmatpush1.msra.mxu0 0.0
    %830 = vmatprep.subr.mxu0 0.0
    %831 = vmatpush1.msra.mxu0 0.0
    %832 = vmatprep.subr.mxu0 0.0
    %833 = vmatpush1.msra.mxu0 0.0
    %834 = vmatprep.mubr.f32.mxu0 0.0
    %835 = vmatmul.mubr.f32.gmra.mrb[0].mxu0 %v768
    %v836 = vpop.f32.mrb[0].mxu0
    %v837 = vadd.f32 0.0, %v836
    %v838 = vpop.f32.mrb[0].mxu0
    %839 = vdwg.mxu0
    %v842 = vunpack.c.l.s4 1966171168
    %v843 = vunpack.c.0.s8 %v842
    %v844 = vlaneseq
    %v845 = vshrl.u32 %v844, 7
    %v846 = vsub.s32 %v843, %v845
    %v847 = vrot.slane %v837, %v846
    %v848 = vcombine.high %v847, %v847
    %v850 = vunpack.c.l.s4 1966171168
    %v851 = vunpack.c.0.s8 %v850
    %v852 = vlaneseq
    %v853 = vshrl.u32 %v852, 7
    %v854 = vsub.s32 %v851, %v853
    %v855 = vrot.slane %v847, %v854
    %v857 = vunpack.c.l.s4 1966171168
    %v858 = vunpack.c.0.s8 %v857
    %v859 = vlaneseq
    %v860 = vshrl.u32 %v859, 7
    %v861 = vsub.s32 %v858, %v860
    %v862 = vrot.slane %v848, %v861
    %v867 = vsel %vm197, %v764, %v763
    %v868 = vsel %vm46, %v867, 0
    %870 = vmatprep.subr.mxu0 0.0
    %871 = vmatpush1.msra.mxu0 %v59
    %872 = vmatprep.subr.mxu0 0.0
    %873 = vmatpush1.msra.mxu0 %v60
    %874 = vmatprep.subr.mxu0 0.0
    %875 = vmatpush1.msra.mxu0 %v61
    %876 = vmatprep.subr.mxu0 0.0
    %877 = vmatpush1.msra.mxu0 %v62
    %878 = vmatprep.subr.mxu0 0.0
    %879 = vmatpush1.msra.mxu0 %v63
    %880 = vmatprep.subr.mxu0 0.0
    %881 = vmatpush1.msra.mxu0 %v64
    %882 = vmatprep.subr.mxu0 0.0
    %883 = vmatpush1.msra.mxu0 %v65
    %884 = vmatprep.subr.mxu0 0.0
    %885 = vmatpush1.msra.mxu0 %v66
    %886 = vmatprep.subr.mxu0 0.0
    %887 = vmatpush1.msra.mxu0 0.0
    %888 = vmatprep.subr.mxu0 0.0
    %889 = vmatpush1.msra.mxu0 0.0
    %890 = vmatprep.subr.mxu0 0.0
    %891 = vmatpush1.msra.mxu0 0.0
    %892 = vmatprep.subr.mxu0 0.0
    %893 = vmatpush1.msra.mxu0 0.0
    %894 = vmatprep.subr.mxu0 0.0
    %895 = vmatpush1.msra.mxu0 0.0
    %896 = vmatprep.subr.mxu0 0.0
    %897 = vmatpush1.msra.mxu0 0.0
    %898 = vmatprep.subr.mxu0 0.0
    %899 = vmatpush1.msra.mxu0 0.0
    %900 = vmatprep.subr.mxu0 0.0
    %901 = vmatpush1.msra.mxu0 0.0
    %902 = vmatprep.subr.mxu0 0.0
    %903 = vmatpush1.msra.mxu0 0.0
    %904 = vmatprep.subr.mxu0 0.0
    %905 = vmatpush1.msra.mxu0 0.0
    %906 = vmatprep.subr.mxu0 0.0
    %907 = vmatpush1.msra.mxu0 0.0
    %908 = vmatprep.subr.mxu0 0.0
    %909 = vmatpush1.msra.mxu0 0.0
    %910 = vmatprep.subr.mxu0 0.0
    %911 = vmatpush1.msra.mxu0 0.0
    %912 = vmatprep.subr.mxu0 0.0
    %913 = vmatpush1.msra.mxu0 0.0
    %914 = vmatprep.subr.mxu0 0.0
    %915 = vmatpush1.msra.mxu0 0.0
    %916 = vmatprep.subr.mxu0 0.0
    %917 = vmatpush1.msra.mxu0 0.0
    %918 = vmatprep.subr.mxu0 0.0
    %919 = vmatpush1.msra.mxu0 0.0
    %920 = vmatprep.subr.mxu0 0.0
    %921 = vmatpush1.msra.mxu0 0.0
    %922 = vmatprep.subr.mxu0 0.0
    %923 = vmatpush1.msra.mxu0 0.0
    %924 = vmatprep.subr.mxu0 0.0
    %925 = vmatpush1.msra.mxu0 0.0
    %926 = vmatprep.subr.mxu0 0.0
    %927 = vmatpush1.msra.mxu0 0.0
    %928 = vmatprep.subr.mxu0 0.0
    %929 = vmatpush1.msra.mxu0 0.0
    %930 = vmatprep.subr.mxu0 0.0
    %931 = vmatpush1.msra.mxu0 0.0
    %932 = vmatprep.subr.mxu0 0.0
    %933 = vmatpush1.msra.mxu0 0.0
    %934 = vmatprep.mubr.f32.mxu0 0.0
    %935 = vmatmul.mubr.f32.gmra.mrb[0].mxu0 %v868
    %v936 = vpop.f32.mrb[0].mxu0
    %v937 = vadd.f32 0.0, %v936
    %v938 = vpop.f32.mrb[0].mxu0
    %939 = vdwg.mxu0
    %v942 = vunpack.c.l.s4 1966171168
    %v943 = vunpack.c.0.s8 %v942
    %v944 = vlaneseq
    %v945 = vshrl.u32 %v944, 7
    %v946 = vsub.s32 %v943, %v945
    %v947 = vrot.slane %v937, %v946
    %v948 = vcombine.high %v947, %v947
    %v950 = vunpack.c.l.s4 1966171168
    %v951 = vunpack.c.0.s8 %v950
    %v952 = vlaneseq
    %v953 = vshrl.u32 %v952, 7
    %v954 = vsub.s32 %v951, %v953
    %v955 = vrot.slane %v947, %v954
    %v957 = vunpack.c.l.s4 1966171168
    %v958 = vunpack.c.0.s8 %v957
    %v959 = vlaneseq
    %v960 = vshrl.u32 %v959, 7
    %v961 = vsub.s32 %v958, %v960
    %v962 = vrot.slane %v948, %v961
    %v965 = vmul.f32 %v855, %v855
    %v966 = vmul.f32 %v862, %v862
    %v967 = vsub.f32 %v955, %v965
    %v968 = vsub.f32 %v962, %v966
    %v969 = vmax.f32 %v967, 0.0
    %v970 = vmax.f32 %v968, 0.0
    %v971 = vlaneseq
    %v972 = vshrl.u32 %v971, 7
    %v973 = vsub.s32 0, %v972
    %v974 = vrot.slane %v855, %v973
    %v975 = vlaneseq
    %v976 = vshrl.u32 %v975, 7
    %v977 = vsub.s32 0, %v976
    %v978 = vrot.slane %v862, %v977
    %v981 = vsub.f32 %v598, %v974
    %v982 = vsub.f32 %v601, %v974
    %v983 = vsub.f32 %v606, %v974
    %v984 = vsub.f32 %v609, %v974
    %v985 = vsub.f32 %v614, %v974
    %v986 = vsub.f32 %v617, %v974
    %v987 = vsub.f32 %v622, %v974
    %v988 = vsub.f32 %v625, %v974
    %v989 = vsub.f32 %v630, %v978
    %v990 = vsub.f32 %v633, %v978
    %v991 = vsub.f32 %v638, %v978
    %v992 = vsub.f32 %v641, %v978
    %v993 = vsub.f32 %v646, %v978
    %v994 = vsub.f32 %v649, %v978
    %v995 = vsub.f32 %v654, %v978
    %v996 = vsub.f32 %v657, %v978
    %v997 = vadd.f32 %v969, 1e-05
    %v998 = vadd.f32 %v970, 1e-05
    %v999 = vrsqrt.pop %v997
    %v1000 = vrsqrt.pop %v998
    %v1003 = vlaneseq
    %v1004 = vshrl.u32 %v1003, 7
    %v1005 = vsub.s32 0, %v1004
    %v1006 = vrot.slane %v999, %v1005
    %v1007 = vlaneseq
    %v1008 = vshrl.u32 %v1007, 7
    %v1009 = vsub.s32 0, %v1008
    %v1010 = vrot.slane %v1000, %v1009
    %v1013 = vmul.f32 %v981, %v1006
    %v1014 = vmul.f32 %v982, %v1006
    %v1015 = vmul.f32 %v983, %v1006
    %v1016 = vmul.f32 %v984, %v1006
    %v1017 = vmul.f32 %v985, %v1006
    %v1018 = vmul.f32 %v986, %v1006
    %v1019 = vmul.f32 %v987, %v1006
    %v1020 = vmul.f32 %v988, %v1006
    %v1021 = vmul.f32 %v989, %v1010
    %v1022 = vmul.f32 %v990, %v1010
    %v1023 = vmul.f32 %v991, %v1010
    %v1024 = vmul.f32 %v992, %v1010
    %v1025 = vmul.f32 %v993, %v1010
    %v1026 = vmul.f32 %v994, %v1010
    %v1027 = vmul.f32 %v995, %v1010
    %v1028 = vmul.f32 %v996, %v1010
    %v1029 = vld [vmem:[%s487 + $0x1] sm:$0x1]
    %v1030 = vlaneseq
    %v1031 = vshrl.u32 %v1030, 7
    %v1032 = vsub.s32 0, %v1031
    %v1033 = vrot.slane %v1029, %v1032
    %v1034 = vmul.f32 %v1013, %v1033
    %v1035 = vmul.f32 %v1014, %v1033
    %v1036 = vmul.f32 %v1015, %v1033
    %v1037 = vmul.f32 %v1016, %v1033
    %v1038 = vmul.f32 %v1017, %v1033
    %v1039 = vmul.f32 %v1018, %v1033
    %v1040 = vmul.f32 %v1019, %v1033
    %v1041 = vmul.f32 %v1020, %v1033
    %v1042 = vmul.f32 %v1021, %v1033
    %v1043 = vmul.f32 %v1022, %v1033
    %v1044 = vmul.f32 %v1023, %v1033
    %v1045 = vmul.f32 %v1024, %v1033
    %v1046 = vmul.f32 %v1025, %v1033
    %v1047 = vmul.f32 %v1026, %v1033
    %v1048 = vmul.f32 %v1027, %v1033
    %v1049 = vmul.f32 %v1028, %v1033
    %v1050 = vld [vmem:[%s487 + $0x2] sm:$0x1]
    %v1051 = vlaneseq
    %v1052 = vshrl.u32 %v1051, 7
    %v1053 = vsub.s32 0, %v1052
    %v1054 = vrot.slane %v1050, %v1053
    %v1055 = vadd.f32 %v1034, %v1054
    %v1056 = vadd.f32 %v1035, %v1054
    %v1057 = vadd.f32 %v1036, %v1054
    %v1058 = vadd.f32 %v1037, %v1054
    %v1059 = vadd.f32 %v1038, %v1054
    %v1060 = vadd.f32 %v1039, %v1054
    %v1061 = vadd.f32 %v1040, %v1054
    %v1062 = vadd.f32 %v1041, %v1054
    %v1063 = vadd.f32 %v1042, %v1054
    %v1064 = vadd.f32 %v1043, %v1054
    %v1065 = vadd.f32 %v1044, %v1054
    %v1066 = vadd.f32 %v1045, %v1054
    %v1067 = vadd.f32 %v1046, %v1054
    %v1068 = vadd.f32 %v1047, %v1054
    %v1069 = vadd.f32 %v1048, %v1054
    %v1070 = vadd.f32 %v1049, %v1054
    %v1071 = vpack.c.bf16 %v1056, %v1055
    %v1072 = vpack.c.bf16 %v1058, %v1057
    %v1073 = vpack.c.bf16 %v1060, %v1059
    %v1074 = vpack.c.bf16 %v1062, %v1061
    %v1075 = vpack.c.bf16 %v1064, %v1063
    %v1076 = vpack.c.bf16 %v1066, %v1065
    %v1077 = vpack.c.bf16 %v1068, %v1067
    %v1078 = vpack.c.bf16 %v1070, %v1069
    %1079 = vst.msk [vmem:[#allocation2 + $0x8] sm:$0xff] %vm46, %v1071
    %1080 = vst.msk [vmem:[#allocation2 + $0x10] sm:$0xff] %vm46, %v1072
    %1081 = vst.msk [vmem:[#allocation2 + $0x18] sm:$0xff] %vm46, %v1073
    %1082 = vst.msk [vmem:[#allocation2 + $0x20] sm:$0xff] %vm46, %v1074
    %1083 = vst.msk [vmem:[#allocation2 + $0x48] sm:$0xff] %vm46, %v1075
    %1084 = vst.msk [vmem:[#allocation2 + $0x50] sm:$0xff] %vm46, %v1076
    %1085 = vst.msk [vmem:[#allocation2 + $0x58] sm:$0xff] %vm46, %v1077
    %1086 = vst.msk [vmem:[#allocation2 + $0x60] sm:$0xff] %vm46, %v1078
    %v1087 = vld [vmem:[%s4 + $0x10] sm:$0xff]
    %v1088 = vld [vmem:[%s4 + $0x18] sm:$0xff]
    %v1089 = vld [vmem:[%s4 + $0x20] sm:$0xff]
    %v1090 = vld [vmem:[%s4 + $0x28] sm:$0xff]
    %v1091 = vld [vmem:[%s4 + $0x30] sm:$0xff]
    %v1092 = vld [vmem:[%s4 + $0x38] sm:$0xff]
    %v1093 = vld [vmem:[%s4 + $0x40] sm:$0xff]
    %v1094 = vld [vmem:[%s4 + $0x48] sm:$0xff]
    %v1095 = vadd.f32 %v1055, %v1087
    %v1096 = vadd.f32 %v1056, %v1088
    %v1097 = vadd.f32 %v1057, %v1089
    %v1098 = vadd.f32 %v1058, %v1090
    %v1099 = vadd.f32 %v1059, %v1091
    %v1100 = vadd.f32 %v1060, %v1092
    %v1101 = vadd.f32 %v1061, %v1093
    %v1102 = vadd.f32 %v1062, %v1094
    %v1103 = vadd.f32 %v1063, %v1087
    %v1104 = vadd.f32 %v1064, %v1088
    %v1105 = vadd.f32 %v1065, %v1089
    %v1106 = vadd.f32 %v1066, %v1090
    %v1107 = vadd.f32 %v1067, %v1091
    %v1108 = vadd.f32 %v1068, %v1092
    %v1109 = vadd.f32 %v1069, %v1093
    %v1110 = vadd.f32 %v1070, %v1094
    %v1111 = vpack.c.bf16 %v1096, %v1095
    %v1112 = vpack.c.bf16 %v1098, %v1097
    %v1113 = vpack.c.bf16 %v1100, %v1099
    %v1114 = vpack.c.bf16 %v1102, %v1101
    %v1115 = vpack.c.bf16 %v1104, %v1103
    %v1116 = vpack.c.bf16 %v1106, %v1105
    %v1117 = vpack.c.bf16 %v1108, %v1107
    %v1118 = vpack.c.bf16 %v1110, %v1109
    %1119 = vst.msk [vmem:[#allocation3 + $0x8] sm:$0xff] %vm46, %v1111
    %1120 = vst.msk [vmem:[#allocation3 + $0x10] sm:$0xff] %vm46, %v1112
    %1121 = vst.msk [vmem:[#allocation3 + $0x18] sm:$0xff] %vm46, %v1113
    %1122 = vst.msk [vmem:[#allocation3 + $0x20] sm:$0xff] %vm46, %v1114
    %1123 = vst.msk [vmem:[#allocation3 + $0x48] sm:$0xff] %vm46, %v1115
    %1124 = vst.msk [vmem:[#allocation3 + $0x50] sm:$0xff] %vm46, %v1116
    %1125 = vst.msk [vmem:[#allocation3 + $0x58] sm:$0xff] %vm46, %v1117
    %1126 = vst.msk [vmem:[#allocation3 + $0x60] sm:$0xff] %vm46, %v1118
    %v1127 = vld [vmem:[#allocation2] sm:$0xff]
    %v1128 = vld [vmem:[#allocation2 + $0x8] sm:$0xff]
    %v1129 = vld [vmem:[#allocation2 + $0x10] sm:$0xff]
    %v1130 = vld [vmem:[#allocation2 + $0x18] sm:$0xff]
    %v1131 = vld [vmem:[#allocation2 + $0x20] sm:$0xff]
    %v1132 = vld [vmem:[#allocation2 + $0x28] sm:$0xff]
    %v1133 = vld [vmem:[#allocation2 + $0x30] sm:$0xff]
    %v1134 = vld [vmem:[#allocation2 + $0x38] sm:$0xff]
    %v1135 = vld [vmem:[#allocation2 + $0x40] sm:$0xff]
    %v1136 = vld [vmem:[#allocation2 + $0x48] sm:$0xff]
    %v1137 = vld [vmem:[#allocation2 + $0x50] sm:$0xff]
    %v1138 = vld [vmem:[#allocation2 + $0x58] sm:$0xff]
    %v1139 = vld [vmem:[#allocation2 + $0x60] sm:$0xff]
    %v1140 = vld [vmem:[#allocation2 + $0x68] sm:$0xff]
    %v1141 = vld [vmem:[#allocation2 + $0x70] sm:$0xff]
    %v1142 = vld [vmem:[#allocation2 + $0x78] sm:$0xff]
    %v1143 = vld [vmem:[#allocation3] sm:$0xff]
    %v1144 = vld [vmem:[#allocation3 + $0x8] sm:$0xff]
    %v1145 = vld [vmem:[#allocation3 + $0x10] sm:$0xff]
    %v1146 = vld [vmem:[#allocation3 + $0x18] sm:$0xff]
    %v1147 = vld [vmem:[#allocation3 + $0x20] sm:$0xff]
    %v1148 = vld [vmem:[#allocation3 + $0x28] sm:$0xff]
    %v1149 = vld [vmem:[#allocation3 + $0x30] sm:$0xff]
    %v1150 = vld [vmem:[#allocation3 + $0x38] sm:$0xff]
    %v1151 = vld [vmem:[#allocation3 + $0x40] sm:$0xff]
    %v1152 = vld [vmem:[#allocation3 + $0x48] sm:$0xff]
    %v1153 = vld [vmem:[#allocation3 + $0x50] sm:$0xff]
    %v1154 = vld [vmem:[#allocation3 + $0x58] sm:$0xff]
    %v1155 = vld [vmem:[#allocation3 + $0x60] sm:$0xff]
    %v1156 = vld [vmem:[#allocation3 + $0x68] sm:$0xff]
    %v1157 = vld [vmem:[#allocation3 + $0x70] sm:$0xff]
    %v1158 = vld [vmem:[#allocation3 + $0x78] sm:$0xff]
    %v1159 = vlaneseq
    %v1160 = vand.u32 %v1159, 127
    %vm1161 = vcmp.lt.s32.totalorder %v1160, 80
    %v1162 = vsel %vm1161, 1, 0
    %v1163 = vcvt.s32.f32 %v1162
    %v1164 = vld [vmem:[%s5] sm:$0xff]
    %v1165 = vld [vmem:[%s5 + $0x8] sm:$0xff]
    %v1166 = vpack.c.bf16 %v1164, %v1164
    %v1167 = vpack.c.bf16 %v1165, %v1165
    %v1168 = vld [vmem:[%s6] sm:$0xf]
    %v1169 = vld [vmem:[%s6 + $0x4] sm:$0xf]
    %v1170 = vld [vmem:[%s6 + $0x8] sm:$0xf]
    %v1171 = vld [vmem:[%s6 + $0xc] sm:$0xf]
    %v1172 = vld [vmem:[%s6 + $0x10] sm:$0xf]
    %v1173 = vld [vmem:[%s6 + $0x14] sm:$0xf]
    %v1174 = vld [vmem:[%s6 + $0x18] sm:$0xf]
    %v1175 = vld [vmem:[%s6 + $0x1c] sm:$0xf]
    %v1176 = vld [vmem:[%s11] sm:$0x1]
    %v1178 = vlaneseq
    %v1179 = vshrl.u32 %v1178, 7
    %v1180 = vsub.s32 0, %v1179
    %v1181 = vrot.slane %v1176, %v1180
    %v1185 = vunpack.c.l.b16 %v1166
    %v1186 = vunpack.c.l.b16 %v1167
    %v1187 = vpack.c.b16 %v1186, %v1185
    %v1196 = vunpack.c.l.b16 %v1168
    %v1197 = vunpack.c.l.b16 %v1169
    %v1198 = vunpack.c.l.b16 %v1170
    %v1199 = vunpack.c.l.b16 %v1171
    %v1200 = vunpack.c.l.b16 %v1172
    %v1201 = vunpack.c.l.b16 %v1173
    %v1202 = vunpack.c.l.b16 %v1174
    %v1203 = vunpack.c.l.b16 %v1175
    %v1204 = vpack.c.b16 %v1197, %v1196
    %v1205 = vpack.c.b16 %v1199, %v1198
    %v1206 = vpack.c.b16 %v1201, %v1200
    %v1207 = vpack.c.b16 %v1203, %v1202
    %v1213 = vsel %vm46, %v1187, 0
    %1215 = vmatprep.subr.bf16.mxu0 0
    %1216 = vmatpush1.bf16.msra.mxu0 %v1204
    %1217 = vmatprep.subr.bf16.mxu0 0
    %1218 = vmatpush1.bf16.msra.mxu0 %v1205
    %1219 = vmatprep.subr.bf16.mxu0 0
    %1220 = vmatpush1.bf16.msra.mxu0 %v1206
    %1221 = vmatprep.subr.bf16.mxu0 0
    %1222 = vmatpush1.bf16.msra.mxu0 %v1207
    %1223 = vmatprep.subr.bf16.mxu0 0
    %1224 = vmatpush1.bf16.msra.mxu0 0
    %1225 = vmatprep.subr.bf16.mxu0 0
    %1226 = vmatpush1.bf16.msra.mxu0 0
    %1227 = vmatprep.subr.bf16.mxu0 0
    %1228 = vmatpush1.bf16.msra.mxu0 0
    %1229 = vmatprep.subr.bf16.mxu0 0
    %1230 = vmatpush1.bf16.msra.mxu0 0
    %1231 = vmatprep.subr.bf16.mxu0 0
    %1232 = vmatpush1.bf16.msra.mxu0 0
    %1233 = vmatprep.subr.bf16.mxu0 0
    %1234 = vmatpush1.bf16.msra.mxu0 0
    %1235 = vmatprep.subr.bf16.mxu0 0
    %1236 = vmatpush1.bf16.msra.mxu0 0
    %1237 = vmatprep.subr.bf16.mxu0 0
    %1238 = vmatpush1.bf16.msra.mxu0 0
    %1239 = vmatprep.subr.bf16.mxu0 0
    %1240 = vmatpush1.bf16.msra.mxu0 0
    %1241 = vmatprep.subr.bf16.mxu0 0
    %1242 = vmatpush1.bf16.msra.mxu0 0
    %1243 = vmatprep.subr.bf16.mxu0 0
    %1244 = vmatpush1.bf16.msra.mxu0 0
    %1245 = vmatprep.subr.bf16.mxu0 0
    %1246 = vmatpush1.bf16.msra.mxu0 0
    %1247 = vmatprep.mubr.bf16.mxu0 0
    %1248 = vmatmul.mubr.bf16.gmra.mrb[0].mxu0 %v1213
    %v1249 = vpop.f32.mrb[0].mxu0
    %v1250 = vadd.f32 %v1181, %v1249
    %v1251 = vpop.f32.mrb[0].mxu0
    %v1252 = vpop.f32.mrb[0].mxu0
    %v1253 = vadd.f32 %v1181, %v1252
    %v1254 = vpop.f32.mrb[0].mxu0
    %1255 = vdwg.mxu0
    %v1256 = vpack.c.bf16 %v1250, %v1250
    %v1257 = vpack.c.bf16 %v1253, %v1253
    %v1258 = vld [vmem:[%s7] sm:$0xf]
    %v1259 = vld [vmem:[%s7 + $0x4] sm:$0xf]
    %v1262 = vunpack.c.l.b16 %v1256
    %v1263 = vunpack.c.l.b16 %v1257
    %v1264 = vpack.c.b16 %v1263, %v1262
    %v1267 = vunpack.c.l.b16 %v1258
    %v1268 = vunpack.c.l.b16 %v1259
    %v1269 = vpack.c.b16 %v1268, %v1267
    %v1272 = vsel %vm94, %v1264, 0
    %1274 = vmatprep.subr.bf16.mxu0 0
    %1275 = vmatpush1.bf16.msra.mxu0 %v1269
    %1276 = vmatprep.subr.bf16.mxu0 0
    %1277 = vmatpush1.bf16.msra.mxu0 0
    %1278 = vmatprep.subr.bf16.mxu0 0
    %1279 = vmatpush1.bf16.msra.mxu0 0
    %1280 = vmatprep.subr.bf16.mxu0 0
    %1281 = vmatpush1.bf16.msra.mxu0 0
    %1282 = vmatprep.subr.bf16.mxu0 0
    %1283 = vmatpush1.bf16.msra.mxu0 0
    %1284 = vmatprep.subr.bf16.mxu0 0
    %1285 = vmatpush1.bf16.msra.mxu0 0
    %1286 = vmatprep.subr.bf16.mxu0 0
    %1287 = vmatpush1.bf16.msra.mxu0 0
    %1288 = vmatprep.subr.bf16.mxu0 0
    %1289 = vmatpush1.bf16.msra.mxu0 0
    %1290 = vmatprep.subr.bf16.mxu0 0
    %1291 = vmatpush1.bf16.msra.mxu0 0
    %1292 = vmatprep.subr.bf16.mxu0 0
    %1293 = vmatpush1.bf16.msra.mxu0 0
    %1294 = vmatprep.subr.bf16.mxu0 0
    %1295 = vmatpush1.bf16.msra.mxu0 0
    %1296 = vmatprep.subr.bf16.mxu0 0
    %1297 = vmatpush1.bf16.msra.mxu0 0
    %1298 = vmatprep.subr.bf16.mxu0 0
    %1299 = vmatpush1.bf16.msra.mxu0 0
    %1300 = vmatprep.subr.bf16.mxu0 0
    %1301 = vmatpush1.bf16.msra.mxu0 0
    %1302 = vmatprep.subr.bf16.mxu0 0
    %1303 = vmatpush1.bf16.msra.mxu0 0
    %1304 = vmatprep.subr.bf16.mxu0 0
    %1305 = vmatpush1.bf16.msra.mxu0 0
    %1306 = vmatprep.mubr.bf16.mxu0 0
    %1307 = vmatmul.mubr.bf16.gmra.mrb[0].mxu0 %v1272
    %v1308 = vpop.f32.mrb[0].mxu0
    %v1309 = vadd.f32 0.0, %v1308
    %v1310 = vpop.f32.mrb[0].mxu0
    %v1311 = vpop.f32.mrb[0].mxu0
    %v1312 = vadd.f32 0.0, %v1311
    %v1313 = vpop.f32.mrb[0].mxu0
    %1314 = vdwg.mxu0
    %v1315 = vpack.c.bf16 %v1309, %v1309
    %v1316 = vpack.c.bf16 %v1312, %v1312
    %v1318 = vsel %vm46, %v1315, 0
    %v1321 = vsel %vm46, %v1166, 0
    %1323 = vmatprep.subr.bf16.mxu0 0
    %1324 = vmatpush1.bf16.xpose.msra.mxu0 %v1321
    %1325 = vmatprep.subr.bf16.mxu0 0
    %1326 = vmatpush1.bf16.xpose.msra.mxu0 0
    %1327 = vmatprep.subr.bf16.mxu0 0
    %1328 = vmatpush1.bf16.xpose.msra.mxu0 0
    %1329 = vmatprep.subr.bf16.mxu0 0
    %1330 = vmatpush1.bf16.xpose.msra.mxu0 0
    %1331 = vmatprep.subr.bf16.mxu0 0
    %1332 = vmatpush1.bf16.xpose.msra.mxu0 0
    %1333 = vmatprep.subr.bf16.mxu0 0
    %1334 = vmatpush1.bf16.xpose.msra.mxu0 0
    %1335 = vmatprep.subr.bf16.mxu0 0
    %1336 = vmatpush1.bf16.xpose.msra.mxu0 0
    %1337 = vmatprep.subr.bf16.mxu0 0
    %1338 = vmatpush1.bf16.xpose.msra.mxu0 0
    %1339 = vmatprep.subr.bf16.mxu0 0
    %1340 = vmatpush1.bf16.xpose.msra.mxu0 0
    %1341 = vmatprep.subr.bf16.mxu0 0
    %1342 = vmatpush1.bf16.xpose.msra.mxu0 0
    %1343 = vmatprep.subr.bf16.mxu0 0
    %1344 = vmatpush1.bf16.xpose.msra.mxu0 0
    %1345 = vmatprep.subr.bf16.mxu0 0
    %1346 = vmatpush1.bf16.xpose.msra.mxu0 0
    %1347 = vmatprep.subr.bf16.mxu0 0
    %1348 = vmatpush1.bf16.xpose.msra.mxu0 0
    %1349 = vmatprep.subr.bf16.mxu0 0
    %1350 = vmatpush1.bf16.xpose.msra.mxu0 0
    %1351 = vmatprep.subr.bf16.mxu0 0
    %1352 = vmatpush1.bf16.xpose.msra.mxu0 0
    %1353 = vmatprep.subr.bf16.mxu0 0
    %1354 = vmatpush1.bf16.xpose.msra.mxu0 0
    %1355 = vmatprep.mubr.bf16.mxu0 0
    %1356 = vmatmul.mubr.bf16.gmra.mrb[0].mxu0 %v1318
    %v1357 = vpop.f32.mrb[0].mxu0
    %v1358 = vadd.f32 0.0, %v1357
    %v1359 = vpop.f32.mrb[0].mxu0
    %v1360 = vpop.f32.mrb[0].mxu0
    %v1361 = vpop.f32.mrb[0].mxu0
    %1362 = vdwg.mxu0
    %v1364 = vsel %vm46, %v1316, 0
    %v1367 = vsel %vm46, %v1167, 0
    %1369 = vmatprep.subr.bf16.mxu0 0
    %1370 = vmatpush1.bf16.xpose.msra.mxu0 %v1367
    %1371 = vmatprep.subr.bf16.mxu0 0
    %1372 = vmatpush1.bf16.xpose.msra.mxu0 0
    %1373 = vmatprep.subr.bf16.mxu0 0
    %1374 = vmatpush1.bf16.xpose.msra.mxu0 0
    %1375 = vmatprep.subr.bf16.mxu0 0
    %1376 = vmatpush1.bf16.xpose.msra.mxu0 0
    %1377 = vmatprep.subr.bf16.mxu0 0
    %1378 = vmatpush1.bf16.xpose.msra.mxu0 0
    %1379 = vmatprep.subr.bf16.mxu0 0
    %1380 = vmatpush1.bf16.xpose.msra.mxu0 0
    %1381 = vmatprep.subr.bf16.mxu0 0
    %1382 = vmatpush1.bf16.xpose.msra.mxu0 0
    %1383 = vmatprep.subr.bf16.mxu0 0
    %1384 = vmatpush1.bf16.xpose.msra.mxu0 0
    %1385 = vmatprep.subr.bf16.mxu0 0
    %1386 = vmatpush1.bf16.xpose.msra.mxu0 0
    %1387 = vmatprep.subr.bf16.mxu0 0
    %1388 = vmatpush1.bf16.xpose.msra.mxu0 0
    %1389 = vmatprep.subr.bf16.mxu0 0
    %1390 = vmatpush1.bf16.xpose.msra.mxu0 0
    %1391 = vmatprep.subr.bf16.mxu0 0
    %1392 = vmatpush1.bf16.xpose.msra.mxu0 0
    %1393 = vmatprep.subr.bf16.mxu0 0
    %1394 = vmatpush1.bf16.xpose.msra.mxu0 0
    %1395 = vmatprep.subr.bf16.mxu0 0
    %1396 = vmatpush1.bf16.xpose.msra.mxu0 0
    %1397 = vmatprep.subr.bf16.mxu0 0
    %1398 = vmatpush1.bf16.xpose.msra.mxu0 0
    %1399 = vmatprep.subr.bf16.mxu0 0
    %1400 = vmatpush1.bf16.xpose.msra.mxu0 0
    %1401 = vmatprep.mubr.bf16.mxu0 0
    %1402 = vmatmul.mubr.bf16.gmra.mrb[0].mxu0 %v1364
    %v1403 = vpop.f32.mrb[0].mxu0
    %v1404 = vadd.f32 0.0, %v1403
    %v1405 = vpop.f32.mrb[0].mxu0
    %v1406 = vpop.f32.mrb[0].mxu0
    %v1407 = vpop.f32.mrb[0].mxu0
    %1408 = vdwg.mxu0
    %vm1409 = vcmask 64512
    %v1410 = vsel %vm1409, %v1358, -inf
    %1411 = vmax.xlane.f32.xlu0 %v1410
    %v1412 = vpop.xlane.xlu0 %1411
    %v1413 = vsel %vm1409, %v1404, -inf
    %1414 = vmax.xlane.f32.xlu0 %v1413
    %v1415 = vpop.xlane.xlu0 %1414
    %v1416 = vsub.f32 %v1358, %v1412
    %v1417 = vsub.f32 %v1404, %v1415
    %v1418 = vmul.f32 %v1416, 1.442695
    %v1419 = vpow.pop %v1418
    %v1420 = vmul.f32 %v1417, 1.442695
    %v1421 = vpow.pop %v1420
    %v1422 = vsel %vm1409, %v1419, 0.0
    %1423 = vadd.xlane.f32.xlu0 %v1422
    %v1424 = vpop.xlane.xlu0 %1423
    %v1425 = vsel %vm1409, %v1421, 0.0
    %1426 = vadd.xlane.f32.xlu0 %v1425
    %v1427 = vpop.xlane.xlu0 %1426
    %v1428 = vrcp.pop %v1424
    %v1429 = vrcp.pop %v1427
    %v1430 = vmul.f32 %v1419, %v1428
    %v1431 = vmul.f32 %v1421, %v1429
    %v1432 = vpack.c.bf16 %v1430, %v1430
    %v1433 = vpack.c.bf16 %v1431, %v1431
    %v1435 = vsel %vm1409, %v1432, 0
    %vm1437 = vcmask 1043456
    %v1438 = vsel %vm1437, %v1166, 0
    %1440 = vmatprep.subr.bf16.mxu0 0
    %1441 = vmatpush1.bf16.msra.mxu0 %v1438
    %1442 = vmatprep.subr.bf16.mxu0 0
    %1443 = vmatpush1.bf16.msra.mxu0 0
    %1444 = vmatprep.subr.bf16.mxu0 0
    %1445 = vmatpush1.bf16.msra.mxu0 0
    %1446 = vmatprep.subr.bf16.mxu0 0
    %1447 = vmatpush1.bf16.msra.mxu0 0
    %1448 = vmatprep.subr.bf16.mxu0 0
    %1449 = vmatpush1.bf16.msra.mxu0 0
    %1450 = vmatprep.subr.bf16.mxu0 0
    %1451 = vmatpush1.bf16.msra.mxu0 0
    %1452 = vmatprep.subr.bf16.mxu0 0
    %1453 = vmatpush1.bf16.msra.mxu0 0
    %1454 = vmatprep.subr.bf16.mxu0 0
    %1455 = vmatpush1.bf16.msra.mxu0 0
    %1456 = vmatprep.subr.bf16.mxu0 0
    %1457 = vmatpush1.bf16.msra.mxu0 0
    %1458 = vmatprep.subr.bf16.mxu0 0
    %1459 = vmatpush1.bf16.msra.mxu0 0
    %1460 = vmatprep.subr.bf16.mxu0 0
    %1461 = vmatpush1.bf16.msra.mxu0 0
    %1462 = vmatprep.subr.bf16.mxu0 0
    %1463 = vmatpush1.bf16.msra.mxu0 0
    %1464 = vmatprep.subr.bf16.mxu0 0
    %1465 = vmatpush1.bf16.msra.mxu0 0
    %1466 = vmatprep.subr.bf16.mxu0 0
    %1467 = vmatpush1.bf16.msra.mxu0 0
    %1468 = vmatprep.subr.bf16.mxu0 0
    %1469 = vmatpush1.bf16.msra.mxu0 0
    %1470 = vmatprep.subr.bf16.mxu0 0
    %1471 = vmatpush1.bf16.msra.mxu0 0
    %1472 = vmatprep.mubr.bf16.mxu0 0
    %1473 = vmatmul.mubr.bf16.gmra.mrb[0].mxu0 %v1435
    %v1474 = vpop.f32.mrb[0].mxu0
    %v1475 = vadd.f32 0.0, %v1474
    %v1476 = vpop.f32.mrb[0].mxu0
    %v1477 = vpop.f32.mrb[0].mxu0
    %v1478 = vpop.f32.mrb[0].mxu0
    %1479 = vdwg.mxu0
    %v1481 = vsel %vm1409, %v1433, 0
    %v1483 = vsel %vm1437, %v1167, 0
    %1485 = vmatprep.subr.bf16.mxu0 0
    %1486 = vmatpush1.bf16.msra.mxu0 %v1483
    %1487 = vmatprep.subr.bf16.mxu0 0
    %1488 = vmatpush1.bf16.msra.mxu0 0
    %1489 = vmatprep.subr.bf16.mxu0 0
    %1490 = vmatpush1.bf16.msra.mxu0 0
    %1491 = vmatprep.subr.bf16.mxu0 0
    %1492 = vmatpush1.bf16.msra.mxu0 0
    %1493 = vmatprep.subr.bf16.mxu0 0
    %1494 = vmatpush1.bf16.msra.mxu0 0
    %1495 = vmatprep.subr.bf16.mxu0 0
    %1496 = vmatpush1.bf16.msra.mxu0 0
    %1497 = vmatprep.subr.bf16.mxu0 0
    %1498 = vmatpush1.bf16.msra.mxu0 0
    %1499 = vmatprep.subr.bf16.mxu0 0
    %1500 = vmatpush1.bf16.msra.mxu0 0
    %1501 = vmatprep.subr.bf16.mxu0 0
    %1502 = vmatpush1.bf16.msra.mxu0 0
    %1503 = vmatprep.subr.bf16.mxu0 0
    %1504 = vmatpush1.bf16.msra.mxu0 0
    %1505 = vmatprep.subr.bf16.mxu0 0
    %1506 = vmatpush1.bf16.msra.mxu0 0
    %1507 = vmatprep.subr.bf16.mxu0 0
    %1508 = vmatpush1.bf16.msra.mxu0 0
    %1509 = vmatprep.subr.bf16.mxu0 0
    %1510 = vmatpush1.bf16.msra.mxu0 0
    %1511 = vmatprep.subr.bf16.mxu0 0
    %1512 = vmatpush1.bf16.msra.mxu0 0
    %1513 = vmatprep.subr.bf16.mxu0 0
    %1514 = vmatpush1.bf16.msra.mxu0 0
    %1515 = vmatprep.subr.bf16.mxu0 0
    %1516 = vmatpush1.bf16.msra.mxu0 0
    %1517 = vmatprep.mubr.bf16.mxu0 0
    %1518 = vmatmul.mubr.bf16.gmra.mrb[0].mxu0 %v1481
    %v1519 = vpop.f32.mrb[0].mxu0
    %v1520 = vadd.f32 0.0, %v1519
    %v1521 = vpop.f32.mrb[0].mxu0
    %v1522 = vpop.f32.mrb[0].mxu0
    %v1523 = vpop.f32.mrb[0].mxu0
    %1524 = vdwg.mxu0
    %v1525 = vpack.c.bf16 %v1475, %v1475
    %v1526 = vpack.c.bf16 %v1520, %v1520
    %v1527 = vld [vmem:[%s8] sm:$0xf]
    %v1528 = vld [vmem:[%s8 + $0x4] sm:$0xf]
    %v1529 = vld [vmem:[%s8 + $0x8] sm:$0xf]
    %v1530 = vld [vmem:[%s8 + $0xc] sm:$0xf]
    %v1531 = vld [vmem:[%s8 + $0x10] sm:$0xf]
    %v1532 = vld [vmem:[%s8 + $0x14] sm:$0xf]
    %v1533 = vld [vmem:[%s8 + $0x18] sm:$0xf]
    %v1534 = vld [vmem:[%s8 + $0x1c] sm:$0xf]
    %s1535 = scalar_lea.vmem %s6, 32
    %v1536 = vld [vmem:[%s1535] sm:$0xf]
    %v1537 = vld [vmem:[%s1535 + $0x4] sm:$0xf]
    %v1538 = vld [vmem:[%s1535 + $0x8] sm:$0xf]
    %v1539 = vld [vmem:[%s1535 + $0xc] sm:$0xf]
    %v1540 = vld [vmem:[%s1535 + $0x10] sm:$0xf]
    %v1541 = vld [vmem:[%s1535 + $0x14] sm:$0xf]
    %v1542 = vld [vmem:[%s1535 + $0x18] sm:$0xf]
    %v1543 = vld [vmem:[%s1535 + $0x1c] sm:$0xf]
    %s1544 = scalar_lea.vmem %s11, 1
    %v1545 = vld [vmem:[%s1544] sm:$0x1]
    %v1547 = vlaneseq
    %v1548 = vshrl.u32 %v1547, 7
    %v1549 = vsub.s32 0, %v1548
    %v1550 = vrot.slane %v1545, %v1549
    %v1560 = vunpack.c.l.b16 %v1536
    %v1561 = vunpack.c.l.b16 %v1537
    %v1562 = vunpack.c.l.b16 %v1538
    %v1563 = vunpack.c.l.b16 %v1539
    %v1564 = vunpack.c.l.b16 %v1540
    %v1565 = vunpack.c.l.b16 %v1541
    %v1566 = vunpack.c.l.b16 %v1542
    %v1567 = vunpack.c.l.b16 %v1543
    %v1568 = vpack.c.b16 %v1561, %v1560
    %v1569 = vpack.c.b16 %v1563, %v1562
    %v1570 = vpack.c.b16 %v1565, %v1564
    %v1571 = vpack.c.b16 %v1567, %v1566
    %1576 = vmatprep.subr.bf16.mxu0 0
    %1577 = vmatpush1.bf16.msra.mxu0 %v1568
    %1578 = vmatprep.subr.bf16.mxu0 0
    %1579 = vmatpush1.bf16.msra.mxu0 %v1569
    %1580 = vmatprep.subr.bf16.mxu0 0
    %1581 = vmatpush1.bf16.msra.mxu0 %v1570
    %1582 = vmatprep.subr.bf16.mxu0 0
    %1583 = vmatpush1.bf16.msra.mxu0 %v1571
    %1584 = vmatprep.subr.bf16.mxu0 0
    %1585 = vmatpush1.bf16.msra.mxu0 0
    %1586 = vmatprep.subr.bf16.mxu0 0
    %1587 = vmatpush1.bf16.msra.mxu0 0
    %1588 = vmatprep.subr.bf16.mxu0 0
    %1589 = vmatpush1.bf16.msra.mxu0 0
    %1590 = vmatprep.subr.bf16.mxu0 0
    %1591 = vmatpush1.bf16.msra.mxu0 0
    %1592 = vmatprep.subr.bf16.mxu0 0
    %1593 = vmatpush1.bf16.msra.mxu0 0
    %1594 = vmatprep.subr.bf16.mxu0 0
    %1595 = vmatpush1.bf16.msra.mxu0 0
    %1596 = vmatprep.subr.bf16.mxu0 0
    %1597 = vmatpush1.bf16.msra.mxu0 0
    %1598 = vmatprep.subr.bf16.mxu0 0
    %1599 = vmatpush1.bf16.msra.mxu0 0
    %1600 = vmatprep.subr.bf16.mxu0 0
    %1601 = vmatpush1.bf16.msra.mxu0 0
    %1602 = vmatprep.subr.bf16.mxu0 0
    %1603 = vmatpush1.bf16.msra.mxu0 0
    %1604 = vmatprep.subr.bf16.mxu0 0
    %1605 = vmatpush1.bf16.msra.mxu0 0
    %1606 = vmatprep.subr.bf16.mxu0 0
    %1607 = vmatpush1.bf16.msra.mxu0 0
    %1608 = vmatprep.mubr.bf16.mxu0 0
    %1609 = vmatmul.mubr.bf16.gmra.mrb[0].mxu0 %v1213
    %v1610 = vpop.f32.mrb[0].mxu0
    %v1611 = vadd.f32 %v1550, %v1610
    %v1612 = vpop.f32.mrb[0].mxu0
    %v1613 = vpop.f32.mrb[0].mxu0
    %v1614 = vadd.f32 %v1550, %v1613
    %v1615 = vpop.f32.mrb[0].mxu0
    %1616 = vdwg.mxu0
    %v1617 = vpack.c.bf16 %v1611, %v1611
    %v1618 = vpack.c.bf16 %v1614, %v1614
    %s1619 = scalar_lea.vmem %s7, 8
    %v1620 = vld [vmem:[%s1619] sm:$0xf]
    %v1621 = vld [vmem:[%s1619 + $0x4] sm:$0xf]
    %v1624 = vunpack.c.l.b16 %v1617
    %v1625 = vunpack.c.l.b16 %v1618
    %v1626 = vpack.c.b16 %v1625, %v1624
    %v1629 = vunpack.c.l.b16 %v1620
    %v1630 = vunpack.c.l.b16 %v1621
    %v1631 = vpack.c.b16 %v1630, %v1629
    %v1634 = vsel %vm94, %v1626, 0
    %1636 = vmatprep.subr.bf16.mxu0 0
    %1637 = vmatpush1.bf16.msra.mxu0 %v1631
    %1638 = vmatprep.subr.bf16.mxu0 0
    %1639 = vmatpush1.bf16.msra.mxu0 0
    %1640 = vmatprep.subr.bf16.mxu0 0
    %1641 = vmatpush1.bf16.msra.mxu0 0
    %1642 = vmatprep.subr.bf16.mxu0 0
    %1643 = vmatpush1.bf16.msra.mxu0 0
    %1644 = vmatprep.subr.bf16.mxu0 0
    %1645 = vmatpush1.bf16.msra.mxu0 0
    %1646 = vmatprep.subr.bf16.mxu0 0
    %1647 = vmatpush1.bf16.msra.mxu0 0
    %1648 = vmatprep.subr.bf16.mxu0 0
    %1649 = vmatpush1.bf16.msra.mxu0 0
    %1650 = vmatprep.subr.bf16.mxu0 0
    %1651 = vmatpush1.bf16.msra.mxu0 0
    %1652 = vmatprep.subr.bf16.mxu0 0
    %1653 = vmatpush1.bf16.msra.mxu0 0
    %1654 = vmatprep.subr.bf16.mxu0 0
    %1655 = vmatpush1.bf16.msra.mxu0 0
    %1656 = vmatprep.subr.bf16.mxu0 0
    %1657 = vmatpush1.bf16.msra.mxu0 0
    %1658 = vmatprep.subr.bf16.mxu0 0
    %1659 = vmatpush1.bf16.msra.mxu0 0
    %1660 = vmatprep.subr.bf16.mxu0 0
    %1661 = vmatpush1.bf16.msra.mxu0 0
    %1662 = vmatprep.subr.bf16.mxu0 0
    %1663 = vmatpush1.bf16.msra.mxu0 0
    %1664 = vmatprep.subr.bf16.mxu0 0
    %1665 = vmatpush1.bf16.msra.mxu0 0
    %1666 = vmatprep.subr.bf16.mxu0 0
    %1667 = vmatpush1.bf16.msra.mxu0 0
    %1668 = vmatprep.mubr.bf16.mxu0 0
    %1669 = vmatmul.mubr.bf16.gmra.mrb[0].mxu0 %v1634
    %v1670 = vpop.f32.mrb[0].mxu0
    %v1671 = vadd.f32 0.0, %v1670
    %v1672 = vpop.f32.mrb[0].mxu0
    %v1673 = vpop.f32.mrb[0].mxu0
    %v1674 = vadd.f32 0.0, %v1673
    %v1675 = vpop.f32.mrb[0].mxu0
    %1676 = vdwg.mxu0
    %v1677 = vpack.c.bf16 %v1671, %v1671
    %v1678 = vpack.c.bf16 %v1674, %v1674
    %v1680 = vsel %vm46, %v1677, 0
    %1682 = vmatprep.subr.bf16.mxu0 0
    %1683 = vmatpush1.bf16.xpose.msra.mxu0 %v1321
    %1684 = vmatprep.subr.bf16.mxu0 0
    %1685 = vmatpush1.bf16.xpose.msra.mxu0 0
    %1686 = vmatprep.subr.bf16.mxu0 0
    %1687 = vmatpush1.bf16.xpose.msra.mxu0 0
    %1688 = vmatprep.subr.bf16.mxu0 0
    %1689 = vmatpush1.bf16.xpose.msra.mxu0 0
    %1690 = vmatprep.subr.bf16.mxu0 0
    %1691 = vmatpush1.bf16.xpose.msra.mxu0 0
    %1692 = vmatprep.subr.bf16.mxu0 0
    %1693 = vmatpush1.bf16.xpose.msra.mxu0 0
    %1694 = vmatprep.subr.bf16.mxu0 0
    %1695 = vmatpush1.bf16.xpose.msra.mxu0 0
    %1696 = vmatprep.subr.bf16.mxu0 0
    %1697 = vmatpush1.bf16.xpose.msra.mxu0 0
    %1698 = vmatprep.subr.bf16.mxu0 0
    %1699 = vmatpush1.bf16.xpose.msra.mxu0 0
    %1700 = vmatprep.subr.bf16.mxu0 0
    %1701 = vmatpush1.bf16.xpose.msra.mxu0 0
    %1702 = vmatprep.subr.bf16.mxu0 0
    %1703 = vmatpush1.bf16.xpose.msra.mxu0 0
    %1704 = vmatprep.subr.bf16.mxu0 0
    %1705 = vmatpush1.bf16.xpose.msra.mxu0 0
    %1706 = vmatprep.subr.bf16.mxu0 0
    %1707 = vmatpush1.bf16.xpose.msra.mxu0 0
    %1708 = vmatprep.subr.bf16.mxu0 0
    %1709 = vmatpush1.bf16.xpose.msra.mxu0 0
    %1710 = vmatprep.subr.bf16.mxu0 0
    %1711 = vmatpush1.bf16.xpose.msra.mxu0 0
    %1712 = vmatprep.subr.bf16.mxu0 0
    %1713 = vmatpush1.bf16.xpose.msra.mxu0 0
    %1714 = vmatprep.mubr.bf16.mxu0 0
    %1715 = vmatmul.mubr.bf16.gmra.mrb[0].mxu0 %v1680
    %v1716 = vpop.f32.mrb[0].mxu0
    %v1717 = vadd.f32 0.0, %v1716
    %v1718 = vpop.f32.mrb[0].mxu0
    %v1719 = vpop.f32.mrb[0].mxu0
    %v1720 = vpop.f32.mrb[0].mxu0
    %1721 = vdwg.mxu0
    %v1723 = vsel %vm46, %v1678, 0
    %1725 = vmatprep.subr.bf16.mxu0 0
    %1726 = vmatpush1.bf16.xpose.msra.mxu0 %v1367
    %1727 = vmatprep.subr.bf16.mxu0 0
    %1728 = vmatpush1.bf16.xpose.msra.mxu0 0
    %1729 = vmatprep.subr.bf16.mxu0 0
    %1730 = vmatpush1.bf16.xpose.msra.mxu0 0
    %1731 = vmatprep.subr.bf16.mxu0 0
    %1732 = vmatpush1.bf16.xpose.msra.mxu0 0
    %1733 = vmatprep.subr.bf16.mxu0 0
    %1734 = vmatpush1.bf16.xpose.msra.mxu0 0
    %1735 = vmatprep.subr.bf16.mxu0 0
    %1736 = vmatpush1.bf16.xpose.msra.mxu0 0
    %1737 = vmatprep.subr.bf16.mxu0 0
    %1738 = vmatpush1.bf16.xpose.msra.mxu0 0
    %1739 = vmatprep.subr.bf16.mxu0 0
    %1740 = vmatpush1.bf16.xpose.msra.mxu0 0
    %1741 = vmatprep.subr.bf16.mxu0 0
    %1742 = vmatpush1.bf16.xpose.msra.mxu0 0
    %1743 = vmatprep.subr.bf16.mxu0 0
    %1744 = vmatpush1.bf16.xpose.msra.mxu0 0
    %1745 = vmatprep.subr.bf16.mxu0 0
    %1746 = vmatpush1.bf16.xpose.msra.mxu0 0
    %1747 = vmatprep.subr.bf16.mxu0 0
    %1748 = vmatpush1.bf16.xpose.msra.mxu0 0
    %1749 = vmatprep.subr.bf16.mxu0 0
    %1750 = vmatpush1.bf16.xpose.msra.mxu0 0
    %1751 = vmatprep.subr.bf16.mxu0 0
    %1752 = vmatpush1.bf16.xpose.msra.mxu0 0
    %1753 = vmatprep.subr.bf16.mxu0 0
    %1754 = vmatpush1.bf16.xpose.msra.mxu0 0
    %1755 = vmatprep.subr.bf16.mxu0 0
    %1756 = vmatpush1.bf16.xpose.msra.mxu0 0
    %1757 = vmatprep.mubr.bf16.mxu0 0
    %1758 = vmatmul.mubr.bf16.gmra.mrb[0].mxu0 %v1723
    %v1759 = vpop.f32.mrb[0].mxu0
    %v1760 = vadd.f32 0.0, %v1759
    %v1761 = vpop.f32.mrb[0].mxu0
    %v1762 = vpop.f32.mrb[0].mxu0
    %v1763 = vpop.f32.mrb[0].mxu0
    %1764 = vdwg.mxu0
    %v1765 = vsel %vm1409, %v1717, -inf
    %1766 = vmax.xlane.f32.xlu0 %v1765
    %v1767 = vpop.xlane.xlu0 %1766
    %v1768 = vsel %vm1409, %v1760, -inf
    %1769 = vmax.xlane.f32.xlu0 %v1768
    %v1770 = vpop.xlane.xlu0 %1769
    %v1771 = vsub.f32 %v1717, %v1767
    %v1772 = vsub.f32 %v1760, %v1770
    %v1773 = vmul.f32 %v1771, 1.442695
    %v1774 = vpow.pop %v1773
    %v1775 = vmul.f32 %v1772, 1.442695
    %v1776 = vpow.pop %v1775
    %v1777 = vsel %vm1409, %v1774, 0.0
    %1778 = vadd.xlane.f32.xlu0 %v1777
    %v1779 = vpop.xlane.xlu0 %1778
    %v1780 = vsel %vm1409, %v1776, 0.0
    %1781 = vadd.xlane.f32.xlu0 %v1780
    %v1782 = vpop.xlane.xlu0 %1781
    %v1783 = vrcp.pop %v1779
    %v1784 = vrcp.pop %v1782
    %v1785 = vmul.f32 %v1774, %v1783
    %v1786 = vmul.f32 %v1776, %v1784
    %v1787 = vpack.c.bf16 %v1785, %v1785
    %v1788 = vpack.c.bf16 %v1786, %v1786
    %v1790 = vsel %vm1409, %v1787, 0
    %1792 = vmatprep.subr.bf16.mxu0 0
    %1793 = vmatpush1.bf16.msra.mxu0 %v1438
    %1794 = vmatprep.subr.bf16.mxu0 0
    %1795 = vmatpush1.bf16.msra.mxu0 0
    %1796 = vmatprep.subr.bf16.mxu0 0
    %1797 = vmatpush1.bf16.msra.mxu0 0
    %1798 = vmatprep.subr.bf16.mxu0 0
    %1799 = vmatpush1.bf16.msra.mxu0 0
    %1800 = vmatprep.subr.bf16.mxu0 0
    %1801 = vmatpush1.bf16.msra.mxu0 0
    %1802 = vmatprep.subr.bf16.mxu0 0
    %1803 = vmatpush1.bf16.msra.mxu0 0
    %1804 = vmatprep.subr.bf16.mxu0 0
    %1805 = vmatpush1.bf16.msra.mxu0 0
    %1806 = vmatprep.subr.bf16.mxu0 0
    %1807 = vmatpush1.bf16.msra.mxu0 0
    %1808 = vmatprep.subr.bf16.mxu0 0
    %1809 = vmatpush1.bf16.msra.mxu0 0
    %1810 = vmatprep.subr.bf16.mxu0 0
    %1811 = vmatpush1.bf16.msra.mxu0 0
    %1812 = vmatprep.subr.bf16.mxu0 0
    %1813 = vmatpush1.bf16.msra.mxu0 0
    %1814 = vmatprep.subr.bf16.mxu0 0
    %1815 = vmatpush1.bf16.msra.mxu0 0
    %1816 = vmatprep.subr.bf16.mxu0 0
    %1817 = vmatpush1.bf16.msra.mxu0 0
    %1818 = vmatprep.subr.bf16.mxu0 0
    %1819 = vmatpush1.bf16.msra.mxu0 0
    %1820 = vmatprep.subr.bf16.mxu0 0
    %1821 = vmatpush1.bf16.msra.mxu0 0
    %1822 = vmatprep.subr.bf16.mxu0 0
    %1823 = vmatpush1.bf16.msra.mxu0 0
    %1824 = vmatprep.mubr.bf16.mxu0 0
    %1825 = vmatmul.mubr.bf16.gmra.mrb[0].mxu0 %v1790
    %v1826 = vpop.f32.mrb[0].mxu0
    %v1827 = vadd.f32 0.0, %v1826
    %v1828 = vpop.f32.mrb[0].mxu0
    %v1829 = vpop.f32.mrb[0].mxu0
    %v1830 = vpop.f32.mrb[0].mxu0
    %1831 = vdwg.mxu0
    %v1833 = vsel %vm1409, %v1788, 0
    %1835 = vmatprep.subr.bf16.mxu0 0
    %1836 = vmatpush1.bf16.msra.mxu0 %v1483
    %1837 = vmatprep.subr.bf16.mxu0 0
    %1838 = vmatpush1.bf16.msra.mxu0 0
    %1839 = vmatprep.subr.bf16.mxu0 0
    %1840 = vmatpush1.bf16.msra.mxu0 0
    %1841 = vmatprep.subr.bf16.mxu0 0
    %1842 = vmatpush1.bf16.msra.mxu0 0
    %1843 = vmatprep.subr.bf16.mxu0 0
    %1844 = vmatpush1.bf16.msra.mxu0 0
    %1845 = vmatprep.subr.bf16.mxu0 0
    %1846 = vmatpush1.bf16.msra.mxu0 0
    %1847 = vmatprep.subr.bf16.mxu0 0
    %1848 = vmatpush1.bf16.msra.mxu0 0
    %1849 = vmatprep.subr.bf16.mxu0 0
    %1850 = vmatpush1.bf16.msra.mxu0 0
    %1851 = vmatprep.subr.bf16.mxu0 0
    %1852 = vmatpush1.bf16.msra.mxu0 0
    %1853 = vmatprep.subr.bf16.mxu0 0
    %1854 = vmatpush1.bf16.msra.mxu0 0
    %1855 = vmatprep.subr.bf16.mxu0 0
    %1856 = vmatpush1.bf16.msra.mxu0 0
    %1857 = vmatprep.subr.bf16.mxu0 0
    %1858 = vmatpush1.bf16.msra.mxu0 0
    %1859 = vmatprep.subr.bf16.mxu0 0
    %1860 = vmatpush1.bf16.msra.mxu0 0
    %1861 = vmatprep.subr.bf16.mxu0 0
    %1862 = vmatpush1.bf16.msra.mxu0 0
    %1863 = vmatprep.subr.bf16.mxu0 0
    %1864 = vmatpush1.bf16.msra.mxu0 0
    %1865 = vmatprep.subr.bf16.mxu0 0
    %1866 = vmatpush1.bf16.msra.mxu0 0
    %1867 = vmatprep.mubr.bf16.mxu0 0
    %1868 = vmatmul.mubr.bf16.gmra.mrb[0].mxu0 %v1833
    %v1869 = vpop.f32.mrb[0].mxu0
    %v1870 = vadd.f32 0.0, %v1869
    %v1871 = vpop.f32.mrb[0].mxu0
    %v1872 = vpop.f32.mrb[0].mxu0
    %v1873 = vpop.f32.mrb[0].mxu0
    %1874 = vdwg.mxu0
    %v1875 = vpack.c.bf16 %v1827, %v1827
    %v1876 = vpack.c.bf16 %v1870, %v1870
    %s1877 = scalar_lea.vmem %s8, 32
    %v1878 = vld [vmem:[%s1877] sm:$0xf]
    %v1879 = vld [vmem:[%s1877 + $0x4] sm:$0xf]
    %v1880 = vld [vmem:[%s1877 + $0x8] sm:$0xf]
    %v1881 = vld [vmem:[%s1877 + $0xc] sm:$0xf]
    %v1882 = vld [vmem:[%s1877 + $0x10] sm:$0xf]
    %v1883 = vld [vmem:[%s1877 + $0x14] sm:$0xf]
    %v1884 = vld [vmem:[%s1877 + $0x18] sm:$0xf]
    %v1885 = vld [vmem:[%s1877 + $0x1c] sm:$0xf]
    %v1888 = vunpack.c.l.b16 %v1875
    %v1889 = vunpack.c.l.b16 %v1876
    %v1890 = vpack.c.b16 %v1889, %v1888
    %v1899 = vunpack.c.l.b16 %v1878
    %v1900 = vunpack.c.l.b16 %v1879
    %v1901 = vunpack.c.l.b16 %v1880
    %v1902 = vunpack.c.l.b16 %v1881
    %v1903 = vunpack.c.l.b16 %v1882
    %v1904 = vunpack.c.l.b16 %v1883
    %v1905 = vunpack.c.l.b16 %v1884
    %v1906 = vunpack.c.l.b16 %v1885
    %v1907 = vpack.c.b16 %v1900, %v1899
    %v1908 = vpack.c.b16 %v1902, %v1901
    %v1909 = vpack.c.b16 %v1904, %v1903
    %v1910 = vpack.c.b16 %v1906, %v1905
    %v1916 = vsel %vm46, %v1890, 0
    %1918 = vmatprep.subr.bf16.mxu0 0
    %1919 = vmatpush1.bf16.msra.mxu0 %v1907
    %1920 = vmatprep.subr.bf16.mxu0 0
    %1921 = vmatpush1.bf16.msra.mxu0 %v1908
    %1922 = vmatprep.subr.bf16.mxu0 0
    %1923 = vmatpush1.bf16.msra.mxu0 %v1909
    %1924 = vmatprep.subr.bf16.mxu0 0
    %1925 = vmatpush1.bf16.msra.mxu0 %v1910
    %1926 = vmatprep.subr.bf16.mxu0 0
    %1927 = vmatpush1.bf16.msra.mxu0 0
    %1928 = vmatprep.subr.bf16.mxu0 0
    %1929 = vmatpush1.bf16.msra.mxu0 0
    %1930 = vmatprep.subr.bf16.mxu0 0
    %1931 = vmatpush1.bf16.msra.mxu0 0
    %1932 = vmatprep.subr.bf16.mxu0 0
    %1933 = vmatpush1.bf16.msra.mxu0 0
    %1934 = vmatprep.subr.bf16.mxu0 0
    %1935 = vmatpush1.bf16.msra.mxu0 0
    %1936 = vmatprep.subr.bf16.mxu0 0
    %1937 = vmatpush1.bf16.msra.mxu0 0
    %1938 = vmatprep.subr.bf16.mxu0 0
    %1939 = vmatpush1.bf16.msra.mxu0 0
    %1940 = vmatprep.subr.bf16.mxu0 0
    %1941 = vmatpush1.bf16.msra.mxu0 0
    %1942 = vmatprep.subr.bf16.mxu0 0
    %1943 = vmatpush1.bf16.msra.mxu0 0
    %1944 = vmatprep.subr.bf16.mxu0 0
    %1945 = vmatpush1.bf16.msra.mxu0 0
    %1946 = vmatprep.subr.bf16.mxu0 0
    %1947 = vmatpush1.bf16.msra.mxu0 0
    %1948 = vmatprep.subr.bf16.mxu0 0
    %1949 = vmatpush1.bf16.msra.mxu0 0
    %1950 = vmatprep.mubr.bf16.mxu0 0
    %1951 = vmatmul.mubr.bf16.gmra.mrb[0].mxu0 %v1916
    %v1952 = vpop.f32.mrb[0].mxu0
    %v1953 = vadd.f32 0.0, %v1952
    %v1954 = vpop.f32.mrb[0].mxu0
    %v1955 = vpop.f32.mrb[0].mxu0
    %v1956 = vadd.f32 0.0, %v1955
    %v1957 = vpop.f32.mrb[0].mxu0
    %1958 = vdwg.mxu0
    %v1961 = vunpack.c.l.b16 %v1525
    %v1962 = vunpack.c.l.b16 %v1526
    %v1963 = vpack.c.b16 %v1962, %v1961
    %v1972 = vunpack.c.l.b16 %v1527
    %v1973 = vunpack.c.l.b16 %v1528
    %v1974 = vunpack.c.l.b16 %v1529
    %v1975 = vunpack.c.l.b16 %v1530
    %v1976 = vunpack.c.l.b16 %v1531
    %v1977 = vunpack.c.l.b16 %v1532
    %v1978 = vunpack.c.l.b16 %v1533
    %v1979 = vunpack.c.l.b16 %v1534
    %v1980 = vpack.c.b16 %v1973, %v1972
    %v1981 = vpack.c.b16 %v1975, %v1974
    %v1982 = vpack.c.b16 %v1977, %v1976
    %v1983 = vpack.c.b16 %v1979, %v1978
    %v1989 = vsel %vm46, %v1963, 0
    %1991 = vmatprep.subr.bf16.mxu0 0
    %1992 = vmatpush1.bf16.msra.mxu0 %v1980
    %1993 = vmatprep.subr.bf16.mxu0 0
    %1994 = vmatpush1.bf16.msra.mxu0 %v1981
    %1995 = vmatprep.subr.bf16.mxu0 0
    %1996 = vmatpush1.bf16.msra.mxu0 %v1982
    %1997 = vmatprep.subr.bf16.mxu0 0
    %1998 = vmatpush1.bf16.msra.mxu0 %v1983
    %1999 = vmatprep.subr.bf16.mxu0 0
    %2000 = vmatpush1.bf16.msra.mxu0 0
    %2001 = vmatprep.subr.bf16.mxu0 0
    %2002 = vmatpush1.bf16.msra.mxu0 0
    %2003 = vmatprep.subr.bf16.mxu0 0
    %2004 = vmatpush1.bf16.msra.mxu0 0
    %2005 = vmatprep.subr.bf16.mxu0 0
    %2006 = vmatpush1.bf16.msra.mxu0 0
    %2007 = vmatprep.subr.bf16.mxu0 0
    %2008 = vmatpush1.bf16.msra.mxu0 0
    %2009 = vmatprep.subr.bf16.mxu0 0
    %2010 = vmatpush1.bf16.msra.mxu0 0
    %2011 = vmatprep.subr.bf16.mxu0 0
    %2012 = vmatpush1.bf16.msra.mxu0 0
    %2013 = vmatprep.subr.bf16.mxu0 0
    %2014 = vmatpush1.bf16.msra.mxu0 0
    %2015 = vmatprep.subr.bf16.mxu0 0
    %2016 = vmatpush1.bf16.msra.mxu0 0
    %2017 = vmatprep.subr.bf16.mxu0 0
    %2018 = vmatpush1.bf16.msra.mxu0 0
    %2019 = vmatprep.subr.bf16.mxu0 0
    %2020 = vmatpush1.bf16.msra.mxu0 0
    %2021 = vmatprep.subr.bf16.mxu0 0
    %2022 = vmatpush1.bf16.msra.mxu0 0
    %2023 = vmatprep.mubr.bf16.mxu0 0
    %2024 = vmatmul.mubr.bf16.gmra.mrb[0].mxu0 %v1989
    %v2025 = vpop.f32.mrb[0].mxu0
    %v2026 = vadd.f32 %v1953, %v2025
    %v2027 = vpop.f32.mrb[0].mxu0
    %v2028 = vpop.f32.mrb[0].mxu0
    %v2029 = vadd.f32 %v1956, %v2028
    %v2030 = vpop.f32.mrb[0].mxu0
    %2031 = vdwg.mxu0
    %s2032 = scalar_lea.vmem %s6, 64
    %v2033 = vld [vmem:[%s2032] sm:$0xf]
    %v2034 = vld [vmem:[%s2032 + $0x4] sm:$0xf]
    %v2035 = vld [vmem:[%s2032 + $0x8] sm:$0xf]
    %v2036 = vld [vmem:[%s2032 + $0xc] sm:$0xf]
    %v2037 = vld [vmem:[%s2032 + $0x10] sm:$0xf]
    %v2038 = vld [vmem:[%s2032 + $0x14] sm:$0xf]
    %v2039 = vld [vmem:[%s2032 + $0x18] sm:$0xf]
    %v2040 = vld [vmem:[%s2032 + $0x1c] sm:$0xf]
    %s2041 = scalar_lea.vmem %s11, 2
    %v2042 = vld [vmem:[%s2041] sm:$0x1]
    %v2044 = vlaneseq
    %v2045 = vshrl.u32 %v2044, 7
    %v2046 = vsub.s32 0, %v2045
    %v2047 = vrot.slane %v2042, %v2046
    %v2057 = vunpack.c.l.b16 %v2033
    %v2058 = vunpack.c.l.b16 %v2034
    %v2059 = vunpack.c.l.b16 %v2035
    %v2060 = vunpack.c.l.b16 %v2036
    %v2061 = vunpack.c.l.b16 %v2037
    %v2062 = vunpack.c.l.b16 %v2038
    %v2063 = vunpack.c.l.b16 %v2039
    %v2064 = vunpack.c.l.b16 %v2040
    %v2065 = vpack.c.b16 %v2058, %v2057
    %v2066 = vpack.c.b16 %v2060, %v2059
    %v2067 = vpack.c.b16 %v2062, %v2061
    %v2068 = vpack.c.b16 %v2064, %v2063
    %2073 = vmatprep.subr.bf16.mxu0 0
    %2074 = vmatpush1.bf16.msra.mxu0 %v2065
    %2075 = vmatprep.subr.bf16.mxu0 0
    %2076 = vmatpush1.bf16.msra.mxu0 %v2066
    %2077 = vmatprep.subr.bf16.mxu0 0
    %2078 = vmatpush1.bf16.msra.mxu0 %v2067
    %2079 = vmatprep.subr.bf16.mxu0 0
    %2080 = vmatpush1.bf16.msra.mxu0 %v2068
    %2081 = vmatprep.subr.bf16.mxu0 0
    %2082 = vmatpush1.bf16.msra.mxu0 0
    %2083 = vmatprep.subr.bf16.mxu0 0
    %2084 = vmatpush1.bf16.msra.mxu0 0
    %2085 = vmatprep.subr.bf16.mxu0 0
    %2086 = vmatpush1.bf16.msra.mxu0 0
    %2087 = vmatprep.subr.bf16.mxu0 0
    %2088 = vmatpush1.bf16.msra.mxu0 0
    %2089 = vmatprep.subr.bf16.mxu0 0
    %2090 = vmatpush1.bf16.msra.mxu0 0
    %2091 = vmatprep.subr.bf16.mxu0 0
    %2092 = vmatpush1.bf16.msra.mxu0 0
    %2093 = vmatprep.subr.bf16.mxu0 0
    %2094 = vmatpush1.bf16.msra.mxu0 0
    %2095 = vmatprep.subr.bf16.mxu0 0
    %2096 = vmatpush1.bf16.msra.mxu0 0
    %2097 = vmatprep.subr.bf16.mxu0 0
    %2098 = vmatpush1.bf16.msra.mxu0 0
    %2099 = vmatprep.subr.bf16.mxu0 0
    %2100 = vmatpush1.bf16.msra.mxu0 0
    %2101 = vmatprep.subr.bf16.mxu0 0
    %2102 = vmatpush1.bf16.msra.mxu0 0
    %2103 = vmatprep.subr.bf16.mxu0 0
    %2104 = vmatpush1.bf16.msra.mxu0 0
    %2105 = vmatprep.mubr.bf16.mxu0 0
    %2106 = vmatmul.mubr.bf16.gmra.mrb[0].mxu0 %v1213
    %v2107 = vpop.f32.mrb[0].mxu0
    %v2108 = vadd.f32 %v2047, %v2107
    %v2109 = vpop.f32.mrb[0].mxu0
    %v2110 = vpop.f32.mrb[0].mxu0
    %v2111 = vadd.f32 %v2047, %v2110
    %v2112 = vpop.f32.mrb[0].mxu0
    %2113 = vdwg.mxu0
    %v2114 = vpack.c.bf16 %v2108, %v2108
    %v2115 = vpack.c.bf16 %v2111, %v2111
    %s2116 = scalar_lea.vmem %s7, 16
    %v2117 = vld [vmem:[%s2116] sm:$0xf]
    %v2118 = vld [vmem:[%s2116 + $0x4] sm:$0xf]
    %v2121 = vunpack.c.l.b16 %v2114
    %v2122 = vunpack.c.l.b16 %v2115
    %v2123 = vpack.c.b16 %v2122, %v2121
    %v2126 = vunpack.c.l.b16 %v2117
    %v2127 = vunpack.c.l.b16 %v2118
    %v2128 = vpack.c.b16 %v2127, %v2126
    %v2131 = vsel %vm94, %v2123, 0
    %2133 = vmatprep.subr.bf16.mxu0 0
    %2134 = vmatpush1.bf16.msra.mxu0 %v2128
    %2135 = vmatprep.subr.bf16.mxu0 0
    %2136 = vmatpush1.bf16.msra.mxu0 0
    %2137 = vmatprep.subr.bf16.mxu0 0
    %2138 = vmatpush1.bf16.msra.mxu0 0
    %2139 = vmatprep.subr.bf16.mxu0 0
    %2140 = vmatpush1.bf16.msra.mxu0 0
    %2141 = vmatprep.subr.bf16.mxu0 0
    %2142 = vmatpush1.bf16.msra.mxu0 0
    %2143 = vmatprep.subr.bf16.mxu0 0
    %2144 = vmatpush1.bf16.msra.mxu0 0
    %2145 = vmatprep.subr.bf16.mxu0 0
    %2146 = vmatpush1.bf16.msra.mxu0 0
    %2147 = vmatprep.subr.bf16.mxu0 0
    %2148 = vmatpush1.bf16.msra.mxu0 0
    %2149 = vmatprep.subr.bf16.mxu0 0
    %2150 = vmatpush1.bf16.msra.mxu0 0
    %2151 = vmatprep.subr.bf16.mxu0 0
    %2152 = vmatpush1.bf16.msra.mxu0 0
    %2153 = vmatprep.subr.bf16.mxu0 0
    %2154 = vmatpush1.bf16.msra.mxu0 0
    %2155 = vmatprep.subr.bf16.mxu0 0
    %2156 = vmatpush1.bf16.msra.mxu0 0
    %2157 = vmatprep.subr.bf16.mxu0 0
    %2158 = vmatpush1.bf16.msra.mxu0 0
    %2159 = vmatprep.subr.bf16.mxu0 0
    %2160 = vmatpush1.bf16.msra.mxu0 0
    %2161 = vmatprep.subr.bf16.mxu0 0
    %2162 = vmatpush1.bf16.msra.mxu0 0
    %2163 = vmatprep.subr.bf16.mxu0 0
    %2164 = vmatpush1.bf16.msra.mxu0 0
    %2165 = vmatprep.mubr.bf16.mxu0 0
    %2166 = vmatmul.mubr.bf16.gmra.mrb[0].mxu0 %v2131
    %v2167 = vpop.f32.mrb[0].mxu0
    %v2168 = vadd.f32 0.0, %v2167
    %v2169 = vpop.f32.mrb[0].mxu0
    %v2170 = vpop.f32.mrb[0].mxu0
    %v2171 = vadd.f32 0.0, %v2170
    %v2172 = vpop.f32.mrb[0].mxu0
    %2173 = vdwg.mxu0
    %v2174 = vpack.c.bf16 %v2168, %v2168
    %v2175 = vpack.c.bf16 %v2171, %v2171
    %v2177 = vsel %vm46, %v2174, 0
    %2179 = vmatprep.subr.bf16.mxu0 0
    %2180 = vmatpush1.bf16.xpose.msra.mxu0 %v1321
    %2181 = vmatprep.subr.bf16.mxu0 0
    %2182 = vmatpush1.bf16.xpose.msra.mxu0 0
    %2183 = vmatprep.subr.bf16.mxu0 0
    %2184 = vmatpush1.bf16.xpose.msra.mxu0 0
    %2185 = vmatprep.subr.bf16.mxu0 0
    %2186 = vmatpush1.bf16.xpose.msra.mxu0 0
    %2187 = vmatprep.subr.bf16.mxu0 0
    %2188 = vmatpush1.bf16.xpose.msra.mxu0 0
    %2189 = vmatprep.subr.bf16.mxu0 0
    %2190 = vmatpush1.bf16.xpose.msra.mxu0 0
    %2191 = vmatprep.subr.bf16.mxu0 0
    %2192 = vmatpush1.bf16.xpose.msra.mxu0 0
    %2193 = vmatprep.subr.bf16.mxu0 0
    %2194 = vmatpush1.bf16.xpose.msra.mxu0 0
    %2195 = vmatprep.subr.bf16.mxu0 0
    %2196 = vmatpush1.bf16.xpose.msra.mxu0 0
    %2197 = vmatprep.subr.bf16.mxu0 0
    %2198 = vmatpush1.bf16.xpose.msra.mxu0 0
    %2199 = vmatprep.subr.bf16.mxu0 0
    %2200 = vmatpush1.bf16.xpose.msra.mxu0 0
    %2201 = vmatprep.subr.bf16.mxu0 0
    %2202 = vmatpush1.bf16.xpose.msra.mxu0 0
    %2203 = vmatprep.subr.bf16.mxu0 0
    %2204 = vmatpush1.bf16.xpose.msra.mxu0 0
    %2205 = vmatprep.subr.bf16.mxu0 0
    %2206 = vmatpush1.bf16.xpose.msra.mxu0 0
    %2207 = vmatprep.subr.bf16.mxu0 0
    %2208 = vmatpush1.bf16.xpose.msra.mxu0 0
    %2209 = vmatprep.subr.bf16.mxu0 0
    %2210 = vmatpush1.bf16.xpose.msra.mxu0 0
    %2211 = vmatprep.mubr.bf16.mxu0 0
    %2212 = vmatmul.mubr.bf16.gmra.mrb[0].mxu0 %v2177
    %v2213 = vpop.f32.mrb[0].mxu0
    %v2214 = vadd.f32 0.0, %v2213
    %v2215 = vpop.f32.mrb[0].mxu0
    %v2216 = vpop.f32.mrb[0].mxu0
    %v2217 = vpop.f32.mrb[0].mxu0
    %2218 = vdwg.mxu0
    %v2220 = vsel %vm46, %v2175, 0
    %2222 = vmatprep.subr.bf16.mxu0 0
    %2223 = vmatpush1.bf16.xpose.msra.mxu0 %v1367
    %2224 = vmatprep.subr.bf16.mxu0 0
    %2225 = vmatpush1.bf16.xpose.msra.mxu0 0
    %2226 = vmatprep.subr.bf16.mxu0 0
    %2227 = vmatpush1.bf16.xpose.msra.mxu0 0
    %2228 = vmatprep.subr.bf16.mxu0 0
    %2229 = vmatpush1.bf16.xpose.msra.mxu0 0
    %2230 = vmatprep.subr.bf16.mxu0 0
    %2231 = vmatpush1.bf16.xpose.msra.mxu0 0
    %2232 = vmatprep.subr.bf16.mxu0 0
    %2233 = vmatpush1.bf16.xpose.msra.mxu0 0
    %2234 = vmatprep.subr.bf16.mxu0 0
    %2235 = vmatpush1.bf16.xpose.msra.mxu0 0
    %2236 = vmatprep.subr.bf16.mxu0 0
    %2237 = vmatpush1.bf16.xpose.msra.mxu0 0
    %2238 = vmatprep.subr.bf16.mxu0 0
    %2239 = vmatpush1.bf16.xpose.msra.mxu0 0
    %2240 = vmatprep.subr.bf16.mxu0 0
    %2241 = vmatpush1.bf16.xpose.msra.mxu0 0
    %2242 = vmatprep.subr.bf16.mxu0 0
    %2243 = vmatpush1.bf16.xpose.msra.mxu0 0
    %2244 = vmatprep.subr.bf16.mxu0 0
    %2245 = vmatpush1.bf16.xpose.msra.mxu0 0
    %2246 = vmatprep.subr.bf16.mxu0 0
    %2247 = vmatpush1.bf16.xpose.msra.mxu0 0
    %2248 = vmatprep.subr.bf16.mxu0 0
    %2249 = vmatpush1.bf16.xpose.msra.mxu0 0
    %2250 = vmatprep.subr.bf16.mxu0 0
    %2251 = vmatpush1.bf16.xpose.msra.mxu0 0
    %2252 = vmatprep.subr.bf16.mxu0 0
    %2253 = vmatpush1.bf16.xpose.msra.mxu0 0
    %2254 = vmatprep.mubr.bf16.mxu0 0
    %2255 = vmatmul.mubr.bf16.gmra.mrb[0].mxu0 %v2220
    %v2256 = vpop.f32.mrb[0].mxu0
    %v2257 = vadd.f32 0.0, %v2256
    %v2258 = vpop.f32.mrb[0].mxu0
    %v2259 = vpop.f32.mrb[0].mxu0
    %v2260 = vpop.f32.mrb[0].mxu0
    %2261 = vdwg.mxu0
    %v2262 = vsel %vm1409, %v2214, -inf
    %2263 = vmax.xlane.f32.xlu0 %v2262
    %v2264 = vpop.xlane.xlu0 %2263
    %v2265 = vsel %vm1409, %v2257, -inf
    %2266 = vmax.xlane.f32.xlu0 %v2265
    %v2267 = vpop.xlane.xlu0 %2266
    %v2268 = vsub.f32 %v2214, %v2264
    %v2269 = vsub.f32 %v2257, %v2267
    %v2270 = vmul.f32 %v2268, 1.442695
    %v2271 = vpow.pop %v2270
    %v2272 = vmul.f32 %v2269, 1.442695
    %v2273 = vpow.pop %v2272
    %v2274 = vsel %vm1409, %v2271, 0.0
    %2275 = vadd.xlane.f32.xlu0 %v2274
    %v2276 = vpop.xlane.xlu0 %2275
    %v2277 = vsel %vm1409, %v2273, 0.0
    %2278 = vadd.xlane.f32.xlu0 %v2277
    %v2279 = vpop.xlane.xlu0 %2278
    %v2280 = vrcp.pop %v2276
    %v2281 = vrcp.pop %v2279
    %v2282 = vmul.f32 %v2271, %v2280
    %v2283 = vmul.f32 %v2273, %v2281
    %v2284 = vpack.c.bf16 %v2282, %v2282
    %v2285 = vpack.c.bf16 %v2283, %v2283
    %v2287 = vsel %vm1409, %v2284, 0
    %2289 = vmatprep.subr.bf16.mxu0 0
    %2290 = vmatpush1.bf16.msra.mxu0 %v1438
    %2291 = vmatprep.subr.bf16.mxu0 0
    %2292 = vmatpush1.bf16.msra.mxu0 0
    %2293 = vmatprep.subr.bf16.mxu0 0
    %2294 = vmatpush1.bf16.msra.mxu0 0
    %2295 = vmatprep.subr.bf16.mxu0 0
    %2296 = vmatpush1.bf16.msra.mxu0 0
    %2297 = vmatprep.subr.bf16.mxu0 0
    %2298 = vmatpush1.bf16.msra.mxu0 0
    %2299 = vmatprep.subr.bf16.mxu0 0
    %2300 = vmatpush1.bf16.msra.mxu0 0
    %2301 = vmatprep.subr.bf16.mxu0 0
    %2302 = vmatpush1.bf16.msra.mxu0 0
    %2303 = vmatprep.subr.bf16.mxu0 0
    %2304 = vmatpush1.bf16.msra.mxu0 0
    %2305 = vmatprep.subr.bf16.mxu0 0
    %2306 = vmatpush1.bf16.msra.mxu0 0
    %2307 = vmatprep.subr.bf16.mxu0 0
    %2308 = vmatpush1.bf16.msra.mxu0 0
    %2309 = vmatprep.subr.bf16.mxu0 0
    %2310 = vmatpush1.bf16.msra.mxu0 0
    %2311 = vmatprep.subr.bf16.mxu0 0
    %2312 = vmatpush1.bf16.msra.mxu0 0
    %2313 = vmatprep.subr.bf16.mxu0 0
    %2314 = vmatpush1.bf16.msra.mxu0 0
    %2315 = vmatprep.subr.bf16.mxu0 0
    %2316 = vmatpush1.bf16.msra.mxu0 0
    %2317 = vmatprep.subr.bf16.mxu0 0
    %2318 = vmatpush1.bf16.msra.mxu0 0
    %2319 = vmatprep.subr.bf16.mxu0 0
    %2320 = vmatpush1.bf16.msra.mxu0 0
    %2321 = vmatprep.mubr.bf16.mxu0 0
    %2322 = vmatmul.mubr.bf16.gmra.mrb[0].mxu0 %v2287
    %v2323 = vpop.f32.mrb[0].mxu0
    %v2324 = vadd.f32 0.0, %v2323
    %v2325 = vpop.f32.mrb[0].mxu0
    %v2326 = vpop.f32.mrb[0].mxu0
    %v2327 = vpop.f32.mrb[0].mxu0
    %2328 = vdwg.mxu0
    %v2330 = vsel %vm1409, %v2285, 0
    %2332 = vmatprep.subr.bf16.mxu0 0
    %2333 = vmatpush1.bf16.msra.mxu0 %v1483
    %2334 = vmatprep.subr.bf16.mxu0 0
    %2335 = vmatpush1.bf16.msra.mxu0 0
    %2336 = vmatprep.subr.bf16.mxu0 0
    %2337 = vmatpush1.bf16.msra.mxu0 0
    %2338 = vmatprep.subr.bf16.mxu0 0
    %2339 = vmatpush1.bf16.msra.mxu0 0
    %2340 = vmatprep.subr.bf16.mxu0 0
    %2341 = vmatpush1.bf16.msra.mxu0 0
    %2342 = vmatprep.subr.bf16.mxu0 0
    %2343 = vmatpush1.bf16.msra.mxu0 0
    %2344 = vmatprep.subr.bf16.mxu0 0
    %2345 = vmatpush1.bf16.msra.mxu0 0
    %2346 = vmatprep.subr.bf16.mxu0 0
    %2347 = vmatpush1.bf16.msra.mxu0 0
    %2348 = vmatprep.subr.bf16.mxu0 0
    %2349 = vmatpush1.bf16.msra.mxu0 0
    %2350 = vmatprep.subr.bf16.mxu0 0
    %2351 = vmatpush1.bf16.msra.mxu0 0
    %2352 = vmatprep.subr.bf16.mxu0 0
    %2353 = vmatpush1.bf16.msra.mxu0 0
    %2354 = vmatprep.subr.bf16.mxu0 0
    %2355 = vmatpush1.bf16.msra.mxu0 0
    %2356 = vmatprep.subr.bf16.mxu0 0
    %2357 = vmatpush1.bf16.msra.mxu0 0
    %2358 = vmatprep.subr.bf16.mxu0 0
    %2359 = vmatpush1.bf16.msra.mxu0 0
    %2360 = vmatprep.subr.bf16.mxu0 0
    %2361 = vmatpush1.bf16.msra.mxu0 0
    %2362 = vmatprep.subr.bf16.mxu0 0
    %2363 = vmatpush1.bf16.msra.mxu0 0
    %2364 = vmatprep.mubr.bf16.mxu0 0
    %2365 = vmatmul.mubr.bf16.gmra.mrb[0].mxu0 %v2330
    %v2366 = vpop.f32.mrb[0].mxu0
    %v2367 = vadd.f32 0.0, %v2366
    %v2368 = vpop.f32.mrb[0].mxu0
    %v2369 = vpop.f32.mrb[0].mxu0
    %v2370 = vpop.f32.mrb[0].mxu0
    %2371 = vdwg.mxu0
    %v2372 = vpack.c.bf16 %v2324, %v2324
    %v2373 = vpack.c.bf16 %v2367, %v2367
    %s2374 = scalar_lea.vmem %s8, 64
    %v2375 = vld [vmem:[%s2374] sm:$0xf]
    %v2376 = vld [vmem:[%s2374 + $0x4] sm:$0xf]
    %v2377 = vld [vmem:[%s2374 + $0x8] sm:$0xf]
    %v2378 = vld [vmem:[%s2374 + $0xc] sm:$0xf]
    %v2379 = vld [vmem:[%s2374 + $0x10] sm:$0xf]
    %v2380 = vld [vmem:[%s2374 + $0x14] sm:$0xf]
    %v2381 = vld [vmem:[%s2374 + $0x18] sm:$0xf]
    %v2382 = vld [vmem:[%s2374 + $0x1c] sm:$0xf]
    %v2385 = vunpack.c.l.b16 %v2372
    %v2386 = vunpack.c.l.b16 %v2373
    %v2387 = vpack.c.b16 %v2386, %v2385
    %v2396 = vunpack.c.l.b16 %v2375
    %v2397 = vunpack.c.l.b16 %v2376
    %v2398 = vunpack.c.l.b16 %v2377
    %v2399 = vunpack.c.l.b16 %v2378
    %v2400 = vunpack.c.l.b16 %v2379
    %v2401 = vunpack.c.l.b16 %v2380
    %v2402 = vunpack.c.l.b16 %v2381
    %v2403 = vunpack.c.l.b16 %v2382
    %v2404 = vpack.c.b16 %v2397, %v2396
    %v2405 = vpack.c.b16 %v2399, %v2398
    %v2406 = vpack.c.b16 %v2401, %v2400
    %v2407 = vpack.c.b16 %v2403, %v2402
    %v2413 = vsel %vm46, %v2387, 0
    %2415 = vmatprep.subr.bf16.mxu0 0
    %2416 = vmatpush1.bf16.msra.mxu0 %v2404
    %2417 = vmatprep.subr.bf16.mxu0 0
    %2418 = vmatpush1.bf16.msra.mxu0 %v2405
    %2419 = vmatprep.subr.bf16.mxu0 0
    %2420 = vmatpush1.bf16.msra.mxu0 %v2406
    %2421 = vmatprep.subr.bf16.mxu0 0
    %2422 = vmatpush1.bf16.msra.mxu0 %v2407
    %2423 = vmatprep.subr.bf16.mxu0 0
    %2424 = vmatpush1.bf16.msra.mxu0 0
    %2425 = vmatprep.subr.bf16.mxu0 0
    %2426 = vmatpush1.bf16.msra.mxu0 0
    %2427 = vmatprep.subr.bf16.mxu0 0
    %2428 = vmatpush1.bf16.msra.mxu0 0
    %2429 = vmatprep.subr.bf16.mxu0 0
    %2430 = vmatpush1.bf16.msra.mxu0 0
    %2431 = vmatprep.subr.bf16.mxu0 0
    %2432 = vmatpush1.bf16.msra.mxu0 0
    %2433 = vmatprep.subr.bf16.mxu0 0
    %2434 = vmatpush1.bf16.msra.mxu0 0
    %2435 = vmatprep.subr.bf16.mxu0 0
    %2436 = vmatpush1.bf16.msra.mxu0 0
    %2437 = vmatprep.subr.bf16.mxu0 0
    %2438 = vmatpush1.bf16.msra.mxu0 0
    %2439 = vmatprep.subr.bf16.mxu0 0
    %2440 = vmatpush1.bf16.msra.mxu0 0
    %2441 = vmatprep.subr.bf16.mxu0 0
    %2442 = vmatpush1.bf16.msra.mxu0 0
    %2443 = vmatprep.subr.bf16.mxu0 0
    %2444 = vmatpush1.bf16.msra.mxu0 0
    %2445 = vmatprep.subr.bf16.mxu0 0
    %2446 = vmatpush1.bf16.msra.mxu0 0
    %2447 = vmatprep.mubr.bf16.mxu0 0
    %2448 = vmatmul.mubr.bf16.gmra.mrb[0].mxu0 %v2413
    %v2449 = vpop.f32.mrb[0].mxu0
    %v2450 = vadd.f32 0.0, %v2449
    %v2451 = vpop.f32.mrb[0].mxu0
    %v2452 = vpop.f32.mrb[0].mxu0
    %v2453 = vadd.f32 0.0, %v2452
    %v2454 = vpop.f32.mrb[0].mxu0
    %2455 = vdwg.mxu0
    %v2456 = vadd.f32 %v2026, %v2450
    %v2457 = vadd.f32 %v2029, %v2453
    %s2458 = scalar_lea.vmem %s6, 96
    %v2459 = vld [vmem:[%s2458] sm:$0xf]
    %v2460 = vld [vmem:[%s2458 + $0x4] sm:$0xf]
    %v2461 = vld [vmem:[%s2458 + $0x8] sm:$0xf]
    %v2462 = vld [vmem:[%s2458 + $0xc] sm:$0xf]
    %v2463 = vld [vmem:[%s2458 + $0x10] sm:$0xf]
    %v2464 = vld [vmem:[%s2458 + $0x14] sm:$0xf]
    %v2465 = vld [vmem:[%s2458 + $0x18] sm:$0xf]
    %v2466 = vld [vmem:[%s2458 + $0x1c] sm:$0xf]
    %s2467 = scalar_lea.vmem %s11, 3
    %v2468 = vld [vmem:[%s2467] sm:$0x1]
    %v2470 = vlaneseq
    %v2471 = vshrl.u32 %v2470, 7
    %v2472 = vsub.s32 0, %v2471
    %v2473 = vrot.slane %v2468, %v2472
    %v2483 = vunpack.c.l.b16 %v2459
    %v2484 = vunpack.c.l.b16 %v2460
    %v2485 = vunpack.c.l.b16 %v2461
    %v2486 = vunpack.c.l.b16 %v2462
    %v2487 = vunpack.c.l.b16 %v2463
    %v2488 = vunpack.c.l.b16 %v2464
    %v2489 = vunpack.c.l.b16 %v2465
    %v2490 = vunpack.c.l.b16 %v2466
    %v2491 = vpack.c.b16 %v2484, %v2483
    %v2492 = vpack.c.b16 %v2486, %v2485
    %v2493 = vpack.c.b16 %v2488, %v2487
    %v2494 = vpack.c.b16 %v2490, %v2489
    %2499 = vmatprep.subr.bf16.mxu0 0
    %2500 = vmatpush1.bf16.msra.mxu0 %v2491
    %2501 = vmatprep.subr.bf16.mxu0 0
    %2502 = vmatpush1.bf16.msra.mxu0 %v2492
    %2503 = vmatprep.subr.bf16.mxu0 0
    %2504 = vmatpush1.bf16.msra.mxu0 %v2493
    %2505 = vmatprep.subr.bf16.mxu0 0
    %2506 = vmatpush1.bf16.msra.mxu0 %v2494
    %2507 = vmatprep.subr.bf16.mxu0 0
    %2508 = vmatpush1.bf16.msra.mxu0 0
    %2509 = vmatprep.subr.bf16.mxu0 0
    %2510 = vmatpush1.bf16.msra.mxu0 0
    %2511 = vmatprep.subr.bf16.mxu0 0
    %2512 = vmatpush1.bf16.msra.mxu0 0
    %2513 = vmatprep.subr.bf16.mxu0 0
    %2514 = vmatpush1.bf16.msra.mxu0 0
    %2515 = vmatprep.subr.bf16.mxu0 0
    %2516 = vmatpush1.bf16.msra.mxu0 0
    %2517 = vmatprep.subr.bf16.mxu0 0
    %2518 = vmatpush1.bf16.msra.mxu0 0
    %2519 = vmatprep.subr.bf16.mxu0 0
    %2520 = vmatpush1.bf16.msra.mxu0 0
    %2521 = vmatprep.subr.bf16.mxu0 0
    %2522 = vmatpush1.bf16.msra.mxu0 0
    %2523 = vmatprep.subr.bf16.mxu0 0
    %2524 = vmatpush1.bf16.msra.mxu0 0
    %2525 = vmatprep.subr.bf16.mxu0 0
    %2526 = vmatpush1.bf16.msra.mxu0 0
    %2527 = vmatprep.subr.bf16.mxu0 0
    %2528 = vmatpush1.bf16.msra.mxu0 0
    %2529 = vmatprep.subr.bf16.mxu0 0
    %2530 = vmatpush1.bf16.msra.mxu0 0
    %2531 = vmatprep.mubr.bf16.mxu0 0
    %2532 = vmatmul.mubr.bf16.gmra.mrb[0].mxu0 %v1213
    %v2533 = vpop.f32.mrb[0].mxu0
    %v2534 = vadd.f32 %v2473, %v2533
    %v2535 = vpop.f32.mrb[0].mxu0
    %v2536 = vpop.f32.mrb[0].mxu0
    %v2537 = vadd.f32 %v2473, %v2536
    %v2538 = vpop.f32.mrb[0].mxu0
    %2539 = vdwg.mxu0
    %v2540 = vpack.c.bf16 %v2534, %v2534
    %v2541 = vpack.c.bf16 %v2537, %v2537
    %s2542 = scalar_lea.vmem %s7, 24
    %v2543 = vld [vmem:[%s2542] sm:$0xf]
    %v2544 = vld [vmem:[%s2542 + $0x4] sm:$0xf]
    %v2547 = vunpack.c.l.b16 %v2540
    %v2548 = vunpack.c.l.b16 %v2541
    %v2549 = vpack.c.b16 %v2548, %v2547
    %v2552 = vunpack.c.l.b16 %v2543
    %v2553 = vunpack.c.l.b16 %v2544
    %v2554 = vpack.c.b16 %v2553, %v2552
    %v2557 = vsel %vm94, %v2549, 0
    %2559 = vmatprep.subr.bf16.mxu0 0
    %2560 = vmatpush1.bf16.msra.mxu0 %v2554
    %2561 = vmatprep.subr.bf16.mxu0 0
    %2562 = vmatpush1.bf16.msra.mxu0 0
    %2563 = vmatprep.subr.bf16.mxu0 0
    %2564 = vmatpush1.bf16.msra.mxu0 0
    %2565 = vmatprep.subr.bf16.mxu0 0
    %2566 = vmatpush1.bf16.msra.mxu0 0
    %2567 = vmatprep.subr.bf16.mxu0 0
    %2568 = vmatpush1.bf16.msra.mxu0 0
    %2569 = vmatprep.subr.bf16.mxu0 0
    %2570 = vmatpush1.bf16.msra.mxu0 0
    %2571 = vmatprep.subr.bf16.mxu0 0
    %2572 = vmatpush1.bf16.msra.mxu0 0
    %2573 = vmatprep.subr.bf16.mxu0 0
    %2574 = vmatpush1.bf16.msra.mxu0 0
    %2575 = vmatprep.subr.bf16.mxu0 0
    %2576 = vmatpush1.bf16.msra.mxu0 0
    %2577 = vmatprep.subr.bf16.mxu0 0
    %2578 = vmatpush1.bf16.msra.mxu0 0
    %2579 = vmatprep.subr.bf16.mxu0 0
    %2580 = vmatpush1.bf16.msra.mxu0 0
    %2581 = vmatprep.subr.bf16.mxu0 0
    %2582 = vmatpush1.bf16.msra.mxu0 0
    %2583 = vmatprep.subr.bf16.mxu0 0
    %2584 = vmatpush1.bf16.msra.mxu0 0
    %2585 = vmatprep.subr.bf16.mxu0 0
    %2586 = vmatpush1.bf16.msra.mxu0 0
    %2587 = vmatprep.subr.bf16.mxu0 0
    %2588 = vmatpush1.bf16.msra.mxu0 0
    %2589 = vmatprep.subr.bf16.mxu0 0
    %2590 = vmatpush1.bf16.msra.mxu0 0
    %2591 = vmatprep.mubr.bf16.mxu0 0
    %2592 = vmatmul.mubr.bf16.gmra.mrb[0].mxu0 %v2557
    %v2593 = vpop.f32.mrb[0].mxu0
    %v2594 = vadd.f32 0.0, %v2593
    %v2595 = vpop.f32.mrb[0].mxu0
    %v2596 = vpop.f32.mrb[0].mxu0
    %v2597 = vadd.f32 0.0, %v2596
    %v2598 = vpop.f32.mrb[0].mxu0
    %2599 = vdwg.mxu0
    %v2600 = vpack.c.bf16 %v2594, %v2594
    %v2601 = vpack.c.bf16 %v2597, %v2597
    %v2603 = vsel %vm46, %v2600, 0
    %2605 = vmatprep.subr.bf16.mxu0 0
    %2606 = vmatpush1.bf16.xpose.msra.mxu0 %v1321
    %2607 = vmatprep.subr.bf16.mxu0 0
    %2608 = vmatpush1.bf16.xpose.msra.mxu0 0
    %2609 = vmatprep.subr.bf16.mxu0 0
    %2610 = vmatpush1.bf16.xpose.msra.mxu0 0
    %2611 = vmatprep.subr.bf16.mxu0 0
    %2612 = vmatpush1.bf16.xpose.msra.mxu0 0
    %2613 = vmatprep.subr.bf16.mxu0 0
    %2614 = vmatpush1.bf16.xpose.msra.mxu0 0
    %2615 = vmatprep.subr.bf16.mxu0 0
    %2616 = vmatpush1.bf16.xpose.msra.mxu0 0
    %2617 = vmatprep.subr.bf16.mxu0 0
    %2618 = vmatpush1.bf16.xpose.msra.mxu0 0
    %2619 = vmatprep.subr.bf16.mxu0 0
    %2620 = vmatpush1.bf16.xpose.msra.mxu0 0
    %2621 = vmatprep.subr.bf16.mxu0 0
    %2622 = vmatpush1.bf16.xpose.msra.mxu0 0
    %2623 = vmatprep.subr.bf16.mxu0 0
    %2624 = vmatpush1.bf16.xpose.msra.mxu0 0
    %2625 = vmatprep.subr.bf16.mxu0 0
    %2626 = vmatpush1.bf16.xpose.msra.mxu0 0
    %2627 = vmatprep.subr.bf16.mxu0 0
    %2628 = vmatpush1.bf16.xpose.msra.mxu0 0
    %2629 = vmatprep.subr.bf16.mxu0 0
    %2630 = vmatpush1.bf16.xpose.msra.mxu0 0
    %2631 = vmatprep.subr.bf16.mxu0 0
    %2632 = vmatpush1.bf16.xpose.msra.mxu0 0
    %2633 = vmatprep.subr.bf16.mxu0 0
    %2634 = vmatpush1.bf16.xpose.msra.mxu0 0
    %2635 = vmatprep.subr.bf16.mxu0 0
    %2636 = vmatpush1.bf16.xpose.msra.mxu0 0
    %2637 = vmatprep.mubr.bf16.mxu0 0
    %2638 = vmatmul.mubr.bf16.gmra.mrb[0].mxu0 %v2603
    %v2639 = vpop.f32.mrb[0].mxu0
    %v2640 = vadd.f32 0.0, %v2639
    %v2641 = vpop.f32.mrb[0].mxu0
    %v2642 = vpop.f32.mrb[0].mxu0
    %v2643 = vpop.f32.mrb[0].mxu0
    %2644 = vdwg.mxu0
    %v2646 = vsel %vm46, %v2601, 0
    %2648 = vmatprep.subr.bf16.mxu0 0
    %2649 = vmatpush1.bf16.xpose.msra.mxu0 %v1367
    %2650 = vmatprep.subr.bf16.mxu0 0
    %2651 = vmatpush1.bf16.xpose.msra.mxu0 0
    %2652 = vmatprep.subr.bf16.mxu0 0
    %2653 = vmatpush1.bf16.xpose.msra.mxu0 0
    %2654 = vmatprep.subr.bf16.mxu0 0
    %2655 = vmatpush1.bf16.xpose.msra.mxu0 0
    %2656 = vmatprep.subr.bf16.mxu0 0
    %2657 = vmatpush1.bf16.xpose.msra.mxu0 0
    %2658 = vmatprep.subr.bf16.mxu0 0
    %2659 = vmatpush1.bf16.xpose.msra.mxu0 0
    %2660 = vmatprep.subr.bf16.mxu0 0
    %2661 = vmatpush1.bf16.xpose.msra.mxu0 0
    %2662 = vmatprep.subr.bf16.mxu0 0
    %2663 = vmatpush1.bf16.xpose.msra.mxu0 0
    %2664 = vmatprep.subr.bf16.mxu0 0
    %2665 = vmatpush1.bf16.xpose.msra.mxu0 0
    %2666 = vmatprep.subr.bf16.mxu0 0
    %2667 = vmatpush1.bf16.xpose.msra.mxu0 0
    %2668 = vmatprep.subr.bf16.mxu0 0
    %2669 = vmatpush1.bf16.xpose.msra.mxu0 0
    %2670 = vmatprep.subr.bf16.mxu0 0
    %2671 = vmatpush1.bf16.xpose.msra.mxu0 0
    %2672 = vmatprep.subr.bf16.mxu0 0
    %2673 = vmatpush1.bf16.xpose.msra.mxu0 0
    %2674 = vmatprep.subr.bf16.mxu0 0
    %2675 = vmatpush1.bf16.xpose.msra.mxu0 0
    %2676 = vmatprep.subr.bf16.mxu0 0
    %2677 = vmatpush1.bf16.xpose.msra.mxu0 0
    %2678 = vmatprep.subr.bf16.mxu0 0
    %2679 = vmatpush1.bf16.xpose.msra.mxu0 0
    %2680 = vmatprep.mubr.bf16.mxu0 0
    %2681 = vmatmul.mubr.bf16.gmra.mrb[0].mxu0 %v2646
    %v2682 = vpop.f32.mrb[0].mxu0
    %v2683 = vadd.f32 0.0, %v2682
    %v2684 = vpop.f32.mrb[0].mxu0
    %v2685 = vpop.f32.mrb[0].mxu0
    %v2686 = vpop.f32.mrb[0].mxu0
    %2687 = vdwg.mxu0
    %v2688 = vsel %vm1409, %v2640, -inf
    %2689 = vmax.xlane.f32.xlu0 %v2688
    %v2690 = vpop.xlane.xlu0 %2689
    %v2691 = vsel %vm1409, %v2683, -inf
    %2692 = vmax.xlane.f32.xlu0 %v2691
    %v2693 = vpop.xlane.xlu0 %2692
    %v2694 = vsub.f32 %v2640, %v2690
    %v2695 = vsub.f32 %v2683, %v2693
    %v2696 = vmul.f32 %v2694, 1.442695
    %v2697 = vpow.pop %v2696
    %v2698 = vmul.f32 %v2695, 1.442695
    %v2699 = vpow.pop %v2698
    %v2700 = vsel %vm1409, %v2697, 0.0
    %2701 = vadd.xlane.f32.xlu0 %v2700
    %v2702 = vpop.xlane.xlu0 %2701
    %v2703 = vsel %vm1409, %v2699, 0.0
    %2704 = vadd.xlane.f32.xlu0 %v2703
    %v2705 = vpop.xlane.xlu0 %2704
    %v2706 = vrcp.pop %v2702
    %v2707 = vrcp.pop %v2705
    %v2708 = vmul.f32 %v2697, %v2706
    %v2709 = vmul.f32 %v2699, %v2707
    %v2710 = vpack.c.bf16 %v2708, %v2708
    %v2711 = vpack.c.bf16 %v2709, %v2709
    %v2713 = vsel %vm1409, %v2710, 0
    %2715 = vmatprep.subr.bf16.mxu0 0
    %2716 = vmatpush1.bf16.msra.mxu0 %v1438
    %2717 = vmatprep.subr.bf16.mxu0 0
    %2718 = vmatpush1.bf16.msra.mxu0 0
    %2719 = vmatprep.subr.bf16.mxu0 0
    %2720 = vmatpush1.bf16.msra.mxu0 0
    %2721 = vmatprep.subr.bf16.mxu0 0
    %2722 = vmatpush1.bf16.msra.mxu0 0
    %2723 = vmatprep.subr.bf16.mxu0 0
    %2724 = vmatpush1.bf16.msra.mxu0 0
    %2725 = vmatprep.subr.bf16.mxu0 0
    %2726 = vmatpush1.bf16.msra.mxu0 0
    %2727 = vmatprep.subr.bf16.mxu0 0
    %2728 = vmatpush1.bf16.msra.mxu0 0
    %2729 = vmatprep.subr.bf16.mxu0 0
    %2730 = vmatpush1.bf16.msra.mxu0 0
    %2731 = vmatprep.subr.bf16.mxu0 0
    %2732 = vmatpush1.bf16.msra.mxu0 0
    %2733 = vmatprep.subr.bf16.mxu0 0
    %2734 = vmatpush1.bf16.msra.mxu0 0
    %2735 = vmatprep.subr.bf16.mxu0 0
    %2736 = vmatpush1.bf16.msra.mxu0 0
    %2737 = vmatprep.subr.bf16.mxu0 0
    %2738 = vmatpush1.bf16.msra.mxu0 0
    %2739 = vmatprep.subr.bf16.mxu0 0
    %2740 = vmatpush1.bf16.msra.mxu0 0
    %2741 = vmatprep.subr.bf16.mxu0 0
    %2742 = vmatpush1.bf16.msra.mxu0 0
    %2743 = vmatprep.subr.bf16.mxu0 0
    %2744 = vmatpush1.bf16.msra.mxu0 0
    %2745 = vmatprep.subr.bf16.mxu0 0
    %2746 = vmatpush1.bf16.msra.mxu0 0
    %2747 = vmatprep.mubr.bf16.mxu0 0
    %2748 = vmatmul.mubr.bf16.gmra.mrb[0].mxu0 %v2713
    %v2749 = vpop.f32.mrb[0].mxu0
    %v2750 = vadd.f32 0.0, %v2749
    %v2751 = vpop.f32.mrb[0].mxu0
    %v2752 = vpop.f32.mrb[0].mxu0
    %v2753 = vpop.f32.mrb[0].mxu0
    %2754 = vdwg.mxu0
    %v2756 = vsel %vm1409, %v2711, 0
    %2758 = vmatprep.subr.bf16.mxu0 0
    %2759 = vmatpush1.bf16.msra.mxu0 %v1483
    %2760 = vmatprep.subr.bf16.mxu0 0
    %2761 = vmatpush1.bf16.msra.mxu0 0
    %2762 = vmatprep.subr.bf16.mxu0 0
    %2763 = vmatpush1.bf16.msra.mxu0 0
    %2764 = vmatprep.subr.bf16.mxu0 0
    %2765 = vmatpush1.bf16.msra.mxu0 0
    %2766 = vmatprep.subr.bf16.mxu0 0
    %2767 = vmatpush1.bf16.msra.mxu0 0
    %2768 = vmatprep.subr.bf16.mxu0 0
    %2769 = vmatpush1.bf16.msra.mxu0 0
    %2770 = vmatprep.subr.bf16.mxu0 0
    %2771 = vmatpush1.bf16.msra.mxu0 0
    %2772 = vmatprep.subr.bf16.mxu0 0
    %2773 = vmatpush1.bf16.msra.mxu0 0
    %2774 = vmatprep.subr.bf16.mxu0 0
    %2775 = vmatpush1.bf16.msra.mxu0 0
    %2776 = vmatprep.subr.bf16.mxu0 0
    %2777 = vmatpush1.bf16.msra.mxu0 0
    %2778 = vmatprep.subr.bf16.mxu0 0
    %2779 = vmatpush1.bf16.msra.mxu0 0
    %2780 = vmatprep.subr.bf16.mxu0 0
    %2781 = vmatpush1.bf16.msra.mxu0 0
    %2782 = vmatprep.subr.bf16.mxu0 0
    %2783 = vmatpush1.bf16.msra.mxu0 0
    %2784 = vmatprep.subr.bf16.mxu0 0
    %2785 = vmatpush1.bf16.msra.mxu0 0
    %2786 = vmatprep.subr.bf16.mxu0 0
    %2787 = vmatpush1.bf16.msra.mxu0 0
    %2788 = vmatprep.subr.bf16.mxu0 0
    %2789 = vmatpush1.bf16.msra.mxu0 0
    %2790 = vmatprep.mubr.bf16.mxu0 0
    %2791 = vmatmul.mubr.bf16.gmra.mrb[0].mxu0 %v2756
    %v2792 = vpop.f32.mrb[0].mxu0
    %v2793 = vadd.f32 0.0, %v2792
    %v2794 = vpop.f32.mrb[0].mxu0
    %v2795 = vpop.f32.mrb[0].mxu0
    %v2796 = vpop.f32.mrb[0].mxu0
    %2797 = vdwg.mxu0
    %v2798 = vpack.c.bf16 %v2750, %v2750
    %v2799 = vpack.c.bf16 %v2793, %v2793
    %s2800 = scalar_lea.vmem %s8, 96
    %v2801 = vld [vmem:[%s2800] sm:$0xf]
    %v2802 = vld [vmem:[%s2800 + $0x4] sm:$0xf]
    %v2803 = vld [vmem:[%s2800 + $0x8] sm:$0xf]
    %v2804 = vld [vmem:[%s2800 + $0xc] sm:$0xf]
    %v2805 = vld [vmem:[%s2800 + $0x10] sm:$0xf]
    %v2806 = vld [vmem:[%s2800 + $0x14] sm:$0xf]
    %v2807 = vld [vmem:[%s2800 + $0x18] sm:$0xf]
    %v2808 = vld [vmem:[%s2800 + $0x1c] sm:$0xf]
    %v2811 = vunpack.c.l.b16 %v2798
    %v2812 = vunpack.c.l.b16 %v2799
    %v2813 = vpack.c.b16 %v2812, %v2811
    %v2822 = vunpack.c.l.b16 %v2801
    %v2823 = vunpack.c.l.b16 %v2802
    %v2824 = vunpack.c.l.b16 %v2803
    %v2825 = vunpack.c.l.b16 %v2804
    %v2826 = vunpack.c.l.b16 %v2805
    %v2827 = vunpack.c.l.b16 %v2806
    %v2828 = vunpack.c.l.b16 %v2807
    %v2829 = vunpack.c.l.b16 %v2808
    %v2830 = vpack.c.b16 %v2823, %v2822
    %v2831 = vpack.c.b16 %v2825, %v2824
    %v2832 = vpack.c.b16 %v2827, %v2826
    %v2833 = vpack.c.b16 %v2829, %v2828
    %v2839 = vsel %vm46, %v2813, 0
    %2841 = vmatprep.subr.bf16.mxu0 0
    %2842 = vmatpush1.bf16.msra.mxu0 %v2830
    %2843 = vmatprep.subr.bf16.mxu0 0
    %2844 = vmatpush1.bf16.msra.mxu0 %v2831
    %2845 = vmatprep.subr.bf16.mxu0 0
    %2846 = vmatpush1.bf16.msra.mxu0 %v2832
    %2847 = vmatprep.subr.bf16.mxu0 0
    %2848 = vmatpush1.bf16.msra.mxu0 %v2833
    %2849 = vmatprep.subr.bf16.mxu0 0
    %2850 = vmatpush1.bf16.msra.mxu0 0
    %2851 = vmatprep.subr.bf16.mxu0 0
    %2852 = vmatpush1.bf16.msra.mxu0 0
    %2853 = vmatprep.subr.bf16.mxu0 0
    %2854 = vmatpush1.bf16.msra.mxu0 0
    %2855 = vmatprep.subr.bf16.mxu0 0
    %2856 = vmatpush1.bf16.msra.mxu0 0
    %2857 = vmatprep.subr.bf16.mxu0 0
    %2858 = vmatpush1.bf16.msra.mxu0 0
    %2859 = vmatprep.subr.bf16.mxu0 0
    %2860 = vmatpush1.bf16.msra.mxu0 0
    %2861 = vmatprep.subr.bf16.mxu0 0
    %2862 = vmatpush1.bf16.msra.mxu0 0
    %2863 = vmatprep.subr.bf16.mxu0 0
    %2864 = vmatpush1.bf16.msra.mxu0 0
    %2865 = vmatprep.subr.bf16.mxu0 0
    %2866 = vmatpush1.bf16.msra.mxu0 0
    %2867 = vmatprep.subr.bf16.mxu0 0
    %2868 = vmatpush1.bf16.msra.mxu0 0
    %2869 = vmatprep.subr.bf16.mxu0 0
    %2870 = vmatpush1.bf16.msra.mxu0 0
    %2871 = vmatprep.subr.bf16.mxu0 0
    %2872 = vmatpush1.bf16.msra.mxu0 0
    %2873 = vmatprep.mubr.bf16.mxu0 0
    %2874 = vmatmul.mubr.bf16.gmra.mrb[0].mxu0 %v2839
    %v2875 = vpop.f32.mrb[0].mxu0
    %v2876 = vadd.f32 0.0, %v2875
    %v2877 = vpop.f32.mrb[0].mxu0
    %v2878 = vpop.f32.mrb[0].mxu0
    %v2879 = vadd.f32 0.0, %v2878
    %v2880 = vpop.f32.mrb[0].mxu0
    %2881 = vdwg.mxu0
    %v2882 = vadd.f32 %v2456, %v2876
    %v2883 = vadd.f32 %v2457, %v2879
    %v2884 = vld [vmem:[%s12] sm:$0x1]
    %v2885 = vlaneseq
    %v2886 = vshrl.u32 %v2885, 7
    %v2887 = vsub.s32 0, %v2886
    %v2888 = vrot.slane %v2884, %v2887
    %v2889 = vadd.f32 %v2882, %v2888
    %v2890 = vadd.f32 %v2883, %v2888
    %v2891 = vadd.f32 %v1164, %v2889
    %v2892 = vadd.f32 %v1165, %v2890
    %v2893 = vld [vmem:[%s12 + $0x4] sm:$0x1]
    %v2894 = vld [vmem:[%s12 + $0x8] sm:$0x1]
    %v2895 = vsel %vm46, %v2891, 0.0
    %2896 = vadd.xlane.f32.xlu0 %v2895
    %v2897 = vpop.xlane.xlu0 %2896
    %v2898 = vsel %vm46, %v2892, 0.0
    %2899 = vadd.xlane.f32.xlu0 %v2898
    %v2900 = vpop.xlane.xlu0 %2899
    %v2901 = vmul.f32 %v2897, %v702
    %v2902 = vmul.f32 %v2900, %v702
    %v2903 = vsub.f32 %v2891, %v2901
    %v2904 = vsub.f32 %v2892, %v2902
    %v2905 = vmul.f32 %v2903, %v2903
    %v2906 = vmul.f32 %v2904, %v2904
    %v2907 = vsel %vm46, %v2905, 0.0
    %2908 = vadd.xlane.f32.xlu0 %v2907
    %v2909 = vpop.xlane.xlu0 %2908
    %v2910 = vsel %vm46, %v2906, 0.0
    %2911 = vadd.xlane.f32.xlu0 %v2910
    %v2912 = vpop.xlane.xlu0 %2911
    %v2913 = vmul.f32 %v2909, %v702
    %v2914 = vmul.f32 %v2912, %v702
    %v2915 = vadd.f32 %v2913, 1e-05
    %v2916 = vadd.f32 %v2914, 1e-05
    %v2917 = vrsqrt.pop %v2915
    %v2918 = vrsqrt.pop %v2916
    %v2919 = vmul.f32 %v2903, %v2917
    %v2920 = vmul.f32 %v2904, %v2918
    %v2921 = vlaneseq
    %v2922 = vshrl.u32 %v2921, 7
    %v2923 = vsub.s32 0, %v2922
    %v2924 = vrot.slane %v2893, %v2923
    %v2925 = vmul.f32 %v2919, %v2924
    %v2926 = vmul.f32 %v2920, %v2924
    %v2927 = vlaneseq
    %v2928 = vshrl.u32 %v2927, 7
    %v2929 = vsub.s32 0, %v2928
    %v2930 = vrot.slane %v2894, %v2929
    %v2931 = vadd.f32 %v2925, %v2930
    %v2932 = vadd.f32 %v2926, %v2930
    %v2933 = vpack.c.bf16 %v2931, %v2931
    %v2934 = vpack.c.bf16 %v2932, %v2932
    %s2935 = scalar_lea.vmem %s6, 128
    %v2936 = vld [vmem:[%s2935] sm:$0xf]
    %v2937 = vld [vmem:[%s2935 + $0x4] sm:$0xf]
    %v2938 = vld [vmem:[%s2935 + $0x8] sm:$0xf]
    %v2939 = vld [vmem:[%s2935 + $0xc] sm:$0xf]
    %v2940 = vld [vmem:[%s2935 + $0x10] sm:$0xf]
    %v2941 = vld [vmem:[%s2935 + $0x14] sm:$0xf]
    %v2942 = vld [vmem:[%s2935 + $0x18] sm:$0xf]
    %v2943 = vld [vmem:[%s2935 + $0x1c] sm:$0xf]
    %s2944 = scalar_lea.vmem %s11, 4
    %v2945 = vld [vmem:[%s2944] sm:$0x1]
    %v2947 = vlaneseq
    %v2948 = vshrl.u32 %v2947, 7
    %v2949 = vsub.s32 0, %v2948
    %v2950 = vrot.slane %v2945, %v2949
    %v2954 = vunpack.c.l.b16 %v2933
    %v2955 = vunpack.c.l.b16 %v2934
    %v2956 = vpack.c.b16 %v2955, %v2954
    %v2965 = vunpack.c.l.b16 %v2936
    %v2966 = vunpack.c.l.b16 %v2937
    %v2967 = vunpack.c.l.b16 %v2938
    %v2968 = vunpack.c.l.b16 %v2939
    %v2969 = vunpack.c.l.b16 %v2940
    %v2970 = vunpack.c.l.b16 %v2941
    %v2971 = vunpack.c.l.b16 %v2942
    %v2972 = vunpack.c.l.b16 %v2943
    %v2973 = vpack.c.b16 %v2966, %v2965
    %v2974 = vpack.c.b16 %v2968, %v2967
    %v2975 = vpack.c.b16 %v2970, %v2969
    %v2976 = vpack.c.b16 %v2972, %v2971
    %v2982 = vsel %vm46, %v2956, 0
    %2984 = vmatprep.subr.bf16.mxu0 0
    %2985 = vmatpush1.bf16.msra.mxu0 %v2973
    %2986 = vmatprep.subr.bf16.mxu0 0
    %2987 = vmatpush1.bf16.msra.mxu0 %v2974
    %2988 = vmatprep.subr.bf16.mxu0 0
    %2989 = vmatpush1.bf16.msra.mxu0 %v2975
    %2990 = vmatprep.subr.bf16.mxu0 0
    %2991 = vmatpush1.bf16.msra.mxu0 %v2976
    %2992 = vmatprep.subr.bf16.mxu0 0
    %2993 = vmatpush1.bf16.msra.mxu0 0
    %2994 = vmatprep.subr.bf16.mxu0 0
    %2995 = vmatpush1.bf16.msra.mxu0 0
    %2996 = vmatprep.subr.bf16.mxu0 0
    %2997 = vmatpush1.bf16.msra.mxu0 0
    %2998 = vmatprep.subr.bf16.mxu0 0
    %2999 = vmatpush1.bf16.msra.mxu0 0
    %3000 = vmatprep.subr.bf16.mxu0 0
    %3001 = vmatpush1.bf16.msra.mxu0 0
    %3002 = vmatprep.subr.bf16.mxu0 0
    %3003 = vmatpush1.bf16.msra.mxu0 0
    %3004 = vmatprep.subr.bf16.mxu0 0
    %3005 = vmatpush1.bf16.msra.mxu0 0
    %3006 = vmatprep.subr.bf16.mxu0 0
    %3007 = vmatpush1.bf16.msra.mxu0 0
    %3008 = vmatprep.subr.bf16.mxu0 0
    %3009 = vmatpush1.bf16.msra.mxu0 0
    %3010 = vmatprep.subr.bf16.mxu0 0
    %3011 = vmatpush1.bf16.msra.mxu0 0
    %3012 = vmatprep.subr.bf16.mxu0 0
    %3013 = vmatpush1.bf16.msra.mxu0 0
    %3014 = vmatprep.subr.bf16.mxu0 0
    %3015 = vmatpush1.bf16.msra.mxu0 0
    %3016 = vmatprep.mubr.bf16.mxu0 0
    %3017 = vmatmul.mubr.bf16.gmra.mrb[0].mxu0 %v2982
    %v3018 = vpop.f32.mrb[0].mxu0
    %v3019 = vadd.f32 %v2950, %v3018
    %v3020 = vpop.f32.mrb[0].mxu0
    %v3021 = vpop.f32.mrb[0].mxu0
    %v3022 = vadd.f32 %v2950, %v3021
    %v3023 = vpop.f32.mrb[0].mxu0
    %3024 = vdwg.mxu0
    %v3025 = vpack.c.bf16 %v3019, %v3019
    %v3026 = vpack.c.bf16 %v3022, %v3022
    %s3027 = scalar_lea.vmem %s7, 32
    %v3028 = vld [vmem:[%s3027] sm:$0xf]
    %v3029 = vld [vmem:[%s3027 + $0x4] sm:$0xf]
    %v3032 = vunpack.c.l.b16 %v3025
    %v3033 = vunpack.c.l.b16 %v3026
    %v3034 = vpack.c.b16 %v3033, %v3032
    %v3037 = vunpack.c.l.b16 %v3028
    %v3038 = vunpack.c.l.b16 %v3029
    %v3039 = vpack.c.b16 %v3038, %v3037
    %v3042 = vsel %vm94, %v3034, 0
    %3044 = vmatprep.subr.bf16.mxu0 0
    %3045 = vmatpush1.bf16.msra.mxu0 %v3039
    %3046 = vmatprep.subr.bf16.mxu0 0
    %3047 = vmatpush1.bf16.msra.mxu0 0
    %3048 = vmatprep.subr.bf16.mxu0 0
    %3049 = vmatpush1.bf16.msra.mxu0 0
    %3050 = vmatprep.subr.bf16.mxu0 0
    %3051 = vmatpush1.bf16.msra.mxu0 0
    %3052 = vmatprep.subr.bf16.mxu0 0
    %3053 = vmatpush1.bf16.msra.mxu0 0
    %3054 = vmatprep.subr.bf16.mxu0 0
    %3055 = vmatpush1.bf16.msra.mxu0 0
    %3056 = vmatprep.subr.bf16.mxu0 0
    %3057 = vmatpush1.bf16.msra.mxu0 0
    %3058 = vmatprep.subr.bf16.mxu0 0
    %3059 = vmatpush1.bf16.msra.mxu0 0
    %3060 = vmatprep.subr.bf16.mxu0 0
    %3061 = vmatpush1.bf16.msra.mxu0 0
    %3062 = vmatprep.subr.bf16.mxu0 0
    %3063 = vmatpush1.bf16.msra.mxu0 0
    %3064 = vmatprep.subr.bf16.mxu0 0
    %3065 = vmatpush1.bf16.msra.mxu0 0
    %3066 = vmatprep.subr.bf16.mxu0 0
    %3067 = vmatpush1.bf16.msra.mxu0 0
    %3068 = vmatprep.subr.bf16.mxu0 0
    %3069 = vmatpush1.bf16.msra.mxu0 0
    %3070 = vmatprep.subr.bf16.mxu0 0
    %3071 = vmatpush1.bf16.msra.mxu0 0
    %3072 = vmatprep.subr.bf16.mxu0 0
    %3073 = vmatpush1.bf16.msra.mxu0 0
    %3074 = vmatprep.subr.bf16.mxu0 0
    %3075 = vmatpush1.bf16.msra.mxu0 0
    %3076 = vmatprep.mubr.bf16.mxu0 0
    %3077 = vmatmul.mubr.bf16.gmra.mrb[0].mxu0 %v3042
    %v3078 = vpop.f32.mrb[0].mxu0
    %v3079 = vadd.f32 0.0, %v3078
    %v3080 = vpop.f32.mrb[0].mxu0
    %v3081 = vpop.f32.mrb[0].mxu0
    %v3082 = vadd.f32 0.0, %v3081
    %v3083 = vpop.f32.mrb[0].mxu0
    %3084 = vdwg.mxu0
    %v3085 = vpack.c.bf16 %v3079, %v3079
    %v3086 = vpack.c.bf16 %v3082, %v3082
    %v3088 = vsel %vm46, %v3085, 0
    %v3091 = vsel %vm46, %v1143, 0
    %v3094 = vsel %vm46, %v1144, 0
    %v3097 = vsel %vm46, %v1145, 0
    %v3100 = vsel %vm46, %v1146, 0
    %v3103 = vsel %vm46, %v1147, 0
    %v3106 = vsel %vm46, %v1148, 0
    %v3109 = vsel %vm46, %v1149, 0
    %v3112 = vsel %vm46, %v1150, 0
    %3114 = vmatprep.subr.bf16.mxu0 0
    %3115 = vmatpush1.bf16.xpose.msra.mxu0 %v3091
    %3116 = vmatprep.subr.bf16.mxu0 0
    %3117 = vmatpush1.bf16.xpose.msra.mxu0 %v3094
    %3118 = vmatprep.subr.bf16.mxu0 0
    %3119 = vmatpush1.bf16.xpose.msra.mxu0 %v3097
    %3120 = vmatprep.subr.bf16.mxu0 0
    %3121 = vmatpush1.bf16.xpose.msra.mxu0 %v3100
    %3122 = vmatprep.subr.bf16.mxu0 0
    %3123 = vmatpush1.bf16.xpose.msra.mxu0 %v3103
    %3124 = vmatprep.subr.bf16.mxu0 0
    %3125 = vmatpush1.bf16.xpose.msra.mxu0 %v3106
    %3126 = vmatprep.subr.bf16.mxu0 0
    %3127 = vmatpush1.bf16.xpose.msra.mxu0 %v3109
    %3128 = vmatprep.subr.bf16.mxu0 0
    %3129 = vmatpush1.bf16.xpose.msra.mxu0 %v3112
    %3130 = vmatprep.subr.bf16.mxu0 0
    %3131 = vmatpush1.bf16.xpose.msra.mxu0 0
    %3132 = vmatprep.subr.bf16.mxu0 0
    %3133 = vmatpush1.bf16.xpose.msra.mxu0 0
    %3134 = vmatprep.subr.bf16.mxu0 0
    %3135 = vmatpush1.bf16.xpose.msra.mxu0 0
    %3136 = vmatprep.subr.bf16.mxu0 0
    %3137 = vmatpush1.bf16.xpose.msra.mxu0 0
    %3138 = vmatprep.subr.bf16.mxu0 0
    %3139 = vmatpush1.bf16.xpose.msra.mxu0 0
    %3140 = vmatprep.subr.bf16.mxu0 0
    %3141 = vmatpush1.bf16.xpose.msra.mxu0 0
    %3142 = vmatprep.subr.bf16.mxu0 0
    %3143 = vmatpush1.bf16.xpose.msra.mxu0 0
    %3144 = vmatprep.subr.bf16.mxu0 0
    %3145 = vmatpush1.bf16.xpose.msra.mxu0 0
    %3146 = vmatprep.mubr.bf16.mxu0 0
    %3147 = vmatmul.mubr.bf16.gmra.mrb[0].mxu0 %v3088
    %v3148 = vpop.f32.mrb[0].mxu0
    %v3149 = vadd.f32 0.0, %v3148
    %v3150 = vpop.f32.mrb[0].mxu0
    %v3151 = vpop.f32.mrb[0].mxu0
    %v3152 = vpop.f32.mrb[0].mxu0
    %3153 = vdwg.mxu0
    %v3155 = vsel %vm46, %v3086, 0
    %v3158 = vsel %vm46, %v1151, 0
    %v3161 = vsel %vm46, %v1152, 0
    %v3164 = vsel %vm46, %v1153, 0
    %v3167 = vsel %vm46, %v1154, 0
    %v3170 = vsel %vm46, %v1155, 0
    %v3173 = vsel %vm46, %v1156, 0
    %v3176 = vsel %vm46, %v1157, 0
    %v3179 = vsel %vm46, %v1158, 0
    %3181 = vmatprep.subr.bf16.mxu0 0
    %3182 = vmatpush1.bf16.xpose.msra.mxu0 %v3158
    %3183 = vmatprep.subr.bf16.mxu0 0
    %3184 = vmatpush1.bf16.xpose.msra.mxu0 %v3161
    %3185 = vmatprep.subr.bf16.mxu0 0
    %3186 = vmatpush1.bf16.xpose.msra.mxu0 %v3164
    %3187 = vmatprep.subr.bf16.mxu0 0
    %3188 = vmatpush1.bf16.xpose.msra.mxu0 %v3167
    %3189 = vmatprep.subr.bf16.mxu0 0
    %3190 = vmatpush1.bf16.xpose.msra.mxu0 %v3170
    %3191 = vmatprep.subr.bf16.mxu0 0
    %3192 = vmatpush1.bf16.xpose.msra.mxu0 %v3173
    %3193 = vmatprep.subr.bf16.mxu0 0
    %3194 = vmatpush1.bf16.xpose.msra.mxu0 %v3176
    %3195 = vmatprep.subr.bf16.mxu0 0
    %3196 = vmatpush1.bf16.xpose.msra.mxu0 %v3179
    %3197 = vmatprep.subr.bf16.mxu0 0
    %3198 = vmatpush1.bf16.xpose.msra.mxu0 0
    %3199 = vmatprep.subr.bf16.mxu0 0
    %3200 = vmatpush1.bf16.xpose.msra.mxu0 0
    %3201 = vmatprep.subr.bf16.mxu0 0
    %3202 = vmatpush1.bf16.xpose.msra.mxu0 0
    %3203 = vmatprep.subr.bf16.mxu0 0
    %3204 = vmatpush1.bf16.xpose.msra.mxu0 0
    %3205 = vmatprep.subr.bf16.mxu0 0
    %3206 = vmatpush1.bf16.xpose.msra.mxu0 0
    %3207 = vmatprep.subr.bf16.mxu0 0
    %3208 = vmatpush1.bf16.xpose.msra.mxu0 0
    %3209 = vmatprep.subr.bf16.mxu0 0
    %3210 = vmatpush1.bf16.xpose.msra.mxu0 0
    %3211 = vmatprep.subr.bf16.mxu0 0
    %3212 = vmatpush1.bf16.xpose.msra.mxu0 0
    %3213 = vmatprep.mubr.bf16.mxu0 0
    %3214 = vmatmul.mubr.bf16.gmra.mrb[0].mxu0 %v3155
    %v3215 = vpop.f32.mrb[0].mxu0
    %v3216 = vadd.f32 0.0, %v3215
    %v3217 = vpop.f32.mrb[0].mxu0
    %v3218 = vpop.f32.mrb[0].mxu0
    %v3219 = vpop.f32.mrb[0].mxu0
    %3220 = vdwg.mxu0
    %3221 = vmax.xlane.f32.xlu0 %v3149
    %v3222 = vpop.xlane.xlu0 %3221
    %3223 = vmax.xlane.f32.xlu0 %v3216
    %v3224 = vpop.xlane.xlu0 %3223
    %v3225 = vsub.f32 %v3149, %v3222
    %v3226 = vsub.f32 %v3216, %v3224
    %v3227 = vmul.f32 %v3225, 1.442695
    %v3228 = vpow.pop %v3227
    %v3229 = vmul.f32 %v3226, 1.442695
    %v3230 = vpow.pop %v3229
    %v3231 = vmul.f32 %v3228, %v1163
    %v3232 = vmul.f32 %v3230, %v1163
    %3233 = vadd.xlane.f32.xlu0 %v3231
    %v3234 = vpop.xlane.xlu0 %3233
    %3235 = vadd.xlane.f32.xlu0 %v3232
    %v3236 = vpop.xlane.xlu0 %3235
    %v3237 = vrcp.pop %v3234
    %v3238 = vrcp.pop %v3236
    %v3239 = vmul.f32 %v3231, %v3237
    %v3240 = vmul.f32 %v3232, %v3238
    %v3241 = vpack.c.bf16 %v3239, %v3239
    %v3242 = vpack.c.bf16 %v3240, %v3240
    %3243 = vmatprep.subr.bf16.mxu0 0
    %3244 = vmatpush1.bf16.msra.mxu0 %v1127
    %3245 = vmatprep.subr.bf16.mxu0 0
    %3246 = vmatpush1.bf16.msra.mxu0 %v1128
    %3247 = vmatprep.subr.bf16.mxu0 0
    %3248 = vmatpush1.bf16.msra.mxu0 %v1129
    %3249 = vmatprep.subr.bf16.mxu0 0
    %3250 = vmatpush1.bf16.msra.mxu0 %v1130
    %3251 = vmatprep.subr.bf16.mxu0 0
    %3252 = vmatpush1.bf16.msra.mxu0 %v1131
    %3253 = vmatprep.subr.bf16.mxu0 0
    %3254 = vmatpush1.bf16.msra.mxu0 %v1132
    %3255 = vmatprep.subr.bf16.mxu0 0
    %3256 = vmatpush1.bf16.msra.mxu0 %v1133
    %3257 = vmatprep.subr.bf16.mxu0 0
    %3258 = vmatpush1.bf16.msra.mxu0 %v1134
    %3259 = vmatprep.subr.bf16.mxu0 0
    %3260 = vmatpush1.bf16.msra.mxu0 0
    %3261 = vmatprep.subr.bf16.mxu0 0
    %3262 = vmatpush1.bf16.msra.mxu0 0
    %3263 = vmatprep.subr.bf16.mxu0 0
    %3264 = vmatpush1.bf16.msra.mxu0 0
    %3265 = vmatprep.subr.bf16.mxu0 0
    %3266 = vmatpush1.bf16.msra.mxu0 0
    %3267 = vmatprep.subr.bf16.mxu0 0
    %3268 = vmatpush1.bf16.msra.mxu0 0
    %3269 = vmatprep.subr.bf16.mxu0 0
    %3270 = vmatpush1.bf16.msra.mxu0 0
    %3271 = vmatprep.subr.bf16.mxu0 0
    %3272 = vmatpush1.bf16.msra.mxu0 0
    %3273 = vmatprep.subr.bf16.mxu0 0
    %3274 = vmatpush1.bf16.msra.mxu0 0
    %3275 = vmatprep.mubr.bf16.mxu0 0
    %3276 = vmatmul.mubr.bf16.gmra.mrb[0].mxu0 %v3241
    %v3277 = vpop.f32.mrb[0].mxu0
    %v3278 = vadd.f32 0.0, %v3277
    %v3279 = vpop.f32.mrb[0].mxu0
    %v3280 = vpop.f32.mrb[0].mxu0
    %v3281 = vpop.f32.mrb[0].mxu0
    %3282 = vdwg.mxu0
    %3283 = vmatprep.subr.bf16.mxu0 0
    %3284 = vmatpush1.bf16.msra.mxu0 %v1135
    %3285 = vmatprep.subr.bf16.mxu0 0
    %3286 = vmatpush1.bf16.msra.mxu0 %v1136
    %3287 = vmatprep.subr.bf16.mxu0 0
    %3288 = vmatpush1.bf16.msra.mxu0 %v1137
    %3289 = vmatprep.subr.bf16.mxu0 0
    %3290 = vmatpush1.bf16.msra.mxu0 %v1138
    %3291 = vmatprep.subr.bf16.mxu0 0
    %3292 = vmatpush1.bf16.msra.mxu0 %v1139
    %3293 = vmatprep.subr.bf16.mxu0 0
    %3294 = vmatpush1.bf16.msra.mxu0 %v1140
    %3295 = vmatprep.subr.bf16.mxu0 0
    %3296 = vmatpush1.bf16.msra.mxu0 %v1141
    %3297 = vmatprep.subr.bf16.mxu0 0
    %3298 = vmatpush1.bf16.msra.mxu0 %v1142
    %3299 = vmatprep.subr.bf16.mxu0 0
    %3300 = vmatpush1.bf16.msra.mxu0 0
    %3301 = vmatprep.subr.bf16.mxu0 0
    %3302 = vmatpush1.bf16.msra.mxu0 0
    %3303 = vmatprep.subr.bf16.mxu0 0
    %3304 = vmatpush1.bf16.msra.mxu0 0
    %3305 = vmatprep.subr.bf16.mxu0 0
    %3306 = vmatpush1.bf16.msra.mxu0 0
    %3307 = vmatprep.subr.bf16.mxu0 0
    %3308 = vmatpush1.bf16.msra.mxu0 0
    %3309 = vmatprep.subr.bf16.mxu0 0
    %3310 = vmatpush1.bf16.msra.mxu0 0
    %3311 = vmatprep.subr.bf16.mxu0 0
    %3312 = vmatpush1.bf16.msra.mxu0 0
    %3313 = vmatprep.subr.bf16.mxu0 0
    %3314 = vmatpush1.bf16.msra.mxu0 0
    %3315 = vmatprep.mubr.bf16.mxu0 0
    %3316 = vmatmul.mubr.bf16.gmra.mrb[0].mxu0 %v3242
    %v3317 = vpop.f32.mrb[0].mxu0
    %v3318 = vadd.f32 0.0, %v3317
    %v3319 = vpop.f32.mrb[0].mxu0
    %v3320 = vpop.f32.mrb[0].mxu0
    %v3321 = vpop.f32.mrb[0].mxu0
    %3322 = vdwg.mxu0
    %v3323 = vpack.c.bf16 %v3278, %v3278
    %v3324 = vpack.c.bf16 %v3318, %v3318
    %s3325 = scalar_lea.vmem %s8, 128
    %v3326 = vld [vmem:[%s3325] sm:$0xf]
    %v3327 = vld [vmem:[%s3325 + $0x4] sm:$0xf]
    %v3328 = vld [vmem:[%s3325 + $0x8] sm:$0xf]
    %v3329 = vld [vmem:[%s3325 + $0xc] sm:$0xf]
    %v3330 = vld [vmem:[%s3325 + $0x10] sm:$0xf]
    %v3331 = vld [vmem:[%s3325 + $0x14] sm:$0xf]
    %v3332 = vld [vmem:[%s3325 + $0x18] sm:$0xf]
    %v3333 = vld [vmem:[%s3325 + $0x1c] sm:$0xf]
    %s3334 = scalar_lea.vmem %s6, 160
    %v3335 = vld [vmem:[%s3334] sm:$0xf]
    %v3336 = vld [vmem:[%s3334 + $0x4] sm:$0xf]
    %v3337 = vld [vmem:[%s3334 + $0x8] sm:$0xf]
    %v3338 = vld [vmem:[%s3334 + $0xc] sm:$0xf]
    %v3339 = vld [vmem:[%s3334 + $0x10] sm:$0xf]
    %v3340 = vld [vmem:[%s3334 + $0x14] sm:$0xf]
    %v3341 = vld [vmem:[%s3334 + $0x18] sm:$0xf]
    %v3342 = vld [vmem:[%s3334 + $0x1c] sm:$0xf]
    %s3343 = scalar_lea.vmem %s11, 5
    %v3344 = vld [vmem:[%s3343] sm:$0x1]
    %v3346 = vlaneseq
    %v3347 = vshrl.u32 %v3346, 7
    %v3348 = vsub.s32 0, %v3347
    %v3349 = vrot.slane %v3344, %v3348
    %v3359 = vunpack.c.l.b16 %v3335
    %v3360 = vunpack.c.l.b16 %v3336
    %v3361 = vunpack.c.l.b16 %v3337
    %v3362 = vunpack.c.l.b16 %v3338
    %v3363 = vunpack.c.l.b16 %v3339
    %v3364 = vunpack.c.l.b16 %v3340
    %v3365 = vunpack.c.l.b16 %v3341
    %v3366 = vunpack.c.l.b16 %v3342
    %v3367 = vpack.c.b16 %v3360, %v3359
    %v3368 = vpack.c.b16 %v3362, %v3361
    %v3369 = vpack.c.b16 %v3364, %v3363
    %v3370 = vpack.c.b16 %v3366, %v3365
    %3375 = vmatprep.subr.bf16.mxu0 0
    %3376 = vmatpush1.bf16.msra.mxu0 %v3367
    %3377 = vmatprep.subr.bf16.mxu0 0
    %3378 = vmatpush1.bf16.msra.mxu0 %v3368
    %3379 = vmatprep.subr.bf16.mxu0 0
    %3380 = vmatpush1.bf16.msra.mxu0 %v3369
    %3381 = vmatprep.subr.bf16.mxu0 0
    %3382 = vmatpush1.bf16.msra.mxu0 %v3370
    %3383 = vmatprep.subr.bf16.mxu0 0
    %3384 = vmatpush1.bf16.msra.mxu0 0
    %3385 = vmatprep.subr.bf16.mxu0 0
    %3386 = vmatpush1.bf16.msra.mxu0 0
    %3387 = vmatprep.subr.bf16.mxu0 0
    %3388 = vmatpush1.bf16.msra.mxu0 0
    %3389 = vmatprep.subr.bf16.mxu0 0
    %3390 = vmatpush1.bf16.msra.mxu0 0
    %3391 = vmatprep.subr.bf16.mxu0 0
    %3392 = vmatpush1.bf16.msra.mxu0 0
    %3393 = vmatprep.subr.bf16.mxu0 0
    %3394 = vmatpush1.bf16.msra.mxu0 0
    %3395 = vmatprep.subr.bf16.mxu0 0
    %3396 = vmatpush1.bf16.msra.mxu0 0
    %3397 = vmatprep.subr.bf16.mxu0 0
    %3398 = vmatpush1.bf16.msra.mxu0 0
    %3399 = vmatprep.subr.bf16.mxu0 0
    %3400 = vmatpush1.bf16.msra.mxu0 0
    %3401 = vmatprep.subr.bf16.mxu0 0
    %3402 = vmatpush1.bf16.msra.mxu0 0
    %3403 = vmatprep.subr.bf16.mxu0 0
    %3404 = vmatpush1.bf16.msra.mxu0 0
    %3405 = vmatprep.subr.bf16.mxu0 0
    %3406 = vmatpush1.bf16.msra.mxu0 0
    %3407 = vmatprep.mubr.bf16.mxu0 0
    %3408 = vmatmul.mubr.bf16.gmra.mrb[0].mxu0 %v2982
    %v3409 = vpop.f32.mrb[0].mxu0
    %v3410 = vadd.f32 %v3349, %v3409
    %v3411 = vpop.f32.mrb[0].mxu0
    %v3412 = vpop.f32.mrb[0].mxu0
    %v3413 = vadd.f32 %v3349, %v3412
    %v3414 = vpop.f32.mrb[0].mxu0
    %3415 = vdwg.mxu0
    %v3416 = vpack.c.bf16 %v3410, %v3410
    %v3417 = vpack.c.bf16 %v3413, %v3413
    %s3418 = scalar_lea.vmem %s7, 40
    %v3419 = vld [vmem:[%s3418] sm:$0xf]
    %v3420 = vld [vmem:[%s3418 + $0x4] sm:$0xf]
    %v3423 = vunpack.c.l.b16 %v3416
    %v3424 = vunpack.c.l.b16 %v3417
    %v3425 = vpack.c.b16 %v3424, %v3423
    %v3428 = vunpack.c.l.b16 %v3419
    %v3429 = vunpack.c.l.b16 %v3420
    %v3430 = vpack.c.b16 %v3429, %v3428
    %v3433 = vsel %vm94, %v3425, 0
    %3435 = vmatprep.subr.bf16.mxu0 0
    %3436 = vmatpush1.bf16.msra.mxu0 %v3430
    %3437 = vmatprep.subr.bf16.mxu0 0
    %3438 = vmatpush1.bf16.msra.mxu0 0
    %3439 = vmatprep.subr.bf16.mxu0 0
    %3440 = vmatpush1.bf16.msra.mxu0 0
    %3441 = vmatprep.subr.bf16.mxu0 0
    %3442 = vmatpush1.bf16.msra.mxu0 0
    %3443 = vmatprep.subr.bf16.mxu0 0
    %3444 = vmatpush1.bf16.msra.mxu0 0
    %3445 = vmatprep.subr.bf16.mxu0 0
    %3446 = vmatpush1.bf16.msra.mxu0 0
    %3447 = vmatprep.subr.bf16.mxu0 0
    %3448 = vmatpush1.bf16.msra.mxu0 0
    %3449 = vmatprep.subr.bf16.mxu0 0
    %3450 = vmatpush1.bf16.msra.mxu0 0
    %3451 = vmatprep.subr.bf16.mxu0 0
    %3452 = vmatpush1.bf16.msra.mxu0 0
    %3453 = vmatprep.subr.bf16.mxu0 0
    %3454 = vmatpush1.bf16.msra.mxu0 0
    %3455 = vmatprep.subr.bf16.mxu0 0
    %3456 = vmatpush1.bf16.msra.mxu0 0
    %3457 = vmatprep.subr.bf16.mxu0 0
    %3458 = vmatpush1.bf16.msra.mxu0 0
    %3459 = vmatprep.subr.bf16.mxu0 0
    %3460 = vmatpush1.bf16.msra.mxu0 0
    %3461 = vmatprep.subr.bf16.mxu0 0
    %3462 = vmatpush1.bf16.msra.mxu0 0
    %3463 = vmatprep.subr.bf16.mxu0 0
    %3464 = vmatpush1.bf16.msra.mxu0 0
    %3465 = vmatprep.subr.bf16.mxu0 0
    %3466 = vmatpush1.bf16.msra.mxu0 0
    %3467 = vmatprep.mubr.bf16.mxu0 0
    %3468 = vmatmul.mubr.bf16.gmra.mrb[0].mxu0 %v3433
    %v3469 = vpop.f32.mrb[0].mxu0
    %v3470 = vadd.f32 0.0, %v3469
    %v3471 = vpop.f32.mrb[0].mxu0
    %v3472 = vpop.f32.mrb[0].mxu0
    %v3473 = vadd.f32 0.0, %v3472
    %v3474 = vpop.f32.mrb[0].mxu0
    %3475 = vdwg.mxu0
    %v3476 = vpack.c.bf16 %v3470, %v3470
    %v3477 = vpack.c.bf16 %v3473, %v3473
    %v3479 = vsel %vm46, %v3476, 0
    %3481 = vmatprep.subr.bf16.mxu0 0
    %3482 = vmatpush1.bf16.xpose.msra.mxu0 %v3091
    %3483 = vmatprep.subr.bf16.mxu0 0
    %3484 = vmatpush1.bf16.xpose.msra.mxu0 %v3094
    %3485 = vmatprep.subr.bf16.mxu0 0
    %3486 = vmatpush1.bf16.xpose.msra.mxu0 %v3097
    %3487 = vmatprep.subr.bf16.mxu0 0
    %3488 = vmatpush1.bf16.xpose.msra.mxu0 %v3100
    %3489 = vmatprep.subr.bf16.mxu0 0
    %3490 = vmatpush1.bf16.xpose.msra.mxu0 %v3103
    %3491 = vmatprep.subr.bf16.mxu0 0
    %3492 = vmatpush1.bf16.xpose.msra.mxu0 %v3106
    %3493 = vmatprep.subr.bf16.mxu0 0
    %3494 = vmatpush1.bf16.xpose.msra.mxu0 %v3109
    %3495 = vmatprep.subr.bf16.mxu0 0
    %3496 = vmatpush1.bf16.xpose.msra.mxu0 %v3112
    %3497 = vmatprep.subr.bf16.mxu0 0
    %3498 = vmatpush1.bf16.xpose.msra.mxu0 0
    %3499 = vmatprep.subr.bf16.mxu0 0
    %3500 = vmatpush1.bf16.xpose.msra.mxu0 0
    %3501 = vmatprep.subr.bf16.mxu0 0
    %3502 = vmatpush1.bf16.xpose.msra.mxu0 0
    %3503 = vmatprep.subr.bf16.mxu0 0
    %3504 = vmatpush1.bf16.xpose.msra.mxu0 0
    %3505 = vmatprep.subr.bf16.mxu0 0
    %3506 = vmatpush1.bf16.xpose.msra.mxu0 0
    %3507 = vmatprep.subr.bf16.mxu0 0
    %3508 = vmatpush1.bf16.xpose.msra.mxu0 0
    %3509 = vmatprep.subr.bf16.mxu0 0
    %3510 = vmatpush1.bf16.xpose.msra.mxu0 0
    %3511 = vmatprep.subr.bf16.mxu0 0
    %3512 = vmatpush1.bf16.xpose.msra.mxu0 0
    %3513 = vmatprep.mubr.bf16.mxu0 0
    %3514 = vmatmul.mubr.bf16.gmra.mrb[0].mxu0 %v3479
    %v3515 = vpop.f32.mrb[0].mxu0
    %v3516 = vadd.f32 0.0, %v3515
    %v3517 = vpop.f32.mrb[0].mxu0
    %v3518 = vpop.f32.mrb[0].mxu0
    %v3519 = vpop.f32.mrb[0].mxu0
    %3520 = vdwg.mxu0
    %v3522 = vsel %vm46, %v3477, 0
    %3524 = vmatprep.subr.bf16.mxu0 0
    %3525 = vmatpush1.bf16.xpose.msra.mxu0 %v3158
    %3526 = vmatprep.subr.bf16.mxu0 0
    %3527 = vmatpush1.bf16.xpose.msra.mxu0 %v3161
    %3528 = vmatprep.subr.bf16.mxu0 0
    %3529 = vmatpush1.bf16.xpose.msra.mxu0 %v3164
    %3530 = vmatprep.subr.bf16.mxu0 0
    %3531 = vmatpush1.bf16.xpose.msra.mxu0 %v3167
    %3532 = vmatprep.subr.bf16.mxu0 0
    %3533 = vmatpush1.bf16.xpose.msra.mxu0 %v3170
    %3534 = vmatprep.subr.bf16.mxu0 0
    %3535 = vmatpush1.bf16.xpose.msra.mxu0 %v3173
    %3536 = vmatprep.subr.bf16.mxu0 0
    %3537 = vmatpush1.bf16.xpose.msra.mxu0 %v3176
    %3538 = vmatprep.subr.bf16.mxu0 0
    %3539 = vmatpush1.bf16.xpose.msra.mxu0 %v3179
    %3540 = vmatprep.subr.bf16.mxu0 0
    %3541 = vmatpush1.bf16.xpose.msra.mxu0 0
    %3542 = vmatprep.subr.bf16.mxu0 0
    %3543 = vmatpush1.bf16.xpose.msra.mxu0 0
    %3544 = vmatprep.subr.bf16.mxu0 0
    %3545 = vmatpush1.bf16.xpose.msra.mxu0 0
    %3546 = vmatprep.subr.bf16.mxu0 0
    %3547 = vmatpush1.bf16.xpose.msra.mxu0 0
    %3548 = vmatprep.subr.bf16.mxu0 0
    %3549 = vmatpush1.bf16.xpose.msra.mxu0 0
    %3550 = vmatprep.subr.bf16.mxu0 0
    %3551 = vmatpush1.bf16.xpose.msra.mxu0 0
    %3552 = vmatprep.subr.bf16.mxu0 0
    %3553 = vmatpush1.bf16.xpose.msra.mxu0 0
    %3554 = vmatprep.subr.bf16.mxu0 0
    %3555 = vmatpush1.bf16.xpose.msra.mxu0 0
    %3556 = vmatprep.mubr.bf16.mxu0 0
    %3557 = vmatmul.mubr.bf16.gmra.mrb[0].mxu0 %v3522
    %v3558 = vpop.f32.mrb[0].mxu0
    %v3559 = vadd.f32 0.0, %v3558
    %v3560 = vpop.f32.mrb[0].mxu0
    %v3561 = vpop.f32.mrb[0].mxu0
    %v3562 = vpop.f32.mrb[0].mxu0
    %3563 = vdwg.mxu0
    %3564 = vmax.xlane.f32.xlu0 %v3516
    %v3565 = vpop.xlane.xlu0 %3564
    %3566 = vmax.xlane.f32.xlu0 %v3559
    %v3567 = vpop.xlane.xlu0 %3566
    %v3568 = vsub.f32 %v3516, %v3565
    %v3569 = vsub.f32 %v3559, %v3567
    %v3570 = vmul.f32 %v3568, 1.442695
    %v3571 = vpow.pop %v3570
    %v3572 = vmul.f32 %v3569, 1.442695
    %v3573 = vpow.pop %v3572
    %v3574 = vmul.f32 %v3571, %v1163
    %v3575 = vmul.f32 %v3573, %v1163
    %3576 = vadd.xlane.f32.xlu0 %v3574
    %v3577 = vpop.xlane.xlu0 %3576
    %3578 = vadd.xlane.f32.xlu0 %v3575
    %v3579 = vpop.xlane.xlu0 %3578
    %v3580 = vrcp.pop %v3577
    %v3581 = vrcp.pop %v3579
    %v3582 = vmul.f32 %v3574, %v3580
    %v3583 = vmul.f32 %v3575, %v3581
    %v3584 = vpack.c.bf16 %v3582, %v3582
    %v3585 = vpack.c.bf16 %v3583, %v3583
    %3586 = vmatprep.subr.bf16.mxu0 0
    %3587 = vmatpush1.bf16.msra.mxu0 %v1127
    %3588 = vmatprep.subr.bf16.mxu0 0
    %3589 = vmatpush1.bf16.msra.mxu0 %v1128
    %3590 = vmatprep.subr.bf16.mxu0 0
    %3591 = vmatpush1.bf16.msra.mxu0 %v1129
    %3592 = vmatprep.subr.bf16.mxu0 0
    %3593 = vmatpush1.bf16.msra.mxu0 %v1130
    %3594 = vmatprep.subr.bf16.mxu0 0
    %3595 = vmatpush1.bf16.msra.mxu0 %v1131
    %3596 = vmatprep.subr.bf16.mxu0 0
    %3597 = vmatpush1.bf16.msra.mxu0 %v1132
    %3598 = vmatprep.subr.bf16.mxu0 0
    %3599 = vmatpush1.bf16.msra.mxu0 %v1133
    %3600 = vmatprep.subr.bf16.mxu0 0
    %3601 = vmatpush1.bf16.msra.mxu0 %v1134
    %3602 = vmatprep.subr.bf16.mxu0 0
    %3603 = vmatpush1.bf16.msra.mxu0 0
    %3604 = vmatprep.subr.bf16.mxu0 0
    %3605 = vmatpush1.bf16.msra.mxu0 0
    %3606 = vmatprep.subr.bf16.mxu0 0
    %3607 = vmatpush1.bf16.msra.mxu0 0
    %3608 = vmatprep.subr.bf16.mxu0 0
    %3609 = vmatpush1.bf16.msra.mxu0 0
    %3610 = vmatprep.subr.bf16.mxu0 0
    %3611 = vmatpush1.bf16.msra.mxu0 0
    %3612 = vmatprep.subr.bf16.mxu0 0
    %3613 = vmatpush1.bf16.msra.mxu0 0
    %3614 = vmatprep.subr.bf16.mxu0 0
    %3615 = vmatpush1.bf16.msra.mxu0 0
    %3616 = vmatprep.subr.bf16.mxu0 0
    %3617 = vmatpush1.bf16.msra.mxu0 0
    %3618 = vmatprep.mubr.bf16.mxu0 0
    %3619 = vmatmul.mubr.bf16.gmra.mrb[0].mxu0 %v3584
    %v3620 = vpop.f32.mrb[0].mxu0
    %v3621 = vadd.f32 0.0, %v3620
    %v3622 = vpop.f32.mrb[0].mxu0
    %v3623 = vpop.f32.mrb[0].mxu0
    %v3624 = vpop.f32.mrb[0].mxu0
    %3625 = vdwg.mxu0
    %3626 = vmatprep.subr.bf16.mxu0 0
    %3627 = vmatpush1.bf16.msra.mxu0 %v1135
    %3628 = vmatprep.subr.bf16.mxu0 0
    %3629 = vmatpush1.bf16.msra.mxu0 %v1136
    %3630 = vmatprep.subr.bf16.mxu0 0
    %3631 = vmatpush1.bf16.msra.mxu0 %v1137
    %3632 = vmatprep.subr.bf16.mxu0 0
    %3633 = vmatpush1.bf16.msra.mxu0 %v1138
    %3634 = vmatprep.subr.bf16.mxu0 0
    %3635 = vmatpush1.bf16.msra.mxu0 %v1139
    %3636 = vmatprep.subr.bf16.mxu0 0
    %3637 = vmatpush1.bf16.msra.mxu0 %v1140
    %3638 = vmatprep.subr.bf16.mxu0 0
    %3639 = vmatpush1.bf16.msra.mxu0 %v1141
    %3640 = vmatprep.subr.bf16.mxu0 0
    %3641 = vmatpush1.bf16.msra.mxu0 %v1142
    %3642 = vmatprep.subr.bf16.mxu0 0
    %3643 = vmatpush1.bf16.msra.mxu0 0
    %3644 = vmatprep.subr.bf16.mxu0 0
    %3645 = vmatpush1.bf16.msra.mxu0 0
    %3646 = vmatprep.subr.bf16.mxu0 0
    %3647 = vmatpush1.bf16.msra.mxu0 0
    %3648 = vmatprep.subr.bf16.mxu0 0
    %3649 = vmatpush1.bf16.msra.mxu0 0
    %3650 = vmatprep.subr.bf16.mxu0 0
    %3651 = vmatpush1.bf16.msra.mxu0 0
    %3652 = vmatprep.subr.bf16.mxu0 0
    %3653 = vmatpush1.bf16.msra.mxu0 0
    %3654 = vmatprep.subr.bf16.mxu0 0
    %3655 = vmatpush1.bf16.msra.mxu0 0
    %3656 = vmatprep.subr.bf16.mxu0 0
    %3657 = vmatpush1.bf16.msra.mxu0 0
    %3658 = vmatprep.mubr.bf16.mxu0 0
    %3659 = vmatmul.mubr.bf16.gmra.mrb[0].mxu0 %v3585
    %v3660 = vpop.f32.mrb[0].mxu0
    %v3661 = vadd.f32 0.0, %v3660
    %v3662 = vpop.f32.mrb[0].mxu0
    %v3663 = vpop.f32.mrb[0].mxu0
    %v3664 = vpop.f32.mrb[0].mxu0
    %3665 = vdwg.mxu0
    %v3666 = vpack.c.bf16 %v3621, %v3621
    %v3667 = vpack.c.bf16 %v3661, %v3661
    %s3668 = scalar_lea.vmem %s8, 160
    %v3669 = vld [vmem:[%s3668] sm:$0xf]
    %v3670 = vld [vmem:[%s3668 + $0x4] sm:$0xf]
    %v3671 = vld [vmem:[%s3668 + $0x8] sm:$0xf]
    %v3672 = vld [vmem:[%s3668 + $0xc] sm:$0xf]
    %v3673 = vld [vmem:[%s3668 + $0x10] sm:$0xf]
    %v3674 = vld [vmem:[%s3668 + $0x14] sm:$0xf]
    %v3675 = vld [vmem:[%s3668 + $0x18] sm:$0xf]
    %v3676 = vld [vmem:[%s3668 + $0x1c] sm:$0xf]
    %v3679 = vunpack.c.l.b16 %v3666
    %v3680 = vunpack.c.l.b16 %v3667
    %v3681 = vpack.c.b16 %v3680, %v3679
    %v3690 = vunpack.c.l.b16 %v3669
    %v3691 = vunpack.c.l.b16 %v3670
    %v3692 = vunpack.c.l.b16 %v3671
    %v3693 = vunpack.c.l.b16 %v3672
    %v3694 = vunpack.c.l.b16 %v3673
    %v3695 = vunpack.c.l.b16 %v3674
    %v3696 = vunpack.c.l.b16 %v3675
    %v3697 = vunpack.c.l.b16 %v3676
    %v3698 = vpack.c.b16 %v3691, %v3690
    %v3699 = vpack.c.b16 %v3693, %v3692
    %v3700 = vpack.c.b16 %v3695, %v3694
    %v3701 = vpack.c.b16 %v3697, %v3696
    %v3707 = vsel %vm46, %v3681, 0
    %3709 = vmatprep.subr.bf16.mxu0 0
    %3710 = vmatpush1.bf16.msra.mxu0 %v3698
    %3711 = vmatprep.subr.bf16.mxu0 0
    %3712 = vmatpush1.bf16.msra.mxu0 %v3699
    %3713 = vmatprep.subr.bf16.mxu0 0
    %3714 = vmatpush1.bf16.msra.mxu0 %v3700
    %3715 = vmatprep.subr.bf16.mxu0 0
    %3716 = vmatpush1.bf16.msra.mxu0 %v3701
    %3717 = vmatprep.subr.bf16.mxu0 0
    %3718 = vmatpush1.bf16.msra.mxu0 0
    %3719 = vmatprep.subr.bf16.mxu0 0
    %3720 = vmatpush1.bf16.msra.mxu0 0
    %3721 = vmatprep.subr.bf16.mxu0 0
    %3722 = vmatpush1.bf16.msra.mxu0 0
    %3723 = vmatprep.subr.bf16.mxu0 0
    %3724 = vmatpush1.bf16.msra.mxu0 0
    %3725 = vmatprep.subr.bf16.mxu0 0
    %3726 = vmatpush1.bf16.msra.mxu0 0
    %3727 = vmatprep.subr.bf16.mxu0 0
    %3728 = vmatpush1.bf16.msra.mxu0 0
    %3729 = vmatprep.subr.bf16.mxu0 0
    %3730 = vmatpush1.bf16.msra.mxu0 0
    %3731 = vmatprep.subr.bf16.mxu0 0
    %3732 = vmatpush1.bf16.msra.mxu0 0
    %3733 = vmatprep.subr.bf16.mxu0 0
    %3734 = vmatpush1.bf16.msra.mxu0 0
    %3735 = vmatprep.subr.bf16.mxu0 0
    %3736 = vmatpush1.bf16.msra.mxu0 0
    %3737 = vmatprep.subr.bf16.mxu0 0
    %3738 = vmatpush1.bf16.msra.mxu0 0
    %3739 = vmatprep.subr.bf16.mxu0 0
    %3740 = vmatpush1.bf16.msra.mxu0 0
    %3741 = vmatprep.mubr.bf16.mxu0 0
    %3742 = vmatmul.mubr.bf16.gmra.mrb[0].mxu0 %v3707
    %v3743 = vpop.f32.mrb[0].mxu0
    %v3744 = vadd.f32 0.0, %v3743
    %v3745 = vpop.f32.mrb[0].mxu0
    %v3746 = vpop.f32.mrb[0].mxu0
    %v3747 = vadd.f32 0.0, %v3746
    %v3748 = vpop.f32.mrb[0].mxu0
    %3749 = vdwg.mxu0
    %v3752 = vunpack.c.l.b16 %v3323
    %v3753 = vunpack.c.l.b16 %v3324
    %v3754 = vpack.c.b16 %v3753, %v3752
    %v3763 = vunpack.c.l.b16 %v3326
    %v3764 = vunpack.c.l.b16 %v3327
    %v3765 = vunpack.c.l.b16 %v3328
    %v3766 = vunpack.c.l.b16 %v3329
    %v3767 = vunpack.c.l.b16 %v3330
    %v3768 = vunpack.c.l.b16 %v3331
    %v3769 = vunpack.c.l.b16 %v3332
    %v3770 = vunpack.c.l.b16 %v3333
    %v3771 = vpack.c.b16 %v3764, %v3763
    %v3772 = vpack.c.b16 %v3766, %v3765
    %v3773 = vpack.c.b16 %v3768, %v3767
    %v3774 = vpack.c.b16 %v3770, %v3769
    %v3780 = vsel %vm46, %v3754, 0
    %3782 = vmatprep.subr.bf16.mxu0 0
    %3783 = vmatpush1.bf16.msra.mxu0 %v3771
    %3784 = vmatprep.subr.bf16.mxu0 0
    %3785 = vmatpush1.bf16.msra.mxu0 %v3772
    %3786 = vmatprep.subr.bf16.mxu0 0
    %3787 = vmatpush1.bf16.msra.mxu0 %v3773
    %3788 = vmatprep.subr.bf16.mxu0 0
    %3789 = vmatpush1.bf16.msra.mxu0 %v3774
    %3790 = vmatprep.subr.bf16.mxu0 0
    %3791 = vmatpush1.bf16.msra.mxu0 0
    %3792 = vmatprep.subr.bf16.mxu0 0
    %3793 = vmatpush1.bf16.msra.mxu0 0
    %3794 = vmatprep.subr.bf16.mxu0 0
    %3795 = vmatpush1.bf16.msra.mxu0 0
    %3796 = vmatprep.subr.bf16.mxu0 0
    %3797 = vmatpush1.bf16.msra.mxu0 0
    %3798 = vmatprep.subr.bf16.mxu0 0
    %3799 = vmatpush1.bf16.msra.mxu0 0
    %3800 = vmatprep.subr.bf16.mxu0 0
    %3801 = vmatpush1.bf16.msra.mxu0 0
    %3802 = vmatprep.subr.bf16.mxu0 0
    %3803 = vmatpush1.bf16.msra.mxu0 0
    %3804 = vmatprep.subr.bf16.mxu0 0
    %3805 = vmatpush1.bf16.msra.mxu0 0
    %3806 = vmatprep.subr.bf16.mxu0 0
    %3807 = vmatpush1.bf16.msra.mxu0 0
    %3808 = vmatprep.subr.bf16.mxu0 0
    %3809 = vmatpush1.bf16.msra.mxu0 0
    %3810 = vmatprep.subr.bf16.mxu0 0
    %3811 = vmatpush1.bf16.msra.mxu0 0
    %3812 = vmatprep.subr.bf16.mxu0 0
    %3813 = vmatpush1.bf16.msra.mxu0 0
    %3814 = vmatprep.mubr.bf16.mxu0 0
    %3815 = vmatmul.mubr.bf16.gmra.mrb[0].mxu0 %v3780
    %v3816 = vpop.f32.mrb[0].mxu0
    %v3817 = vadd.f32 %v3744, %v3816
    %v3818 = vpop.f32.mrb[0].mxu0
    %v3819 = vpop.f32.mrb[0].mxu0
    %v3820 = vadd.f32 %v3747, %v3819
    %v3821 = vpop.f32.mrb[0].mxu0
    %3822 = vdwg.mxu0
    %s3823 = scalar_lea.vmem %s6, 192
    %v3824 = vld [vmem:[%s3823] sm:$0xf]
    %v3825 = vld [vmem:[%s3823 + $0x4] sm:$0xf]
    %v3826 = vld [vmem:[%s3823 + $0x8] sm:$0xf]
    %v3827 = vld [vmem:[%s3823 + $0xc] sm:$0xf]
    %v3828 = vld [vmem:[%s3823 + $0x10] sm:$0xf]
    %v3829 = vld [vmem:[%s3823 + $0x14] sm:$0xf]
    %v3830 = vld [vmem:[%s3823 + $0x18] sm:$0xf]
    %v3831 = vld [vmem:[%s3823 + $0x1c] sm:$0xf]
    %s3832 = scalar_lea.vmem %s11, 6
    %v3833 = vld [vmem:[%s3832] sm:$0x1]
    %v3835 = vlaneseq
    %v3836 = vshrl.u32 %v3835, 7
    %v3837 = vsub.s32 0, %v3836
    %v3838 = vrot.slane %v3833, %v3837
    %v3848 = vunpack.c.l.b16 %v3824
    %v3849 = vunpack.c.l.b16 %v3825
    %v3850 = vunpack.c.l.b16 %v3826
    %v3851 = vunpack.c.l.b16 %v3827
    %v3852 = vunpack.c.l.b16 %v3828
    %v3853 = vunpack.c.l.b16 %v3829
    %v3854 = vunpack.c.l.b16 %v3830
    %v3855 = vunpack.c.l.b16 %v3831
    %v3856 = vpack.c.b16 %v3849, %v3848
    %v3857 = vpack.c.b16 %v3851, %v3850
    %v3858 = vpack.c.b16 %v3853, %v3852
    %v3859 = vpack.c.b16 %v3855, %v3854
    %3864 = vmatprep.subr.bf16.mxu0 0
    %3865 = vmatpush1.bf16.msra.mxu0 %v3856
    %3866 = vmatprep.subr.bf16.mxu0 0
    %3867 = vmatpush1.bf16.msra.mxu0 %v3857
    %3868 = vmatprep.subr.bf16.mxu0 0
    %3869 = vmatpush1.bf16.msra.mxu0 %v3858
    %3870 = vmatprep.subr.bf16.mxu0 0
    %3871 = vmatpush1.bf16.msra.mxu0 %v3859
    %3872 = vmatprep.subr.bf16.mxu0 0
    %3873 = vmatpush1.bf16.msra.mxu0 0
    %3874 = vmatprep.subr.bf16.mxu0 0
    %3875 = vmatpush1.bf16.msra.mxu0 0
    %3876 = vmatprep.subr.bf16.mxu0 0
    %3877 = vmatpush1.bf16.msra.mxu0 0
    %3878 = vmatprep.subr.bf16.mxu0 0
    %3879 = vmatpush1.bf16.msra.mxu0 0
    %3880 = vmatprep.subr.bf16.mxu0 0
    %3881 = vmatpush1.bf16.msra.mxu0 0
    %3882 = vmatprep.subr.bf16.mxu0 0
    %3883 = vmatpush1.bf16.msra.mxu0 0
    %3884 = vmatprep.subr.bf16.mxu0 0
    %3885 = vmatpush1.bf16.msra.mxu0 0
    %3886 = vmatprep.subr.bf16.mxu0 0
    %3887 = vmatpush1.bf16.msra.mxu0 0
    %3888 = vmatprep.subr.bf16.mxu0 0
    %3889 = vmatpush1.bf16.msra.mxu0 0
    %3890 = vmatprep.subr.bf16.mxu0 0
    %3891 = vmatpush1.bf16.msra.mxu0 0
    %3892 = vmatprep.subr.bf16.mxu0 0
    %3893 = vmatpush1.bf16.msra.mxu0 0
    %3894 = vmatprep.subr.bf16.mxu0 0
    %3895 = vmatpush1.bf16.msra.mxu0 0
    %3896 = vmatprep.mubr.bf16.mxu0 0
    %3897 = vmatmul.mubr.bf16.gmra.mrb[0].mxu0 %v2982
    %v3898 = vpop.f32.mrb[0].mxu0
    %v3899 = vadd.f32 %v3838, %v3898
    %v3900 = vpop.f32.mrb[0].mxu0
    %v3901 = vpop.f32.mrb[0].mxu0
    %v3902 = vadd.f32 %v3838, %v3901
    %v3903 = vpop.f32.mrb[0].mxu0
    %3904 = vdwg.mxu0
    %v3905 = vpack.c.bf16 %v3899, %v3899
    %v3906 = vpack.c.bf16 %v3902, %v3902
    %s3907 = scalar_lea.vmem %s7, 48
    %v3908 = vld [vmem:[%s3907] sm:$0xf]
    %v3909 = vld [vmem:[%s3907 + $0x4] sm:$0xf]
    %v3912 = vunpack.c.l.b16 %v3905
    %v3913 = vunpack.c.l.b16 %v3906
    %v3914 = vpack.c.b16 %v3913, %v3912
    %v3917 = vunpack.c.l.b16 %v3908
    %v3918 = vunpack.c.l.b16 %v3909
    %v3919 = vpack.c.b16 %v3918, %v3917
    %v3922 = vsel %vm94, %v3914, 0
    %3924 = vmatprep.subr.bf16.mxu0 0
    %3925 = vmatpush1.bf16.msra.mxu0 %v3919
    %3926 = vmatprep.subr.bf16.mxu0 0
    %3927 = vmatpush1.bf16.msra.mxu0 0
    %3928 = vmatprep.subr.bf16.mxu0 0
    %3929 = vmatpush1.bf16.msra.mxu0 0
    %3930 = vmatprep.subr.bf16.mxu0 0
    %3931 = vmatpush1.bf16.msra.mxu0 0
    %3932 = vmatprep.subr.bf16.mxu0 0
    %3933 = vmatpush1.bf16.msra.mxu0 0
    %3934 = vmatprep.subr.bf16.mxu0 0
    %3935 = vmatpush1.bf16.msra.mxu0 0
    %3936 = vmatprep.subr.bf16.mxu0 0
    %3937 = vmatpush1.bf16.msra.mxu0 0
    %3938 = vmatprep.subr.bf16.mxu0 0
    %3939 = vmatpush1.bf16.msra.mxu0 0
    %3940 = vmatprep.subr.bf16.mxu0 0
    %3941 = vmatpush1.bf16.msra.mxu0 0
    %3942 = vmatprep.subr.bf16.mxu0 0
    %3943 = vmatpush1.bf16.msra.mxu0 0
    %3944 = vmatprep.subr.bf16.mxu0 0
    %3945 = vmatpush1.bf16.msra.mxu0 0
    %3946 = vmatprep.subr.bf16.mxu0 0
    %3947 = vmatpush1.bf16.msra.mxu0 0
    %3948 = vmatprep.subr.bf16.mxu0 0
    %3949 = vmatpush1.bf16.msra.mxu0 0
    %3950 = vmatprep.subr.bf16.mxu0 0
    %3951 = vmatpush1.bf16.msra.mxu0 0
    %3952 = vmatprep.subr.bf16.mxu0 0
    %3953 = vmatpush1.bf16.msra.mxu0 0
    %3954 = vmatprep.subr.bf16.mxu0 0
    %3955 = vmatpush1.bf16.msra.mxu0 0
    %3956 = vmatprep.mubr.bf16.mxu0 0
    %3957 = vmatmul.mubr.bf16.gmra.mrb[0].mxu0 %v3922
    %v3958 = vpop.f32.mrb[0].mxu0
    %v3959 = vadd.f32 0.0, %v3958
    %v3960 = vpop.f32.mrb[0].mxu0
    %v3961 = vpop.f32.mrb[0].mxu0
    %v3962 = vadd.f32 0.0, %v3961
    %v3963 = vpop.f32.mrb[0].mxu0
    %3964 = vdwg.mxu0
    %v3965 = vpack.c.bf16 %v3959, %v3959
    %v3966 = vpack.c.bf16 %v3962, %v3962
    %v3968 = vsel %vm46, %v3965, 0
    %3970 = vmatprep.subr.bf16.mxu0 0
    %3971 = vmatpush1.bf16.xpose.msra.mxu0 %v3091
    %3972 = vmatprep.subr.bf16.mxu0 0
    %3973 = vmatpush1.bf16.xpose.msra.mxu0 %v3094
    %3974 = vmatprep.subr.bf16.mxu0 0
    %3975 = vmatpush1.bf16.xpose.msra.mxu0 %v3097
    %3976 = vmatprep.subr.bf16.mxu0 0
    %3977 = vmatpush1.bf16.xpose.msra.mxu0 %v3100
    %3978 = vmatprep.subr.bf16.mxu0 0
    %3979 = vmatpush1.bf16.xpose.msra.mxu0 %v3103
    %3980 = vmatprep.subr.bf16.mxu0 0
    %3981 = vmatpush1.bf16.xpose.msra.mxu0 %v3106
    %3982 = vmatprep.subr.bf16.mxu0 0
    %3983 = vmatpush1.bf16.xpose.msra.mxu0 %v3109
    %3984 = vmatprep.subr.bf16.mxu0 0
    %3985 = vmatpush1.bf16.xpose.msra.mxu0 %v3112
    %3986 = vmatprep.subr.bf16.mxu0 0
    %3987 = vmatpush1.bf16.xpose.msra.mxu0 0
    %3988 = vmatprep.subr.bf16.mxu0 0
    %3989 = vmatpush1.bf16.xpose.msra.mxu0 0
    %3990 = vmatprep.subr.bf16.mxu0 0
    %3991 = vmatpush1.bf16.xpose.msra.mxu0 0
    %3992 = vmatprep.subr.bf16.mxu0 0
    %3993 = vmatpush1.bf16.xpose.msra.mxu0 0
    %3994 = vmatprep.subr.bf16.mxu0 0
    %3995 = vmatpush1.bf16.xpose.msra.mxu0 0
    %3996 = vmatprep.subr.bf16.mxu0 0
    %3997 = vmatpush1.bf16.xpose.msra.mxu0 0
    %3998 = vmatprep.subr.bf16.mxu0 0
    %3999 = vmatpush1.bf16.xpose.msra.mxu0 0
    %4000 = vmatprep.subr.bf16.mxu0 0
    %4001 = vmatpush1.bf16.xpose.msra.mxu0 0
    %4002 = vmatprep.mubr.bf16.mxu0 0
    %4003 = vmatmul.mubr.bf16.gmra.mrb[0].mxu0 %v3968
    %v4004 = vpop.f32.mrb[0].mxu0
    %v4005 = vadd.f32 0.0, %v4004
    %v4006 = vpop.f32.mrb[0].mxu0
    %v4007 = vpop.f32.mrb[0].mxu0
    %v4008 = vpop.f32.mrb[0].mxu0
    %4009 = vdwg.mxu0
    %v4011 = vsel %vm46, %v3966, 0
    %4013 = vmatprep.subr.bf16.mxu0 0
    %4014 = vmatpush1.bf16.xpose.msra.mxu0 %v3158
    %4015 = vmatprep.subr.bf16.mxu0 0
    %4016 = vmatpush1.bf16.xpose.msra.mxu0 %v3161
    %4017 = vmatprep.subr.bf16.mxu0 0
    %4018 = vmatpush1.bf16.xpose.msra.mxu0 %v3164
    %4019 = vmatprep.subr.bf16.mxu0 0
    %4020 = vmatpush1.bf16.xpose.msra.mxu0 %v3167
    %4021 = vmatprep.subr.bf16.mxu0 0
    %4022 = vmatpush1.bf16.xpose.msra.mxu0 %v3170
    %4023 = vmatprep.subr.bf16.mxu0 0
    %4024 = vmatpush1.bf16.xpose.msra.mxu0 %v3173
    %4025 = vmatprep.subr.bf16.mxu0 0
    %4026 = vmatpush1.bf16.xpose.msra.mxu0 %v3176
    %4027 = vmatprep.subr.bf16.mxu0 0
    %4028 = vmatpush1.bf16.xpose.msra.mxu0 %v3179
    %4029 = vmatprep.subr.bf16.mxu0 0
    %4030 = vmatpush1.bf16.xpose.msra.mxu0 0
    %4031 = vmatprep.subr.bf16.mxu0 0
    %4032 = vmatpush1.bf16.xpose.msra.mxu0 0
    %4033 = vmatprep.subr.bf16.mxu0 0
    %4034 = vmatpush1.bf16.xpose.msra.mxu0 0
    %4035 = vmatprep.subr.bf16.mxu0 0
    %4036 = vmatpush1.bf16.xpose.msra.mxu0 0
    %4037 = vmatprep.subr.bf16.mxu0 0
    %4038 = vmatpush1.bf16.xpose.msra.mxu0 0
    %4039 = vmatprep.subr.bf16.mxu0 0
    %4040 = vmatpush1.bf16.xpose.msra.mxu0 0
    %4041 = vmatprep.subr.bf16.mxu0 0
    %4042 = vmatpush1.bf16.xpose.msra.mxu0 0
    %4043 = vmatprep.subr.bf16.mxu0 0
    %4044 = vmatpush1.bf16.xpose.msra.mxu0 0
    %4045 = vmatprep.mubr.bf16.mxu0 0
    %4046 = vmatmul.mubr.bf16.gmra.mrb[0].mxu0 %v4011
    %v4047 = vpop.f32.mrb[0].mxu0
    %v4048 = vadd.f32 0.0, %v4047
    %v4049 = vpop.f32.mrb[0].mxu0
    %v4050 = vpop.f32.mrb[0].mxu0
    %v4051 = vpop.f32.mrb[0].mxu0
    %4052 = vdwg.mxu0
    %4053 = vmax.xlane.f32.xlu0 %v4005
    %v4054 = vpop.xlane.xlu0 %4053
    %4055 = vmax.xlane.f32.xlu0 %v4048
    %v4056 = vpop.xlane.xlu0 %4055
    %v4057 = vsub.f32 %v4005, %v4054
    %v4058 = vsub.f32 %v4048, %v4056
    %v4059 = vmul.f32 %v4057, 1.442695
    %v4060 = vpow.pop %v4059
    %v4061 = vmul.f32 %v4058, 1.442695
    %v4062 = vpow.pop %v4061
    %v4063 = vmul.f32 %v4060, %v1163
    %v4064 = vmul.f32 %v4062, %v1163
    %4065 = vadd.xlane.f32.xlu0 %v4063
    %v4066 = vpop.xlane.xlu0 %4065
    %4067 = vadd.xlane.f32.xlu0 %v4064
    %v4068 = vpop.xlane.xlu0 %4067
    %v4069 = vrcp.pop %v4066
    %v4070 = vrcp.pop %v4068
    %v4071 = vmul.f32 %v4063, %v4069
    %v4072 = vmul.f32 %v4064, %v4070
    %v4073 = vpack.c.bf16 %v4071, %v4071
    %v4074 = vpack.c.bf16 %v4072, %v4072
    %4075 = vmatprep.subr.bf16.mxu0 0
    %4076 = vmatpush1.bf16.msra.mxu0 %v1127
    %4077 = vmatprep.subr.bf16.mxu0 0
    %4078 = vmatpush1.bf16.msra.mxu0 %v1128
    %4079 = vmatprep.subr.bf16.mxu0 0
    %4080 = vmatpush1.bf16.msra.mxu0 %v1129
    %4081 = vmatprep.subr.bf16.mxu0 0
    %4082 = vmatpush1.bf16.msra.mxu0 %v1130
    %4083 = vmatprep.subr.bf16.mxu0 0
    %4084 = vmatpush1.bf16.msra.mxu0 %v1131
    %4085 = vmatprep.subr.bf16.mxu0 0
    %4086 = vmatpush1.bf16.msra.mxu0 %v1132
    %4087 = vmatprep.subr.bf16.mxu0 0
    %4088 = vmatpush1.bf16.msra.mxu0 %v1133
    %4089 = vmatprep.subr.bf16.mxu0 0
    %4090 = vmatpush1.bf16.msra.mxu0 %v1134
    %4091 = vmatprep.subr.bf16.mxu0 0
    %4092 = vmatpush1.bf16.msra.mxu0 0
    %4093 = vmatprep.subr.bf16.mxu0 0
    %4094 = vmatpush1.bf16.msra.mxu0 0
    %4095 = vmatprep.subr.bf16.mxu0 0
    %4096 = vmatpush1.bf16.msra.mxu0 0
    %4097 = vmatprep.subr.bf16.mxu0 0
    %4098 = vmatpush1.bf16.msra.mxu0 0
    %4099 = vmatprep.subr.bf16.mxu0 0
    %4100 = vmatpush1.bf16.msra.mxu0 0
    %4101 = vmatprep.subr.bf16.mxu0 0
    %4102 = vmatpush1.bf16.msra.mxu0 0
    %4103 = vmatprep.subr.bf16.mxu0 0
    %4104 = vmatpush1.bf16.msra.mxu0 0
    %4105 = vmatprep.subr.bf16.mxu0 0
    %4106 = vmatpush1.bf16.msra.mxu0 0
    %4107 = vmatprep.mubr.bf16.mxu0 0
    %4108 = vmatmul.mubr.bf16.gmra.mrb[0].mxu0 %v4073
    %v4109 = vpop.f32.mrb[0].mxu0
    %v4110 = vadd.f32 0.0, %v4109
    %v4111 = vpop.f32.mrb[0].mxu0
    %v4112 = vpop.f32.mrb[0].mxu0
    %v4113 = vpop.f32.mrb[0].mxu0
    %4114 = vdwg.mxu0
    %4115 = vmatprep.subr.bf16.mxu0 0
    %4116 = vmatpush1.bf16.msra.mxu0 %v1135
    %4117 = vmatprep.subr.bf16.mxu0 0
    %4118 = vmatpush1.bf16.msra.mxu0 %v1136
    %4119 = vmatprep.subr.bf16.mxu0 0
    %4120 = vmatpush1.bf16.msra.mxu0 %v1137
    %4121 = vmatprep.subr.bf16.mxu0 0
    %4122 = vmatpush1.bf16.msra.mxu0 %v1138
    %4123 = vmatprep.subr.bf16.mxu0 0
    %4124 = vmatpush1.bf16.msra.mxu0 %v1139
    %4125 = vmatprep.subr.bf16.mxu0 0
    %4126 = vmatpush1.bf16.msra.mxu0 %v1140
    %4127 = vmatprep.subr.bf16.mxu0 0
    %4128 = vmatpush1.bf16.msra.mxu0 %v1141
    %4129 = vmatprep.subr.bf16.mxu0 0
    %4130 = vmatpush1.bf16.msra.mxu0 %v1142
    %4131 = vmatprep.subr.bf16.mxu0 0
    %4132 = vmatpush1.bf16.msra.mxu0 0
    %4133 = vmatprep.subr.bf16.mxu0 0
    %4134 = vmatpush1.bf16.msra.mxu0 0
    %4135 = vmatprep.subr.bf16.mxu0 0
    %4136 = vmatpush1.bf16.msra.mxu0 0
    %4137 = vmatprep.subr.bf16.mxu0 0
    %4138 = vmatpush1.bf16.msra.mxu0 0
    %4139 = vmatprep.subr.bf16.mxu0 0
    %4140 = vmatpush1.bf16.msra.mxu0 0
    %4141 = vmatprep.subr.bf16.mxu0 0
    %4142 = vmatpush1.bf16.msra.mxu0 0
    %4143 = vmatprep.subr.bf16.mxu0 0
    %4144 = vmatpush1.bf16.msra.mxu0 0
    %4145 = vmatprep.subr.bf16.mxu0 0
    %4146 = vmatpush1.bf16.msra.mxu0 0
    %4147 = vmatprep.mubr.bf16.mxu0 0
    %4148 = vmatmul.mubr.bf16.gmra.mrb[0].mxu0 %v4074
    %v4149 = vpop.f32.mrb[0].mxu0
    %v4150 = vadd.f32 0.0, %v4149
    %v4151 = vpop.f32.mrb[0].mxu0
    %v4152 = vpop.f32.mrb[0].mxu0
    %v4153 = vpop.f32.mrb[0].mxu0
    %4154 = vdwg.mxu0
    %v4155 = vpack.c.bf16 %v4110, %v4110
    %v4156 = vpack.c.bf16 %v4150, %v4150
    %s4157 = scalar_lea.vmem %s8, 192
    %v4158 = vld [vmem:[%s4157] sm:$0xf]
    %v4159 = vld [vmem:[%s4157 + $0x4] sm:$0xf]
    %v4160 = vld [vmem:[%s4157 + $0x8] sm:$0xf]
    %v4161 = vld [vmem:[%s4157 + $0xc] sm:$0xf]
    %v4162 = vld [vmem:[%s4157 + $0x10] sm:$0xf]
    %v4163 = vld [vmem:[%s4157 + $0x14] sm:$0xf]
    %v4164 = vld [vmem:[%s4157 + $0x18] sm:$0xf]
    %v4165 = vld [vmem:[%s4157 + $0x1c] sm:$0xf]
    %v4168 = vunpack.c.l.b16 %v4155
    %v4169 = vunpack.c.l.b16 %v4156
    %v4170 = vpack.c.b16 %v4169, %v4168
    %v4179 = vunpack.c.l.b16 %v4158
    %v4180 = vunpack.c.l.b16 %v4159
    %v4181 = vunpack.c.l.b16 %v4160
    %v4182 = vunpack.c.l.b16 %v4161
    %v4183 = vunpack.c.l.b16 %v4162
    %v4184 = vunpack.c.l.b16 %v4163
    %v4185 = vunpack.c.l.b16 %v4164
    %v4186 = vunpack.c.l.b16 %v4165
    %v4187 = vpack.c.b16 %v4180, %v4179
    %v4188 = vpack.c.b16 %v4182, %v4181
    %v4189 = vpack.c.b16 %v4184, %v4183
    %v4190 = vpack.c.b16 %v4186, %v4185
    %v4196 = vsel %vm46, %v4170, 0
    %4198 = vmatprep.subr.bf16.mxu0 0
    %4199 = vmatpush1.bf16.msra.mxu0 %v4187
    %4200 = vmatprep.subr.bf16.mxu0 0
    %4201 = vmatpush1.bf16.msra.mxu0 %v4188
    %4202 = vmatprep.subr.bf16.mxu0 0
    %4203 = vmatpush1.bf16.msra.mxu0 %v4189
    %4204 = vmatprep.subr.bf16.mxu0 0
    %4205 = vmatpush1.bf16.msra.mxu0 %v4190
    %4206 = vmatprep.subr.bf16.mxu0 0
    %4207 = vmatpush1.bf16.msra.mxu0 0
    %4208 = vmatprep.subr.bf16.mxu0 0
    %4209 = vmatpush1.bf16.msra.mxu0 0
    %4210 = vmatprep.subr.bf16.mxu0 0
    %4211 = vmatpush1.bf16.msra.mxu0 0
    %4212 = vmatprep.subr.bf16.mxu0 0
    %4213 = vmatpush1.bf16.msra.mxu0 0
    %4214 = vmatprep.subr.bf16.mxu0 0
    %4215 = vmatpush1.bf16.msra.mxu0 0
    %4216 = vmatprep.subr.bf16.mxu0 0
    %4217 = vmatpush1.bf16.msra.mxu0 0
    %4218 = vmatprep.subr.bf16.mxu0 0
    %4219 = vmatpush1.bf16.msra.mxu0 0
    %4220 = vmatprep.subr.bf16.mxu0 0
    %4221 = vmatpush1.bf16.msra.mxu0 0
    %4222 = vmatprep.subr.bf16.mxu0 0
    %4223 = vmatpush1.bf16.msra.mxu0 0
    %4224 = vmatprep.subr.bf16.mxu0 0
    %4225 = vmatpush1.bf16.msra.mxu0 0
    %4226 = vmatprep.subr.bf16.mxu0 0
    %4227 = vmatpush1.bf16.msra.mxu0 0
    %4228 = vmatprep.subr.bf16.mxu0 0
    %4229 = vmatpush1.bf16.msra.mxu0 0
    %4230 = vmatprep.mubr.bf16.mxu0 0
    %4231 = vmatmul.mubr.bf16.gmra.mrb[0].mxu0 %v4196
    %v4232 = vpop.f32.mrb[0].mxu0
    %v4233 = vadd.f32 0.0, %v4232
    %v4234 = vpop.f32.mrb[0].mxu0
    %v4235 = vpop.f32.mrb[0].mxu0
    %v4236 = vadd.f32 0.0, %v4235
    %v4237 = vpop.f32.mrb[0].mxu0
    %4238 = vdwg.mxu0
    %v4239 = vadd.f32 %v3817, %v4233
    %v4240 = vadd.f32 %v3820, %v4236
    %s4241 = scalar_lea.vmem %s6, 224
    %v4242 = vld [vmem:[%s4241] sm:$0xf]
    %v4243 = vld [vmem:[%s4241 + $0x4] sm:$0xf]
    %v4244 = vld [vmem:[%s4241 + $0x8] sm:$0xf]
    %v4245 = vld [vmem:[%s4241 + $0xc] sm:$0xf]
    %v4246 = vld [vmem:[%s4241 + $0x10] sm:$0xf]
    %v4247 = vld [vmem:[%s4241 + $0x14] sm:$0xf]
    %v4248 = vld [vmem:[%s4241 + $0x18] sm:$0xf]
    %v4249 = vld [vmem:[%s4241 + $0x1c] sm:$0xf]
    %s4250 = scalar_lea.vmem %s11, 7
    %v4251 = vld [vmem:[%s4250] sm:$0x1]
    %v4253 = vlaneseq
    %v4254 = vshrl.u32 %v4253, 7
    %v4255 = vsub.s32 0, %v4254
    %v4256 = vrot.slane %v4251, %v4255
    %v4266 = vunpack.c.l.b16 %v4242
    %v4267 = vunpack.c.l.b16 %v4243
    %v4268 = vunpack.c.l.b16 %v4244
    %v4269 = vunpack.c.l.b16 %v4245
    %v4270 = vunpack.c.l.b16 %v4246
    %v4271 = vunpack.c.l.b16 %v4247
    %v4272 = vunpack.c.l.b16 %v4248
    %v4273 = vunpack.c.l.b16 %v4249
    %v4274 = vpack.c.b16 %v4267, %v4266
    %v4275 = vpack.c.b16 %v4269, %v4268
    %v4276 = vpack.c.b16 %v4271, %v4270
    %v4277 = vpack.c.b16 %v4273, %v4272
    %4282 = vmatprep.subr.bf16.mxu0 0
    %4283 = vmatpush1.bf16.msra.mxu0 %v4274
    %4284 = vmatprep.subr.bf16.mxu0 0
    %4285 = vmatpush1.bf16.msra.mxu0 %v4275
    %4286 = vmatprep.subr.bf16.mxu0 0
    %4287 = vmatpush1.bf16.msra.mxu0 %v4276
    %4288 = vmatprep.subr.bf16.mxu0 0
    %4289 = vmatpush1.bf16.msra.mxu0 %v4277
    %4290 = vmatprep.subr.bf16.mxu0 0
    %4291 = vmatpush1.bf16.msra.mxu0 0
    %4292 = vmatprep.subr.bf16.mxu0 0
    %4293 = vmatpush1.bf16.msra.mxu0 0
    %4294 = vmatprep.subr.bf16.mxu0 0
    %4295 = vmatpush1.bf16.msra.mxu0 0
    %4296 = vmatprep.subr.bf16.mxu0 0
    %4297 = vmatpush1.bf16.msra.mxu0 0
    %4298 = vmatprep.subr.bf16.mxu0 0
    %4299 = vmatpush1.bf16.msra.mxu0 0
    %4300 = vmatprep.subr.bf16.mxu0 0
    %4301 = vmatpush1.bf16.msra.mxu0 0
    %4302 = vmatprep.subr.bf16.mxu0 0
    %4303 = vmatpush1.bf16.msra.mxu0 0
    %4304 = vmatprep.subr.bf16.mxu0 0
    %4305 = vmatpush1.bf16.msra.mxu0 0
    %4306 = vmatprep.subr.bf16.mxu0 0
    %4307 = vmatpush1.bf16.msra.mxu0 0
    %4308 = vmatprep.subr.bf16.mxu0 0
    %4309 = vmatpush1.bf16.msra.mxu0 0
    %4310 = vmatprep.subr.bf16.mxu0 0
    %4311 = vmatpush1.bf16.msra.mxu0 0
    %4312 = vmatprep.subr.bf16.mxu0 0
    %4313 = vmatpush1.bf16.msra.mxu0 0
    %4314 = vmatprep.mubr.bf16.mxu0 0
    %4315 = vmatmul.mubr.bf16.gmra.mrb[0].mxu0 %v2982
    %v4316 = vpop.f32.mrb[0].mxu0
    %v4317 = vadd.f32 %v4256, %v4316
    %v4318 = vpop.f32.mrb[0].mxu0
    %v4319 = vpop.f32.mrb[0].mxu0
    %v4320 = vadd.f32 %v4256, %v4319
    %v4321 = vpop.f32.mrb[0].mxu0
    %4322 = vdwg.mxu0
    %v4323 = vpack.c.bf16 %v4317, %v4317
    %v4324 = vpack.c.bf16 %v4320, %v4320
    %s4325 = scalar_lea.vmem %s7, 56
    %v4326 = vld [vmem:[%s4325] sm:$0xf]
    %v4327 = vld [vmem:[%s4325 + $0x4] sm:$0xf]
    %v4330 = vunpack.c.l.b16 %v4323
    %v4331 = vunpack.c.l.b16 %v4324
    %v4332 = vpack.c.b16 %v4331, %v4330
    %v4335 = vunpack.c.l.b16 %v4326
    %v4336 = vunpack.c.l.b16 %v4327
    %v4337 = vpack.c.b16 %v4336, %v4335
    %v4340 = vsel %vm94, %v4332, 0
    %4342 = vmatprep.subr.bf16.mxu0 0
    %4343 = vmatpush1.bf16.msra.mxu0 %v4337
    %4344 = vmatprep.subr.bf16.mxu0 0
    %4345 = vmatpush1.bf16.msra.mxu0 0
    %4346 = vmatprep.subr.bf16.mxu0 0
    %4347 = vmatpush1.bf16.msra.mxu0 0
    %4348 = vmatprep.subr.bf16.mxu0 0
    %4349 = vmatpush1.bf16.msra.mxu0 0
    %4350 = vmatprep.subr.bf16.mxu0 0
    %4351 = vmatpush1.bf16.msra.mxu0 0
    %4352 = vmatprep.subr.bf16.mxu0 0
    %4353 = vmatpush1.bf16.msra.mxu0 0
    %4354 = vmatprep.subr.bf16.mxu0 0
    %4355 = vmatpush1.bf16.msra.mxu0 0
    %4356 = vmatprep.subr.bf16.mxu0 0
    %4357 = vmatpush1.bf16.msra.mxu0 0
    %4358 = vmatprep.subr.bf16.mxu0 0
    %4359 = vmatpush1.bf16.msra.mxu0 0
    %4360 = vmatprep.subr.bf16.mxu0 0
    %4361 = vmatpush1.bf16.msra.mxu0 0
    %4362 = vmatprep.subr.bf16.mxu0 0
    %4363 = vmatpush1.bf16.msra.mxu0 0
    %4364 = vmatprep.subr.bf16.mxu0 0
    %4365 = vmatpush1.bf16.msra.mxu0 0
    %4366 = vmatprep.subr.bf16.mxu0 0
    %4367 = vmatpush1.bf16.msra.mxu0 0
    %4368 = vmatprep.subr.bf16.mxu0 0
    %4369 = vmatpush1.bf16.msra.mxu0 0
    %4370 = vmatprep.subr.bf16.mxu0 0
    %4371 = vmatpush1.bf16.msra.mxu0 0
    %4372 = vmatprep.subr.bf16.mxu0 0
    %4373 = vmatpush1.bf16.msra.mxu0 0
    %4374 = vmatprep.mubr.bf16.mxu0 0
    %4375 = vmatmul.mubr.bf16.gmra.mrb[0].mxu0 %v4340
    %v4376 = vpop.f32.mrb[0].mxu0
    %v4377 = vadd.f32 0.0, %v4376
    %v4378 = vpop.f32.mrb[0].mxu0
    %v4379 = vpop.f32.mrb[0].mxu0
    %v4380 = vadd.f32 0.0, %v4379
    %v4381 = vpop.f32.mrb[0].mxu0
    %4382 = vdwg.mxu0
    %v4383 = vpack.c.bf16 %v4377, %v4377
    %v4384 = vpack.c.bf16 %v4380, %v4380
    %v4386 = vsel %vm46, %v4383, 0
    %4388 = vmatprep.subr.bf16.mxu0 0
    %4389 = vmatpush1.bf16.xpose.msra.mxu0 %v3091
    %4390 = vmatprep.subr.bf16.mxu0 0
    %4391 = vmatpush1.bf16.xpose.msra.mxu0 %v3094
    %4392 = vmatprep.subr.bf16.mxu0 0
    %4393 = vmatpush1.bf16.xpose.msra.mxu0 %v3097
    %4394 = vmatprep.subr.bf16.mxu0 0
    %4395 = vmatpush1.bf16.xpose.msra.mxu0 %v3100
    %4396 = vmatprep.subr.bf16.mxu0 0
    %4397 = vmatpush1.bf16.xpose.msra.mxu0 %v3103
    %4398 = vmatprep.subr.bf16.mxu0 0
    %4399 = vmatpush1.bf16.xpose.msra.mxu0 %v3106
    %4400 = vmatprep.subr.bf16.mxu0 0
    %4401 = vmatpush1.bf16.xpose.msra.mxu0 %v3109
    %4402 = vmatprep.subr.bf16.mxu0 0
    %4403 = vmatpush1.bf16.xpose.msra.mxu0 %v3112
    %4404 = vmatprep.subr.bf16.mxu0 0
    %4405 = vmatpush1.bf16.xpose.msra.mxu0 0
    %4406 = vmatprep.subr.bf16.mxu0 0
    %4407 = vmatpush1.bf16.xpose.msra.mxu0 0
    %4408 = vmatprep.subr.bf16.mxu0 0
    %4409 = vmatpush1.bf16.xpose.msra.mxu0 0
    %4410 = vmatprep.subr.bf16.mxu0 0
    %4411 = vmatpush1.bf16.xpose.msra.mxu0 0
    %4412 = vmatprep.subr.bf16.mxu0 0
    %4413 = vmatpush1.bf16.xpose.msra.mxu0 0
    %4414 = vmatprep.subr.bf16.mxu0 0
    %4415 = vmatpush1.bf16.xpose.msra.mxu0 0
    %4416 = vmatprep.subr.bf16.mxu0 0
    %4417 = vmatpush1.bf16.xpose.msra.mxu0 0
    %4418 = vmatprep.subr.bf16.mxu0 0
    %4419 = vmatpush1.bf16.xpose.msra.mxu0 0
    %4420 = vmatprep.mubr.bf16.mxu0 0
    %4421 = vmatmul.mubr.bf16.gmra.mrb[0].mxu0 %v4386
    %v4422 = vpop.f32.mrb[0].mxu0
    %v4423 = vadd.f32 0.0, %v4422
    %v4424 = vpop.f32.mrb[0].mxu0
    %v4425 = vpop.f32.mrb[0].mxu0
    %v4426 = vpop.f32.mrb[0].mxu0
    %4427 = vdwg.mxu0
    %v4429 = vsel %vm46, %v4384, 0
    %4431 = vmatprep.subr.bf16.mxu0 0
    %4432 = vmatpush1.bf16.xpose.msra.mxu0 %v3158
    %4433 = vmatprep.subr.bf16.mxu0 0
    %4434 = vmatpush1.bf16.xpose.msra.mxu0 %v3161
    %4435 = vmatprep.subr.bf16.mxu0 0
    %4436 = vmatpush1.bf16.xpose.msra.mxu0 %v3164
    %4437 = vmatprep.subr.bf16.mxu0 0
    %4438 = vmatpush1.bf16.xpose.msra.mxu0 %v3167
    %4439 = vmatprep.subr.bf16.mxu0 0
    %4440 = vmatpush1.bf16.xpose.msra.mxu0 %v3170
    %4441 = vmatprep.subr.bf16.mxu0 0
    %4442 = vmatpush1.bf16.xpose.msra.mxu0 %v3173
    %4443 = vmatprep.subr.bf16.mxu0 0
    %4444 = vmatpush1.bf16.xpose.msra.mxu0 %v3176
    %4445 = vmatprep.subr.bf16.mxu0 0
    %4446 = vmatpush1.bf16.xpose.msra.mxu0 %v3179
    %4447 = vmatprep.subr.bf16.mxu0 0
    %4448 = vmatpush1.bf16.xpose.msra.mxu0 0
    %4449 = vmatprep.subr.bf16.mxu0 0
    %4450 = vmatpush1.bf16.xpose.msra.mxu0 0
    %4451 = vmatprep.subr.bf16.mxu0 0
    %4452 = vmatpush1.bf16.xpose.msra.mxu0 0
    %4453 = vmatprep.subr.bf16.mxu0 0
    %4454 = vmatpush1.bf16.xpose.msra.mxu0 0
    %4455 = vmatprep.subr.bf16.mxu0 0
    %4456 = vmatpush1.bf16.xpose.msra.mxu0 0
    %4457 = vmatprep.subr.bf16.mxu0 0
    %4458 = vmatpush1.bf16.xpose.msra.mxu0 0
    %4459 = vmatprep.subr.bf16.mxu0 0
    %4460 = vmatpush1.bf16.xpose.msra.mxu0 0
    %4461 = vmatprep.subr.bf16.mxu0 0
    %4462 = vmatpush1.bf16.xpose.msra.mxu0 0
    %4463 = vmatprep.mubr.bf16.mxu0 0
    %4464 = vmatmul.mubr.bf16.gmra.mrb[0].mxu0 %v4429
    %v4465 = vpop.f32.mrb[0].mxu0
    %v4466 = vadd.f32 0.0, %v4465
    %v4467 = vpop.f32.mrb[0].mxu0
    %v4468 = vpop.f32.mrb[0].mxu0
    %v4469 = vpop.f32.mrb[0].mxu0
    %4470 = vdwg.mxu0
    %4471 = vmax.xlane.f32.xlu0 %v4423
    %v4472 = vpop.xlane.xlu0 %4471
    %4473 = vmax.xlane.f32.xlu0 %v4466
    %v4474 = vpop.xlane.xlu0 %4473
    %v4475 = vsub.f32 %v4423, %v4472
    %v4476 = vsub.f32 %v4466, %v4474
    %v4477 = vmul.f32 %v4475, 1.442695
    %v4478 = vpow.pop %v4477
    %v4479 = vmul.f32 %v4476, 1.442695
    %v4480 = vpow.pop %v4479
    %v4481 = vmul.f32 %v4478, %v1163
    %v4482 = vmul.f32 %v4480, %v1163
    %4483 = vadd.xlane.f32.xlu0 %v4481
    %v4484 = vpop.xlane.xlu0 %4483
    %4485 = vadd.xlane.f32.xlu0 %v4482
    %v4486 = vpop.xlane.xlu0 %4485
    %v4487 = vrcp.pop %v4484
    %v4488 = vrcp.pop %v4486
    %v4489 = vmul.f32 %v4481, %v4487
    %v4490 = vmul.f32 %v4482, %v4488
    %v4491 = vpack.c.bf16 %v4489, %v4489
    %v4492 = vpack.c.bf16 %v4490, %v4490
    %4493 = vmatprep.subr.bf16.mxu0 0
    %4494 = vmatpush1.bf16.msra.mxu0 %v1127
    %4495 = vmatprep.subr.bf16.mxu0 0
    %4496 = vmatpush1.bf16.msra.mxu0 %v1128
    %4497 = vmatprep.subr.bf16.mxu0 0
    %4498 = vmatpush1.bf16.msra.mxu0 %v1129
    %4499 = vmatprep.subr.bf16.mxu0 0
    %4500 = vmatpush1.bf16.msra.mxu0 %v1130
    %4501 = vmatprep.subr.bf16.mxu0 0
    %4502 = vmatpush1.bf16.msra.mxu0 %v1131
    %4503 = vmatprep.subr.bf16.mxu0 0
    %4504 = vmatpush1.bf16.msra.mxu0 %v1132
    %4505 = vmatprep.subr.bf16.mxu0 0
    %4506 = vmatpush1.bf16.msra.mxu0 %v1133
    %4507 = vmatprep.subr.bf16.mxu0 0
    %4508 = vmatpush1.bf16.msra.mxu0 %v1134
    %4509 = vmatprep.subr.bf16.mxu0 0
    %4510 = vmatpush1.bf16.msra.mxu0 0
    %4511 = vmatprep.subr.bf16.mxu0 0
    %4512 = vmatpush1.bf16.msra.mxu0 0
    %4513 = vmatprep.subr.bf16.mxu0 0
    %4514 = vmatpush1.bf16.msra.mxu0 0
    %4515 = vmatprep.subr.bf16.mxu0 0
    %4516 = vmatpush1.bf16.msra.mxu0 0
    %4517 = vmatprep.subr.bf16.mxu0 0
    %4518 = vmatpush1.bf16.msra.mxu0 0
    %4519 = vmatprep.subr.bf16.mxu0 0
    %4520 = vmatpush1.bf16.msra.mxu0 0
    %4521 = vmatprep.subr.bf16.mxu0 0
    %4522 = vmatpush1.bf16.msra.mxu0 0
    %4523 = vmatprep.subr.bf16.mxu0 0
    %4524 = vmatpush1.bf16.msra.mxu0 0
    %4525 = vmatprep.mubr.bf16.mxu0 0
    %4526 = vmatmul.mubr.bf16.gmra.mrb[0].mxu0 %v4491
    %v4527 = vpop.f32.mrb[0].mxu0
    %v4528 = vadd.f32 0.0, %v4527
    %v4529 = vpop.f32.mrb[0].mxu0
    %v4530 = vpop.f32.mrb[0].mxu0
    %v4531 = vpop.f32.mrb[0].mxu0
    %4532 = vdwg.mxu0
    %4533 = vmatprep.subr.bf16.mxu0 0
    %4534 = vmatpush1.bf16.msra.mxu0 %v1135
    %4535 = vmatprep.subr.bf16.mxu0 0
    %4536 = vmatpush1.bf16.msra.mxu0 %v1136
    %4537 = vmatprep.subr.bf16.mxu0 0
    %4538 = vmatpush1.bf16.msra.mxu0 %v1137
    %4539 = vmatprep.subr.bf16.mxu0 0
    %4540 = vmatpush1.bf16.msra.mxu0 %v1138
    %4541 = vmatprep.subr.bf16.mxu0 0
    %4542 = vmatpush1.bf16.msra.mxu0 %v1139
    %4543 = vmatprep.subr.bf16.mxu0 0
    %4544 = vmatpush1.bf16.msra.mxu0 %v1140
    %4545 = vmatprep.subr.bf16.mxu0 0
    %4546 = vmatpush1.bf16.msra.mxu0 %v1141
    %4547 = vmatprep.subr.bf16.mxu0 0
    %4548 = vmatpush1.bf16.msra.mxu0 %v1142
    %4549 = vmatprep.subr.bf16.mxu0 0
    %4550 = vmatpush1.bf16.msra.mxu0 0
    %4551 = vmatprep.subr.bf16.mxu0 0
    %4552 = vmatpush1.bf16.msra.mxu0 0
    %4553 = vmatprep.subr.bf16.mxu0 0
    %4554 = vmatpush1.bf16.msra.mxu0 0
    %4555 = vmatprep.subr.bf16.mxu0 0
    %4556 = vmatpush1.bf16.msra.mxu0 0
    %4557 = vmatprep.subr.bf16.mxu0 0
    %4558 = vmatpush1.bf16.msra.mxu0 0
    %4559 = vmatprep.subr.bf16.mxu0 0
    %4560 = vmatpush1.bf16.msra.mxu0 0
    %4561 = vmatprep.subr.bf16.mxu0 0
    %4562 = vmatpush1.bf16.msra.mxu0 0
    %4563 = vmatprep.subr.bf16.mxu0 0
    %4564 = vmatpush1.bf16.msra.mxu0 0
    %4565 = vmatprep.mubr.bf16.mxu0 0
    %4566 = vmatmul.mubr.bf16.gmra.mrb[0].mxu0 %v4492
    %v4567 = vpop.f32.mrb[0].mxu0
    %v4568 = vadd.f32 0.0, %v4567
    %v4569 = vpop.f32.mrb[0].mxu0
    %v4570 = vpop.f32.mrb[0].mxu0
    %v4571 = vpop.f32.mrb[0].mxu0
    %4572 = vdwg.mxu0
    %v4573 = vpack.c.bf16 %v4528, %v4528
    %v4574 = vpack.c.bf16 %v4568, %v4568
    %s4575 = scalar_lea.vmem %s8, 224
    %v4576 = vld [vmem:[%s4575] sm:$0xf]
    %v4577 = vld [vmem:[%s4575 + $0x4] sm:$0xf]
    %v4578 = vld [vmem:[%s4575 + $0x8] sm:$0xf]
    %v4579 = vld [vmem:[%s4575 + $0xc] sm:$0xf]
    %v4580 = vld [vmem:[%s4575 + $0x10] sm:$0xf]
    %v4581 = vld [vmem:[%s4575 + $0x14] sm:$0xf]
    %v4582 = vld [vmem:[%s4575 + $0x18] sm:$0xf]
    %v4583 = vld [vmem:[%s4575 + $0x1c] sm:$0xf]
    %v4586 = vunpack.c.l.b16 %v4573
    %v4587 = vunpack.c.l.b16 %v4574
    %v4588 = vpack.c.b16 %v4587, %v4586
    %v4597 = vunpack.c.l.b16 %v4576
    %v4598 = vunpack.c.l.b16 %v4577
    %v4599 = vunpack.c.l.b16 %v4578
    %v4600 = vunpack.c.l.b16 %v4579
    %v4601 = vunpack.c.l.b16 %v4580
    %v4602 = vunpack.c.l.b16 %v4581
    %v4603 = vunpack.c.l.b16 %v4582
    %v4604 = vunpack.c.l.b16 %v4583
    %v4605 = vpack.c.b16 %v4598, %v4597
    %v4606 = vpack.c.b16 %v4600, %v4599
    %v4607 = vpack.c.b16 %v4602, %v4601
    %v4608 = vpack.c.b16 %v4604, %v4603
    %v4614 = vsel %vm46, %v4588, 0
    %4616 = vmatprep.subr.bf16.mxu0 0
    %4617 = vmatpush1.bf16.msra.mxu0 %v4605
    %4618 = vmatprep.subr.bf16.mxu0 0
    %4619 = vmatpush1.bf16.msra.mxu0 %v4606
    %4620 = vmatprep.subr.bf16.mxu0 0
    %4621 = vmatpush1.bf16.msra.mxu0 %v4607
    %4622 = vmatprep.subr.bf16.mxu0 0
    %4623 = vmatpush1.bf16.msra.mxu0 %v4608
    %4624 = vmatprep.subr.bf16.mxu0 0
    %4625 = vmatpush1.bf16.msra.mxu0 0
    %4626 = vmatprep.subr.bf16.mxu0 0
    %4627 = vmatpush1.bf16.msra.mxu0 0
    %4628 = vmatprep.subr.bf16.mxu0 0
    %4629 = vmatpush1.bf16.msra.mxu0 0
    %4630 = vmatprep.subr.bf16.mxu0 0
    %4631 = vmatpush1.bf16.msra.mxu0 0
    %4632 = vmatprep.subr.bf16.mxu0 0
    %4633 = vmatpush1.bf16.msra.mxu0 0
    %4634 = vmatprep.subr.bf16.mxu0 0
    %4635 = vmatpush1.bf16.msra.mxu0 0
    %4636 = vmatprep.subr.bf16.mxu0 0
    %4637 = vmatpush1.bf16.msra.mxu0 0
    %4638 = vmatprep.subr.bf16.mxu0 0
    %4639 = vmatpush1.bf16.msra.mxu0 0
    %4640 = vmatprep.subr.bf16.mxu0 0
    %4641 = vmatpush1.bf16.msra.mxu0 0
    %4642 = vmatprep.subr.bf16.mxu0 0
    %4643 = vmatpush1.bf16.msra.mxu0 0
    %4644 = vmatprep.subr.bf16.mxu0 0
    %4645 = vmatpush1.bf16.msra.mxu0 0
    %4646 = vmatprep.subr.bf16.mxu0 0
    %4647 = vmatpush1.bf16.msra.mxu0 0
    %4648 = vmatprep.mubr.bf16.mxu0 0
    %4649 = vmatmul.mubr.bf16.gmra.mrb[0].mxu0 %v4614
    %v4650 = vpop.f32.mrb[0].mxu0
    %v4651 = vadd.f32 0.0, %v4650
    %v4652 = vpop.f32.mrb[0].mxu0
    %v4653 = vpop.f32.mrb[0].mxu0
    %v4654 = vadd.f32 0.0, %v4653
    %v4655 = vpop.f32.mrb[0].mxu0
    %4656 = vdwg.mxu0
    %v4657 = vadd.f32 %v4239, %v4651
    %v4658 = vadd.f32 %v4240, %v4654
    %v4659 = vld [vmem:[%s12 + $0x1] sm:$0x1]
    %v4660 = vlaneseq
    %v4661 = vshrl.u32 %v4660, 7
    %v4662 = vsub.s32 0, %v4661
    %v4663 = vrot.slane %v4659, %v4662
    %v4664 = vadd.f32 %v4657, %v4663
    %v4665 = vadd.f32 %v4658, %v4663
    %v4666 = vadd.f32 %v2931, %v4664
    %v4667 = vadd.f32 %v2932, %v4665
    %v4668 = vld [vmem:[%s12 + $0x5] sm:$0x1]
    %v4669 = vld [vmem:[%s12 + $0x9] sm:$0x1]
    %v4670 = vsel %vm46, %v4666, 0.0
    %4671 = vadd.xlane.f32.xlu0 %v4670
    %v4672 = vpop.xlane.xlu0 %4671
    %v4673 = vsel %vm46, %v4667, 0.0
    %4674 = vadd.xlane.f32.xlu0 %v4673
    %v4675 = vpop.xlane.xlu0 %4674
    %v4676 = vmul.f32 %v4672, %v702
    %v4677 = vmul.f32 %v4675, %v702
    %v4678 = vsub.f32 %v4666, %v4676
    %v4679 = vsub.f32 %v4667, %v4677
    %v4680 = vmul.f32 %v4678, %v4678
    %v4681 = vmul.f32 %v4679, %v4679
    %v4682 = vsel %vm46, %v4680, 0.0
    %4683 = vadd.xlane.f32.xlu0 %v4682
    %v4684 = vpop.xlane.xlu0 %4683
    %v4685 = vsel %vm46, %v4681, 0.0
    %4686 = vadd.xlane.f32.xlu0 %v4685
    %v4687 = vpop.xlane.xlu0 %4686
    %v4688 = vmul.f32 %v4684, %v702
    %v4689 = vmul.f32 %v4687, %v702
    %v4690 = vadd.f32 %v4688, 1e-05
    %v4691 = vadd.f32 %v4689, 1e-05
    %v4692 = vrsqrt.pop %v4690
    %v4693 = vrsqrt.pop %v4691
    %v4694 = vmul.f32 %v4678, %v4692
    %v4695 = vmul.f32 %v4679, %v4693
    %v4696 = vlaneseq
    %v4697 = vshrl.u32 %v4696, 7
    %v4698 = vsub.s32 0, %v4697
    %v4699 = vrot.slane %v4668, %v4698
    %v4700 = vmul.f32 %v4694, %v4699
    %v4701 = vmul.f32 %v4695, %v4699
    %v4702 = vlaneseq
    %v4703 = vshrl.u32 %v4702, 7
    %v4704 = vsub.s32 0, %v4703
    %v4705 = vrot.slane %v4669, %v4704
    %v4706 = vadd.f32 %v4700, %v4705
    %v4707 = vadd.f32 %v4701, %v4705
    %v4708 = vpack.c.bf16 %v4706, %v4706
    %v4709 = vpack.c.bf16 %v4707, %v4707
    %v4710 = vld [vmem:[%s9] sm:$0xf]
    %v4711 = vld [vmem:[%s9 + $0x4] sm:$0xf]
    %v4712 = vld [vmem:[%s9 + $0x8] sm:$0xf]
    %v4713 = vld [vmem:[%s9 + $0xc] sm:$0xf]
    %v4714 = vld [vmem:[%s9 + $0x10] sm:$0xf]
    %v4715 = vld [vmem:[%s9 + $0x14] sm:$0xf]
    %v4716 = vld [vmem:[%s9 + $0x18] sm:$0xf]
    %v4717 = vld [vmem:[%s9 + $0x1c] sm:$0xf]
    %v4718 = vld [vmem:[%s12 + $0x2] sm:$0x1]
    %v4719 = vlaneseq
    %v4720 = vshrl.u32 %v4719, 7
    %v4721 = vsub.s32 0, %v4720
    %v4722 = vrot.slane %v4718, %v4721
    %v4725 = vunpack.c.l.b16 %v4708
    %v4726 = vunpack.c.l.b16 %v4709
    %v4727 = vpack.c.b16 %v4726, %v4725
    %v4736 = vunpack.c.l.b16 %v4710
    %v4737 = vunpack.c.l.b16 %v4711
    %v4738 = vunpack.c.l.b16 %v4712
    %v4739 = vunpack.c.l.b16 %v4713
    %v4740 = vunpack.c.l.b16 %v4714
    %v4741 = vunpack.c.l.b16 %v4715
    %v4742 = vunpack.c.l.b16 %v4716
    %v4743 = vunpack.c.l.b16 %v4717
    %v4744 = vpack.c.b16 %v4737, %v4736
    %v4745 = vpack.c.b16 %v4739, %v4738
    %v4746 = vpack.c.b16 %v4741, %v4740
    %v4747 = vpack.c.b16 %v4743, %v4742
    %v4753 = vsel %vm46, %v4727, 0
    %4755 = vmatprep.subr.bf16.mxu0 0
    %4756 = vmatpush1.bf16.msra.mxu0 %v4744
    %4757 = vmatprep.subr.bf16.mxu0 0
    %4758 = vmatpush1.bf16.msra.mxu0 %v4745
    %4759 = vmatprep.subr.bf16.mxu0 0
    %4760 = vmatpush1.bf16.msra.mxu0 %v4746
    %4761 = vmatprep.subr.bf16.mxu0 0
    %4762 = vmatpush1.bf16.msra.mxu0 %v4747
    %4763 = vmatprep.subr.bf16.mxu0 0
    %4764 = vmatpush1.bf16.msra.mxu0 0
    %4765 = vmatprep.subr.bf16.mxu0 0
    %4766 = vmatpush1.bf16.msra.mxu0 0
    %4767 = vmatprep.subr.bf16.mxu0 0
    %4768 = vmatpush1.bf16.msra.mxu0 0
    %4769 = vmatprep.subr.bf16.mxu0 0
    %4770 = vmatpush1.bf16.msra.mxu0 0
    %4771 = vmatprep.subr.bf16.mxu0 0
    %4772 = vmatpush1.bf16.msra.mxu0 0
    %4773 = vmatprep.subr.bf16.mxu0 0
    %4774 = vmatpush1.bf16.msra.mxu0 0
    %4775 = vmatprep.subr.bf16.mxu0 0
    %4776 = vmatpush1.bf16.msra.mxu0 0
    %4777 = vmatprep.subr.bf16.mxu0 0
    %4778 = vmatpush1.bf16.msra.mxu0 0
    %4779 = vmatprep.subr.bf16.mxu0 0
    %4780 = vmatpush1.bf16.msra.mxu0 0
    %4781 = vmatprep.subr.bf16.mxu0 0
    %4782 = vmatpush1.bf16.msra.mxu0 0
    %4783 = vmatprep.subr.bf16.mxu0 0
    %4784 = vmatpush1.bf16.msra.mxu0 0
    %4785 = vmatprep.subr.bf16.mxu0 0
    %4786 = vmatpush1.bf16.msra.mxu0 0
    %4787 = vmatprep.mubr.bf16.mxu0 0
    %4788 = vmatmul.mubr.bf16.gmra.mrb[0].mxu0 %v4753
    %v4789 = vpop.f32.mrb[0].mxu0
    %v4790 = vadd.f32 %v4722, %v4789
    %v4791 = vpop.f32.mrb[0].mxu0
    %v4792 = vpop.f32.mrb[0].mxu0
    %v4793 = vadd.f32 %v4722, %v4792
    %v4794 = vpop.f32.mrb[0].mxu0
    %4795 = vdwg.mxu0
    %v4796 = vmax.f32 %v4790, 0.0
    %v4797 = vmax.f32 %v4793, 0.0
    %v4798 = vpack.c.bf16 %v4796, %v4796
    %v4799 = vpack.c.bf16 %v4797, %v4797
    %v4800 = vld [vmem:[%s10] sm:$0xf]
    %v4801 = vld [vmem:[%s10 + $0x4] sm:$0xf]
    %v4802 = vld [vmem:[%s10 + $0x8] sm:$0xf]
    %v4803 = vld [vmem:[%s10 + $0xc] sm:$0xf]
    %v4804 = vld [vmem:[%s10 + $0x10] sm:$0xf]
    %v4805 = vld [vmem:[%s10 + $0x14] sm:$0xf]
    %v4806 = vld [vmem:[%s10 + $0x18] sm:$0xf]
    %v4807 = vld [vmem:[%s10 + $0x1c] sm:$0xf]
    %v4808 = vld [vmem:[%s10 + $0x20] sm:$0xf]
    %v4809 = vld [vmem:[%s10 + $0x24] sm:$0xf]
    %v4810 = vld [vmem:[%s10 + $0x28] sm:$0xf]
    %v4811 = vld [vmem:[%s10 + $0x2c] sm:$0xf]
    %v4812 = vld [vmem:[%s10 + $0x30] sm:$0xf]
    %v4813 = vld [vmem:[%s10 + $0x34] sm:$0xf]
    %v4814 = vld [vmem:[%s10 + $0x38] sm:$0xf]
    %v4815 = vld [vmem:[%s10 + $0x3c] sm:$0xf]
    %v4816 = vld [vmem:[%s12 + $0x3] sm:$0x1]
    %v4817 = vlaneseq
    %v4818 = vshrl.u32 %v4817, 7
    %v4819 = vsub.s32 0, %v4818
    %v4820 = vrot.slane %v4816, %v4819
    %v4823 = vunpack.c.l.b16 %v4798
    %v4824 = vunpack.c.l.b16 %v4799
    %v4825 = vpack.c.b16 %v4824, %v4823
    %v4843 = vunpack.c.l.b16 %v4800
    %v4844 = vunpack.c.l.b16 %v4801
    %v4845 = vunpack.c.l.b16 %v4802
    %v4846 = vunpack.c.l.b16 %v4803
    %v4847 = vunpack.c.l.b16 %v4804
    %v4848 = vunpack.c.l.b16 %v4805
    %v4849 = vunpack.c.l.b16 %v4806
    %v4850 = vunpack.c.l.b16 %v4807
    %v4851 = vunpack.c.l.b16 %v4808
    %v4852 = vunpack.c.l.b16 %v4809
    %v4853 = vunpack.c.l.b16 %v4810
    %v4854 = vunpack.c.l.b16 %v4811
    %v4855 = vunpack.c.l.b16 %v4812
    %v4856 = vunpack.c.l.b16 %v4813
    %v4857 = vunpack.c.l.b16 %v4814
    %v4858 = vunpack.c.l.b16 %v4815
    %v4859 = vpack.c.b16 %v4844, %v4843
    %v4860 = vpack.c.b16 %v4846, %v4845
    %v4861 = vpack.c.b16 %v4848, %v4847
    %v4862 = vpack.c.b16 %v4850, %v4849
    %v4863 = vpack.c.b16 %v4852, %v4851
    %v4864 = vpack.c.b16 %v4854, %v4853
    %v4865 = vpack.c.b16 %v4856, %v4855
    %v4866 = vpack.c.b16 %v4858, %v4857
    %4875 = vmatprep.subr.bf16.mxu0 0
    %4876 = vmatpush1.bf16.msra.mxu0 %v4859
    %4877 = vmatprep.subr.bf16.mxu0 0
    %4878 = vmatpush1.bf16.msra.mxu0 %v4860
    %4879 = vmatprep.subr.bf16.mxu0 0
    %4880 = vmatpush1.bf16.msra.mxu0 %v4861
    %4881 = vmatprep.subr.bf16.mxu0 0
    %4882 = vmatpush1.bf16.msra.mxu0 %v4862
    %4883 = vmatprep.subr.bf16.mxu0 0
    %4884 = vmatpush1.bf16.msra.mxu0 %v4863
    %4885 = vmatprep.subr.bf16.mxu0 0
    %4886 = vmatpush1.bf16.msra.mxu0 %v4864
    %4887 = vmatprep.subr.bf16.mxu0 0
    %4888 = vmatpush1.bf16.msra.mxu0 %v4865
    %4889 = vmatprep.subr.bf16.mxu0 0
    %4890 = vmatpush1.bf16.msra.mxu0 %v4866
    %4891 = vmatprep.subr.bf16.mxu0 0
    %4892 = vmatpush1.bf16.msra.mxu0 0
    %4893 = vmatprep.subr.bf16.mxu0 0
    %4894 = vmatpush1.bf16.msra.mxu0 0
    %4895 = vmatprep.subr.bf16.mxu0 0
    %4896 = vmatpush1.bf16.msra.mxu0 0
    %4897 = vmatprep.subr.bf16.mxu0 0
    %4898 = vmatpush1.bf16.msra.mxu0 0
    %4899 = vmatprep.subr.bf16.mxu0 0
    %4900 = vmatpush1.bf16.msra.mxu0 0
    %4901 = vmatprep.subr.bf16.mxu0 0
    %4902 = vmatpush1.bf16.msra.mxu0 0
    %4903 = vmatprep.subr.bf16.mxu0 0
    %4904 = vmatpush1.bf16.msra.mxu0 0
    %4905 = vmatprep.subr.bf16.mxu0 0
    %4906 = vmatpush1.bf16.msra.mxu0 0
    %4907 = vmatprep.mubr.bf16.mxu0 0
    %4908 = vmatmul.mubr.bf16.gmra.mrb[0].mxu0 %v4825
    %v4909 = vpop.f32.mrb[0].mxu0
    %v4910 = vadd.f32 %v4820, %v4909
    %v4911 = vpop.f32.mrb[0].mxu0
    %v4912 = vpop.f32.mrb[0].mxu0
    %v4913 = vadd.f32 %v4820, %v4912
    %v4914 = vpop.f32.mrb[0].mxu0
    %4915 = vdwg.mxu0
    %v4916 = vadd.f32 %v4706, %v4910
    %v4917 = vadd.f32 %v4707, %v4913
    %v4918 = vld [vmem:[%s12 + $0x6] sm:$0x1]
    %v4919 = vld [vmem:[%s12 + $0xa] sm:$0x1]
    %v4920 = vsel %vm46, %v4916, 0.0
    %4921 = vadd.xlane.f32.xlu0 %v4920
    %v4922 = vpop.xlane.xlu0 %4921
    %v4923 = vsel %vm46, %v4917, 0.0
    %4924 = vadd.xlane.f32.xlu0 %v4923
    %v4925 = vpop.xlane.xlu0 %4924
    %v4926 = vmul.f32 %v4922, %v702
    %v4927 = vmul.f32 %v4925, %v702
    %v4928 = vsub.f32 %v4916, %v4926
    %v4929 = vsub.f32 %v4917, %v4927
    %v4930 = vmul.f32 %v4928, %v4928
    %v4931 = vmul.f32 %v4929, %v4929
    %v4932 = vsel %vm46, %v4930, 0.0
    %4933 = vadd.xlane.f32.xlu0 %v4932
    %v4934 = vpop.xlane.xlu0 %4933
    %v4935 = vsel %vm46, %v4931, 0.0
    %4936 = vadd.xlane.f32.xlu0 %v4935
    %v4937 = vpop.xlane.xlu0 %4936
    %v4938 = vmul.f32 %v4934, %v702
    %v4939 = vmul.f32 %v4937, %v702
    %v4940 = vadd.f32 %v4938, 1e-05
    %v4941 = vadd.f32 %v4939, 1e-05
    %v4942 = vrsqrt.pop %v4940
    %v4943 = vrsqrt.pop %v4941
    %v4944 = vmul.f32 %v4928, %v4942
    %v4945 = vmul.f32 %v4929, %v4943
    %v4946 = vlaneseq
    %v4947 = vshrl.u32 %v4946, 7
    %v4948 = vsub.s32 0, %v4947
    %v4949 = vrot.slane %v4918, %v4948
    %v4950 = vmul.f32 %v4944, %v4949
    %v4951 = vmul.f32 %v4945, %v4949
    %v4952 = vlaneseq
    %v4953 = vshrl.u32 %v4952, 7
    %v4954 = vsub.s32 0, %v4953
    %v4955 = vrot.slane %v4919, %v4954
    %v4956 = vadd.f32 %v4950, %v4955
    %v4957 = vadd.f32 %v4951, %v4955
    %v4958 = vld [vmem:[%s12 + $0x7] sm:$0x1]
    %v4959 = vld [vmem:[%s12 + $0xb] sm:$0x1]
    %v4960 = vsel %vm46, %v4956, 0.0
    %4961 = vadd.xlane.f32.xlu0 %v4960
    %v4962 = vpop.xlane.xlu0 %4961
    %v4963 = vsel %vm46, %v4957, 0.0
    %4964 = vadd.xlane.f32.xlu0 %v4963
    %v4965 = vpop.xlane.xlu0 %4964
    %v4966 = vmul.f32 %v4962, %v702
    %v4967 = vmul.f32 %v4965, %v702
    %v4968 = vsub.f32 %v4956, %v4966
    %v4969 = vsub.f32 %v4957, %v4967
    %v4970 = vmul.f32 %v4968, %v4968
    %v4971 = vmul.f32 %v4969, %v4969
    %v4972 = vsel %vm46, %v4970, 0.0
    %4973 = vadd.xlane.f32.xlu0 %v4972
    %v4974 = vpop.xlane.xlu0 %4973
    %v4975 = vsel %vm46, %v4971, 0.0
    %4976 = vadd.xlane.f32.xlu0 %v4975
    %v4977 = vpop.xlane.xlu0 %4976
    %v4978 = vmul.f32 %v4974, %v702
    %v4979 = vmul.f32 %v4977, %v702
    %v4980 = vadd.f32 %v4978, 1e-05
    %v4981 = vadd.f32 %v4979, 1e-05
    %v4982 = vrsqrt.pop %v4980
    %v4983 = vrsqrt.pop %v4981
    %v4984 = vmul.f32 %v4968, %v4982
    %v4985 = vmul.f32 %v4969, %v4983
    %v4986 = vlaneseq
    %v4987 = vshrl.u32 %v4986, 7
    %v4988 = vsub.s32 0, %v4987
    %v4989 = vrot.slane %v4958, %v4988
    %v4990 = vmul.f32 %v4984, %v4989
    %v4991 = vmul.f32 %v4985, %v4989
    %v4992 = vlaneseq
    %v4993 = vshrl.u32 %v4992, 7
    %v4994 = vsub.s32 0, %v4993
    %v4995 = vrot.slane %v4959, %v4994
    %v4996 = vadd.f32 %v4990, %v4995
    %v4997 = vadd.f32 %v4991, %v4995
    %v4998 = vpack.c.bf16 %v4996, %v4996
    %v4999 = vpack.c.bf16 %v4997, %v4997
    %s5000 = scalar_lea.vmem %s6, 256
    %v5001 = vld [vmem:[%s5000] sm:$0xf]
    %v5002 = vld [vmem:[%s5000 + $0x4] sm:$0xf]
    %v5003 = vld [vmem:[%s5000 + $0x8] sm:$0xf]
    %v5004 = vld [vmem:[%s5000 + $0xc] sm:$0xf]
    %v5005 = vld [vmem:[%s5000 + $0x10] sm:$0xf]
    %v5006 = vld [vmem:[%s5000 + $0x14] sm:$0xf]
    %v5007 = vld [vmem:[%s5000 + $0x18] sm:$0xf]
    %v5008 = vld [vmem:[%s5000 + $0x1c] sm:$0xf]
    %s5009 = scalar_lea.vmem %s11, 8
    %v5010 = vld [vmem:[%s5009] sm:$0x1]
    %v5012 = vlaneseq
    %v5013 = vshrl.u32 %v5012, 7
    %v5014 = vsub.s32 0, %v5013
    %v5015 = vrot.slane %v5010, %v5014
    %v5019 = vunpack.c.l.b16 %v4998
    %v5020 = vunpack.c.l.b16 %v4999
    %v5021 = vpack.c.b16 %v5020, %v5019
    %v5030 = vunpack.c.l.b16 %v5001
    %v5031 = vunpack.c.l.b16 %v5002
    %v5032 = vunpack.c.l.b16 %v5003
    %v5033 = vunpack.c.l.b16 %v5004
    %v5034 = vunpack.c.l.b16 %v5005
    %v5035 = vunpack.c.l.b16 %v5006
    %v5036 = vunpack.c.l.b16 %v5007
    %v5037 = vunpack.c.l.b16 %v5008
    %v5038 = vpack.c.b16 %v5031, %v5030
    %v5039 = vpack.c.b16 %v5033, %v5032
    %v5040 = vpack.c.b16 %v5035, %v5034
    %v5041 = vpack.c.b16 %v5037, %v5036
    %v5047 = vsel %vm46, %v5021, 0
    %5049 = vmatprep.subr.bf16.mxu0 0
    %5050 = vmatpush1.bf16.msra.mxu0 %v5038
    %5051 = vmatprep.subr.bf16.mxu0 0
    %5052 = vmatpush1.bf16.msra.mxu0 %v5039
    %5053 = vmatprep.subr.bf16.mxu0 0
    %5054 = vmatpush1.bf16.msra.mxu0 %v5040
    %5055 = vmatprep.subr.bf16.mxu0 0
    %5056 = vmatpush1.bf16.msra.mxu0 %v5041
    %5057 = vmatprep.subr.bf16.mxu0 0
    %5058 = vmatpush1.bf16.msra.mxu0 0
    %5059 = vmatprep.subr.bf16.mxu0 0
    %5060 = vmatpush1.bf16.msra.mxu0 0
    %5061 = vmatprep.subr.bf16.mxu0 0
    %5062 = vmatpush1.bf16.msra.mxu0 0
    %5063 = vmatprep.subr.bf16.mxu0 0
    %5064 = vmatpush1.bf16.msra.mxu0 0
    %5065 = vmatprep.subr.bf16.mxu0 0
    %5066 = vmatpush1.bf16.msra.mxu0 0
    %5067 = vmatprep.subr.bf16.mxu0 0
    %5068 = vmatpush1.bf16.msra.mxu0 0
    %5069 = vmatprep.subr.bf16.mxu0 0
    %5070 = vmatpush1.bf16.msra.mxu0 0
    %5071 = vmatprep.subr.bf16.mxu0 0
    %5072 = vmatpush1.bf16.msra.mxu0 0
    %5073 = vmatprep.subr.bf16.mxu0 0
    %5074 = vmatpush1.bf16.msra.mxu0 0
    %5075 = vmatprep.subr.bf16.mxu0 0
    %5076 = vmatpush1.bf16.msra.mxu0 0
    %5077 = vmatprep.subr.bf16.mxu0 0
    %5078 = vmatpush1.bf16.msra.mxu0 0
    %5079 = vmatprep.subr.bf16.mxu0 0
    %5080 = vmatpush1.bf16.msra.mxu0 0
    %5081 = vmatprep.mubr.bf16.mxu0 0
    %5082 = vmatmul.mubr.bf16.gmra.mrb[0].mxu0 %v5047
    %v5083 = vpop.f32.mrb[0].mxu0
    %v5084 = vadd.f32 %v5015, %v5083
    %v5085 = vpop.f32.mrb[0].mxu0
    %v5086 = vpop.f32.mrb[0].mxu0
    %v5087 = vadd.f32 %v5015, %v5086
    %v5088 = vpop.f32.mrb[0].mxu0
    %5089 = vdwg.mxu0
    %v5090 = vpack.c.bf16 %v5084, %v5084
    %v5091 = vpack.c.bf16 %v5087, %v5087
    %s5092 = scalar_lea.vmem %s7, 64
    %v5093 = vld [vmem:[%s5092] sm:$0xf]
    %v5094 = vld [vmem:[%s5092 + $0x4] sm:$0xf]
    %v5097 = vunpack.c.l.b16 %v5090
    %v5098 = vunpack.c.l.b16 %v5091
    %v5099 = vpack.c.b16 %v5098, %v5097
    %v5102 = vunpack.c.l.b16 %v5093
    %v5103 = vunpack.c.l.b16 %v5094
    %v5104 = vpack.c.b16 %v5103, %v5102
    %v5107 = vsel %vm94, %v5099, 0
    %5109 = vmatprep.subr.bf16.mxu0 0
    %5110 = vmatpush1.bf16.msra.mxu0 %v5104
    %5111 = vmatprep.subr.bf16.mxu0 0
    %5112 = vmatpush1.bf16.msra.mxu0 0
    %5113 = vmatprep.subr.bf16.mxu0 0
    %5114 = vmatpush1.bf16.msra.mxu0 0
    %5115 = vmatprep.subr.bf16.mxu0 0
    %5116 = vmatpush1.bf16.msra.mxu0 0
    %5117 = vmatprep.subr.bf16.mxu0 0
    %5118 = vmatpush1.bf16.msra.mxu0 0
    %5119 = vmatprep.subr.bf16.mxu0 0
    %5120 = vmatpush1.bf16.msra.mxu0 0
    %5121 = vmatprep.subr.bf16.mxu0 0
    %5122 = vmatpush1.bf16.msra.mxu0 0
    %5123 = vmatprep.subr.bf16.mxu0 0
    %5124 = vmatpush1.bf16.msra.mxu0 0
    %5125 = vmatprep.subr.bf16.mxu0 0
    %5126 = vmatpush1.bf16.msra.mxu0 0
    %5127 = vmatprep.subr.bf16.mxu0 0
    %5128 = vmatpush1.bf16.msra.mxu0 0
    %5129 = vmatprep.subr.bf16.mxu0 0
    %5130 = vmatpush1.bf16.msra.mxu0 0
    %5131 = vmatprep.subr.bf16.mxu0 0
    %5132 = vmatpush1.bf16.msra.mxu0 0
    %5133 = vmatprep.subr.bf16.mxu0 0
    %5134 = vmatpush1.bf16.msra.mxu0 0
    %5135 = vmatprep.subr.bf16.mxu0 0
    %5136 = vmatpush1.bf16.msra.mxu0 0
    %5137 = vmatprep.subr.bf16.mxu0 0
    %5138 = vmatpush1.bf16.msra.mxu0 0
    %5139 = vmatprep.subr.bf16.mxu0 0
    %5140 = vmatpush1.bf16.msra.mxu0 0
    %5141 = vmatprep.mubr.bf16.mxu0 0
    %5142 = vmatmul.mubr.bf16.gmra.mrb[0].mxu0 %v5107
    %v5143 = vpop.f32.mrb[0].mxu0
    %v5144 = vadd.f32 0.0, %v5143
    %v5145 = vpop.f32.mrb[0].mxu0
    %v5146 = vpop.f32.mrb[0].mxu0
    %v5147 = vadd.f32 0.0, %v5146
    %v5148 = vpop.f32.mrb[0].mxu0
    %5149 = vdwg.mxu0
    %v5150 = vpack.c.bf16 %v5144, %v5144
    %v5151 = vpack.c.bf16 %v5147, %v5147
    %v5153 = vsel %vm46, %v5150, 0
    %v5156 = vsel %vm46, %v4998, 0
    %5158 = vmatprep.subr.bf16.mxu0 0
    %5159 = vmatpush1.bf16.xpose.msra.mxu0 %v5156
    %5160 = vmatprep.subr.bf16.mxu0 0
    %5161 = vmatpush1.bf16.xpose.msra.mxu0 0
    %5162 = vmatprep.subr.bf16.mxu0 0
    %5163 = vmatpush1.bf16.xpose.msra.mxu0 0
    %5164 = vmatprep.subr.bf16.mxu0 0
    %5165 = vmatpush1.bf16.xpose.msra.mxu0 0
    %5166 = vmatprep.subr.bf16.mxu0 0
    %5167 = vmatpush1.bf16.xpose.msra.mxu0 0
    %5168 = vmatprep.subr.bf16.mxu0 0
    %5169 = vmatpush1.bf16.xpose.msra.mxu0 0
    %5170 = vmatprep.subr.bf16.mxu0 0
    %5171 = vmatpush1.bf16.xpose.msra.mxu0 0
    %5172 = vmatprep.subr.bf16.mxu0 0
    %5173 = vmatpush1.bf16.xpose.msra.mxu0 0
    %5174 = vmatprep.subr.bf16.mxu0 0
    %5175 = vmatpush1.bf16.xpose.msra.mxu0 0
    %5176 = vmatprep.subr.bf16.mxu0 0
    %5177 = vmatpush1.bf16.xpose.msra.mxu0 0
    %5178 = vmatprep.subr.bf16.mxu0 0
    %5179 = vmatpush1.bf16.xpose.msra.mxu0 0
    %5180 = vmatprep.subr.bf16.mxu0 0
    %5181 = vmatpush1.bf16.xpose.msra.mxu0 0
    %5182 = vmatprep.subr.bf16.mxu0 0
    %5183 = vmatpush1.bf16.xpose.msra.mxu0 0
    %5184 = vmatprep.subr.bf16.mxu0 0
    %5185 = vmatpush1.bf16.xpose.msra.mxu0 0
    %5186 = vmatprep.subr.bf16.mxu0 0
    %5187 = vmatpush1.bf16.xpose.msra.mxu0 0
    %5188 = vmatprep.subr.bf16.mxu0 0
    %5189 = vmatpush1.bf16.xpose.msra.mxu0 0
    %5190 = vmatprep.mubr.bf16.mxu0 0
    %5191 = vmatmul.mubr.bf16.gmra.mrb[0].mxu0 %v5153
    %v5192 = vpop.f32.mrb[0].mxu0
    %v5193 = vadd.f32 0.0, %v5192
    %v5194 = vpop.f32.mrb[0].mxu0
    %v5195 = vpop.f32.mrb[0].mxu0
    %v5196 = vpop.f32.mrb[0].mxu0
    %5197 = vdwg.mxu0
    %v5199 = vsel %vm46, %v5151, 0
    %v5202 = vsel %vm46, %v4999, 0
    %5204 = vmatprep.subr.bf16.mxu0 0
    %5205 = vmatpush1.bf16.xpose.msra.mxu0 %v5202
    %5206 = vmatprep.subr.bf16.mxu0 0
    %5207 = vmatpush1.bf16.xpose.msra.mxu0 0
    %5208 = vmatprep.subr.bf16.mxu0 0
    %5209 = vmatpush1.bf16.xpose.msra.mxu0 0
    %5210 = vmatprep.subr.bf16.mxu0 0
    %5211 = vmatpush1.bf16.xpose.msra.mxu0 0
    %5212 = vmatprep.subr.bf16.mxu0 0
    %5213 = vmatpush1.bf16.xpose.msra.mxu0 0
    %5214 = vmatprep.subr.bf16.mxu0 0
    %5215 = vmatpush1.bf16.xpose.msra.mxu0 0
    %5216 = vmatprep.subr.bf16.mxu0 0
    %5217 = vmatpush1.bf16.xpose.msra.mxu0 0
    %5218 = vmatprep.subr.bf16.mxu0 0
    %5219 = vmatpush1.bf16.xpose.msra.mxu0 0
    %5220 = vmatprep.subr.bf16.mxu0 0
    %5221 = vmatpush1.bf16.xpose.msra.mxu0 0
    %5222 = vmatprep.subr.bf16.mxu0 0
    %5223 = vmatpush1.bf16.xpose.msra.mxu0 0
    %5224 = vmatprep.subr.bf16.mxu0 0
    %5225 = vmatpush1.bf16.xpose.msra.mxu0 0
    %5226 = vmatprep.subr.bf16.mxu0 0
    %5227 = vmatpush1.bf16.xpose.msra.mxu0 0
    %5228 = vmatprep.subr.bf16.mxu0 0
    %5229 = vmatpush1.bf16.xpose.msra.mxu0 0
    %5230 = vmatprep.subr.bf16.mxu0 0
    %5231 = vmatpush1.bf16.xpose.msra.mxu0 0
    %5232 = vmatprep.subr.bf16.mxu0 0
    %5233 = vmatpush1.bf16.xpose.msra.mxu0 0
    %5234 = vmatprep.subr.bf16.mxu0 0
    %5235 = vmatpush1.bf16.xpose.msra.mxu0 0
    %5236 = vmatprep.mubr.bf16.mxu0 0
    %5237 = vmatmul.mubr.bf16.gmra.mrb[0].mxu0 %v5199
    %v5238 = vpop.f32.mrb[0].mxu0
    %v5239 = vadd.f32 0.0, %v5238
    %v5240 = vpop.f32.mrb[0].mxu0
    %v5241 = vpop.f32.mrb[0].mxu0
    %v5242 = vpop.f32.mrb[0].mxu0
    %5243 = vdwg.mxu0
    %v5244 = vsel %vm1409, %v5193, -inf
    %5245 = vmax.xlane.f32.xlu0 %v5244
    %v5246 = vpop.xlane.xlu0 %5245
    %v5247 = vsel %vm1409, %v5239, -inf
    %5248 = vmax.xlane.f32.xlu0 %v5247
    %v5249 = vpop.xlane.xlu0 %5248
    %v5250 = vsub.f32 %v5193, %v5246
    %v5251 = vsub.f32 %v5239, %v5249
    %v5252 = vmul.f32 %v5250, 1.442695
    %v5253 = vpow.pop %v5252
    %v5254 = vmul.f32 %v5251, 1.442695
    %v5255 = vpow.pop %v5254
    %v5256 = vsel %vm1409, %v5253, 0.0
    %5257 = vadd.xlane.f32.xlu0 %v5256
    %v5258 = vpop.xlane.xlu0 %5257
    %v5259 = vsel %vm1409, %v5255, 0.0
    %5260 = vadd.xlane.f32.xlu0 %v5259
    %v5261 = vpop.xlane.xlu0 %5260
    %v5262 = vrcp.pop %v5258
    %v5263 = vrcp.pop %v5261
    %v5264 = vmul.f32 %v5253, %v5262
    %v5265 = vmul.f32 %v5255, %v5263
    %v5266 = vpack.c.bf16 %v5264, %v5264
    %v5267 = vpack.c.bf16 %v5265, %v5265
    %v5269 = vsel %vm1409, %v5266, 0
    %v5271 = vsel %vm1437, %v4998, 0
    %5273 = vmatprep.subr.bf16.mxu0 0
    %5274 = vmatpush1.bf16.msra.mxu0 %v5271
    %5275 = vmatprep.subr.bf16.mxu0 0
    %5276 = vmatpush1.bf16.msra.mxu0 0
    %5277 = vmatprep.subr.bf16.mxu0 0
    %5278 = vmatpush1.bf16.msra.mxu0 0
    %5279 = vmatprep.subr.bf16.mxu0 0
    %5280 = vmatpush1.bf16.msra.mxu0 0
    %5281 = vmatprep.subr.bf16.mxu0 0
    %5282 = vmatpush1.bf16.msra.mxu0 0
    %5283 = vmatprep.subr.bf16.mxu0 0
    %5284 = vmatpush1.bf16.msra.mxu0 0
    %5285 = vmatprep.subr.bf16.mxu0 0
    %5286 = vmatpush1.bf16.msra.mxu0 0
    %5287 = vmatprep.subr.bf16.mxu0 0
    %5288 = vmatpush1.bf16.msra.mxu0 0
    %5289 = vmatprep.subr.bf16.mxu0 0
    %5290 = vmatpush1.bf16.msra.mxu0 0
    %5291 = vmatprep.subr.bf16.mxu0 0
    %5292 = vmatpush1.bf16.msra.mxu0 0
    %5293 = vmatprep.subr.bf16.mxu0 0
    %5294 = vmatpush1.bf16.msra.mxu0 0
    %5295 = vmatprep.subr.bf16.mxu0 0
    %5296 = vmatpush1.bf16.msra.mxu0 0
    %5297 = vmatprep.subr.bf16.mxu0 0
    %5298 = vmatpush1.bf16.msra.mxu0 0
    %5299 = vmatprep.subr.bf16.mxu0 0
    %5300 = vmatpush1.bf16.msra.mxu0 0
    %5301 = vmatprep.subr.bf16.mxu0 0
    %5302 = vmatpush1.bf16.msra.mxu0 0
    %5303 = vmatprep.subr.bf16.mxu0 0
    %5304 = vmatpush1.bf16.msra.mxu0 0
    %5305 = vmatprep.mubr.bf16.mxu0 0
    %5306 = vmatmul.mubr.bf16.gmra.mrb[0].mxu0 %v5269
    %v5307 = vpop.f32.mrb[0].mxu0
    %v5308 = vadd.f32 0.0, %v5307
    %v5309 = vpop.f32.mrb[0].mxu0
    %v5310 = vpop.f32.mrb[0].mxu0
    %v5311 = vpop.f32.mrb[0].mxu0
    %5312 = vdwg.mxu0
    %v5314 = vsel %vm1409, %v5267, 0
    %v5316 = vsel %vm1437, %v4999, 0
    %5318 = vmatprep.subr.bf16.mxu0 0
    %5319 = vmatpush1.bf16.msra.mxu0 %v5316
    %5320 = vmatprep.subr.bf16.mxu0 0
    %5321 = vmatpush1.bf16.msra.mxu0 0
    %5322 = vmatprep.subr.bf16.mxu0 0
    %5323 = vmatpush1.bf16.msra.mxu0 0
    %5324 = vmatprep.subr.bf16.mxu0 0
    %5325 = vmatpush1.bf16.msra.mxu0 0
    %5326 = vmatprep.subr.bf16.mxu0 0
    %5327 = vmatpush1.bf16.msra.mxu0 0
    %5328 = vmatprep.subr.bf16.mxu0 0
    %5329 = vmatpush1.bf16.msra.mxu0 0
    %5330 = vmatprep.subr.bf16.mxu0 0
    %5331 = vmatpush1.bf16.msra.mxu0 0
    %5332 = vmatprep.subr.bf16.mxu0 0
    %5333 = vmatpush1.bf16.msra.mxu0 0
    %5334 = vmatprep.subr.bf16.mxu0 0
    %5335 = vmatpush1.bf16.msra.mxu0 0
    %5336 = vmatprep.subr.bf16.mxu0 0
    %5337 = vmatpush1.bf16.msra.mxu0 0
    %5338 = vmatprep.subr.bf16.mxu0 0
    %5339 = vmatpush1.bf16.msra.mxu0 0
    %5340 = vmatprep.subr.bf16.mxu0 0
    %5341 = vmatpush1.bf16.msra.mxu0 0
    %5342 = vmatprep.subr.bf16.mxu0 0
    %5343 = vmatpush1.bf16.msra.mxu0 0
    %5344 = vmatprep.subr.bf16.mxu0 0
    %5345 = vmatpush1.bf16.msra.mxu0 0
    %5346 = vmatprep.subr.bf16.mxu0 0
    %5347 = vmatpush1.bf16.msra.mxu0 0
    %5348 = vmatprep.subr.bf16.mxu0 0
    %5349 = vmatpush1.bf16.msra.mxu0 0
    %5350 = vmatprep.mubr.bf16.mxu0 0
    %5351 = vmatmul.mubr.bf16.gmra.mrb[0].mxu0 %v5314
    %v5352 = vpop.f32.mrb[0].mxu0
    %v5353 = vadd.f32 0.0, %v5352
    %v5354 = vpop.f32.mrb[0].mxu0
    %v5355 = vpop.f32.mrb[0].mxu0
    %v5356 = vpop.f32.mrb[0].mxu0
    %5357 = vdwg.mxu0
    %v5358 = vpack.c.bf16 %v5308, %v5308
    %v5359 = vpack.c.bf16 %v5353, %v5353
    %s5360 = scalar_lea.vmem %s8, 256
    %v5361 = vld [vmem:[%s5360] sm:$0xf]
    %v5362 = vld [vmem:[%s5360 + $0x4] sm:$0xf]
    %v5363 = vld [vmem:[%s5360 + $0x8] sm:$0xf]
    %v5364 = vld [vmem:[%s5360 + $0xc] sm:$0xf]
    %v5365 = vld [vmem:[%s5360 + $0x10] sm:$0xf]
    %v5366 = vld [vmem:[%s5360 + $0x14] sm:$0xf]
    %v5367 = vld [vmem:[%s5360 + $0x18] sm:$0xf]
    %v5368 = vld [vmem:[%s5360 + $0x1c] sm:$0xf]
    %s5369 = scalar_lea.vmem %s6, 288
    %v5370 = vld [vmem:[%s5369] sm:$0xf]
    %v5371 = vld [vmem:[%s5369 + $0x4] sm:$0xf]
    %v5372 = vld [vmem:[%s5369 + $0x8] sm:$0xf]
    %v5373 = vld [vmem:[%s5369 + $0xc] sm:$0xf]
    %v5374 = vld [vmem:[%s5369 + $0x10] sm:$0xf]
    %v5375 = vld [vmem:[%s5369 + $0x14] sm:$0xf]
    %v5376 = vld [vmem:[%s5369 + $0x18] sm:$0xf]
    %v5377 = vld [vmem:[%s5369 + $0x1c] sm:$0xf]
    %s5378 = scalar_lea.vmem %s11, 9
    %v5379 = vld [vmem:[%s5378] sm:$0x1]
    %v5381 = vlaneseq
    %v5382 = vshrl.u32 %v5381, 7
    %v5383 = vsub.s32 0, %v5382
    %v5384 = vrot.slane %v5379, %v5383
    %v5394 = vunpack.c.l.b16 %v5370
    %v5395 = vunpack.c.l.b16 %v5371
    %v5396 = vunpack.c.l.b16 %v5372
    %v5397 = vunpack.c.l.b16 %v5373
    %v5398 = vunpack.c.l.b16 %v5374
    %v5399 = vunpack.c.l.b16 %v5375
    %v5400 = vunpack.c.l.b16 %v5376
    %v5401 = vunpack.c.l.b16 %v5377
    %v5402 = vpack.c.b16 %v5395, %v5394
    %v5403 = vpack.c.b16 %v5397, %v5396
    %v5404 = vpack.c.b16 %v5399, %v5398
    %v5405 = vpack.c.b16 %v5401, %v5400
    %5410 = vmatprep.subr.bf16.mxu0 0
    %5411 = vmatpush1.bf16.msra.mxu0 %v5402
    %5412 = vmatprep.subr.bf16.mxu0 0
    %5413 = vmatpush1.bf16.msra.mxu0 %v5403
    %5414 = vmatprep.subr.bf16.mxu0 0
    %5415 = vmatpush1.bf16.msra.mxu0 %v5404
    %5416 = vmatprep.subr.bf16.mxu0 0
    %5417 = vmatpush1.bf16.msra.mxu0 %v5405
    %5418 = vmatprep.subr.bf16.mxu0 0
    %5419 = vmatpush1.bf16.msra.mxu0 0
    %5420 = vmatprep.subr.bf16.mxu0 0
    %5421 = vmatpush1.bf16.msra.mxu0 0
    %5422 = vmatprep.subr.bf16.mxu0 0
    %5423 = vmatpush1.bf16.msra.mxu0 0
    %5424 = vmatprep.subr.bf16.mxu0 0
    %5425 = vmatpush1.bf16.msra.mxu0 0
    %5426 = vmatprep.subr.bf16.mxu0 0
    %5427 = vmatpush1.bf16.msra.mxu0 0
    %5428 = vmatprep.subr.bf16.mxu0 0
    %5429 = vmatpush1.bf16.msra.mxu0 0
    %5430 = vmatprep.subr.bf16.mxu0 0
    %5431 = vmatpush1.bf16.msra.mxu0 0
    %5432 = vmatprep.subr.bf16.mxu0 0
    %5433 = vmatpush1.bf16.msra.mxu0 0
    %5434 = vmatprep.subr.bf16.mxu0 0
    %5435 = vmatpush1.bf16.msra.mxu0 0
    %5436 = vmatprep.subr.bf16.mxu0 0
    %5437 = vmatpush1.bf16.msra.mxu0 0
    %5438 = vmatprep.subr.bf16.mxu0 0
    %5439 = vmatpush1.bf16.msra.mxu0 0
    %5440 = vmatprep.subr.bf16.mxu0 0
    %5441 = vmatpush1.bf16.msra.mxu0 0
    %5442 = vmatprep.mubr.bf16.mxu0 0
    %5443 = vmatmul.mubr.bf16.gmra.mrb[0].mxu0 %v5047
    %v5444 = vpop.f32.mrb[0].mxu0
    %v5445 = vadd.f32 %v5384, %v5444
    %v5446 = vpop.f32.mrb[0].mxu0
    %v5447 = vpop.f32.mrb[0].mxu0
    %v5448 = vadd.f32 %v5384, %v5447
    %v5449 = vpop.f32.mrb[0].mxu0
    %5450 = vdwg.mxu0
    %v5451 = vpack.c.bf16 %v5445, %v5445
    %v5452 = vpack.c.bf16 %v5448, %v5448
    %s5453 = scalar_lea.vmem %s7, 72
    %v5454 = vld [vmem:[%s5453] sm:$0xf]
    %v5455 = vld [vmem:[%s5453 + $0x4] sm:$0xf]
    %v5458 = vunpack.c.l.b16 %v5451
    %v5459 = vunpack.c.l.b16 %v5452
    %v5460 = vpack.c.b16 %v5459, %v5458
    %v5463 = vunpack.c.l.b16 %v5454
    %v5464 = vunpack.c.l.b16 %v5455
    %v5465 = vpack.c.b16 %v5464, %v5463
    %v5468 = vsel %vm94, %v5460, 0
    %5470 = vmatprep.subr.bf16.mxu0 0
    %5471 = vmatpush1.bf16.msra.mxu0 %v5465
    %5472 = vmatprep.subr.bf16.mxu0 0
    %5473 = vmatpush1.bf16.msra.mxu0 0
    %5474 = vmatprep.subr.bf16.mxu0 0
    %5475 = vmatpush1.bf16.msra.mxu0 0
    %5476 = vmatprep.subr.bf16.mxu0 0
    %5477 = vmatpush1.bf16.msra.mxu0 0
    %5478 = vmatprep.subr.bf16.mxu0 0
    %5479 = vmatpush1.bf16.msra.mxu0 0
    %5480 = vmatprep.subr.bf16.mxu0 0
    %5481 = vmatpush1.bf16.msra.mxu0 0
    %5482 = vmatprep.subr.bf16.mxu0 0
    %5483 = vmatpush1.bf16.msra.mxu0 0
    %5484 = vmatprep.subr.bf16.mxu0 0
    %5485 = vmatpush1.bf16.msra.mxu0 0
    %5486 = vmatprep.subr.bf16.mxu0 0
    %5487 = vmatpush1.bf16.msra.mxu0 0
    %5488 = vmatprep.subr.bf16.mxu0 0
    %5489 = vmatpush1.bf16.msra.mxu0 0
    %5490 = vmatprep.subr.bf16.mxu0 0
    %5491 = vmatpush1.bf16.msra.mxu0 0
    %5492 = vmatprep.subr.bf16.mxu0 0
    %5493 = vmatpush1.bf16.msra.mxu0 0
    %5494 = vmatprep.subr.bf16.mxu0 0
    %5495 = vmatpush1.bf16.msra.mxu0 0
    %5496 = vmatprep.subr.bf16.mxu0 0
    %5497 = vmatpush1.bf16.msra.mxu0 0
    %5498 = vmatprep.subr.bf16.mxu0 0
    %5499 = vmatpush1.bf16.msra.mxu0 0
    %5500 = vmatprep.subr.bf16.mxu0 0
    %5501 = vmatpush1.bf16.msra.mxu0 0
    %5502 = vmatprep.mubr.bf16.mxu0 0
    %5503 = vmatmul.mubr.bf16.gmra.mrb[0].mxu0 %v5468
    %v5504 = vpop.f32.mrb[0].mxu0
    %v5505 = vadd.f32 0.0, %v5504
    %v5506 = vpop.f32.mrb[0].mxu0
    %v5507 = vpop.f32.mrb[0].mxu0
    %v5508 = vadd.f32 0.0, %v5507
    %v5509 = vpop.f32.mrb[0].mxu0
    %5510 = vdwg.mxu0
    %v5511 = vpack.c.bf16 %v5505, %v5505
    %v5512 = vpack.c.bf16 %v5508, %v5508
    %v5514 = vsel %vm46, %v5511, 0
    %5516 = vmatprep.subr.bf16.mxu0 0
    %5517 = vmatpush1.bf16.xpose.msra.mxu0 %v5156
    %5518 = vmatprep.subr.bf16.mxu0 0
    %5519 = vmatpush1.bf16.xpose.msra.mxu0 0
    %5520 = vmatprep.subr.bf16.mxu0 0
    %5521 = vmatpush1.bf16.xpose.msra.mxu0 0
    %5522 = vmatprep.subr.bf16.mxu0 0
    %5523 = vmatpush1.bf16.xpose.msra.mxu0 0
    %5524 = vmatprep.subr.bf16.mxu0 0
    %5525 = vmatpush1.bf16.xpose.msra.mxu0 0
    %5526 = vmatprep.subr.bf16.mxu0 0
    %5527 = vmatpush1.bf16.xpose.msra.mxu0 0
    %5528 = vmatprep.subr.bf16.mxu0 0
    %5529 = vmatpush1.bf16.xpose.msra.mxu0 0
    %5530 = vmatprep.subr.bf16.mxu0 0
    %5531 = vmatpush1.bf16.xpose.msra.mxu0 0
    %5532 = vmatprep.subr.bf16.mxu0 0
    %5533 = vmatpush1.bf16.xpose.msra.mxu0 0
    %5534 = vmatprep.subr.bf16.mxu0 0
    %5535 = vmatpush1.bf16.xpose.msra.mxu0 0
    %5536 = vmatprep.subr.bf16.mxu0 0
    %5537 = vmatpush1.bf16.xpose.msra.mxu0 0
    %5538 = vmatprep.subr.bf16.mxu0 0
    %5539 = vmatpush1.bf16.xpose.msra.mxu0 0
    %5540 = vmatprep.subr.bf16.mxu0 0
    %5541 = vmatpush1.bf16.xpose.msra.mxu0 0
    %5542 = vmatprep.subr.bf16.mxu0 0
    %5543 = vmatpush1.bf16.xpose.msra.mxu0 0
    %5544 = vmatprep.subr.bf16.mxu0 0
    %5545 = vmatpush1.bf16.xpose.msra.mxu0 0
    %5546 = vmatprep.subr.bf16.mxu0 0
    %5547 = vmatpush1.bf16.xpose.msra.mxu0 0
    %5548 = vmatprep.mubr.bf16.mxu0 0
    %5549 = vmatmul.mubr.bf16.gmra.mrb[0].mxu0 %v5514
    %v5550 = vpop.f32.mrb[0].mxu0
    %v5551 = vadd.f32 0.0, %v5550
    %v5552 = vpop.f32.mrb[0].mxu0
    %v5553 = vpop.f32.mrb[0].mxu0
    %v5554 = vpop.f32.mrb[0].mxu0
    %5555 = vdwg.mxu0
    %v5557 = vsel %vm46, %v5512, 0
    %5559 = vmatprep.subr.bf16.mxu0 0
    %5560 = vmatpush1.bf16.xpose.msra.mxu0 %v5202
    %5561 = vmatprep.subr.bf16.mxu0 0
    %5562 = vmatpush1.bf16.xpose.msra.mxu0 0
    %5563 = vmatprep.subr.bf16.mxu0 0
    %5564 = vmatpush1.bf16.xpose.msra.mxu0 0
    %5565 = vmatprep.subr.bf16.mxu0 0
    %5566 = vmatpush1.bf16.xpose.msra.mxu0 0
    %5567 = vmatprep.subr.bf16.mxu0 0
    %5568 = vmatpush1.bf16.xpose.msra.mxu0 0
    %5569 = vmatprep.subr.bf16.mxu0 0
    %5570 = vmatpush1.bf16.xpose.msra.mxu0 0
    %5571 = vmatprep.subr.bf16.mxu0 0
    %5572 = vmatpush1.bf16.xpose.msra.mxu0 0
    %5573 = vmatprep.subr.bf16.mxu0 0
    %5574 = vmatpush1.bf16.xpose.msra.mxu0 0
    %5575 = vmatprep.subr.bf16.mxu0 0
    %5576 = vmatpush1.bf16.xpose.msra.mxu0 0
    %5577 = vmatprep.subr.bf16.mxu0 0
    %5578 = vmatpush1.bf16.xpose.msra.mxu0 0
    %5579 = vmatprep.subr.bf16.mxu0 0
    %5580 = vmatpush1.bf16.xpose.msra.mxu0 0
    %5581 = vmatprep.subr.bf16.mxu0 0
    %5582 = vmatpush1.bf16.xpose.msra.mxu0 0
    %5583 = vmatprep.subr.bf16.mxu0 0
    %5584 = vmatpush1.bf16.xpose.msra.mxu0 0
    %5585 = vmatprep.subr.bf16.mxu0 0
    %5586 = vmatpush1.bf16.xpose.msra.mxu0 0
    %5587 = vmatprep.subr.bf16.mxu0 0
    %5588 = vmatpush1.bf16.xpose.msra.mxu0 0
    %5589 = vmatprep.subr.bf16.mxu0 0
    %5590 = vmatpush1.bf16.xpose.msra.mxu0 0
    %5591 = vmatprep.mubr.bf16.mxu0 0
    %5592 = vmatmul.mubr.bf16.gmra.mrb[0].mxu0 %v5557
    %v5593 = vpop.f32.mrb[0].mxu0
    %v5594 = vadd.f32 0.0, %v5593
    %v5595 = vpop.f32.mrb[0].mxu0
    %v5596 = vpop.f32.mrb[0].mxu0
    %v5597 = vpop.f32.mrb[0].mxu0
    %5598 = vdwg.mxu0
    %v5599 = vsel %vm1409, %v5551, -inf
    %5600 = vmax.xlane.f32.xlu0 %v5599
    %v5601 = vpop.xlane.xlu0 %5600
    %v5602 = vsel %vm1409, %v5594, -inf
    %5603 = vmax.xlane.f32.xlu0 %v5602
    %v5604 = vpop.xlane.xlu0 %5603
    %v5605 = vsub.f32 %v5551, %v5601
    %v5606 = vsub.f32 %v5594, %v5604
    %v5607 = vmul.f32 %v5605, 1.442695
    %v5608 = vpow.pop %v5607
    %v5609 = vmul.f32 %v5606, 1.442695
    %v5610 = vpow.pop %v5609
    %v5611 = vsel %vm1409, %v5608, 0.0
    %5612 = vadd.xlane.f32.xlu0 %v5611
    %v5613 = vpop.xlane.xlu0 %5612
    %v5614 = vsel %vm1409, %v5610, 0.0
    %5615 = vadd.xlane.f32.xlu0 %v5614
    %v5616 = vpop.xlane.xlu0 %5615
    %v5617 = vrcp.pop %v5613
    %v5618 = vrcp.pop %v5616
    %v5619 = vmul.f32 %v5608, %v5617
    %v5620 = vmul.f32 %v5610, %v5618
    %v5621 = vpack.c.bf16 %v5619, %v5619
    %v5622 = vpack.c.bf16 %v5620, %v5620
    %v5624 = vsel %vm1409, %v5621, 0
    %5626 = vmatprep.subr.bf16.mxu0 0
    %5627 = vmatpush1.bf16.msra.mxu0 %v5271
    %5628 = vmatprep.subr.bf16.mxu0 0
    %5629 = vmatpush1.bf16.msra.mxu0 0
    %5630 = vmatprep.subr.bf16.mxu0 0
    %5631 = vmatpush1.bf16.msra.mxu0 0
    %5632 = vmatprep.subr.bf16.mxu0 0
    %5633 = vmatpush1.bf16.msra.mxu0 0
    %5634 = vmatprep.subr.bf16.mxu0 0
    %5635 = vmatpush1.bf16.msra.mxu0 0
    %5636 = vmatprep.subr.bf16.mxu0 0
    %5637 = vmatpush1.bf16.msra.mxu0 0
    %5638 = vmatprep.subr.bf16.mxu0 0
    %5639 = vmatpush1.bf16.msra.mxu0 0
    %5640 = vmatprep.subr.bf16.mxu0 0
    %5641 = vmatpush1.bf16.msra.mxu0 0
    %5642 = vmatprep.subr.bf16.mxu0 0
    %5643 = vmatpush1.bf16.msra.mxu0 0
    %5644 = vmatprep.subr.bf16.mxu0 0
    %5645 = vmatpush1.bf16.msra.mxu0 0
    %5646 = vmatprep.subr.bf16.mxu0 0
    %5647 = vmatpush1.bf16.msra.mxu0 0
    %5648 = vmatprep.subr.bf16.mxu0 0
    %5649 = vmatpush1.bf16.msra.mxu0 0
    %5650 = vmatprep.subr.bf16.mxu0 0
    %5651 = vmatpush1.bf16.msra.mxu0 0
    %5652 = vmatprep.subr.bf16.mxu0 0
    %5653 = vmatpush1.bf16.msra.mxu0 0
    %5654 = vmatprep.subr.bf16.mxu0 0
    %5655 = vmatpush1.bf16.msra.mxu0 0
    %5656 = vmatprep.subr.bf16.mxu0 0
    %5657 = vmatpush1.bf16.msra.mxu0 0
    %5658 = vmatprep.mubr.bf16.mxu0 0
    %5659 = vmatmul.mubr.bf16.gmra.mrb[0].mxu0 %v5624
    %v5660 = vpop.f32.mrb[0].mxu0
    %v5661 = vadd.f32 0.0, %v5660
    %v5662 = vpop.f32.mrb[0].mxu0
    %v5663 = vpop.f32.mrb[0].mxu0
    %v5664 = vpop.f32.mrb[0].mxu0
    %5665 = vdwg.mxu0
    %v5667 = vsel %vm1409, %v5622, 0
    %5669 = vmatprep.subr.bf16.mxu0 0
    %5670 = vmatpush1.bf16.msra.mxu0 %v5316
    %5671 = vmatprep.subr.bf16.mxu0 0
    %5672 = vmatpush1.bf16.msra.mxu0 0
    %5673 = vmatprep.subr.bf16.mxu0 0
    %5674 = vmatpush1.bf16.msra.mxu0 0
    %5675 = vmatprep.subr.bf16.mxu0 0
    %5676 = vmatpush1.bf16.msra.mxu0 0
    %5677 = vmatprep.subr.bf16.mxu0 0
    %5678 = vmatpush1.bf16.msra.mxu0 0
    %5679 = vmatprep.subr.bf16.mxu0 0
    %5680 = vmatpush1.bf16.msra.mxu0 0
    %5681 = vmatprep.subr.bf16.mxu0 0
    %5682 = vmatpush1.bf16.msra.mxu0 0
    %5683 = vmatprep.subr.bf16.mxu0 0
    %5684 = vmatpush1.bf16.msra.mxu0 0
    %5685 = vmatprep.subr.bf16.mxu0 0
    %5686 = vmatpush1.bf16.msra.mxu0 0
    %5687 = vmatprep.subr.bf16.mxu0 0
    %5688 = vmatpush1.bf16.msra.mxu0 0
    %5689 = vmatprep.subr.bf16.mxu0 0
    %5690 = vmatpush1.bf16.msra.mxu0 0
    %5691 = vmatprep.subr.bf16.mxu0 0
    %5692 = vmatpush1.bf16.msra.mxu0 0
    %5693 = vmatprep.subr.bf16.mxu0 0
    %5694 = vmatpush1.bf16.msra.mxu0 0
    %5695 = vmatprep.subr.bf16.mxu0 0
    %5696 = vmatpush1.bf16.msra.mxu0 0
    %5697 = vmatprep.subr.bf16.mxu0 0
    %5698 = vmatpush1.bf16.msra.mxu0 0
    %5699 = vmatprep.subr.bf16.mxu0 0
    %5700 = vmatpush1.bf16.msra.mxu0 0
    %5701 = vmatprep.mubr.bf16.mxu0 0
    %5702 = vmatmul.mubr.bf16.gmra.mrb[0].mxu0 %v5667
    %v5703 = vpop.f32.mrb[0].mxu0
    %v5704 = vadd.f32 0.0, %v5703
    %v5705 = vpop.f32.mrb[0].mxu0
    %v5706 = vpop.f32.mrb[0].mxu0
    %v5707 = vpop.f32.mrb[0].mxu0
    %5708 = vdwg.mxu0
    %v5709 = vpack.c.bf16 %v5661, %v5661
    %v5710 = vpack.c.bf16 %v5704, %v5704
    %s5711 = scalar_lea.vmem %s8, 288
    %v5712 = vld [vmem:[%s5711] sm:$0xf]
    %v5713 = vld [vmem:[%s5711 + $0x4] sm:$0xf]
    %v5714 = vld [vmem:[%s5711 + $0x8] sm:$0xf]
    %v5715 = vld [vmem:[%s5711 + $0xc] sm:$0xf]
    %v5716 = vld [vmem:[%s5711 + $0x10] sm:$0xf]
    %v5717 = vld [vmem:[%s5711 + $0x14] sm:$0xf]
    %v5718 = vld [vmem:[%s5711 + $0x18] sm:$0xf]
    %v5719 = vld [vmem:[%s5711 + $0x1c] sm:$0xf]
    %v5722 = vunpack.c.l.b16 %v5709
    %v5723 = vunpack.c.l.b16 %v5710
    %v5724 = vpack.c.b16 %v5723, %v5722
    %v5733 = vunpack.c.l.b16 %v5712
    %v5734 = vunpack.c.l.b16 %v5713
    %v5735 = vunpack.c.l.b16 %v5714
    %v5736 = vunpack.c.l.b16 %v5715
    %v5737 = vunpack.c.l.b16 %v5716
    %v5738 = vunpack.c.l.b16 %v5717
    %v5739 = vunpack.c.l.b16 %v5718
    %v5740 = vunpack.c.l.b16 %v5719
    %v5741 = vpack.c.b16 %v5734, %v5733
    %v5742 = vpack.c.b16 %v5736, %v5735
    %v5743 = vpack.c.b16 %v5738, %v5737
    %v5744 = vpack.c.b16 %v5740, %v5739
    %v5750 = vsel %vm46, %v5724, 0
    %5752 = vmatprep.subr.bf16.mxu0 0
    %5753 = vmatpush1.bf16.msra.mxu0 %v5741
    %5754 = vmatprep.subr.bf16.mxu0 0
    %5755 = vmatpush1.bf16.msra.mxu0 %v5742
    %5756 = vmatprep.subr.bf16.mxu0 0
    %5757 = vmatpush1.bf16.msra.mxu0 %v5743
    %5758 = vmatprep.subr.bf16.mxu0 0
    %5759 = vmatpush1.bf16.msra.mxu0 %v5744
    %5760 = vmatprep.subr.bf16.mxu0 0
    %5761 = vmatpush1.bf16.msra.mxu0 0
    %5762 = vmatprep.subr.bf16.mxu0 0
    %5763 = vmatpush1.bf16.msra.mxu0 0
    %5764 = vmatprep.subr.bf16.mxu0 0
    %5765 = vmatpush1.bf16.msra.mxu0 0
    %5766 = vmatprep.subr.bf16.mxu0 0
    %5767 = vmatpush1.bf16.msra.mxu0 0
    %5768 = vmatprep.subr.bf16.mxu0 0
    %5769 = vmatpush1.bf16.msra.mxu0 0
    %5770 = vmatprep.subr.bf16.mxu0 0
    %5771 = vmatpush1.bf16.msra.mxu0 0
    %5772 = vmatprep.subr.bf16.mxu0 0
    %5773 = vmatpush1.bf16.msra.mxu0 0
    %5774 = vmatprep.subr.bf16.mxu0 0
    %5775 = vmatpush1.bf16.msra.mxu0 0
    %5776 = vmatprep.subr.bf16.mxu0 0
    %5777 = vmatpush1.bf16.msra.mxu0 0
    %5778 = vmatprep.subr.bf16.mxu0 0
    %5779 = vmatpush1.bf16.msra.mxu0 0
    %5780 = vmatprep.subr.bf16.mxu0 0
    %5781 = vmatpush1.bf16.msra.mxu0 0
    %5782 = vmatprep.subr.bf16.mxu0 0
    %5783 = vmatpush1.bf16.msra.mxu0 0
    %5784 = vmatprep.mubr.bf16.mxu0 0
    %5785 = vmatmul.mubr.bf16.gmra.mrb[0].mxu0 %v5750
    %v5786 = vpop.f32.mrb[0].mxu0
    %v5787 = vadd.f32 0.0, %v5786
    %v5788 = vpop.f32.mrb[0].mxu0
    %v5789 = vpop.f32.mrb[0].mxu0
    %v5790 = vadd.f32 0.0, %v5789
    %v5791 = vpop.f32.mrb[0].mxu0
    %5792 = vdwg.mxu0
    %v5795 = vunpack.c.l.b16 %v5358
    %v5796 = vunpack.c.l.b16 %v5359
    %v5797 = vpack.c.b16 %v5796, %v5795
    %v5806 = vunpack.c.l.b16 %v5361
    %v5807 = vunpack.c.l.b16 %v5362
    %v5808 = vunpack.c.l.b16 %v5363
    %v5809 = vunpack.c.l.b16 %v5364
    %v5810 = vunpack.c.l.b16 %v5365
    %v5811 = vunpack.c.l.b16 %v5366
    %v5812 = vunpack.c.l.b16 %v5367
    %v5813 = vunpack.c.l.b16 %v5368
    %v5814 = vpack.c.b16 %v5807, %v5806
    %v5815 = vpack.c.b16 %v5809, %v5808
    %v5816 = vpack.c.b16 %v5811, %v5810
    %v5817 = vpack.c.b16 %v5813, %v5812
    %v5823 = vsel %vm46, %v5797, 0
    %5825 = vmatprep.subr.bf16.mxu0 0
    %5826 = vmatpush1.bf16.msra.mxu0 %v5814
    %5827 = vmatprep.subr.bf16.mxu0 0
    %5828 = vmatpush1.bf16.msra.mxu0 %v5815
    %5829 = vmatprep.subr.bf16.mxu0 0
    %5830 = vmatpush1.bf16.msra.mxu0 %v5816
    %5831 = vmatprep.subr.bf16.mxu0 0
    %5832 = vmatpush1.bf16.msra.mxu0 %v5817
    %5833 = vmatprep.subr.bf16.mxu0 0
    %5834 = vmatpush1.bf16.msra.mxu0 0
    %5835 = vmatprep.subr.bf16.mxu0 0
    %5836 = vmatpush1.bf16.msra.mxu0 0
    %5837 = vmatprep.subr.bf16.mxu0 0
    %5838 = vmatpush1.bf16.msra.mxu0 0
    %5839 = vmatprep.subr.bf16.mxu0 0
    %5840 = vmatpush1.bf16.msra.mxu0 0
    %5841 = vmatprep.subr.bf16.mxu0 0
    %5842 = vmatpush1.bf16.msra.mxu0 0
    %5843 = vmatprep.subr.bf16.mxu0 0
    %5844 = vmatpush1.bf16.msra.mxu0 0
    %5845 = vmatprep.subr.bf16.mxu0 0
    %5846 = vmatpush1.bf16.msra.mxu0 0
    %5847 = vmatprep.subr.bf16.mxu0 0
    %5848 = vmatpush1.bf16.msra.mxu0 0
    %5849 = vmatprep.subr.bf16.mxu0 0
    %5850 = vmatpush1.bf16.msra.mxu0 0
    %5851 = vmatprep.subr.bf16.mxu0 0
    %5852 = vmatpush1.bf16.msra.mxu0 0
    %5853 = vmatprep.subr.bf16.mxu0 0
    %5854 = vmatpush1.bf16.msra.mxu0 0
    %5855 = vmatprep.subr.bf16.mxu0 0
    %5856 = vmatpush1.bf16.msra.mxu0 0
    %5857 = vmatprep.mubr.bf16.mxu0 0
    %5858 = vmatmul.mubr.bf16.gmra.mrb[0].mxu0 %v5823
    %v5859 = vpop.f32.mrb[0].mxu0
    %v5860 = vadd.f32 %v5787, %v5859
    %v5861 = vpop.f32.mrb[0].mxu0
    %v5862 = vpop.f32.mrb[0].mxu0
    %v5863 = vadd.f32 %v5790, %v5862
    %v5864 = vpop.f32.mrb[0].mxu0
    %5865 = vdwg.mxu0
    %s5866 = scalar_lea.vmem %s6, 320
    %v5867 = vld [vmem:[%s5866] sm:$0xf]
    %v5868 = vld [vmem:[%s5866 + $0x4] sm:$0xf]
    %v5869 = vld [vmem:[%s5866 + $0x8] sm:$0xf]
    %v5870 = vld [vmem:[%s5866 + $0xc] sm:$0xf]
    %v5871 = vld [vmem:[%s5866 + $0x10] sm:$0xf]
    %v5872 = vld [vmem:[%s5866 + $0x14] sm:$0xf]
    %v5873 = vld [vmem:[%s5866 + $0x18] sm:$0xf]
    %v5874 = vld [vmem:[%s5866 + $0x1c] sm:$0xf]
    %s5875 = scalar_lea.vmem %s11, 10
    %v5876 = vld [vmem:[%s5875] sm:$0x1]
    %v5878 = vlaneseq
    %v5879 = vshrl.u32 %v5878, 7
    %v5880 = vsub.s32 0, %v5879
    %v5881 = vrot.slane %v5876, %v5880
    %v5891 = vunpack.c.l.b16 %v5867
    %v5892 = vunpack.c.l.b16 %v5868
    %v5893 = vunpack.c.l.b16 %v5869
    %v5894 = vunpack.c.l.b16 %v5870
    %v5895 = vunpack.c.l.b16 %v5871
    %v5896 = vunpack.c.l.b16 %v5872
    %v5897 = vunpack.c.l.b16 %v5873
    %v5898 = vunpack.c.l.b16 %v5874
    %v5899 = vpack.c.b16 %v5892, %v5891
    %v5900 = vpack.c.b16 %v5894, %v5893
    %v5901 = vpack.c.b16 %v5896, %v5895
    %v5902 = vpack.c.b16 %v5898, %v5897
    %5907 = vmatprep.subr.bf16.mxu0 0
    %5908 = vmatpush1.bf16.msra.mxu0 %v5899
    %5909 = vmatprep.subr.bf16.mxu0 0
    %5910 = vmatpush1.bf16.msra.mxu0 %v5900
    %5911 = vmatprep.subr.bf16.mxu0 0
    %5912 = vmatpush1.bf16.msra.mxu0 %v5901
    %5913 = vmatprep.subr.bf16.mxu0 0
    %5914 = vmatpush1.bf16.msra.mxu0 %v5902
    %5915 = vmatprep.subr.bf16.mxu0 0
    %5916 = vmatpush1.bf16.msra.mxu0 0
    %5917 = vmatprep.subr.bf16.mxu0 0
    %5918 = vmatpush1.bf16.msra.mxu0 0
    %5919 = vmatprep.subr.bf16.mxu0 0
    %5920 = vmatpush1.bf16.msra.mxu0 0
    %5921 = vmatprep.subr.bf16.mxu0 0
    %5922 = vmatpush1.bf16.msra.mxu0 0
    %5923 = vmatprep.subr.bf16.mxu0 0
    %5924 = vmatpush1.bf16.msra.mxu0 0
    %5925 = vmatprep.subr.bf16.mxu0 0
    %5926 = vmatpush1.bf16.msra.mxu0 0
    %5927 = vmatprep.subr.bf16.mxu0 0
    %5928 = vmatpush1.bf16.msra.mxu0 0
    %5929 = vmatprep.subr.bf16.mxu0 0
    %5930 = vmatpush1.bf16.msra.mxu0 0
    %5931 = vmatprep.subr.bf16.mxu0 0
    %5932 = vmatpush1.bf16.msra.mxu0 0
    %5933 = vmatprep.subr.bf16.mxu0 0
    %5934 = vmatpush1.bf16.msra.mxu0 0
    %5935 = vmatprep.subr.bf16.mxu0 0
    %5936 = vmatpush1.bf16.msra.mxu0 0
    %5937 = vmatprep.subr.bf16.mxu0 0
    %5938 = vmatpush1.bf16.msra.mxu0 0
    %5939 = vmatprep.mubr.bf16.mxu0 0
    %5940 = vmatmul.mubr.bf16.gmra.mrb[0].mxu0 %v5047
    %v5941 = vpop.f32.mrb[0].mxu0
    %v5942 = vadd.f32 %v5881, %v5941
    %v5943 = vpop.f32.mrb[0].mxu0
    %v5944 = vpop.f32.mrb[0].mxu0
    %v5945 = vadd.f32 %v5881, %v5944
    %v5946 = vpop.f32.mrb[0].mxu0
    %5947 = vdwg.mxu0
    %v5948 = vpack.c.bf16 %v5942, %v5942
    %v5949 = vpack.c.bf16 %v5945, %v5945
    %s5950 = scalar_lea.vmem %s7, 80
    %v5951 = vld [vmem:[%s5950] sm:$0xf]
    %v5952 = vld [vmem:[%s5950 + $0x4] sm:$0xf]
    %v5955 = vunpack.c.l.b16 %v5948
    %v5956 = vunpack.c.l.b16 %v5949
    %v5957 = vpack.c.b16 %v5956, %v5955
    %v5960 = vunpack.c.l.b16 %v5951
    %v5961 = vunpack.c.l.b16 %v5952
    %v5962 = vpack.c.b16 %v5961, %v5960
    %v5965 = vsel %vm94, %v5957, 0
    %5967 = vmatprep.subr.bf16.mxu0 0
    %5968 = vmatpush1.bf16.msra.mxu0 %v5962
    %5969 = vmatprep.subr.bf16.mxu0 0
    %5970 = vmatpush1.bf16.msra.mxu0 0
    %5971 = vmatprep.subr.bf16.mxu0 0
    %5972 = vmatpush1.bf16.msra.mxu0 0
    %5973 = vmatprep.subr.bf16.mxu0 0
    %5974 = vmatpush1.bf16.msra.mxu0 0
    %5975 = vmatprep.subr.bf16.mxu0 0
    %5976 = vmatpush1.bf16.msra.mxu0 0
    %5977 = vmatprep.subr.bf16.mxu0 0
    %5978 = vmatpush1.bf16.msra.mxu0 0
    %5979 = vmatprep.subr.bf16.mxu0 0
    %5980 = vmatpush1.bf16.msra.mxu0 0
    %5981 = vmatprep.subr.bf16.mxu0 0
    %5982 = vmatpush1.bf16.msra.mxu0 0
    %5983 = vmatprep.subr.bf16.mxu0 0
    %5984 = vmatpush1.bf16.msra.mxu0 0
    %5985 = vmatprep.subr.bf16.mxu0 0
    %5986 = vmatpush1.bf16.msra.mxu0 0
    %5987 = vmatprep.subr.bf16.mxu0 0
    %5988 = vmatpush1.bf16.msra.mxu0 0
    %5989 = vmatprep.subr.bf16.mxu0 0
    %5990 = vmatpush1.bf16.msra.mxu0 0
    %5991 = vmatprep.subr.bf16.mxu0 0
    %5992 = vmatpush1.bf16.msra.mxu0 0
    %5993 = vmatprep.subr.bf16.mxu0 0
    %5994 = vmatpush1.bf16.msra.mxu0 0
    %5995 = vmatprep.subr.bf16.mxu0 0
    %5996 = vmatpush1.bf16.msra.mxu0 0
    %5997 = vmatprep.subr.bf16.mxu0 0
    %5998 = vmatpush1.bf16.msra.mxu0 0
    %5999 = vmatprep.mubr.bf16.mxu0 0
    %6000 = vmatmul.mubr.bf16.gmra.mrb[0].mxu0 %v5965
    %v6001 = vpop.f32.mrb[0].mxu0
    %v6002 = vadd.f32 0.0, %v6001
    %v6003 = vpop.f32.mrb[0].mxu0
    %v6004 = vpop.f32.mrb[0].mxu0
    %v6005 = vadd.f32 0.0, %v6004
    %v6006 = vpop.f32.mrb[0].mxu0
    %6007 = vdwg.mxu0
    %v6008 = vpack.c.bf16 %v6002, %v6002
    %v6009 = vpack.c.bf16 %v6005, %v6005
    %v6011 = vsel %vm46, %v6008, 0
    %6013 = vmatprep.subr.bf16.mxu0 0
    %6014 = vmatpush1.bf16.xpose.msra.mxu0 %v5156
    %6015 = vmatprep.subr.bf16.mxu0 0
    %6016 = vmatpush1.bf16.xpose.msra.mxu0 0
    %6017 = vmatprep.subr.bf16.mxu0 0
    %6018 = vmatpush1.bf16.xpose.msra.mxu0 0
    %6019 = vmatprep.subr.bf16.mxu0 0
    %6020 = vmatpush1.bf16.xpose.msra.mxu0 0
    %6021 = vmatprep.subr.bf16.mxu0 0
    %6022 = vmatpush1.bf16.xpose.msra.mxu0 0
    %6023 = vmatprep.subr.bf16.mxu0 0
    %6024 = vmatpush1.bf16.xpose.msra.mxu0 0
    %6025 = vmatprep.subr.bf16.mxu0 0
    %6026 = vmatpush1.bf16.xpose.msra.mxu0 0
    %6027 = vmatprep.subr.bf16.mxu0 0
    %6028 = vmatpush1.bf16.xpose.msra.mxu0 0
    %6029 = vmatprep.subr.bf16.mxu0 0
    %6030 = vmatpush1.bf16.xpose.msra.mxu0 0
    %6031 = vmatprep.subr.bf16.mxu0 0
    %6032 = vmatpush1.bf16.xpose.msra.mxu0 0
    %6033 = vmatprep.subr.bf16.mxu0 0
    %6034 = vmatpush1.bf16.xpose.msra.mxu0 0
    %6035 = vmatprep.subr.bf16.mxu0 0
    %6036 = vmatpush1.bf16.xpose.msra.mxu0 0
    %6037 = vmatprep.subr.bf16.mxu0 0
    %6038 = vmatpush1.bf16.xpose.msra.mxu0 0
    %6039 = vmatprep.subr.bf16.mxu0 0
    %6040 = vmatpush1.bf16.xpose.msra.mxu0 0
    %6041 = vmatprep.subr.bf16.mxu0 0
    %6042 = vmatpush1.bf16.xpose.msra.mxu0 0
    %6043 = vmatprep.subr.bf16.mxu0 0
    %6044 = vmatpush1.bf16.xpose.msra.mxu0 0
    %6045 = vmatprep.mubr.bf16.mxu0 0
    %6046 = vmatmul.mubr.bf16.gmra.mrb[0].mxu0 %v6011
    %v6047 = vpop.f32.mrb[0].mxu0
    %v6048 = vadd.f32 0.0, %v6047
    %v6049 = vpop.f32.mrb[0].mxu0
    %v6050 = vpop.f32.mrb[0].mxu0
    %v6051 = vpop.f32.mrb[0].mxu0
    %6052 = vdwg.mxu0
    %v6054 = vsel %vm46, %v6009, 0
    %6056 = vmatprep.subr.bf16.mxu0 0
    %6057 = vmatpush1.bf16.xpose.msra.mxu0 %v5202
    %6058 = vmatprep.subr.bf16.mxu0 0
    %6059 = vmatpush1.bf16.xpose.msra.mxu0 0
    %6060 = vmatprep.subr.bf16.mxu0 0
    %6061 = vmatpush1.bf16.xpose.msra.mxu0 0
    %6062 = vmatprep.subr.bf16.mxu0 0
    %6063 = vmatpush1.bf16.xpose.msra.mxu0 0
    %6064 = vmatprep.subr.bf16.mxu0 0
    %6065 = vmatpush1.bf16.xpose.msra.mxu0 0
    %6066 = vmatprep.subr.bf16.mxu0 0
    %6067 = vmatpush1.bf16.xpose.msra.mxu0 0
    %6068 = vmatprep.subr.bf16.mxu0 0
    %6069 = vmatpush1.bf16.xpose.msra.mxu0 0
    %6070 = vmatprep.subr.bf16.mxu0 0
    %6071 = vmatpush1.bf16.xpose.msra.mxu0 0
    %6072 = vmatprep.subr.bf16.mxu0 0
    %6073 = vmatpush1.bf16.xpose.msra.mxu0 0
    %6074 = vmatprep.subr.bf16.mxu0 0
    %6075 = vmatpush1.bf16.xpose.msra.mxu0 0
    %6076 = vmatprep.subr.bf16.mxu0 0
    %6077 = vmatpush1.bf16.xpose.msra.mxu0 0
    %6078 = vmatprep.subr.bf16.mxu0 0
    %6079 = vmatpush1.bf16.xpose.msra.mxu0 0
    %6080 = vmatprep.subr.bf16.mxu0 0
    %6081 = vmatpush1.bf16.xpose.msra.mxu0 0
    %6082 = vmatprep.subr.bf16.mxu0 0
    %6083 = vmatpush1.bf16.xpose.msra.mxu0 0
    %6084 = vmatprep.subr.bf16.mxu0 0
    %6085 = vmatpush1.bf16.xpose.msra.mxu0 0
    %6086 = vmatprep.subr.bf16.mxu0 0
    %6087 = vmatpush1.bf16.xpose.msra.mxu0 0
    %6088 = vmatprep.mubr.bf16.mxu0 0
    %6089 = vmatmul.mubr.bf16.gmra.mrb[0].mxu0 %v6054
    %v6090 = vpop.f32.mrb[0].mxu0
    %v6091 = vadd.f32 0.0, %v6090
    %v6092 = vpop.f32.mrb[0].mxu0
    %v6093 = vpop.f32.mrb[0].mxu0
    %v6094 = vpop.f32.mrb[0].mxu0
    %6095 = vdwg.mxu0
    %v6096 = vsel %vm1409, %v6048, -inf
    %6097 = vmax.xlane.f32.xlu0 %v6096
    %v6098 = vpop.xlane.xlu0 %6097
    %v6099 = vsel %vm1409, %v6091, -inf
    %6100 = vmax.xlane.f32.xlu0 %v6099
    %v6101 = vpop.xlane.xlu0 %6100
    %v6102 = vsub.f32 %v6048, %v6098
    %v6103 = vsub.f32 %v6091, %v6101
    %v6104 = vmul.f32 %v6102, 1.442695
    %v6105 = vpow.pop %v6104
    %v6106 = vmul.f32 %v6103, 1.442695
    %v6107 = vpow.pop %v6106
    %v6108 = vsel %vm1409, %v6105, 0.0
    %6109 = vadd.xlane.f32.xlu0 %v6108
    %v6110 = vpop.xlane.xlu0 %6109
    %v6111 = vsel %vm1409, %v6107, 0.0
    %6112 = vadd.xlane.f32.xlu0 %v6111
    %v6113 = vpop.xlane.xlu0 %6112
    %v6114 = vrcp.pop %v6110
    %v6115 = vrcp.pop %v6113
    %v6116 = vmul.f32 %v6105, %v6114
    %v6117 = vmul.f32 %v6107, %v6115
    %v6118 = vpack.c.bf16 %v6116, %v6116
    %v6119 = vpack.c.bf16 %v6117, %v6117
    %v6121 = vsel %vm1409, %v6118, 0
    %6123 = vmatprep.subr.bf16.mxu0 0
    %6124 = vmatpush1.bf16.msra.mxu0 %v5271
    %6125 = vmatprep.subr.bf16.mxu0 0
    %6126 = vmatpush1.bf16.msra.mxu0 0
    %6127 = vmatprep.subr.bf16.mxu0 0
    %6128 = vmatpush1.bf16.msra.mxu0 0
    %6129 = vmatprep.subr.bf16.mxu0 0
    %6130 = vmatpush1.bf16.msra.mxu0 0
    %6131 = vmatprep.subr.bf16.mxu0 0
    %6132 = vmatpush1.bf16.msra.mxu0 0
    %6133 = vmatprep.subr.bf16.mxu0 0
    %6134 = vmatpush1.bf16.msra.mxu0 0
    %6135 = vmatprep.subr.bf16.mxu0 0
    %6136 = vmatpush1.bf16.msra.mxu0 0
    %6137 = vmatprep.subr.bf16.mxu0 0
    %6138 = vmatpush1.bf16.msra.mxu0 0
    %6139 = vmatprep.subr.bf16.mxu0 0
    %6140 = vmatpush1.bf16.msra.mxu0 0
    %6141 = vmatprep.subr.bf16.mxu0 0
    %6142 = vmatpush1.bf16.msra.mxu0 0
    %6143 = vmatprep.subr.bf16.mxu0 0
    %6144 = vmatpush1.bf16.msra.mxu0 0
    %6145 = vmatprep.subr.bf16.mxu0 0
    %6146 = vmatpush1.bf16.msra.mxu0 0
    %6147 = vmatprep.subr.bf16.mxu0 0
    %6148 = vmatpush1.bf16.msra.mxu0 0
    %6149 = vmatprep.subr.bf16.mxu0 0
    %6150 = vmatpush1.bf16.msra.mxu0 0
    %6151 = vmatprep.subr.bf16.mxu0 0
    %6152 = vmatpush1.bf16.msra.mxu0 0
    %6153 = vmatprep.subr.bf16.mxu0 0
    %6154 = vmatpush1.bf16.msra.mxu0 0
    %6155 = vmatprep.mubr.bf16.mxu0 0
    %6156 = vmatmul.mubr.bf16.gmra.mrb[0].mxu0 %v6121
    %v6157 = vpop.f32.mrb[0].mxu0
    %v6158 = vadd.f32 0.0, %v6157
    %v6159 = vpop.f32.mrb[0].mxu0
    %v6160 = vpop.f32.mrb[0].mxu0
    %v6161 = vpop.f32.mrb[0].mxu0
    %6162 = vdwg.mxu0
    %v6164 = vsel %vm1409, %v6119, 0
    %6166 = vmatprep.subr.bf16.mxu0 0
    %6167 = vmatpush1.bf16.msra.mxu0 %v5316
    %6168 = vmatprep.subr.bf16.mxu0 0
    %6169 = vmatpush1.bf16.msra.mxu0 0
    %6170 = vmatprep.subr.bf16.mxu0 0
    %6171 = vmatpush1.bf16.msra.mxu0 0
    %6172 = vmatprep.subr.bf16.mxu0 0
    %6173 = vmatpush1.bf16.msra.mxu0 0
    %6174 = vmatprep.subr.bf16.mxu0 0
    %6175 = vmatpush1.bf16.msra.mxu0 0
    %6176 = vmatprep.subr.bf16.mxu0 0
    %6177 = vmatpush1.bf16.msra.mxu0 0
    %6178 = vmatprep.subr.bf16.mxu0 0
    %6179 = vmatpush1.bf16.msra.mxu0 0
    %6180 = vmatprep.subr.bf16.mxu0 0
    %6181 = vmatpush1.bf16.msra.mxu0 0
    %6182 = vmatprep.subr.bf16.mxu0 0
    %6183 = vmatpush1.bf16.msra.mxu0 0
    %6184 = vmatprep.subr.bf16.mxu0 0
    %6185 = vmatpush1.bf16.msra.mxu0 0
    %6186 = vmatprep.subr.bf16.mxu0 0
    %6187 = vmatpush1.bf16.msra.mxu0 0
    %6188 = vmatprep.subr.bf16.mxu0 0
    %6189 = vmatpush1.bf16.msra.mxu0 0
    %6190 = vmatprep.subr.bf16.mxu0 0
    %6191 = vmatpush1.bf16.msra.mxu0 0
    %6192 = vmatprep.subr.bf16.mxu0 0
    %6193 = vmatpush1.bf16.msra.mxu0 0
    %6194 = vmatprep.subr.bf16.mxu0 0
    %6195 = vmatpush1.bf16.msra.mxu0 0
    %6196 = vmatprep.subr.bf16.mxu0 0
    %6197 = vmatpush1.bf16.msra.mxu0 0
    %6198 = vmatprep.mubr.bf16.mxu0 0
    %6199 = vmatmul.mubr.bf16.gmra.mrb[0].mxu0 %v6164
    %v6200 = vpop.f32.mrb[0].mxu0
    %v6201 = vadd.f32 0.0, %v6200
    %v6202 = vpop.f32.mrb[0].mxu0
    %v6203 = vpop.f32.mrb[0].mxu0
    %v6204 = vpop.f32.mrb[0].mxu0
    %6205 = vdwg.mxu0
    %v6206 = vpack.c.bf16 %v6158, %v6158
    %v6207 = vpack.c.bf16 %v6201, %v6201
    %s6208 = scalar_lea.vmem %s8, 320
    %v6209 = vld [vmem:[%s6208] sm:$0xf]
    %v6210 = vld [vmem:[%s6208 + $0x4] sm:$0xf]
    %v6211 = vld [vmem:[%s6208 + $0x8] sm:$0xf]
    %v6212 = vld [vmem:[%s6208 + $0xc] sm:$0xf]
    %v6213 = vld [vmem:[%s6208 + $0x10] sm:$0xf]
    %v6214 = vld [vmem:[%s6208 + $0x14] sm:$0xf]
    %v6215 = vld [vmem:[%s6208 + $0x18] sm:$0xf]
    %v6216 = vld [vmem:[%s6208 + $0x1c] sm:$0xf]
    %v6219 = vunpack.c.l.b16 %v6206
    %v6220 = vunpack.c.l.b16 %v6207
    %v6221 = vpack.c.b16 %v6220, %v6219
    %v6230 = vunpack.c.l.b16 %v6209
    %v6231 = vunpack.c.l.b16 %v6210
    %v6232 = vunpack.c.l.b16 %v6211
    %v6233 = vunpack.c.l.b16 %v6212
    %v6234 = vunpack.c.l.b16 %v6213
    %v6235 = vunpack.c.l.b16 %v6214
    %v6236 = vunpack.c.l.b16 %v6215
    %v6237 = vunpack.c.l.b16 %v6216
    %v6238 = vpack.c.b16 %v6231, %v6230
    %v6239 = vpack.c.b16 %v6233, %v6232
    %v6240 = vpack.c.b16 %v6235, %v6234
    %v6241 = vpack.c.b16 %v6237, %v6236
    %v6247 = vsel %vm46, %v6221, 0
    %6249 = vmatprep.subr.bf16.mxu0 0
    %6250 = vmatpush1.bf16.msra.mxu0 %v6238
    %6251 = vmatprep.subr.bf16.mxu0 0
    %6252 = vmatpush1.bf16.msra.mxu0 %v6239
    %6253 = vmatprep.subr.bf16.mxu0 0
    %6254 = vmatpush1.bf16.msra.mxu0 %v6240
    %6255 = vmatprep.subr.bf16.mxu0 0
    %6256 = vmatpush1.bf16.msra.mxu0 %v6241
    %6257 = vmatprep.subr.bf16.mxu0 0
    %6258 = vmatpush1.bf16.msra.mxu0 0
    %6259 = vmatprep.subr.bf16.mxu0 0
    %6260 = vmatpush1.bf16.msra.mxu0 0
    %6261 = vmatprep.subr.bf16.mxu0 0
    %6262 = vmatpush1.bf16.msra.mxu0 0
    %6263 = vmatprep.subr.bf16.mxu0 0
    %6264 = vmatpush1.bf16.msra.mxu0 0
    %6265 = vmatprep.subr.bf16.mxu0 0
    %6266 = vmatpush1.bf16.msra.mxu0 0
    %6267 = vmatprep.subr.bf16.mxu0 0
    %6268 = vmatpush1.bf16.msra.mxu0 0
    %6269 = vmatprep.subr.bf16.mxu0 0
    %6270 = vmatpush1.bf16.msra.mxu0 0
    %6271 = vmatprep.subr.bf16.mxu0 0
    %6272 = vmatpush1.bf16.msra.mxu0 0
    %6273 = vmatprep.subr.bf16.mxu0 0
    %6274 = vmatpush1.bf16.msra.mxu0 0
    %6275 = vmatprep.subr.bf16.mxu0 0
    %6276 = vmatpush1.bf16.msra.mxu0 0
    %6277 = vmatprep.subr.bf16.mxu0 0
    %6278 = vmatpush1.bf16.msra.mxu0 0
    %6279 = vmatprep.subr.bf16.mxu0 0
    %6280 = vmatpush1.bf16.msra.mxu0 0
    %6281 = vmatprep.mubr.bf16.mxu0 0
    %6282 = vmatmul.mubr.bf16.gmra.mrb[0].mxu0 %v6247
    %v6283 = vpop.f32.mrb[0].mxu0
    %v6284 = vadd.f32 0.0, %v6283
    %v6285 = vpop.f32.mrb[0].mxu0
    %v6286 = vpop.f32.mrb[0].mxu0
    %v6287 = vadd.f32 0.0, %v6286
    %v6288 = vpop.f32.mrb[0].mxu0
    %6289 = vdwg.mxu0
    %v6290 = vadd.f32 %v5860, %v6284
    %v6291 = vadd.f32 %v5863, %v6287
    %s6292 = scalar_lea.vmem %s6, 352
    %v6293 = vld [vmem:[%s6292] sm:$0xf]
    %v6294 = vld [vmem:[%s6292 + $0x4] sm:$0xf]
    %v6295 = vld [vmem:[%s6292 + $0x8] sm:$0xf]
    %v6296 = vld [vmem:[%s6292 + $0xc] sm:$0xf]
    %v6297 = vld [vmem:[%s6292 + $0x10] sm:$0xf]
    %v6298 = vld [vmem:[%s6292 + $0x14] sm:$0xf]
    %v6299 = vld [vmem:[%s6292 + $0x18] sm:$0xf]
    %v6300 = vld [vmem:[%s6292 + $0x1c] sm:$0xf]
    %s6301 = scalar_lea.vmem %s11, 11
    %v6302 = vld [vmem:[%s6301] sm:$0x1]
    %v6304 = vlaneseq
    %v6305 = vshrl.u32 %v6304, 7
    %v6306 = vsub.s32 0, %v6305
    %v6307 = vrot.slane %v6302, %v6306
    %v6317 = vunpack.c.l.b16 %v6293
    %v6318 = vunpack.c.l.b16 %v6294
    %v6319 = vunpack.c.l.b16 %v6295
    %v6320 = vunpack.c.l.b16 %v6296
    %v6321 = vunpack.c.l.b16 %v6297
    %v6322 = vunpack.c.l.b16 %v6298
    %v6323 = vunpack.c.l.b16 %v6299
    %v6324 = vunpack.c.l.b16 %v6300
    %v6325 = vpack.c.b16 %v6318, %v6317
    %v6326 = vpack.c.b16 %v6320, %v6319
    %v6327 = vpack.c.b16 %v6322, %v6321
    %v6328 = vpack.c.b16 %v6324, %v6323
    %6333 = vmatprep.subr.bf16.mxu0 0
    %6334 = vmatpush1.bf16.msra.mxu0 %v6325
    %6335 = vmatprep.subr.bf16.mxu0 0
    %6336 = vmatpush1.bf16.msra.mxu0 %v6326
    %6337 = vmatprep.subr.bf16.mxu0 0
    %6338 = vmatpush1.bf16.msra.mxu0 %v6327
    %6339 = vmatprep.subr.bf16.mxu0 0
    %6340 = vmatpush1.bf16.msra.mxu0 %v6328
    %6341 = vmatprep.subr.bf16.mxu0 0
    %6342 = vmatpush1.bf16.msra.mxu0 0
    %6343 = vmatprep.subr.bf16.mxu0 0
    %6344 = vmatpush1.bf16.msra.mxu0 0
    %6345 = vmatprep.subr.bf16.mxu0 0
    %6346 = vmatpush1.bf16.msra.mxu0 0
    %6347 = vmatprep.subr.bf16.mxu0 0
    %6348 = vmatpush1.bf16.msra.mxu0 0
    %6349 = vmatprep.subr.bf16.mxu0 0
    %6350 = vmatpush1.bf16.msra.mxu0 0
    %6351 = vmatprep.subr.bf16.mxu0 0
    %6352 = vmatpush1.bf16.msra.mxu0 0
    %6353 = vmatprep.subr.bf16.mxu0 0
    %6354 = vmatpush1.bf16.msra.mxu0 0
    %6355 = vmatprep.subr.bf16.mxu0 0
    %6356 = vmatpush1.bf16.msra.mxu0 0
    %6357 = vmatprep.subr.bf16.mxu0 0
    %6358 = vmatpush1.bf16.msra.mxu0 0
    %6359 = vmatprep.subr.bf16.mxu0 0
    %6360 = vmatpush1.bf16.msra.mxu0 0
    %6361 = vmatprep.subr.bf16.mxu0 0
    %6362 = vmatpush1.bf16.msra.mxu0 0
    %6363 = vmatprep.subr.bf16.mxu0 0
    %6364 = vmatpush1.bf16.msra.mxu0 0
    %6365 = vmatprep.mubr.bf16.mxu0 0
    %6366 = vmatmul.mubr.bf16.gmra.mrb[0].mxu0 %v5047
    %v6367 = vpop.f32.mrb[0].mxu0
    %v6368 = vadd.f32 %v6307, %v6367
    %v6369 = vpop.f32.mrb[0].mxu0
    %v6370 = vpop.f32.mrb[0].mxu0
    %v6371 = vadd.f32 %v6307, %v6370
    %v6372 = vpop.f32.mrb[0].mxu0
    %6373 = vdwg.mxu0
    %v6374 = vpack.c.bf16 %v6368, %v6368
    %v6375 = vpack.c.bf16 %v6371, %v6371
    %s6376 = scalar_lea.vmem %s7, 88
    %v6377 = vld [vmem:[%s6376] sm:$0xf]
    %v6378 = vld [vmem:[%s6376 + $0x4] sm:$0xf]
    %v6381 = vunpack.c.l.b16 %v6374
    %v6382 = vunpack.c.l.b16 %v6375
    %v6383 = vpack.c.b16 %v6382, %v6381
    %v6386 = vunpack.c.l.b16 %v6377
    %v6387 = vunpack.c.l.b16 %v6378
    %v6388 = vpack.c.b16 %v6387, %v6386
    %v6391 = vsel %vm94, %v6383, 0
    %6393 = vmatprep.subr.bf16.mxu0 0
    %6394 = vmatpush1.bf16.msra.mxu0 %v6388
    %6395 = vmatprep.subr.bf16.mxu0 0
    %6396 = vmatpush1.bf16.msra.mxu0 0
    %6397 = vmatprep.subr.bf16.mxu0 0
    %6398 = vmatpush1.bf16.msra.mxu0 0
    %6399 = vmatprep.subr.bf16.mxu0 0
    %6400 = vmatpush1.bf16.msra.mxu0 0
    %6401 = vmatprep.subr.bf16.mxu0 0
    %6402 = vmatpush1.bf16.msra.mxu0 0
    %6403 = vmatprep.subr.bf16.mxu0 0
    %6404 = vmatpush1.bf16.msra.mxu0 0
    %6405 = vmatprep.subr.bf16.mxu0 0
    %6406 = vmatpush1.bf16.msra.mxu0 0
    %6407 = vmatprep.subr.bf16.mxu0 0
    %6408 = vmatpush1.bf16.msra.mxu0 0
    %6409 = vmatprep.subr.bf16.mxu0 0
    %6410 = vmatpush1.bf16.msra.mxu0 0
    %6411 = vmatprep.subr.bf16.mxu0 0
    %6412 = vmatpush1.bf16.msra.mxu0 0
    %6413 = vmatprep.subr.bf16.mxu0 0
    %6414 = vmatpush1.bf16.msra.mxu0 0
    %6415 = vmatprep.subr.bf16.mxu0 0
    %6416 = vmatpush1.bf16.msra.mxu0 0
    %6417 = vmatprep.subr.bf16.mxu0 0
    %6418 = vmatpush1.bf16.msra.mxu0 0
    %6419 = vmatprep.subr.bf16.mxu0 0
    %6420 = vmatpush1.bf16.msra.mxu0 0
    %6421 = vmatprep.subr.bf16.mxu0 0
    %6422 = vmatpush1.bf16.msra.mxu0 0
    %6423 = vmatprep.subr.bf16.mxu0 0
    %6424 = vmatpush1.bf16.msra.mxu0 0
    %6425 = vmatprep.mubr.bf16.mxu0 0
    %6426 = vmatmul.mubr.bf16.gmra.mrb[0].mxu0 %v6391
    %v6427 = vpop.f32.mrb[0].mxu0
    %v6428 = vadd.f32 0.0, %v6427
    %v6429 = vpop.f32.mrb[0].mxu0
    %v6430 = vpop.f32.mrb[0].mxu0
    %v6431 = vadd.f32 0.0, %v6430
    %v6432 = vpop.f32.mrb[0].mxu0
    %6433 = vdwg.mxu0
    %v6434 = vpack.c.bf16 %v6428, %v6428
    %v6435 = vpack.c.bf16 %v6431, %v6431
    %v6437 = vsel %vm46, %v6434, 0
    %6439 = vmatprep.subr.bf16.mxu0 0
    %6440 = vmatpush1.bf16.xpose.msra.mxu0 %v5156
    %6441 = vmatprep.subr.bf16.mxu0 0
    %6442 = vmatpush1.bf16.xpose.msra.mxu0 0
    %6443 = vmatprep.subr.bf16.mxu0 0
    %6444 = vmatpush1.bf16.xpose.msra.mxu0 0
    %6445 = vmatprep.subr.bf16.mxu0 0
    %6446 = vmatpush1.bf16.xpose.msra.mxu0 0
    %6447 = vmatprep.subr.bf16.mxu0 0
    %6448 = vmatpush1.bf16.xpose.msra.mxu0 0
    %6449 = vmatprep.subr.bf16.mxu0 0
    %6450 = vmatpush1.bf16.xpose.msra.mxu0 0
    %6451 = vmatprep.subr.bf16.mxu0 0
    %6452 = vmatpush1.bf16.xpose.msra.mxu0 0
    %6453 = vmatprep.subr.bf16.mxu0 0
    %6454 = vmatpush1.bf16.xpose.msra.mxu0 0
    %6455 = vmatprep.subr.bf16.mxu0 0
    %6456 = vmatpush1.bf16.xpose.msra.mxu0 0
    %6457 = vmatprep.subr.bf16.mxu0 0
    %6458 = vmatpush1.bf16.xpose.msra.mxu0 0
    %6459 = vmatprep.subr.bf16.mxu0 0
    %6460 = vmatpush1.bf16.xpose.msra.mxu0 0
    %6461 = vmatprep.subr.bf16.mxu0 0
    %6462 = vmatpush1.bf16.xpose.msra.mxu0 0
    %6463 = vmatprep.subr.bf16.mxu0 0
    %6464 = vmatpush1.bf16.xpose.msra.mxu0 0
    %6465 = vmatprep.subr.bf16.mxu0 0
    %6466 = vmatpush1.bf16.xpose.msra.mxu0 0
    %6467 = vmatprep.subr.bf16.mxu0 0
    %6468 = vmatpush1.bf16.xpose.msra.mxu0 0
    %6469 = vmatprep.subr.bf16.mxu0 0
    %6470 = vmatpush1.bf16.xpose.msra.mxu0 0
    %6471 = vmatprep.mubr.bf16.mxu0 0
    %6472 = vmatmul.mubr.bf16.gmra.mrb[0].mxu0 %v6437
    %v6473 = vpop.f32.mrb[0].mxu0
    %v6474 = vadd.f32 0.0, %v6473
    %v6475 = vpop.f32.mrb[0].mxu0
    %v6476 = vpop.f32.mrb[0].mxu0
    %v6477 = vpop.f32.mrb[0].mxu0
    %6478 = vdwg.mxu0
    %v6480 = vsel %vm46, %v6435, 0
    %6482 = vmatprep.subr.bf16.mxu0 0
    %6483 = vmatpush1.bf16.xpose.msra.mxu0 %v5202
    %6484 = vmatprep.subr.bf16.mxu0 0
    %6485 = vmatpush1.bf16.xpose.msra.mxu0 0
    %6486 = vmatprep.subr.bf16.mxu0 0
    %6487 = vmatpush1.bf16.xpose.msra.mxu0 0
    %6488 = vmatprep.subr.bf16.mxu0 0
    %6489 = vmatpush1.bf16.xpose.msra.mxu0 0
    %6490 = vmatprep.subr.bf16.mxu0 0
    %6491 = vmatpush1.bf16.xpose.msra.mxu0 0
    %6492 = vmatprep.subr.bf16.mxu0 0
    %6493 = vmatpush1.bf16.xpose.msra.mxu0 0
    %6494 = vmatprep.subr.bf16.mxu0 0
    %6495 = vmatpush1.bf16.xpose.msra.mxu0 0
    %6496 = vmatprep.subr.bf16.mxu0 0
    %6497 = vmatpush1.bf16.xpose.msra.mxu0 0
    %6498 = vmatprep.subr.bf16.mxu0 0
    %6499 = vmatpush1.bf16.xpose.msra.mxu0 0
    %6500 = vmatprep.subr.bf16.mxu0 0
    %6501 = vmatpush1.bf16.xpose.msra.mxu0 0
    %6502 = vmatprep.subr.bf16.mxu0 0
    %6503 = vmatpush1.bf16.xpose.msra.mxu0 0
    %6504 = vmatprep.subr.bf16.mxu0 0
    %6505 = vmatpush1.bf16.xpose.msra.mxu0 0
    %6506 = vmatprep.subr.bf16.mxu0 0
    %6507 = vmatpush1.bf16.xpose.msra.mxu0 0
    %6508 = vmatprep.subr.bf16.mxu0 0
    %6509 = vmatpush1.bf16.xpose.msra.mxu0 0
    %6510 = vmatprep.subr.bf16.mxu0 0
    %6511 = vmatpush1.bf16.xpose.msra.mxu0 0
    %6512 = vmatprep.subr.bf16.mxu0 0
    %6513 = vmatpush1.bf16.xpose.msra.mxu0 0
    %6514 = vmatprep.mubr.bf16.mxu0 0
    %6515 = vmatmul.mubr.bf16.gmra.mrb[0].mxu0 %v6480
    %v6516 = vpop.f32.mrb[0].mxu0
    %v6517 = vadd.f32 0.0, %v6516
    %v6518 = vpop.f32.mrb[0].mxu0
    %v6519 = vpop.f32.mrb[0].mxu0
    %v6520 = vpop.f32.mrb[0].mxu0
    %6521 = vdwg.mxu0
    %v6522 = vsel %vm1409, %v6474, -inf
    %6523 = vmax.xlane.f32.xlu0 %v6522
    %v6524 = vpop.xlane.xlu0 %6523
    %v6525 = vsel %vm1409, %v6517, -inf
    %6526 = vmax.xlane.f32.xlu0 %v6525
    %v6527 = vpop.xlane.xlu0 %6526
    %v6528 = vsub.f32 %v6474, %v6524
    %v6529 = vsub.f32 %v6517, %v6527
    %v6530 = vmul.f32 %v6528, 1.442695
    %v6531 = vpow.pop %v6530
    %v6532 = vmul.f32 %v6529, 1.442695
    %v6533 = vpow.pop %v6532
    %v6534 = vsel %vm1409, %v6531, 0.0
    %6535 = vadd.xlane.f32.xlu0 %v6534
    %v6536 = vpop.xlane.xlu0 %6535
    %v6537 = vsel %vm1409, %v6533, 0.0
    %6538 = vadd.xlane.f32.xlu0 %v6537
    %v6539 = vpop.xlane.xlu0 %6538
    %v6540 = vrcp.pop %v6536
    %v6541 = vrcp.pop %v6539
    %v6542 = vmul.f32 %v6531, %v6540
    %v6543 = vmul.f32 %v6533, %v6541
    %v6544 = vpack.c.bf16 %v6542, %v6542
    %v6545 = vpack.c.bf16 %v6543, %v6543
    %v6547 = vsel %vm1409, %v6544, 0
    %6549 = vmatprep.subr.bf16.mxu0 0
    %6550 = vmatpush1.bf16.msra.mxu0 %v5271
    %6551 = vmatprep.subr.bf16.mxu0 0
    %6552 = vmatpush1.bf16.msra.mxu0 0
    %6553 = vmatprep.subr.bf16.mxu0 0
    %6554 = vmatpush1.bf16.msra.mxu0 0
    %6555 = vmatprep.subr.bf16.mxu0 0
    %6556 = vmatpush1.bf16.msra.mxu0 0
    %6557 = vmatprep.subr.bf16.mxu0 0
    %6558 = vmatpush1.bf16.msra.mxu0 0
    %6559 = vmatprep.subr.bf16.mxu0 0
    %6560 = vmatpush1.bf16.msra.mxu0 0
    %6561 = vmatprep.subr.bf16.mxu0 0
    %6562 = vmatpush1.bf16.msra.mxu0 0
    %6563 = vmatprep.subr.bf16.mxu0 0
    %6564 = vmatpush1.bf16.msra.mxu0 0
    %6565 = vmatprep.subr.bf16.mxu0 0
    %6566 = vmatpush1.bf16.msra.mxu0 0
    %6567 = vmatprep.subr.bf16.mxu0 0
    %6568 = vmatpush1.bf16.msra.mxu0 0
    %6569 = vmatprep.subr.bf16.mxu0 0
    %6570 = vmatpush1.bf16.msra.mxu0 0
    %6571 = vmatprep.subr.bf16.mxu0 0
    %6572 = vmatpush1.bf16.msra.mxu0 0
    %6573 = vmatprep.subr.bf16.mxu0 0
    %6574 = vmatpush1.bf16.msra.mxu0 0
    %6575 = vmatprep.subr.bf16.mxu0 0
    %6576 = vmatpush1.bf16.msra.mxu0 0
    %6577 = vmatprep.subr.bf16.mxu0 0
    %6578 = vmatpush1.bf16.msra.mxu0 0
    %6579 = vmatprep.subr.bf16.mxu0 0
    %6580 = vmatpush1.bf16.msra.mxu0 0
    %6581 = vmatprep.mubr.bf16.mxu0 0
    %6582 = vmatmul.mubr.bf16.gmra.mrb[0].mxu0 %v6547
    %v6583 = vpop.f32.mrb[0].mxu0
    %v6584 = vadd.f32 0.0, %v6583
    %v6585 = vpop.f32.mrb[0].mxu0
    %v6586 = vpop.f32.mrb[0].mxu0
    %v6587 = vpop.f32.mrb[0].mxu0
    %6588 = vdwg.mxu0
    %v6590 = vsel %vm1409, %v6545, 0
    %6592 = vmatprep.subr.bf16.mxu0 0
    %6593 = vmatpush1.bf16.msra.mxu0 %v5316
    %6594 = vmatprep.subr.bf16.mxu0 0
    %6595 = vmatpush1.bf16.msra.mxu0 0
    %6596 = vmatprep.subr.bf16.mxu0 0
    %6597 = vmatpush1.bf16.msra.mxu0 0
    %6598 = vmatprep.subr.bf16.mxu0 0
    %6599 = vmatpush1.bf16.msra.mxu0 0
    %6600 = vmatprep.subr.bf16.mxu0 0
    %6601 = vmatpush1.bf16.msra.mxu0 0
    %6602 = vmatprep.subr.bf16.mxu0 0
    %6603 = vmatpush1.bf16.msra.mxu0 0
    %6604 = vmatprep.subr.bf16.mxu0 0
    %6605 = vmatpush1.bf16.msra.mxu0 0
    %6606 = vmatprep.subr.bf16.mxu0 0
    %6607 = vmatpush1.bf16.msra.mxu0 0
    %6608 = vmatprep.subr.bf16.mxu0 0
    %6609 = vmatpush1.bf16.msra.mxu0 0
    %6610 = vmatprep.subr.bf16.mxu0 0
    %6611 = vmatpush1.bf16.msra.mxu0 0
    %6612 = vmatprep.subr.bf16.mxu0 0
    %6613 = vmatpush1.bf16.msra.mxu0 0
    %6614 = vmatprep.subr.bf16.mxu0 0
    %6615 = vmatpush1.bf16.msra.mxu0 0
    %6616 = vmatprep.subr.bf16.mxu0 0
    %6617 = vmatpush1.bf16.msra.mxu0 0
    %6618 = vmatprep.subr.bf16.mxu0 0
    %6619 = vmatpush1.bf16.msra.mxu0 0
    %6620 = vmatprep.subr.bf16.mxu0 0
    %6621 = vmatpush1.bf16.msra.mxu0 0
    %6622 = vmatprep.subr.bf16.mxu0 0
    %6623 = vmatpush1.bf16.msra.mxu0 0
    %6624 = vmatprep.mubr.bf16.mxu0 0
    %6625 = vmatmul.mubr.bf16.gmra.mrb[0].mxu0 %v6590
    %v6626 = vpop.f32.mrb[0].mxu0
    %v6627 = vadd.f32 0.0, %v6626
    %v6628 = vpop.f32.mrb[0].mxu0
    %v6629 = vpop.f32.mrb[0].mxu0
    %v6630 = vpop.f32.mrb[0].mxu0
    %6631 = vdwg.mxu0
    %v6632 = vpack.c.bf16 %v6584, %v6584
    %v6633 = vpack.c.bf16 %v6627, %v6627
    %s6634 = scalar_lea.vmem %s8, 352
    %v6635 = vld [vmem:[%s6634] sm:$0xf]
    %v6636 = vld [vmem:[%s6634 + $0x4] sm:$0xf]
    %v6637 = vld [vmem:[%s6634 + $0x8] sm:$0xf]
    %v6638 = vld [vmem:[%s6634 + $0xc] sm:$0xf]
    %v6639 = vld [vmem:[%s6634 + $0x10] sm:$0xf]
    %v6640 = vld [vmem:[%s6634 + $0x14] sm:$0xf]
    %v6641 = vld [vmem:[%s6634 + $0x18] sm:$0xf]
    %v6642 = vld [vmem:[%s6634 + $0x1c] sm:$0xf]
    %v6645 = vunpack.c.l.b16 %v6632
    %v6646 = vunpack.c.l.b16 %v6633
    %v6647 = vpack.c.b16 %v6646, %v6645
    %v6656 = vunpack.c.l.b16 %v6635
    %v6657 = vunpack.c.l.b16 %v6636
    %v6658 = vunpack.c.l.b16 %v6637
    %v6659 = vunpack.c.l.b16 %v6638
    %v6660 = vunpack.c.l.b16 %v6639
    %v6661 = vunpack.c.l.b16 %v6640
    %v6662 = vunpack.c.l.b16 %v6641
    %v6663 = vunpack.c.l.b16 %v6642
    %v6664 = vpack.c.b16 %v6657, %v6656
    %v6665 = vpack.c.b16 %v6659, %v6658
    %v6666 = vpack.c.b16 %v6661, %v6660
    %v6667 = vpack.c.b16 %v6663, %v6662
    %v6673 = vsel %vm46, %v6647, 0
    %6675 = vmatprep.subr.bf16.mxu0 0
    %6676 = vmatpush1.bf16.msra.mxu0 %v6664
    %6677 = vmatprep.subr.bf16.mxu0 0
    %6678 = vmatpush1.bf16.msra.mxu0 %v6665
    %6679 = vmatprep.subr.bf16.mxu0 0
    %6680 = vmatpush1.bf16.msra.mxu0 %v6666
    %6681 = vmatprep.subr.bf16.mxu0 0
    %6682 = vmatpush1.bf16.msra.mxu0 %v6667
    %6683 = vmatprep.subr.bf16.mxu0 0
    %6684 = vmatpush1.bf16.msra.mxu0 0
    %6685 = vmatprep.subr.bf16.mxu0 0
    %6686 = vmatpush1.bf16.msra.mxu0 0
    %6687 = vmatprep.subr.bf16.mxu0 0
    %6688 = vmatpush1.bf16.msra.mxu0 0
    %6689 = vmatprep.subr.bf16.mxu0 0
    %6690 = vmatpush1.bf16.msra.mxu0 0
    %6691 = vmatprep.subr.bf16.mxu0 0
    %6692 = vmatpush1.bf16.msra.mxu0 0
    %6693 = vmatprep.subr.bf16.mxu0 0
    %6694 = vmatpush1.bf16.msra.mxu0 0
    %6695 = vmatprep.subr.bf16.mxu0 0
    %6696 = vmatpush1.bf16.msra.mxu0 0
    %6697 = vmatprep.subr.bf16.mxu0 0
    %6698 = vmatpush1.bf16.msra.mxu0 0
    %6699 = vmatprep.subr.bf16.mxu0 0
    %6700 = vmatpush1.bf16.msra.mxu0 0
    %6701 = vmatprep.subr.bf16.mxu0 0
    %6702 = vmatpush1.bf16.msra.mxu0 0
    %6703 = vmatprep.subr.bf16.mxu0 0
    %6704 = vmatpush1.bf16.msra.mxu0 0
    %6705 = vmatprep.subr.bf16.mxu0 0
    %6706 = vmatpush1.bf16.msra.mxu0 0
    %6707 = vmatprep.mubr.bf16.mxu0 0
    %6708 = vmatmul.mubr.bf16.gmra.mrb[0].mxu0 %v6673
    %v6709 = vpop.f32.mrb[0].mxu0
    %v6710 = vadd.f32 0.0, %v6709
    %v6711 = vpop.f32.mrb[0].mxu0
    %v6712 = vpop.f32.mrb[0].mxu0
    %v6713 = vadd.f32 0.0, %v6712
    %v6714 = vpop.f32.mrb[0].mxu0
    %6715 = vdwg.mxu0
    %v6716 = vadd.f32 %v6290, %v6710
    %v6717 = vadd.f32 %v6291, %v6713
    %s6718 = scalar_lea.vmem %s12, 16
    %v6719 = vld [vmem:[%s6718] sm:$0x1]
    %v6720 = vlaneseq
    %v6721 = vshrl.u32 %v6720, 7
    %v6722 = vsub.s32 0, %v6721
    %v6723 = vrot.slane %v6719, %v6722
    %v6724 = vadd.f32 %v6716, %v6723
    %v6725 = vadd.f32 %v6717, %v6723
    %v6726 = vadd.f32 %v4996, %v6724
    %v6727 = vadd.f32 %v4997, %v6725
    %v6728 = vld [vmem:[%s6718 + $0x4] sm:$0x1]
    %v6729 = vld [vmem:[%s6718 + $0x8] sm:$0x1]
    %v6730 = vsel %vm46, %v6726, 0.0
    %6731 = vadd.xlane.f32.xlu0 %v6730
    %v6732 = vpop.xlane.xlu0 %6731
    %v6733 = vsel %vm46, %v6727, 0.0
    %6734 = vadd.xlane.f32.xlu0 %v6733
    %v6735 = vpop.xlane.xlu0 %6734
    %v6736 = vmul.f32 %v6732, %v702
    %v6737 = vmul.f32 %v6735, %v702
    %v6738 = vsub.f32 %v6726, %v6736
    %v6739 = vsub.f32 %v6727, %v6737
    %v6740 = vmul.f32 %v6738, %v6738
    %v6741 = vmul.f32 %v6739, %v6739
    %v6742 = vsel %vm46, %v6740, 0.0
    %6743 = vadd.xlane.f32.xlu0 %v6742
    %v6744 = vpop.xlane.xlu0 %6743
    %v6745 = vsel %vm46, %v6741, 0.0
    %6746 = vadd.xlane.f32.xlu0 %v6745
    %v6747 = vpop.xlane.xlu0 %6746
    %v6748 = vmul.f32 %v6744, %v702
    %v6749 = vmul.f32 %v6747, %v702
    %v6750 = vadd.f32 %v6748, 1e-05
    %v6751 = vadd.f32 %v6749, 1e-05
    %v6752 = vrsqrt.pop %v6750
    %v6753 = vrsqrt.pop %v6751
    %v6754 = vmul.f32 %v6738, %v6752
    %v6755 = vmul.f32 %v6739, %v6753
    %v6756 = vlaneseq
    %v6757 = vshrl.u32 %v6756, 7
    %v6758 = vsub.s32 0, %v6757
    %v6759 = vrot.slane %v6728, %v6758
    %v6760 = vmul.f32 %v6754, %v6759
    %v6761 = vmul.f32 %v6755, %v6759
    %v6762 = vlaneseq
    %v6763 = vshrl.u32 %v6762, 7
    %v6764 = vsub.s32 0, %v6763
    %v6765 = vrot.slane %v6729, %v6764
    %v6766 = vadd.f32 %v6760, %v6765
    %v6767 = vadd.f32 %v6761, %v6765
    %v6768 = vpack.c.bf16 %v6766, %v6766
    %v6769 = vpack.c.bf16 %v6767, %v6767
    %s6770 = scalar_lea.vmem %s6, 384
    %v6771 = vld [vmem:[%s6770] sm:$0xf]
    %v6772 = vld [vmem:[%s6770 + $0x4] sm:$0xf]
    %v6773 = vld [vmem:[%s6770 + $0x8] sm:$0xf]
    %v6774 = vld [vmem:[%s6770 + $0xc] sm:$0xf]
    %v6775 = vld [vmem:[%s6770 + $0x10] sm:$0xf]
    %v6776 = vld [vmem:[%s6770 + $0x14] sm:$0xf]
    %v6777 = vld [vmem:[%s6770 + $0x18] sm:$0xf]
    %v6778 = vld [vmem:[%s6770 + $0x1c] sm:$0xf]
    %s6779 = scalar_lea.vmem %s11, 12
    %v6780 = vld [vmem:[%s6779] sm:$0x1]
    %v6782 = vlaneseq
    %v6783 = vshrl.u32 %v6782, 7
    %v6784 = vsub.s32 0, %v6783
    %v6785 = vrot.slane %v6780, %v6784
    %v6789 = vunpack.c.l.b16 %v6768
    %v6790 = vunpack.c.l.b16 %v6769
    %v6791 = vpack.c.b16 %v6790, %v6789
    %v6800 = vunpack.c.l.b16 %v6771
    %v6801 = vunpack.c.l.b16 %v6772
    %v6802 = vunpack.c.l.b16 %v6773
    %v6803 = vunpack.c.l.b16 %v6774
    %v6804 = vunpack.c.l.b16 %v6775
    %v6805 = vunpack.c.l.b16 %v6776
    %v6806 = vunpack.c.l.b16 %v6777
    %v6807 = vunpack.c.l.b16 %v6778
    %v6808 = vpack.c.b16 %v6801, %v6800
    %v6809 = vpack.c.b16 %v6803, %v6802
    %v6810 = vpack.c.b16 %v6805, %v6804
    %v6811 = vpack.c.b16 %v6807, %v6806
    %v6817 = vsel %vm46, %v6791, 0
    %6819 = vmatprep.subr.bf16.mxu0 0
    %6820 = vmatpush1.bf16.msra.mxu0 %v6808
    %6821 = vmatprep.subr.bf16.mxu0 0
    %6822 = vmatpush1.bf16.msra.mxu0 %v6809
    %6823 = vmatprep.subr.bf16.mxu0 0
    %6824 = vmatpush1.bf16.msra.mxu0 %v6810
    %6825 = vmatprep.subr.bf16.mxu0 0
    %6826 = vmatpush1.bf16.msra.mxu0 %v6811
    %6827 = vmatprep.subr.bf16.mxu0 0
    %6828 = vmatpush1.bf16.msra.mxu0 0
    %6829 = vmatprep.subr.bf16.mxu0 0
    %6830 = vmatpush1.bf16.msra.mxu0 0
    %6831 = vmatprep.subr.bf16.mxu0 0
    %6832 = vmatpush1.bf16.msra.mxu0 0
    %6833 = vmatprep.subr.bf16.mxu0 0
    %6834 = vmatpush1.bf16.msra.mxu0 0
    %6835 = vmatprep.subr.bf16.mxu0 0
    %6836 = vmatpush1.bf16.msra.mxu0 0
    %6837 = vmatprep.subr.bf16.mxu0 0
    %6838 = vmatpush1.bf16.msra.mxu0 0
    %6839 = vmatprep.subr.bf16.mxu0 0
    %6840 = vmatpush1.bf16.msra.mxu0 0
    %6841 = vmatprep.subr.bf16.mxu0 0
    %6842 = vmatpush1.bf16.msra.mxu0 0
    %6843 = vmatprep.subr.bf16.mxu0 0
    %6844 = vmatpush1.bf16.msra.mxu0 0
    %6845 = vmatprep.subr.bf16.mxu0 0
    %6846 = vmatpush1.bf16.msra.mxu0 0
    %6847 = vmatprep.subr.bf16.mxu0 0
    %6848 = vmatpush1.bf16.msra.mxu0 0
    %6849 = vmatprep.subr.bf16.mxu0 0
    %6850 = vmatpush1.bf16.msra.mxu0 0
    %6851 = vmatprep.mubr.bf16.mxu0 0
    %6852 = vmatmul.mubr.bf16.gmra.mrb[0].mxu0 %v6817
    %v6853 = vpop.f32.mrb[0].mxu0
    %v6854 = vadd.f32 %v6785, %v6853
    %v6855 = vpop.f32.mrb[0].mxu0
    %v6856 = vpop.f32.mrb[0].mxu0
    %v6857 = vadd.f32 %v6785, %v6856
    %v6858 = vpop.f32.mrb[0].mxu0
    %6859 = vdwg.mxu0
    %v6860 = vpack.c.bf16 %v6854, %v6854
    %v6861 = vpack.c.bf16 %v6857, %v6857
    %s6862 = scalar_lea.vmem %s7, 96
    %v6863 = vld [vmem:[%s6862] sm:$0xf]
    %v6864 = vld [vmem:[%s6862 + $0x4] sm:$0xf]
    %v6867 = vunpack.c.l.b16 %v6860
    %v6868 = vunpack.c.l.b16 %v6861
    %v6869 = vpack.c.b16 %v6868, %v6867
    %v6872 = vunpack.c.l.b16 %v6863
    %v6873 = vunpack.c.l.b16 %v6864
    %v6874 = vpack.c.b16 %v6873, %v6872
    %v6877 = vsel %vm94, %v6869, 0
    %6879 = vmatprep.subr.bf16.mxu0 0
    %6880 = vmatpush1.bf16.msra.mxu0 %v6874
    %6881 = vmatprep.subr.bf16.mxu0 0
    %6882 = vmatpush1.bf16.msra.mxu0 0
    %6883 = vmatprep.subr.bf16.mxu0 0
    %6884 = vmatpush1.bf16.msra.mxu0 0
    %6885 = vmatprep.subr.bf16.mxu0 0
    %6886 = vmatpush1.bf16.msra.mxu0 0
    %6887 = vmatprep.subr.bf16.mxu0 0
    %6888 = vmatpush1.bf16.msra.mxu0 0
    %6889 = vmatprep.subr.bf16.mxu0 0
    %6890 = vmatpush1.bf16.msra.mxu0 0
    %6891 = vmatprep.subr.bf16.mxu0 0
    %6892 = vmatpush1.bf16.msra.mxu0 0
    %6893 = vmatprep.subr.bf16.mxu0 0
    %6894 = vmatpush1.bf16.msra.mxu0 0
    %6895 = vmatprep.subr.bf16.mxu0 0
    %6896 = vmatpush1.bf16.msra.mxu0 0
    %6897 = vmatprep.subr.bf16.mxu0 0
    %6898 = vmatpush1.bf16.msra.mxu0 0
    %6899 = vmatprep.subr.bf16.mxu0 0
    %6900 = vmatpush1.bf16.msra.mxu0 0
    %6901 = vmatprep.subr.bf16.mxu0 0
    %6902 = vmatpush1.bf16.msra.mxu0 0
    %6903 = vmatprep.subr.bf16.mxu0 0
    %6904 = vmatpush1.bf16.msra.mxu0 0
    %6905 = vmatprep.subr.bf16.mxu0 0
    %6906 = vmatpush1.bf16.msra.mxu0 0
    %6907 = vmatprep.subr.bf16.mxu0 0
    %6908 = vmatpush1.bf16.msra.mxu0 0
    %6909 = vmatprep.subr.bf16.mxu0 0
    %6910 = vmatpush1.bf16.msra.mxu0 0
    %6911 = vmatprep.mubr.bf16.mxu0 0
    %6912 = vmatmul.mubr.bf16.gmra.mrb[0].mxu0 %v6877
    %v6913 = vpop.f32.mrb[0].mxu0
    %v6914 = vadd.f32 0.0, %v6913
    %v6915 = vpop.f32.mrb[0].mxu0
    %v6916 = vpop.f32.mrb[0].mxu0
    %v6917 = vadd.f32 0.0, %v6916
    %v6918 = vpop.f32.mrb[0].mxu0
    %6919 = vdwg.mxu0
    %v6920 = vpack.c.bf16 %v6914, %v6914
    %v6921 = vpack.c.bf16 %v6917, %v6917
    %v6923 = vsel %vm46, %v6920, 0
    %6925 = vmatprep.subr.bf16.mxu0 0
    %6926 = vmatpush1.bf16.xpose.msra.mxu0 %v3091
    %6927 = vmatprep.subr.bf16.mxu0 0
    %6928 = vmatpush1.bf16.xpose.msra.mxu0 %v3094
    %6929 = vmatprep.subr.bf16.mxu0 0
    %6930 = vmatpush1.bf16.xpose.msra.mxu0 %v3097
    %6931 = vmatprep.subr.bf16.mxu0 0
    %6932 = vmatpush1.bf16.xpose.msra.mxu0 %v3100
    %6933 = vmatprep.subr.bf16.mxu0 0
    %6934 = vmatpush1.bf16.xpose.msra.mxu0 %v3103
    %6935 = vmatprep.subr.bf16.mxu0 0
    %6936 = vmatpush1.bf16.xpose.msra.mxu0 %v3106
    %6937 = vmatprep.subr.bf16.mxu0 0
    %6938 = vmatpush1.bf16.xpose.msra.mxu0 %v3109
    %6939 = vmatprep.subr.bf16.mxu0 0
    %6940 = vmatpush1.bf16.xpose.msra.mxu0 %v3112
    %6941 = vmatprep.subr.bf16.mxu0 0
    %6942 = vmatpush1.bf16.xpose.msra.mxu0 0
    %6943 = vmatprep.subr.bf16.mxu0 0
    %6944 = vmatpush1.bf16.xpose.msra.mxu0 0
    %6945 = vmatprep.subr.bf16.mxu0 0
    %6946 = vmatpush1.bf16.xpose.msra.mxu0 0
    %6947 = vmatprep.subr.bf16.mxu0 0
    %6948 = vmatpush1.bf16.xpose.msra.mxu0 0
    %6949 = vmatprep.subr.bf16.mxu0 0
    %6950 = vmatpush1.bf16.xpose.msra.mxu0 0
    %6951 = vmatprep.subr.bf16.mxu0 0
    %6952 = vmatpush1.bf16.xpose.msra.mxu0 0
    %6953 = vmatprep.subr.bf16.mxu0 0
    %6954 = vmatpush1.bf16.xpose.msra.mxu0 0
    %6955 = vmatprep.subr.bf16.mxu0 0
    %6956 = vmatpush1.bf16.xpose.msra.mxu0 0
    %6957 = vmatprep.mubr.bf16.mxu0 0
    %6958 = vmatmul.mubr.bf16.gmra.mrb[0].mxu0 %v6923
    %v6959 = vpop.f32.mrb[0].mxu0
    %v6960 = vadd.f32 0.0, %v6959
    %v6961 = vpop.f32.mrb[0].mxu0
    %v6962 = vpop.f32.mrb[0].mxu0
    %v6963 = vpop.f32.mrb[0].mxu0
    %6964 = vdwg.mxu0
    %v6966 = vsel %vm46, %v6921, 0
    %6968 = vmatprep.subr.bf16.mxu0 0
    %6969 = vmatpush1.bf16.xpose.msra.mxu0 %v3158
    %6970 = vmatprep.subr.bf16.mxu0 0
    %6971 = vmatpush1.bf16.xpose.msra.mxu0 %v3161
    %6972 = vmatprep.subr.bf16.mxu0 0
    %6973 = vmatpush1.bf16.xpose.msra.mxu0 %v3164
    %6974 = vmatprep.subr.bf16.mxu0 0
    %6975 = vmatpush1.bf16.xpose.msra.mxu0 %v3167
    %6976 = vmatprep.subr.bf16.mxu0 0
    %6977 = vmatpush1.bf16.xpose.msra.mxu0 %v3170
    %6978 = vmatprep.subr.bf16.mxu0 0
    %6979 = vmatpush1.bf16.xpose.msra.mxu0 %v3173
    %6980 = vmatprep.subr.bf16.mxu0 0
    %6981 = vmatpush1.bf16.xpose.msra.mxu0 %v3176
    %6982 = vmatprep.subr.bf16.mxu0 0
    %6983 = vmatpush1.bf16.xpose.msra.mxu0 %v3179
    %6984 = vmatprep.subr.bf16.mxu0 0
    %6985 = vmatpush1.bf16.xpose.msra.mxu0 0
    %6986 = vmatprep.subr.bf16.mxu0 0
    %6987 = vmatpush1.bf16.xpose.msra.mxu0 0
    %6988 = vmatprep.subr.bf16.mxu0 0
    %6989 = vmatpush1.bf16.xpose.msra.mxu0 0
    %6990 = vmatprep.subr.bf16.mxu0 0
    %6991 = vmatpush1.bf16.xpose.msra.mxu0 0
    %6992 = vmatprep.subr.bf16.mxu0 0
    %6993 = vmatpush1.bf16.xpose.msra.mxu0 0
    %6994 = vmatprep.subr.bf16.mxu0 0
    %6995 = vmatpush1.bf16.xpose.msra.mxu0 0
    %6996 = vmatprep.subr.bf16.mxu0 0
    %6997 = vmatpush1.bf16.xpose.msra.mxu0 0
    %6998 = vmatprep.subr.bf16.mxu0 0
    %6999 = vmatpush1.bf16.xpose.msra.mxu0 0
    %7000 = vmatprep.mubr.bf16.mxu0 0
    %7001 = vmatmul.mubr.bf16.gmra.mrb[0].mxu0 %v6966
    %v7002 = vpop.f32.mrb[0].mxu0
    %v7003 = vadd.f32 0.0, %v7002
    %v7004 = vpop.f32.mrb[0].mxu0
    %v7005 = vpop.f32.mrb[0].mxu0
    %v7006 = vpop.f32.mrb[0].mxu0
    %7007 = vdwg.mxu0
    %7008 = vmax.xlane.f32.xlu0 %v6960
    %v7009 = vpop.xlane.xlu0 %7008
    %7010 = vmax.xlane.f32.xlu0 %v7003
    %v7011 = vpop.xlane.xlu0 %7010
    %v7012 = vsub.f32 %v6960, %v7009
    %v7013 = vsub.f32 %v7003, %v7011
    %v7014 = vmul.f32 %v7012, 1.442695
    %v7015 = vpow.pop %v7014
    %v7016 = vmul.f32 %v7013, 1.442695
    %v7017 = vpow.pop %v7016
    %v7018 = vmul.f32 %v7015, %v1163
    %v7019 = vmul.f32 %v7017, %v1163
    %7020 = vadd.xlane.f32.xlu0 %v7018
    %v7021 = vpop.xlane.xlu0 %7020
    %7022 = vadd.xlane.f32.xlu0 %v7019
    %v7023 = vpop.xlane.xlu0 %7022
    %v7024 = vrcp.pop %v7021
    %v7025 = vrcp.pop %v7023
    %v7026 = vmul.f32 %v7018, %v7024
    %v7027 = vmul.f32 %v7019, %v7025
    %v7028 = vpack.c.bf16 %v7026, %v7026
    %v7029 = vpack.c.bf16 %v7027, %v7027
    %7030 = vmatprep.subr.bf16.mxu0 0
    %7031 = vmatpush1.bf16.msra.mxu0 %v1127
    %7032 = vmatprep.subr.bf16.mxu0 0
    %7033 = vmatpush1.bf16.msra.mxu0 %v1128
    %7034 = vmatprep.subr.bf16.mxu0 0
    %7035 = vmatpush1.bf16.msra.mxu0 %v1129
    %7036 = vmatprep.subr.bf16.mxu0 0
    %7037 = vmatpush1.bf16.msra.mxu0 %v1130
    %7038 = vmatprep.subr.bf16.mxu0 0
    %7039 = vmatpush1.bf16.msra.mxu0 %v1131
    %7040 = vmatprep.subr.bf16.mxu0 0
    %7041 = vmatpush1.bf16.msra.mxu0 %v1132
    %7042 = vmatprep.subr.bf16.mxu0 0
    %7043 = vmatpush1.bf16.msra.mxu0 %v1133
    %7044 = vmatprep.subr.bf16.mxu0 0
    %7045 = vmatpush1.bf16.msra.mxu0 %v1134
    %7046 = vmatprep.subr.bf16.mxu0 0
    %7047 = vmatpush1.bf16.msra.mxu0 0
    %7048 = vmatprep.subr.bf16.mxu0 0
    %7049 = vmatpush1.bf16.msra.mxu0 0
    %7050 = vmatprep.subr.bf16.mxu0 0
    %7051 = vmatpush1.bf16.msra.mxu0 0
    %7052 = vmatprep.subr.bf16.mxu0 0
    %7053 = vmatpush1.bf16.msra.mxu0 0
    %7054 = vmatprep.subr.bf16.mxu0 0
    %7055 = vmatpush1.bf16.msra.mxu0 0
    %7056 = vmatprep.subr.bf16.mxu0 0
    %7057 = vmatpush1.bf16.msra.mxu0 0
    %7058 = vmatprep.subr.bf16.mxu0 0
    %7059 = vmatpush1.bf16.msra.mxu0 0
    %7060 = vmatprep.subr.bf16.mxu0 0
    %7061 = vmatpush1.bf16.msra.mxu0 0
    %7062 = vmatprep.mubr.bf16.mxu0 0
    %7063 = vmatmul.mubr.bf16.gmra.mrb[0].mxu0 %v7028
    %v7064 = vpop.f32.mrb[0].mxu0
    %v7065 = vadd.f32 0.0, %v7064
    %v7066 = vpop.f32.mrb[0].mxu0
    %v7067 = vpop.f32.mrb[0].mxu0
    %v7068 = vpop.f32.mrb[0].mxu0
    %7069 = vdwg.mxu0
    %7070 = vmatprep.subr.bf16.mxu0 0
    %7071 = vmatpush1.bf16.msra.mxu0 %v1135
    %7072 = vmatprep.subr.bf16.mxu0 0
    %7073 = vmatpush1.bf16.msra.mxu0 %v1136
    %7074 = vmatprep.subr.bf16.mxu0 0
    %7075 = vmatpush1.bf16.msra.mxu0 %v1137
    %7076 = vmatprep.subr.bf16.mxu0 0
    %7077 = vmatpush1.bf16.msra.mxu0 %v1138
    %7078 = vmatprep.subr.bf16.mxu0 0
    %7079 = vmatpush1.bf16.msra.mxu0 %v1139
    %7080 = vmatprep.subr.bf16.mxu0 0
    %7081 = vmatpush1.bf16.msra.mxu0 %v1140
    %7082 = vmatprep.subr.bf16.mxu0 0
    %7083 = vmatpush1.bf16.msra.mxu0 %v1141
    %7084 = vmatprep.subr.bf16.mxu0 0
    %7085 = vmatpush1.bf16.msra.mxu0 %v1142
    %7086 = vmatprep.subr.bf16.mxu0 0
    %7087 = vmatpush1.bf16.msra.mxu0 0
    %7088 = vmatprep.subr.bf16.mxu0 0
    %7089 = vmatpush1.bf16.msra.mxu0 0
    %7090 = vmatprep.subr.bf16.mxu0 0
    %7091 = vmatpush1.bf16.msra.mxu0 0
    %7092 = vmatprep.subr.bf16.mxu0 0
    %7093 = vmatpush1.bf16.msra.mxu0 0
    %7094 = vmatprep.subr.bf16.mxu0 0
    %7095 = vmatpush1.bf16.msra.mxu0 0
    %7096 = vmatprep.subr.bf16.mxu0 0
    %7097 = vmatpush1.bf16.msra.mxu0 0
    %7098 = vmatprep.subr.bf16.mxu0 0
    %7099 = vmatpush1.bf16.msra.mxu0 0
    %7100 = vmatprep.subr.bf16.mxu0 0
    %7101 = vmatpush1.bf16.msra.mxu0 0
    %7102 = vmatprep.mubr.bf16.mxu0 0
    %7103 = vmatmul.mubr.bf16.gmra.mrb[0].mxu0 %v7029
    %v7104 = vpop.f32.mrb[0].mxu0
    %v7105 = vadd.f32 0.0, %v7104
    %v7106 = vpop.f32.mrb[0].mxu0
    %v7107 = vpop.f32.mrb[0].mxu0
    %v7108 = vpop.f32.mrb[0].mxu0
    %7109 = vdwg.mxu0
    %v7110 = vpack.c.bf16 %v7065, %v7065
    %v7111 = vpack.c.bf16 %v7105, %v7105
    %s7112 = scalar_lea.vmem %s8, 384
    %v7113 = vld [vmem:[%s7112] sm:$0xf]
    %v7114 = vld [vmem:[%s7112 + $0x4] sm:$0xf]
    %v7115 = vld [vmem:[%s7112 + $0x8] sm:$0xf]
    %v7116 = vld [vmem:[%s7112 + $0xc] sm:$0xf]
    %v7117 = vld [vmem:[%s7112 + $0x10] sm:$0xf]
    %v7118 = vld [vmem:[%s7112 + $0x14] sm:$0xf]
    %v7119 = vld [vmem:[%s7112 + $0x18] sm:$0xf]
    %v7120 = vld [vmem:[%s7112 + $0x1c] sm:$0xf]
    %s7121 = scalar_lea.vmem %s6, 416
    %v7122 = vld [vmem:[%s7121] sm:$0xf]
    %v7123 = vld [vmem:[%s7121 + $0x4] sm:$0xf]
    %v7124 = vld [vmem:[%s7121 + $0x8] sm:$0xf]
    %v7125 = vld [vmem:[%s7121 + $0xc] sm:$0xf]
    %v7126 = vld [vmem:[%s7121 + $0x10] sm:$0xf]
    %v7127 = vld [vmem:[%s7121 + $0x14] sm:$0xf]
    %v7128 = vld [vmem:[%s7121 + $0x18] sm:$0xf]
    %v7129 = vld [vmem:[%s7121 + $0x1c] sm:$0xf]
    %s7130 = scalar_lea.vmem %s11, 13
    %v7131 = vld [vmem:[%s7130] sm:$0x1]
    %v7133 = vlaneseq
    %v7134 = vshrl.u32 %v7133, 7
    %v7135 = vsub.s32 0, %v7134
    %v7136 = vrot.slane %v7131, %v7135
    %v7146 = vunpack.c.l.b16 %v7122
    %v7147 = vunpack.c.l.b16 %v7123
    %v7148 = vunpack.c.l.b16 %v7124
    %v7149 = vunpack.c.l.b16 %v7125
    %v7150 = vunpack.c.l.b16 %v7126
    %v7151 = vunpack.c.l.b16 %v7127
    %v7152 = vunpack.c.l.b16 %v7128
    %v7153 = vunpack.c.l.b16 %v7129
    %v7154 = vpack.c.b16 %v7147, %v7146
    %v7155 = vpack.c.b16 %v7149, %v7148
    %v7156 = vpack.c.b16 %v7151, %v7150
    %v7157 = vpack.c.b16 %v7153, %v7152
    %7162 = vmatprep.subr.bf16.mxu0 0
    %7163 = vmatpush1.bf16.msra.mxu0 %v7154
    %7164 = vmatprep.subr.bf16.mxu0 0
    %7165 = vmatpush1.bf16.msra.mxu0 %v7155
    %7166 = vmatprep.subr.bf16.mxu0 0
    %7167 = vmatpush1.bf16.msra.mxu0 %v7156
    %7168 = vmatprep.subr.bf16.mxu0 0
    %7169 = vmatpush1.bf16.msra.mxu0 %v7157
    %7170 = vmatprep.subr.bf16.mxu0 0
    %7171 = vmatpush1.bf16.msra.mxu0 0
    %7172 = vmatprep.subr.bf16.mxu0 0
    %7173 = vmatpush1.bf16.msra.mxu0 0
    %7174 = vmatprep.subr.bf16.mxu0 0
    %7175 = vmatpush1.bf16.msra.mxu0 0
    %7176 = vmatprep.subr.bf16.mxu0 0
    %7177 = vmatpush1.bf16.msra.mxu0 0
    %7178 = vmatprep.subr.bf16.mxu0 0
    %7179 = vmatpush1.bf16.msra.mxu0 0
    %7180 = vmatprep.subr.bf16.mxu0 0
    %7181 = vmatpush1.bf16.msra.mxu0 0
    %7182 = vmatprep.subr.bf16.mxu0 0
    %7183 = vmatpush1.bf16.msra.mxu0 0
    %7184 = vmatprep.subr.bf16.mxu0 0
    %7185 = vmatpush1.bf16.msra.mxu0 0
    %7186 = vmatprep.subr.bf16.mxu0 0
    %7187 = vmatpush1.bf16.msra.mxu0 0
    %7188 = vmatprep.subr.bf16.mxu0 0
    %7189 = vmatpush1.bf16.msra.mxu0 0
    %7190 = vmatprep.subr.bf16.mxu0 0
    %7191 = vmatpush1.bf16.msra.mxu0 0
    %7192 = vmatprep.subr.bf16.mxu0 0
    %7193 = vmatpush1.bf16.msra.mxu0 0
    %7194 = vmatprep.mubr.bf16.mxu0 0
    %7195 = vmatmul.mubr.bf16.gmra.mrb[0].mxu0 %v6817
    %v7196 = vpop.f32.mrb[0].mxu0
    %v7197 = vadd.f32 %v7136, %v7196
    %v7198 = vpop.f32.mrb[0].mxu0
    %v7199 = vpop.f32.mrb[0].mxu0
    %v7200 = vadd.f32 %v7136, %v7199
    %v7201 = vpop.f32.mrb[0].mxu0
    %7202 = vdwg.mxu0
    %v7203 = vpack.c.bf16 %v7197, %v7197
    %v7204 = vpack.c.bf16 %v7200, %v7200
    %s7205 = scalar_lea.vmem %s7, 104
    %v7206 = vld [vmem:[%s7205] sm:$0xf]
    %v7207 = vld [vmem:[%s7205 + $0x4] sm:$0xf]
    %v7210 = vunpack.c.l.b16 %v7203
    %v7211 = vunpack.c.l.b16 %v7204
    %v7212 = vpack.c.b16 %v7211, %v7210
    %v7215 = vunpack.c.l.b16 %v7206
    %v7216 = vunpack.c.l.b16 %v7207
    %v7217 = vpack.c.b16 %v7216, %v7215
    %v7220 = vsel %vm94, %v7212, 0
    %7222 = vmatprep.subr.bf16.mxu0 0
    %7223 = vmatpush1.bf16.msra.mxu0 %v7217
    %7224 = vmatprep.subr.bf16.mxu0 0
    %7225 = vmatpush1.bf16.msra.mxu0 0
    %7226 = vmatprep.subr.bf16.mxu0 0
    %7227 = vmatpush1.bf16.msra.mxu0 0
    %7228 = vmatprep.subr.bf16.mxu0 0
    %7229 = vmatpush1.bf16.msra.mxu0 0
    %7230 = vmatprep.subr.bf16.mxu0 0
    %7231 = vmatpush1.bf16.msra.mxu0 0
    %7232 = vmatprep.subr.bf16.mxu0 0
    %7233 = vmatpush1.bf16.msra.mxu0 0
    %7234 = vmatprep.subr.bf16.mxu0 0
    %7235 = vmatpush1.bf16.msra.mxu0 0
    %7236 = vmatprep.subr.bf16.mxu0 0
    %7237 = vmatpush1.bf16.msra.mxu0 0
    %7238 = vmatprep.subr.bf16.mxu0 0
    %7239 = vmatpush1.bf16.msra.mxu0 0
    %7240 = vmatprep.subr.bf16.mxu0 0
    %7241 = vmatpush1.bf16.msra.mxu0 0
    %7242 = vmatprep.subr.bf16.mxu0 0
    %7243 = vmatpush1.bf16.msra.mxu0 0
    %7244 = vmatprep.subr.bf16.mxu0 0
    %7245 = vmatpush1.bf16.msra.mxu0 0
    %7246 = vmatprep.subr.bf16.mxu0 0
    %7247 = vmatpush1.bf16.msra.mxu0 0
    %7248 = vmatprep.subr.bf16.mxu0 0
    %7249 = vmatpush1.bf16.msra.mxu0 0
    %7250 = vmatprep.subr.bf16.mxu0 0
    %7251 = vmatpush1.bf16.msra.mxu0 0
    %7252 = vmatprep.subr.bf16.mxu0 0
    %7253 = vmatpush1.bf16.msra.mxu0 0
    %7254 = vmatprep.mubr.bf16.mxu0 0
    %7255 = vmatmul.mubr.bf16.gmra.mrb[0].mxu0 %v7220
    %v7256 = vpop.f32.mrb[0].mxu0
    %v7257 = vadd.f32 0.0, %v7256
    %v7258 = vpop.f32.mrb[0].mxu0
    %v7259 = vpop.f32.mrb[0].mxu0
    %v7260 = vadd.f32 0.0, %v7259
    %v7261 = vpop.f32.mrb[0].mxu0
    %7262 = vdwg.mxu0
    %v7263 = vpack.c.bf16 %v7257, %v7257
    %v7264 = vpack.c.bf16 %v7260, %v7260
    %v7266 = vsel %vm46, %v7263, 0
    %7268 = vmatprep.subr.bf16.mxu0 0
    %7269 = vmatpush1.bf16.xpose.msra.mxu0 %v3091
    %7270 = vmatprep.subr.bf16.mxu0 0
    %7271 = vmatpush1.bf16.xpose.msra.mxu0 %v3094
    %7272 = vmatprep.subr.bf16.mxu0 0
    %7273 = vmatpush1.bf16.xpose.msra.mxu0 %v3097
    %7274 = vmatprep.subr.bf16.mxu0 0
    %7275 = vmatpush1.bf16.xpose.msra.mxu0 %v3100
    %7276 = vmatprep.subr.bf16.mxu0 0
    %7277 = vmatpush1.bf16.xpose.msra.mxu0 %v3103
    %7278 = vmatprep.subr.bf16.mxu0 0
    %7279 = vmatpush1.bf16.xpose.msra.mxu0 %v3106
    %7280 = vmatprep.subr.bf16.mxu0 0
    %7281 = vmatpush1.bf16.xpose.msra.mxu0 %v3109
    %7282 = vmatprep.subr.bf16.mxu0 0
    %7283 = vmatpush1.bf16.xpose.msra.mxu0 %v3112
    %7284 = vmatprep.subr.bf16.mxu0 0
    %7285 = vmatpush1.bf16.xpose.msra.mxu0 0
    %7286 = vmatprep.subr.bf16.mxu0 0
    %7287 = vmatpush1.bf16.xpose.msra.mxu0 0
    %7288 = vmatprep.subr.bf16.mxu0 0
    %7289 = vmatpush1.bf16.xpose.msra.mxu0 0
    %7290 = vmatprep.subr.bf16.mxu0 0
    %7291 = vmatpush1.bf16.xpose.msra.mxu0 0
    %7292 = vmatprep.subr.bf16.mxu0 0
    %7293 = vmatpush1.bf16.xpose.msra.mxu0 0
    %7294 = vmatprep.subr.bf16.mxu0 0
    %7295 = vmatpush1.bf16.xpose.msra.mxu0 0
    %7296 = vmatprep.subr.bf16.mxu0 0
    %7297 = vmatpush1.bf16.xpose.msra.mxu0 0
    %7298 = vmatprep.subr.bf16.mxu0 0
    %7299 = vmatpush1.bf16.xpose.msra.mxu0 0
    %7300 = vmatprep.mubr.bf16.mxu0 0
    %7301 = vmatmul.mubr.bf16.gmra.mrb[0].mxu0 %v7266
    %v7302 = vpop.f32.mrb[0].mxu0
    %v7303 = vadd.f32 0.0, %v7302
    %v7304 = vpop.f32.mrb[0].mxu0
    %v7305 = vpop.f32.mrb[0].mxu0
    %v7306 = vpop.f32.mrb[0].mxu0
    %7307 = vdwg.mxu0
    %v7309 = vsel %vm46, %v7264, 0
    %7311 = vmatprep.subr.bf16.mxu0 0
    %7312 = vmatpush1.bf16.xpose.msra.mxu0 %v3158
    %7313 = vmatprep.subr.bf16.mxu0 0
    %7314 = vmatpush1.bf16.xpose.msra.mxu0 %v3161
    %7315 = vmatprep.subr.bf16.mxu0 0
    %7316 = vmatpush1.bf16.xpose.msra.mxu0 %v3164
    %7317 = vmatprep.subr.bf16.mxu0 0
    %7318 = vmatpush1.bf16.xpose.msra.mxu0 %v3167
    %7319 = vmatprep.subr.bf16.mxu0 0
    %7320 = vmatpush1.bf16.xpose.msra.mxu0 %v3170
    %7321 = vmatprep.subr.bf16.mxu0 0
    %7322 = vmatpush1.bf16.xpose.msra.mxu0 %v3173
    %7323 = vmatprep.subr.bf16.mxu0 0
    %7324 = vmatpush1.bf16.xpose.msra.mxu0 %v3176
    %7325 = vmatprep.subr.bf16.mxu0 0
    %7326 = vmatpush1.bf16.xpose.msra.mxu0 %v3179
    %7327 = vmatprep.subr.bf16.mxu0 0
    %7328 = vmatpush1.bf16.xpose.msra.mxu0 0
    %7329 = vmatprep.subr.bf16.mxu0 0
    %7330 = vmatpush1.bf16.xpose.msra.mxu0 0
    %7331 = vmatprep.subr.bf16.mxu0 0
    %7332 = vmatpush1.bf16.xpose.msra.mxu0 0
    %7333 = vmatprep.subr.bf16.mxu0 0
    %7334 = vmatpush1.bf16.xpose.msra.mxu0 0
    %7335 = vmatprep.subr.bf16.mxu0 0
    %7336 = vmatpush1.bf16.xpose.msra.mxu0 0
    %7337 = vmatprep.subr.bf16.mxu0 0
    %7338 = vmatpush1.bf16.xpose.msra.mxu0 0
    %7339 = vmatprep.subr.bf16.mxu0 0
    %7340 = vmatpush1.bf16.xpose.msra.mxu0 0
    %7341 = vmatprep.subr.bf16.mxu0 0
    %7342 = vmatpush1.bf16.xpose.msra.mxu0 0
    %7343 = vmatprep.mubr.bf16.mxu0 0
    %7344 = vmatmul.mubr.bf16.gmra.mrb[0].mxu0 %v7309
    %v7345 = vpop.f32.mrb[0].mxu0
    %v7346 = vadd.f32 0.0, %v7345
    %v7347 = vpop.f32.mrb[0].mxu0
    %v7348 = vpop.f32.mrb[0].mxu0
    %v7349 = vpop.f32.mrb[0].mxu0
    %7350 = vdwg.mxu0
    %7351 = vmax.xlane.f32.xlu0 %v7303
    %v7352 = vpop.xlane.xlu0 %7351
    %7353 = vmax.xlane.f32.xlu0 %v7346
    %v7354 = vpop.xlane.xlu0 %7353
    %v7355 = vsub.f32 %v7303, %v7352
    %v7356 = vsub.f32 %v7346, %v7354
    %v7357 = vmul.f32 %v7355, 1.442695
    %v7358 = vpow.pop %v7357
    %v7359 = vmul.f32 %v7356, 1.442695
    %v7360 = vpow.pop %v7359
    %v7361 = vmul.f32 %v7358, %v1163
    %v7362 = vmul.f32 %v7360, %v1163
    %7363 = vadd.xlane.f32.xlu0 %v7361
    %v7364 = vpop.xlane.xlu0 %7363
    %7365 = vadd.xlane.f32.xlu0 %v7362
    %v7366 = vpop.xlane.xlu0 %7365
    %v7367 = vrcp.pop %v7364
    %v7368 = vrcp.pop %v7366
    %v7369 = vmul.f32 %v7361, %v7367
    %v7370 = vmul.f32 %v7362, %v7368
    %v7371 = vpack.c.bf16 %v7369, %v7369
    %v7372 = vpack.c.bf16 %v7370, %v7370
    %7373 = vmatprep.subr.bf16.mxu0 0
    %7374 = vmatpush1.bf16.msra.mxu0 %v1127
    %7375 = vmatprep.subr.bf16.mxu0 0
    %7376 = vmatpush1.bf16.msra.mxu0 %v1128
    %7377 = vmatprep.subr.bf16.mxu0 0
    %7378 = vmatpush1.bf16.msra.mxu0 %v1129
    %7379 = vmatprep.subr.bf16.mxu0 0
    %7380 = vmatpush1.bf16.msra.mxu0 %v1130
    %7381 = vmatprep.subr.bf16.mxu0 0
    %7382 = vmatpush1.bf16.msra.mxu0 %v1131
    %7383 = vmatprep.subr.bf16.mxu0 0
    %7384 = vmatpush1.bf16.msra.mxu0 %v1132
    %7385 = vmatprep.subr.bf16.mxu0 0
    %7386 = vmatpush1.bf16.msra.mxu0 %v1133
    %7387 = vmatprep.subr.bf16.mxu0 0
    %7388 = vmatpush1.bf16.msra.mxu0 %v1134
    %7389 = vmatprep.subr.bf16.mxu0 0
    %7390 = vmatpush1.bf16.msra.mxu0 0
    %7391 = vmatprep.subr.bf16.mxu0 0
    %7392 = vmatpush1.bf16.msra.mxu0 0
    %7393 = vmatprep.subr.bf16.mxu0 0
    %7394 = vmatpush1.bf16.msra.mxu0 0
    %7395 = vmatprep.subr.bf16.mxu0 0
    %7396 = vmatpush1.bf16.msra.mxu0 0
    %7397 = vmatprep.subr.bf16.mxu0 0
    %7398 = vmatpush1.bf16.msra.mxu0 0
    %7399 = vmatprep.subr.bf16.mxu0 0
    %7400 = vmatpush1.bf16.msra.mxu0 0
    %7401 = vmatprep.subr.bf16.mxu0 0
    %7402 = vmatpush1.bf16.msra.mxu0 0
    %7403 = vmatprep.subr.bf16.mxu0 0
    %7404 = vmatpush1.bf16.msra.mxu0 0
    %7405 = vmatprep.mubr.bf16.mxu0 0
    %7406 = vmatmul.mubr.bf16.gmra.mrb[0].mxu0 %v7371
    %v7407 = vpop.f32.mrb[0].mxu0
    %v7408 = vadd.f32 0.0, %v7407
    %v7409 = vpop.f32.mrb[0].mxu0
    %v7410 = vpop.f32.mrb[0].mxu0
    %v7411 = vpop.f32.mrb[0].mxu0
    %7412 = vdwg.mxu0
    %7413 = vmatprep.subr.bf16.mxu0 0
    %7414 = vmatpush1.bf16.msra.mxu0 %v1135
    %7415 = vmatprep.subr.bf16.mxu0 0
    %7416 = vmatpush1.bf16.msra.mxu0 %v1136
    %7417 = vmatprep.subr.bf16.mxu0 0
    %7418 = vmatpush1.bf16.msra.mxu0 %v1137
    %7419 = vmatprep.subr.bf16.mxu0 0
    %7420 = vmatpush1.bf16.msra.mxu0 %v1138
    %7421 = vmatprep.subr.bf16.mxu0 0
    %7422 = vmatpush1.bf16.msra.mxu0 %v1139
    %7423 = vmatprep.subr.bf16.mxu0 0
    %7424 = vmatpush1.bf16.msra.mxu0 %v1140
    %7425 = vmatprep.subr.bf16.mxu0 0
    %7426 = vmatpush1.bf16.msra.mxu0 %v1141
    %7427 = vmatprep.subr.bf16.mxu0 0
    %7428 = vmatpush1.bf16.msra.mxu0 %v1142
    %7429 = vmatprep.subr.bf16.mxu0 0
    %7430 = vmatpush1.bf16.msra.mxu0 0
    %7431 = vmatprep.subr.bf16.mxu0 0
    %7432 = vmatpush1.bf16.msra.mxu0 0
    %7433 = vmatprep.subr.bf16.mxu0 0
    %7434 = vmatpush1.bf16.msra.mxu0 0
    %7435 = vmatprep.subr.bf16.mxu0 0
    %7436 = vmatpush1.bf16.msra.mxu0 0
    %7437 = vmatprep.subr.bf16.mxu0 0
    %7438 = vmatpush1.bf16.msra.mxu0 0
    %7439 = vmatprep.subr.bf16.mxu0 0
    %7440 = vmatpush1.bf16.msra.mxu0 0
    %7441 = vmatprep.subr.bf16.mxu0 0
    %7442 = vmatpush1.bf16.msra.mxu0 0
    %7443 = vmatprep.subr.bf16.mxu0 0
    %7444 = vmatpush1.bf16.msra.mxu0 0
    %7445 = vmatprep.mubr.bf16.mxu0 0
    %7446 = vmatmul.mubr.bf16.gmra.mrb[0].mxu0 %v7372
    %v7447 = vpop.f32.mrb[0].mxu0
    %v7448 = vadd.f32 0.0, %v7447
    %v7449 = vpop.f32.mrb[0].mxu0
    %v7450 = vpop.f32.mrb[0].mxu0
    %v7451 = vpop.f32.mrb[0].mxu0
    %7452 = vdwg.mxu0
    %v7453 = vpack.c.bf16 %v7408, %v7408
    %v7454 = vpack.c.bf16 %v7448, %v7448
    %s7455 = scalar_lea.vmem %s8, 416
    %v7456 = vld [vmem:[%s7455] sm:$0xf]
    %v7457 = vld [vmem:[%s7455 + $0x4] sm:$0xf]
    %v7458 = vld [vmem:[%s7455 + $0x8] sm:$0xf]
    %v7459 = vld [vmem:[%s7455 + $0xc] sm:$0xf]
    %v7460 = vld [vmem:[%s7455 + $0x10] sm:$0xf]
    %v7461 = vld [vmem:[%s7455 + $0x14] sm:$0xf]
    %v7462 = vld [vmem:[%s7455 + $0x18] sm:$0xf]
    %v7463 = vld [vmem:[%s7455 + $0x1c] sm:$0xf]
    %v7466 = vunpack.c.l.b16 %v7453
    %v7467 = vunpack.c.l.b16 %v7454
    %v7468 = vpack.c.b16 %v7467, %v7466
    %v7477 = vunpack.c.l.b16 %v7456
    %v7478 = vunpack.c.l.b16 %v7457
    %v7479 = vunpack.c.l.b16 %v7458
    %v7480 = vunpack.c.l.b16 %v7459
    %v7481 = vunpack.c.l.b16 %v7460
    %v7482 = vunpack.c.l.b16 %v7461
    %v7483 = vunpack.c.l.b16 %v7462
    %v7484 = vunpack.c.l.b16 %v7463
    %v7485 = vpack.c.b16 %v7478, %v7477
    %v7486 = vpack.c.b16 %v7480, %v7479
    %v7487 = vpack.c.b16 %v7482, %v7481
    %v7488 = vpack.c.b16 %v7484, %v7483
    %v7494 = vsel %vm46, %v7468, 0
    %7496 = vmatprep.subr.bf16.mxu0 0
    %7497 = vmatpush1.bf16.msra.mxu0 %v7485
    %7498 = vmatprep.subr.bf16.mxu0 0
    %7499 = vmatpush1.bf16.msra.mxu0 %v7486
    %7500 = vmatprep.subr.bf16.mxu0 0
    %7501 = vmatpush1.bf16.msra.mxu0 %v7487
    %7502 = vmatprep.subr.bf16.mxu0 0
    %7503 = vmatpush1.bf16.msra.mxu0 %v7488
    %7504 = vmatprep.subr.bf16.mxu0 0
    %7505 = vmatpush1.bf16.msra.mxu0 0
    %7506 = vmatprep.subr.bf16.mxu0 0
    %7507 = vmatpush1.bf16.msra.mxu0 0
    %7508 = vmatprep.subr.bf16.mxu0 0
    %7509 = vmatpush1.bf16.msra.mxu0 0
    %7510 = vmatprep.subr.bf16.mxu0 0
    %7511 = vmatpush1.bf16.msra.mxu0 0
    %7512 = vmatprep.subr.bf16.mxu0 0
    %7513 = vmatpush1.bf16.msra.mxu0 0
    %7514 = vmatprep.subr.bf16.mxu0 0
    %7515 = vmatpush1.bf16.msra.mxu0 0
    %7516 = vmatprep.subr.bf16.mxu0 0
    %7517 = vmatpush1.bf16.msra.mxu0 0
    %7518 = vmatprep.subr.bf16.mxu0 0
    %7519 = vmatpush1.bf16.msra.mxu0 0
    %7520 = vmatprep.subr.bf16.mxu0 0
    %7521 = vmatpush1.bf16.msra.mxu0 0
    %7522 = vmatprep.subr.bf16.mxu0 0
    %7523 = vmatpush1.bf16.msra.mxu0 0
    %7524 = vmatprep.subr.bf16.mxu0 0
    %7525 = vmatpush1.bf16.msra.mxu0 0
    %7526 = vmatprep.subr.bf16.mxu0 0
    %7527 = vmatpush1.bf16.msra.mxu0 0
    %7528 = vmatprep.mubr.bf16.mxu0 0
    %7529 = vmatmul.mubr.bf16.gmra.mrb[0].mxu0 %v7494
    %v7530 = vpop.f32.mrb[0].mxu0
    %v7531 = vadd.f32 0.0, %v7530
    %v7532 = vpop.f32.mrb[0].mxu0
    %v7533 = vpop.f32.mrb[0].mxu0
    %v7534 = vadd.f32 0.0, %v7533
    %v7535 = vpop.f32.mrb[0].mxu0
    %7536 = vdwg.mxu0
    %v7539 = vunpack.c.l.b16 %v7110
    %v7540 = vunpack.c.l.b16 %v7111
    %v7541 = vpack.c.b16 %v7540, %v7539
    %v7550 = vunpack.c.l.b16 %v7113
    %v7551 = vunpack.c.l.b16 %v7114
    %v7552 = vunpack.c.l.b16 %v7115
    %v7553 = vunpack.c.l.b16 %v7116
    %v7554 = vunpack.c.l.b16 %v7117
    %v7555 = vunpack.c.l.b16 %v7118
    %v7556 = vunpack.c.l.b16 %v7119
    %v7557 = vunpack.c.l.b16 %v7120
    %v7558 = vpack.c.b16 %v7551, %v7550
    %v7559 = vpack.c.b16 %v7553, %v7552
    %v7560 = vpack.c.b16 %v7555, %v7554
    %v7561 = vpack.c.b16 %v7557, %v7556
    %v7567 = vsel %vm46, %v7541, 0
    %7569 = vmatprep.subr.bf16.mxu0 0
    %7570 = vmatpush1.bf16.msra.mxu0 %v7558
    %7571 = vmatprep.subr.bf16.mxu0 0
    %7572 = vmatpush1.bf16.msra.mxu0 %v7559
    %7573 = vmatprep.subr.bf16.mxu0 0
    %7574 = vmatpush1.bf16.msra.mxu0 %v7560
    %7575 = vmatprep.subr.bf16.mxu0 0
    %7576 = vmatpush1.bf16.msra.mxu0 %v7561
    %7577 = vmatprep.subr.bf16.mxu0 0
    %7578 = vmatpush1.bf16.msra.mxu0 0
    %7579 = vmatprep.subr.bf16.mxu0 0
    %7580 = vmatpush1.bf16.msra.mxu0 0
    %7581 = vmatprep.subr.bf16.mxu0 0
    %7582 = vmatpush1.bf16.msra.mxu0 0
    %7583 = vmatprep.subr.bf16.mxu0 0
    %7584 = vmatpush1.bf16.msra.mxu0 0
    %7585 = vmatprep.subr.bf16.mxu0 0
    %7586 = vmatpush1.bf16.msra.mxu0 0
    %7587 = vmatprep.subr.bf16.mxu0 0
    %7588 = vmatpush1.bf16.msra.mxu0 0
    %7589 = vmatprep.subr.bf16.mxu0 0
    %7590 = vmatpush1.bf16.msra.mxu0 0
    %7591 = vmatprep.subr.bf16.mxu0 0
    %7592 = vmatpush1.bf16.msra.mxu0 0
    %7593 = vmatprep.subr.bf16.mxu0 0
    %7594 = vmatpush1.bf16.msra.mxu0 0
    %7595 = vmatprep.subr.bf16.mxu0 0
    %7596 = vmatpush1.bf16.msra.mxu0 0
    %7597 = vmatprep.subr.bf16.mxu0 0
    %7598 = vmatpush1.bf16.msra.mxu0 0
    %7599 = vmatprep.subr.bf16.mxu0 0
    %7600 = vmatpush1.bf16.msra.mxu0 0
    %7601 = vmatprep.mubr.bf16.mxu0 0
    %7602 = vmatmul.mubr.bf16.gmra.mrb[0].mxu0 %v7567
    %v7603 = vpop.f32.mrb[0].mxu0
    %v7604 = vadd.f32 %v7531, %v7603
    %v7605 = vpop.f32.mrb[0].mxu0
    %v7606 = vpop.f32.mrb[0].mxu0
    %v7607 = vadd.f32 %v7534, %v7606
    %v7608 = vpop.f32.mrb[0].mxu0
    %7609 = vdwg.mxu0
    %s7610 = scalar_lea.vmem %s6, 448
    %v7611 = vld [vmem:[%s7610] sm:$0xf]
    %v7612 = vld [vmem:[%s7610 + $0x4] sm:$0xf]
    %v7613 = vld [vmem:[%s7610 + $0x8] sm:$0xf]
    %v7614 = vld [vmem:[%s7610 + $0xc] sm:$0xf]
    %v7615 = vld [vmem:[%s7610 + $0x10] sm:$0xf]
    %v7616 = vld [vmem:[%s7610 + $0x14] sm:$0xf]
    %v7617 = vld [vmem:[%s7610 + $0x18] sm:$0xf]
    %v7618 = vld [vmem:[%s7610 + $0x1c] sm:$0xf]
    %s7619 = scalar_lea.vmem %s11, 14
    %v7620 = vld [vmem:[%s7619] sm:$0x1]
    %v7622 = vlaneseq
    %v7623 = vshrl.u32 %v7622, 7
    %v7624 = vsub.s32 0, %v7623
    %v7625 = vrot.slane %v7620, %v7624
    %v7635 = vunpack.c.l.b16 %v7611
    %v7636 = vunpack.c.l.b16 %v7612
    %v7637 = vunpack.c.l.b16 %v7613
    %v7638 = vunpack.c.l.b16 %v7614
    %v7639 = vunpack.c.l.b16 %v7615
    %v7640 = vunpack.c.l.b16 %v7616
    %v7641 = vunpack.c.l.b16 %v7617
    %v7642 = vunpack.c.l.b16 %v7618
    %v7643 = vpack.c.b16 %v7636, %v7635
    %v7644 = vpack.c.b16 %v7638, %v7637
    %v7645 = vpack.c.b16 %v7640, %v7639
    %v7646 = vpack.c.b16 %v7642, %v7641
    %7651 = vmatprep.subr.bf16.mxu0 0
    %7652 = vmatpush1.bf16.msra.mxu0 %v7643
    %7653 = vmatprep.subr.bf16.mxu0 0
    %7654 = vmatpush1.bf16.msra.mxu0 %v7644
    %7655 = vmatprep.subr.bf16.mxu0 0
    %7656 = vmatpush1.bf16.msra.mxu0 %v7645
    %7657 = vmatprep.subr.bf16.mxu0 0
    %7658 = vmatpush1.bf16.msra.mxu0 %v7646
    %7659 = vmatprep.subr.bf16.mxu0 0
    %7660 = vmatpush1.bf16.msra.mxu0 0
    %7661 = vmatprep.subr.bf16.mxu0 0
    %7662 = vmatpush1.bf16.msra.mxu0 0
    %7663 = vmatprep.subr.bf16.mxu0 0
    %7664 = vmatpush1.bf16.msra.mxu0 0
    %7665 = vmatprep.subr.bf16.mxu0 0
    %7666 = vmatpush1.bf16.msra.mxu0 0
    %7667 = vmatprep.subr.bf16.mxu0 0
    %7668 = vmatpush1.bf16.msra.mxu0 0
    %7669 = vmatprep.subr.bf16.mxu0 0
    %7670 = vmatpush1.bf16.msra.mxu0 0
    %7671 = vmatprep.subr.bf16.mxu0 0
    %7672 = vmatpush1.bf16.msra.mxu0 0
    %7673 = vmatprep.subr.bf16.mxu0 0
    %7674 = vmatpush1.bf16.msra.mxu0 0
    %7675 = vmatprep.subr.bf16.mxu0 0
    %7676 = vmatpush1.bf16.msra.mxu0 0
    %7677 = vmatprep.subr.bf16.mxu0 0
    %7678 = vmatpush1.bf16.msra.mxu0 0
    %7679 = vmatprep.subr.bf16.mxu0 0
    %7680 = vmatpush1.bf16.msra.mxu0 0
    %7681 = vmatprep.subr.bf16.mxu0 0
    %7682 = vmatpush1.bf16.msra.mxu0 0
    %7683 = vmatprep.mubr.bf16.mxu0 0
    %7684 = vmatmul.mubr.bf16.gmra.mrb[0].mxu0 %v6817
    %v7685 = vpop.f32.mrb[0].mxu0
    %v7686 = vadd.f32 %v7625, %v7685
    %v7687 = vpop.f32.mrb[0].mxu0
    %v7688 = vpop.f32.mrb[0].mxu0
    %v7689 = vadd.f32 %v7625, %v7688
    %v7690 = vpop.f32.mrb[0].mxu0
    %7691 = vdwg.mxu0
    %v7692 = vpack.c.bf16 %v7686, %v7686
    %v7693 = vpack.c.bf16 %v7689, %v7689
    %s7694 = scalar_lea.vmem %s7, 112
    %v7695 = vld [vmem:[%s7694] sm:$0xf]
    %v7696 = vld [vmem:[%s7694 + $0x4] sm:$0xf]
    %v7699 = vunpack.c.l.b16 %v7692
    %v7700 = vunpack.c.l.b16 %v7693
    %v7701 = vpack.c.b16 %v7700, %v7699
    %v7704 = vunpack.c.l.b16 %v7695
    %v7705 = vunpack.c.l.b16 %v7696
    %v7706 = vpack.c.b16 %v7705, %v7704
    %v7709 = vsel %vm94, %v7701, 0
    %7711 = vmatprep.subr.bf16.mxu0 0
    %7712 = vmatpush1.bf16.msra.mxu0 %v7706
    %7713 = vmatprep.subr.bf16.mxu0 0
    %7714 = vmatpush1.bf16.msra.mxu0 0
    %7715 = vmatprep.subr.bf16.mxu0 0
    %7716 = vmatpush1.bf16.msra.mxu0 0
    %7717 = vmatprep.subr.bf16.mxu0 0
    %7718 = vmatpush1.bf16.msra.mxu0 0
    %7719 = vmatprep.subr.bf16.mxu0 0
    %7720 = vmatpush1.bf16.msra.mxu0 0
    %7721 = vmatprep.subr.bf16.mxu0 0
    %7722 = vmatpush1.bf16.msra.mxu0 0
    %7723 = vmatprep.subr.bf16.mxu0 0
    %7724 = vmatpush1.bf16.msra.mxu0 0
    %7725 = vmatprep.subr.bf16.mxu0 0
    %7726 = vmatpush1.bf16.msra.mxu0 0
    %7727 = vmatprep.subr.bf16.mxu0 0
    %7728 = vmatpush1.bf16.msra.mxu0 0
    %7729 = vmatprep.subr.bf16.mxu0 0
    %7730 = vmatpush1.bf16.msra.mxu0 0
    %7731 = vmatprep.subr.bf16.mxu0 0
    %7732 = vmatpush1.bf16.msra.mxu0 0
    %7733 = vmatprep.subr.bf16.mxu0 0
    %7734 = vmatpush1.bf16.msra.mxu0 0
    %7735 = vmatprep.subr.bf16.mxu0 0
    %7736 = vmatpush1.bf16.msra.mxu0 0
    %7737 = vmatprep.subr.bf16.mxu0 0
    %7738 = vmatpush1.bf16.msra.mxu0 0
    %7739 = vmatprep.subr.bf16.mxu0 0
    %7740 = vmatpush1.bf16.msra.mxu0 0
    %7741 = vmatprep.subr.bf16.mxu0 0
    %7742 = vmatpush1.bf16.msra.mxu0 0
    %7743 = vmatprep.mubr.bf16.mxu0 0
    %7744 = vmatmul.mubr.bf16.gmra.mrb[0].mxu0 %v7709
    %v7745 = vpop.f32.mrb[0].mxu0
    %v7746 = vadd.f32 0.0, %v7745
    %v7747 = vpop.f32.mrb[0].mxu0
    %v7748 = vpop.f32.mrb[0].mxu0
    %v7749 = vadd.f32 0.0, %v7748
    %v7750 = vpop.f32.mrb[0].mxu0
    %7751 = vdwg.mxu0
    %v7752 = vpack.c.bf16 %v7746, %v7746
    %v7753 = vpack.c.bf16 %v7749, %v7749
    %v7755 = vsel %vm46, %v7752, 0
    %7757 = vmatprep.subr.bf16.mxu0 0
    %7758 = vmatpush1.bf16.xpose.msra.mxu0 %v3091
    %7759 = vmatprep.subr.bf16.mxu0 0
    %7760 = vmatpush1.bf16.xpose.msra.mxu0 %v3094
    %7761 = vmatprep.subr.bf16.mxu0 0
    %7762 = vmatpush1.bf16.xpose.msra.mxu0 %v3097
    %7763 = vmatprep.subr.bf16.mxu0 0
    %7764 = vmatpush1.bf16.xpose.msra.mxu0 %v3100
    %7765 = vmatprep.subr.bf16.mxu0 0
    %7766 = vmatpush1.bf16.xpose.msra.mxu0 %v3103
    %7767 = vmatprep.subr.bf16.mxu0 0
    %7768 = vmatpush1.bf16.xpose.msra.mxu0 %v3106
    %7769 = vmatprep.subr.bf16.mxu0 0
    %7770 = vmatpush1.bf16.xpose.msra.mxu0 %v3109
    %7771 = vmatprep.subr.bf16.mxu0 0
    %7772 = vmatpush1.bf16.xpose.msra.mxu0 %v3112
    %7773 = vmatprep.subr.bf16.mxu0 0
    %7774 = vmatpush1.bf16.xpose.msra.mxu0 0
    %7775 = vmatprep.subr.bf16.mxu0 0
    %7776 = vmatpush1.bf16.xpose.msra.mxu0 0
    %7777 = vmatprep.subr.bf16.mxu0 0
    %7778 = vmatpush1.bf16.xpose.msra.mxu0 0
    %7779 = vmatprep.subr.bf16.mxu0 0
    %7780 = vmatpush1.bf16.xpose.msra.mxu0 0
    %7781 = vmatprep.subr.bf16.mxu0 0
    %7782 = vmatpush1.bf16.xpose.msra.mxu0 0
    %7783 = vmatprep.subr.bf16.mxu0 0
    %7784 = vmatpush1.bf16.xpose.msra.mxu0 0
    %7785 = vmatprep.subr.bf16.mxu0 0
    %7786 = vmatpush1.bf16.xpose.msra.mxu0 0
    %7787 = vmatprep.subr.bf16.mxu0 0
    %7788 = vmatpush1.bf16.xpose.msra.mxu0 0
    %7789 = vmatprep.mubr.bf16.mxu0 0
    %7790 = vmatmul.mubr.bf16.gmra.mrb[0].mxu0 %v7755
    %v7791 = vpop.f32.mrb[0].mxu0
    %v7792 = vadd.f32 0.0, %v7791
    %v7793 = vpop.f32.mrb[0].mxu0
    %v7794 = vpop.f32.mrb[0].mxu0
    %v7795 = vpop.f32.mrb[0].mxu0
    %7796 = vdwg.mxu0
    %v7798 = vsel %vm46, %v7753, 0
    %7800 = vmatprep.subr.bf16.mxu0 0
    %7801 = vmatpush1.bf16.xpose.msra.mxu0 %v3158
    %7802 = vmatprep.subr.bf16.mxu0 0
    %7803 = vmatpush1.bf16.xpose.msra.mxu0 %v3161
    %7804 = vmatprep.subr.bf16.mxu0 0
    %7805 = vmatpush1.bf16.xpose.msra.mxu0 %v3164
    %7806 = vmatprep.subr.bf16.mxu0 0
    %7807 = vmatpush1.bf16.xpose.msra.mxu0 %v3167
    %7808 = vmatprep.subr.bf16.mxu0 0
    %7809 = vmatpush1.bf16.xpose.msra.mxu0 %v3170
    %7810 = vmatprep.subr.bf16.mxu0 0
    %7811 = vmatpush1.bf16.xpose.msra.mxu0 %v3173
    %7812 = vmatprep.subr.bf16.mxu0 0
    %7813 = vmatpush1.bf16.xpose.msra.mxu0 %v3176
    %7814 = vmatprep.subr.bf16.mxu0 0
    %7815 = vmatpush1.bf16.xpose.msra.mxu0 %v3179
    %7816 = vmatprep.subr.bf16.mxu0 0
    %7817 = vmatpush1.bf16.xpose.msra.mxu0 0
    %7818 = vmatprep.subr.bf16.mxu0 0
    %7819 = vmatpush1.bf16.xpose.msra.mxu0 0
    %7820 = vmatprep.subr.bf16.mxu0 0
    %7821 = vmatpush1.bf16.xpose.msra.mxu0 0
    %7822 = vmatprep.subr.bf16.mxu0 0
    %7823 = vmatpush1.bf16.xpose.msra.mxu0 0
    %7824 = vmatprep.subr.bf16.mxu0 0
    %7825 = vmatpush1.bf16.xpose.msra.mxu0 0
    %7826 = vmatprep.subr.bf16.mxu0 0
    %7827 = vmatpush1.bf16.xpose.msra.mxu0 0
    %7828 = vmatprep.subr.bf16.mxu0 0
    %7829 = vmatpush1.bf16.xpose.msra.mxu0 0
    %7830 = vmatprep.subr.bf16.mxu0 0
    %7831 = vmatpush1.bf16.xpose.msra.mxu0 0
    %7832 = vmatprep.mubr.bf16.mxu0 0
    %7833 = vmatmul.mubr.bf16.gmra.mrb[0].mxu0 %v7798
    %v7834 = vpop.f32.mrb[0].mxu0
    %v7835 = vadd.f32 0.0, %v7834
    %v7836 = vpop.f32.mrb[0].mxu0
    %v7837 = vpop.f32.mrb[0].mxu0
    %v7838 = vpop.f32.mrb[0].mxu0
    %7839 = vdwg.mxu0
    %7840 = vmax.xlane.f32.xlu0 %v7792
    %v7841 = vpop.xlane.xlu0 %7840
    %7842 = vmax.xlane.f32.xlu0 %v7835
    %v7843 = vpop.xlane.xlu0 %7842
    %v7844 = vsub.f32 %v7792, %v7841
    %v7845 = vsub.f32 %v7835, %v7843
    %v7846 = vmul.f32 %v7844, 1.442695
    %v7847 = vpow.pop %v7846
    %v7848 = vmul.f32 %v7845, 1.442695
    %v7849 = vpow.pop %v7848
    %v7850 = vmul.f32 %v7847, %v1163
    %v7851 = vmul.f32 %v7849, %v1163
    %7852 = vadd.xlane.f32.xlu0 %v7850
    %v7853 = vpop.xlane.xlu0 %7852
    %7854 = vadd.xlane.f32.xlu0 %v7851
    %v7855 = vpop.xlane.xlu0 %7854
    %v7856 = vrcp.pop %v7853
    %v7857 = vrcp.pop %v7855
    %v7858 = vmul.f32 %v7850, %v7856
    %v7859 = vmul.f32 %v7851, %v7857
    %v7860 = vpack.c.bf16 %v7858, %v7858
    %v7861 = vpack.c.bf16 %v7859, %v7859
    %7862 = vmatprep.subr.bf16.mxu0 0
    %7863 = vmatpush1.bf16.msra.mxu0 %v1127
    %7864 = vmatprep.subr.bf16.mxu0 0
    %7865 = vmatpush1.bf16.msra.mxu0 %v1128
    %7866 = vmatprep.subr.bf16.mxu0 0
    %7867 = vmatpush1.bf16.msra.mxu0 %v1129
    %7868 = vmatprep.subr.bf16.mxu0 0
    %7869 = vmatpush1.bf16.msra.mxu0 %v1130
    %7870 = vmatprep.subr.bf16.mxu0 0
    %7871 = vmatpush1.bf16.msra.mxu0 %v1131
    %7872 = vmatprep.subr.bf16.mxu0 0
    %7873 = vmatpush1.bf16.msra.mxu0 %v1132
    %7874 = vmatprep.subr.bf16.mxu0 0
    %7875 = vmatpush1.bf16.msra.mxu0 %v1133
    %7876 = vmatprep.subr.bf16.mxu0 0
    %7877 = vmatpush1.bf16.msra.mxu0 %v1134
    %7878 = vmatprep.subr.bf16.mxu0 0
    %7879 = vmatpush1.bf16.msra.mxu0 0
    %7880 = vmatprep.subr.bf16.mxu0 0
    %7881 = vmatpush1.bf16.msra.mxu0 0
    %7882 = vmatprep.subr.bf16.mxu0 0
    %7883 = vmatpush1.bf16.msra.mxu0 0
    %7884 = vmatprep.subr.bf16.mxu0 0
    %7885 = vmatpush1.bf16.msra.mxu0 0
    %7886 = vmatprep.subr.bf16.mxu0 0
    %7887 = vmatpush1.bf16.msra.mxu0 0
    %7888 = vmatprep.subr.bf16.mxu0 0
    %7889 = vmatpush1.bf16.msra.mxu0 0
    %7890 = vmatprep.subr.bf16.mxu0 0
    %7891 = vmatpush1.bf16.msra.mxu0 0
    %7892 = vmatprep.subr.bf16.mxu0 0
    %7893 = vmatpush1.bf16.msra.mxu0 0
    %7894 = vmatprep.mubr.bf16.mxu0 0
    %7895 = vmatmul.mubr.bf16.gmra.mrb[0].mxu0 %v7860
    %v7896 = vpop.f32.mrb[0].mxu0
    %v7897 = vadd.f32 0.0, %v7896
    %v7898 = vpop.f32.mrb[0].mxu0
    %v7899 = vpop.f32.mrb[0].mxu0
    %v7900 = vpop.f32.mrb[0].mxu0
    %7901 = vdwg.mxu0
    %7902 = vmatprep.subr.bf16.mxu0 0
    %7903 = vmatpush1.bf16.msra.mxu0 %v1135
    %7904 = vmatprep.subr.bf16.mxu0 0
    %7905 = vmatpush1.bf16.msra.mxu0 %v1136
    %7906 = vmatprep.subr.bf16.mxu0 0
    %7907 = vmatpush1.bf16.msra.mxu0 %v1137
    %7908 = vmatprep.subr.bf16.mxu0 0
    %7909 = vmatpush1.bf16.msra.mxu0 %v1138
    %7910 = vmatprep.subr.bf16.mxu0 0
    %7911 = vmatpush1.bf16.msra.mxu0 %v1139
    %7912 = vmatprep.subr.bf16.mxu0 0
    %7913 = vmatpush1.bf16.msra.mxu0 %v1140
    %7914 = vmatprep.subr.bf16.mxu0 0
    %7915 = vmatpush1.bf16.msra.mxu0 %v1141
    %7916 = vmatprep.subr.bf16.mxu0 0
    %7917 = vmatpush1.bf16.msra.mxu0 %v1142
    %7918 = vmatprep.subr.bf16.mxu0 0
    %7919 = vmatpush1.bf16.msra.mxu0 0
    %7920 = vmatprep.subr.bf16.mxu0 0
    %7921 = vmatpush1.bf16.msra.mxu0 0
    %7922 = vmatprep.subr.bf16.mxu0 0
    %7923 = vmatpush1.bf16.msra.mxu0 0
    %7924 = vmatprep.subr.bf16.mxu0 0
    %7925 = vmatpush1.bf16.msra.mxu0 0
    %7926 = vmatprep.subr.bf16.mxu0 0
    %7927 = vmatpush1.bf16.msra.mxu0 0
    %7928 = vmatprep.subr.bf16.mxu0 0
    %7929 = vmatpush1.bf16.msra.mxu0 0
    %7930 = vmatprep.subr.bf16.mxu0 0
    %7931 = vmatpush1.bf16.msra.mxu0 0
    %7932 = vmatprep.subr.bf16.mxu0 0
    %7933 = vmatpush1.bf16.msra.mxu0 0
    %7934 = vmatprep.mubr.bf16.mxu0 0
    %7935 = vmatmul.mubr.bf16.gmra.mrb[0].mxu0 %v7861
    %v7936 = vpop.f32.mrb[0].mxu0
    %v7937 = vadd.f32 0.0, %v7936
    %v7938 = vpop.f32.mrb[0].mxu0
    %v7939 = vpop.f32.mrb[0].mxu0
    %v7940 = vpop.f32.mrb[0].mxu0
    %7941 = vdwg.mxu0
    %v7942 = vpack.c.bf16 %v7897, %v7897
    %v7943 = vpack.c.bf16 %v7937, %v7937
    %s7944 = scalar_lea.vmem %s8, 448
    %v7945 = vld [vmem:[%s7944] sm:$0xf]
    %v7946 = vld [vmem:[%s7944 + $0x4] sm:$0xf]
    %v7947 = vld [vmem:[%s7944 + $0x8] sm:$0xf]
    %v7948 = vld [vmem:[%s7944 + $0xc] sm:$0xf]
    %v7949 = vld [vmem:[%s7944 + $0x10] sm:$0xf]
    %v7950 = vld [vmem:[%s7944 + $0x14] sm:$0xf]
    %v7951 = vld [vmem:[%s7944 + $0x18] sm:$0xf]
    %v7952 = vld [vmem:[%s7944 + $0x1c] sm:$0xf]
    %v7955 = vunpack.c.l.b16 %v7942
    %v7956 = vunpack.c.l.b16 %v7943
    %v7957 = vpack.c.b16 %v7956, %v7955
    %v7966 = vunpack.c.l.b16 %v7945
    %v7967 = vunpack.c.l.b16 %v7946
    %v7968 = vunpack.c.l.b16 %v7947
    %v7969 = vunpack.c.l.b16 %v7948
    %v7970 = vunpack.c.l.b16 %v7949
    %v7971 = vunpack.c.l.b16 %v7950
    %v7972 = vunpack.c.l.b16 %v7951
    %v7973 = vunpack.c.l.b16 %v7952
    %v7974 = vpack.c.b16 %v7967, %v7966
    %v7975 = vpack.c.b16 %v7969, %v7968
    %v7976 = vpack.c.b16 %v7971, %v7970
    %v7977 = vpack.c.b16 %v7973, %v7972
    %v7983 = vsel %vm46, %v7957, 0
    %7985 = vmatprep.subr.bf16.mxu0 0
    %7986 = vmatpush1.bf16.msra.mxu0 %v7974
    %7987 = vmatprep.subr.bf16.mxu0 0
    %7988 = vmatpush1.bf16.msra.mxu0 %v7975
    %7989 = vmatprep.subr.bf16.mxu0 0
    %7990 = vmatpush1.bf16.msra.mxu0 %v7976
    %7991 = vmatprep.subr.bf16.mxu0 0
    %7992 = vmatpush1.bf16.msra.mxu0 %v7977
    %7993 = vmatprep.subr.bf16.mxu0 0
    %7994 = vmatpush1.bf16.msra.mxu0 0
    %7995 = vmatprep.subr.bf16.mxu0 0
    %7996 = vmatpush1.bf16.msra.mxu0 0
    %7997 = vmatprep.subr.bf16.mxu0 0
    %7998 = vmatpush1.bf16.msra.mxu0 0
    %7999 = vmatprep.subr.bf16.mxu0 0
    %8000 = vmatpush1.bf16.msra.mxu0 0
    %8001 = vmatprep.subr.bf16.mxu0 0
    %8002 = vmatpush1.bf16.msra.mxu0 0
    %8003 = vmatprep.subr.bf16.mxu0 0
    %8004 = vmatpush1.bf16.msra.mxu0 0
    %8005 = vmatprep.subr.bf16.mxu0 0
    %8006 = vmatpush1.bf16.msra.mxu0 0
    %8007 = vmatprep.subr.bf16.mxu0 0
    %8008 = vmatpush1.bf16.msra.mxu0 0
    %8009 = vmatprep.subr.bf16.mxu0 0
    %8010 = vmatpush1.bf16.msra.mxu0 0
    %8011 = vmatprep.subr.bf16.mxu0 0
    %8012 = vmatpush1.bf16.msra.mxu0 0
    %8013 = vmatprep.subr.bf16.mxu0 0
    %8014 = vmatpush1.bf16.msra.mxu0 0
    %8015 = vmatprep.subr.bf16.mxu0 0
    %8016 = vmatpush1.bf16.msra.mxu0 0
    %8017 = vmatprep.mubr.bf16.mxu0 0
    %8018 = vmatmul.mubr.bf16.gmra.mrb[0].mxu0 %v7983
    %v8019 = vpop.f32.mrb[0].mxu0
    %v8020 = vadd.f32 0.0, %v8019
    %v8021 = vpop.f32.mrb[0].mxu0
    %v8022 = vpop.f32.mrb[0].mxu0
    %v8023 = vadd.f32 0.0, %v8022
    %v8024 = vpop.f32.mrb[0].mxu0
    %8025 = vdwg.mxu0
    %v8026 = vadd.f32 %v7604, %v8020
    %v8027 = vadd.f32 %v7607, %v8023
    %s8028 = scalar_lea.vmem %s6, 480
    %v8029 = vld [vmem:[%s8028] sm:$0xf]
    %v8030 = vld [vmem:[%s8028 + $0x4] sm:$0xf]
    %v8031 = vld [vmem:[%s8028 + $0x8] sm:$0xf]
    %v8032 = vld [vmem:[%s8028 + $0xc] sm:$0xf]
    %v8033 = vld [vmem:[%s8028 + $0x10] sm:$0xf]
    %v8034 = vld [vmem:[%s8028 + $0x14] sm:$0xf]
    %v8035 = vld [vmem:[%s8028 + $0x18] sm:$0xf]
    %v8036 = vld [vmem:[%s8028 + $0x1c] sm:$0xf]
    %s8037 = scalar_lea.vmem %s11, 15
    %v8038 = vld [vmem:[%s8037] sm:$0x1]
    %v8040 = vlaneseq
    %v8041 = vshrl.u32 %v8040, 7
    %v8042 = vsub.s32 0, %v8041
    %v8043 = vrot.slane %v8038, %v8042
    %v8053 = vunpack.c.l.b16 %v8029
    %v8054 = vunpack.c.l.b16 %v8030
    %v8055 = vunpack.c.l.b16 %v8031
    %v8056 = vunpack.c.l.b16 %v8032
    %v8057 = vunpack.c.l.b16 %v8033
    %v8058 = vunpack.c.l.b16 %v8034
    %v8059 = vunpack.c.l.b16 %v8035
    %v8060 = vunpack.c.l.b16 %v8036
    %v8061 = vpack.c.b16 %v8054, %v8053
    %v8062 = vpack.c.b16 %v8056, %v8055
    %v8063 = vpack.c.b16 %v8058, %v8057
    %v8064 = vpack.c.b16 %v8060, %v8059
    %8069 = vmatprep.subr.bf16.mxu0 0
    %8070 = vmatpush1.bf16.msra.mxu0 %v8061
    %8071 = vmatprep.subr.bf16.mxu0 0
    %8072 = vmatpush1.bf16.msra.mxu0 %v8062
    %8073 = vmatprep.subr.bf16.mxu0 0
    %8074 = vmatpush1.bf16.msra.mxu0 %v8063
    %8075 = vmatprep.subr.bf16.mxu0 0
    %8076 = vmatpush1.bf16.msra.mxu0 %v8064
    %8077 = vmatprep.subr.bf16.mxu0 0
    %8078 = vmatpush1.bf16.msra.mxu0 0
    %8079 = vmatprep.subr.bf16.mxu0 0
    %8080 = vmatpush1.bf16.msra.mxu0 0
    %8081 = vmatprep.subr.bf16.mxu0 0
    %8082 = vmatpush1.bf16.msra.mxu0 0
    %8083 = vmatprep.subr.bf16.mxu0 0
    %8084 = vmatpush1.bf16.msra.mxu0 0
    %8085 = vmatprep.subr.bf16.mxu0 0
    %8086 = vmatpush1.bf16.msra.mxu0 0
    %8087 = vmatprep.subr.bf16.mxu0 0
    %8088 = vmatpush1.bf16.msra.mxu0 0
    %8089 = vmatprep.subr.bf16.mxu0 0
    %8090 = vmatpush1.bf16.msra.mxu0 0
    %8091 = vmatprep.subr.bf16.mxu0 0
    %8092 = vmatpush1.bf16.msra.mxu0 0
    %8093 = vmatprep.subr.bf16.mxu0 0
    %8094 = vmatpush1.bf16.msra.mxu0 0
    %8095 = vmatprep.subr.bf16.mxu0 0
    %8096 = vmatpush1.bf16.msra.mxu0 0
    %8097 = vmatprep.subr.bf16.mxu0 0
    %8098 = vmatpush1.bf16.msra.mxu0 0
    %8099 = vmatprep.subr.bf16.mxu0 0
    %8100 = vmatpush1.bf16.msra.mxu0 0
    %8101 = vmatprep.mubr.bf16.mxu0 0
    %8102 = vmatmul.mubr.bf16.gmra.mrb[0].mxu0 %v6817
    %v8103 = vpop.f32.mrb[0].mxu0
    %v8104 = vadd.f32 %v8043, %v8103
    %v8105 = vpop.f32.mrb[0].mxu0
    %v8106 = vpop.f32.mrb[0].mxu0
    %v8107 = vadd.f32 %v8043, %v8106
    %v8108 = vpop.f32.mrb[0].mxu0
    %8109 = vdwg.mxu0
    %v8110 = vpack.c.bf16 %v8104, %v8104
    %v8111 = vpack.c.bf16 %v8107, %v8107
    %s8112 = scalar_lea.vmem %s7, 120
    %v8113 = vld [vmem:[%s8112] sm:$0xf]
    %v8114 = vld [vmem:[%s8112 + $0x4] sm:$0xf]
    %v8117 = vunpack.c.l.b16 %v8110
    %v8118 = vunpack.c.l.b16 %v8111
    %v8119 = vpack.c.b16 %v8118, %v8117
    %v8122 = vunpack.c.l.b16 %v8113
    %v8123 = vunpack.c.l.b16 %v8114
    %v8124 = vpack.c.b16 %v8123, %v8122
    %v8127 = vsel %vm94, %v8119, 0
    %8129 = vmatprep.subr.bf16.mxu0 0
    %8130 = vmatpush1.bf16.msra.mxu0 %v8124
    %8131 = vmatprep.subr.bf16.mxu0 0
    %8132 = vmatpush1.bf16.msra.mxu0 0
    %8133 = vmatprep.subr.bf16.mxu0 0
    %8134 = vmatpush1.bf16.msra.mxu0 0
    %8135 = vmatprep.subr.bf16.mxu0 0
    %8136 = vmatpush1.bf16.msra.mxu0 0
    %8137 = vmatprep.subr.bf16.mxu0 0
    %8138 = vmatpush1.bf16.msra.mxu0 0
    %8139 = vmatprep.subr.bf16.mxu0 0
    %8140 = vmatpush1.bf16.msra.mxu0 0
    %8141 = vmatprep.subr.bf16.mxu0 0
    %8142 = vmatpush1.bf16.msra.mxu0 0
    %8143 = vmatprep.subr.bf16.mxu0 0
    %8144 = vmatpush1.bf16.msra.mxu0 0
    %8145 = vmatprep.subr.bf16.mxu0 0
    %8146 = vmatpush1.bf16.msra.mxu0 0
    %8147 = vmatprep.subr.bf16.mxu0 0
    %8148 = vmatpush1.bf16.msra.mxu0 0
    %8149 = vmatprep.subr.bf16.mxu0 0
    %8150 = vmatpush1.bf16.msra.mxu0 0
    %8151 = vmatprep.subr.bf16.mxu0 0
    %8152 = vmatpush1.bf16.msra.mxu0 0
    %8153 = vmatprep.subr.bf16.mxu0 0
    %8154 = vmatpush1.bf16.msra.mxu0 0
    %8155 = vmatprep.subr.bf16.mxu0 0
    %8156 = vmatpush1.bf16.msra.mxu0 0
    %8157 = vmatprep.subr.bf16.mxu0 0
    %8158 = vmatpush1.bf16.msra.mxu0 0
    %8159 = vmatprep.subr.bf16.mxu0 0
    %8160 = vmatpush1.bf16.msra.mxu0 0
    %8161 = vmatprep.mubr.bf16.mxu0 0
    %8162 = vmatmul.mubr.bf16.gmra.mrb[0].mxu0 %v8127
    %v8163 = vpop.f32.mrb[0].mxu0
    %v8164 = vadd.f32 0.0, %v8163
    %v8165 = vpop.f32.mrb[0].mxu0
    %v8166 = vpop.f32.mrb[0].mxu0
    %v8167 = vadd.f32 0.0, %v8166
    %v8168 = vpop.f32.mrb[0].mxu0
    %8169 = vdwg.mxu0
    %v8170 = vpack.c.bf16 %v8164, %v8164
    %v8171 = vpack.c.bf16 %v8167, %v8167
    %v8173 = vsel %vm46, %v8170, 0
    %8175 = vmatprep.subr.bf16.mxu0 0
    %8176 = vmatpush1.bf16.xpose.msra.mxu0 %v3091
    %8177 = vmatprep.subr.bf16.mxu0 0
    %8178 = vmatpush1.bf16.xpose.msra.mxu0 %v3094
    %8179 = vmatprep.subr.bf16.mxu0 0
    %8180 = vmatpush1.bf16.xpose.msra.mxu0 %v3097
    %8181 = vmatprep.subr.bf16.mxu0 0
    %8182 = vmatpush1.bf16.xpose.msra.mxu0 %v3100
    %8183 = vmatprep.subr.bf16.mxu0 0
    %8184 = vmatpush1.bf16.xpose.msra.mxu0 %v3103
    %8185 = vmatprep.subr.bf16.mxu0 0
    %8186 = vmatpush1.bf16.xpose.msra.mxu0 %v3106
    %8187 = vmatprep.subr.bf16.mxu0 0
    %8188 = vmatpush1.bf16.xpose.msra.mxu0 %v3109
    %8189 = vmatprep.subr.bf16.mxu0 0
    %8190 = vmatpush1.bf16.xpose.msra.mxu0 %v3112
    %8191 = vmatprep.subr.bf16.mxu0 0
    %8192 = vmatpush1.bf16.xpose.msra.mxu0 0
    %8193 = vmatprep.subr.bf16.mxu0 0
    %8194 = vmatpush1.bf16.xpose.msra.mxu0 0
    %8195 = vmatprep.subr.bf16.mxu0 0
    %8196 = vmatpush1.bf16.xpose.msra.mxu0 0
    %8197 = vmatprep.subr.bf16.mxu0 0
    %8198 = vmatpush1.bf16.xpose.msra.mxu0 0
    %8199 = vmatprep.subr.bf16.mxu0 0
    %8200 = vmatpush1.bf16.xpose.msra.mxu0 0
    %8201 = vmatprep.subr.bf16.mxu0 0
    %8202 = vmatpush1.bf16.xpose.msra.mxu0 0
    %8203 = vmatprep.subr.bf16.mxu0 0
    %8204 = vmatpush1.bf16.xpose.msra.mxu0 0
    %8205 = vmatprep.subr.bf16.mxu0 0
    %8206 = vmatpush1.bf16.xpose.msra.mxu0 0
    %8207 = vmatprep.mubr.bf16.mxu0 0
    %8208 = vmatmul.mubr.bf16.gmra.mrb[0].mxu0 %v8173
    %v8209 = vpop.f32.mrb[0].mxu0
    %v8210 = vadd.f32 0.0, %v8209
    %v8211 = vpop.f32.mrb[0].mxu0
    %v8212 = vpop.f32.mrb[0].mxu0
    %v8213 = vpop.f32.mrb[0].mxu0
    %8214 = vdwg.mxu0
    %v8216 = vsel %vm46, %v8171, 0
    %8218 = vmatprep.subr.bf16.mxu0 0
    %8219 = vmatpush1.bf16.xpose.msra.mxu0 %v3158
    %8220 = vmatprep.subr.bf16.mxu0 0
    %8221 = vmatpush1.bf16.xpose.msra.mxu0 %v3161
    %8222 = vmatprep.subr.bf16.mxu0 0
    %8223 = vmatpush1.bf16.xpose.msra.mxu0 %v3164
    %8224 = vmatprep.subr.bf16.mxu0 0
    %8225 = vmatpush1.bf16.xpose.msra.mxu0 %v3167
    %8226 = vmatprep.subr.bf16.mxu0 0
    %8227 = vmatpush1.bf16.xpose.msra.mxu0 %v3170
    %8228 = vmatprep.subr.bf16.mxu0 0
    %8229 = vmatpush1.bf16.xpose.msra.mxu0 %v3173
    %8230 = vmatprep.subr.bf16.mxu0 0
    %8231 = vmatpush1.bf16.xpose.msra.mxu0 %v3176
    %8232 = vmatprep.subr.bf16.mxu0 0
    %8233 = vmatpush1.bf16.xpose.msra.mxu0 %v3179
    %8234 = vmatprep.subr.bf16.mxu0 0
    %8235 = vmatpush1.bf16.xpose.msra.mxu0 0
    %8236 = vmatprep.subr.bf16.mxu0 0
    %8237 = vmatpush1.bf16.xpose.msra.mxu0 0
    %8238 = vmatprep.subr.bf16.mxu0 0
    %8239 = vmatpush1.bf16.xpose.msra.mxu0 0
    %8240 = vmatprep.subr.bf16.mxu0 0
    %8241 = vmatpush1.bf16.xpose.msra.mxu0 0
    %8242 = vmatprep.subr.bf16.mxu0 0
    %8243 = vmatpush1.bf16.xpose.msra.mxu0 0
    %8244 = vmatprep.subr.bf16.mxu0 0
    %8245 = vmatpush1.bf16.xpose.msra.mxu0 0
    %8246 = vmatprep.subr.bf16.mxu0 0
    %8247 = vmatpush1.bf16.xpose.msra.mxu0 0
    %8248 = vmatprep.subr.bf16.mxu0 0
    %8249 = vmatpush1.bf16.xpose.msra.mxu0 0
    %8250 = vmatprep.mubr.bf16.mxu0 0
    %8251 = vmatmul.mubr.bf16.gmra.mrb[0].mxu0 %v8216
    %v8252 = vpop.f32.mrb[0].mxu0
    %v8253 = vadd.f32 0.0, %v8252
    %v8254 = vpop.f32.mrb[0].mxu0
    %v8255 = vpop.f32.mrb[0].mxu0
    %v8256 = vpop.f32.mrb[0].mxu0
    %8257 = vdwg.mxu0
    %8258 = vmax.xlane.f32.xlu0 %v8210
    %v8259 = vpop.xlane.xlu0 %8258
    %8260 = vmax.xlane.f32.xlu0 %v8253
    %v8261 = vpop.xlane.xlu0 %8260
    %v8262 = vsub.f32 %v8210, %v8259
    %v8263 = vsub.f32 %v8253, %v8261
    %v8264 = vmul.f32 %v8262, 1.442695
    %v8265 = vpow.pop %v8264
    %v8266 = vmul.f32 %v8263, 1.442695
    %v8267 = vpow.pop %v8266
    %v8268 = vmul.f32 %v8265, %v1163
    %v8269 = vmul.f32 %v8267, %v1163
    %8270 = vadd.xlane.f32.xlu0 %v8268
    %v8271 = vpop.xlane.xlu0 %8270
    %8272 = vadd.xlane.f32.xlu0 %v8269
    %v8273 = vpop.xlane.xlu0 %8272
    %v8274 = vrcp.pop %v8271
    %v8275 = vrcp.pop %v8273
    %v8276 = vmul.f32 %v8268, %v8274
    %v8277 = vmul.f32 %v8269, %v8275
    %v8278 = vpack.c.bf16 %v8276, %v8276
    %v8279 = vpack.c.bf16 %v8277, %v8277
    %8280 = vmatprep.subr.bf16.mxu0 0
    %8281 = vmatpush1.bf16.msra.mxu0 %v1127
    %8282 = vmatprep.subr.bf16.mxu0 0
    %8283 = vmatpush1.bf16.msra.mxu0 %v1128
    %8284 = vmatprep.subr.bf16.mxu0 0
    %8285 = vmatpush1.bf16.msra.mxu0 %v1129
    %8286 = vmatprep.subr.bf16.mxu0 0
    %8287 = vmatpush1.bf16.msra.mxu0 %v1130
    %8288 = vmatprep.subr.bf16.mxu0 0
    %8289 = vmatpush1.bf16.msra.mxu0 %v1131
    %8290 = vmatprep.subr.bf16.mxu0 0
    %8291 = vmatpush1.bf16.msra.mxu0 %v1132
    %8292 = vmatprep.subr.bf16.mxu0 0
    %8293 = vmatpush1.bf16.msra.mxu0 %v1133
    %8294 = vmatprep.subr.bf16.mxu0 0
    %8295 = vmatpush1.bf16.msra.mxu0 %v1134
    %8296 = vmatprep.subr.bf16.mxu0 0
    %8297 = vmatpush1.bf16.msra.mxu0 0
    %8298 = vmatprep.subr.bf16.mxu0 0
    %8299 = vmatpush1.bf16.msra.mxu0 0
    %8300 = vmatprep.subr.bf16.mxu0 0
    %8301 = vmatpush1.bf16.msra.mxu0 0
    %8302 = vmatprep.subr.bf16.mxu0 0
    %8303 = vmatpush1.bf16.msra.mxu0 0
    %8304 = vmatprep.subr.bf16.mxu0 0
    %8305 = vmatpush1.bf16.msra.mxu0 0
    %8306 = vmatprep.subr.bf16.mxu0 0
    %8307 = vmatpush1.bf16.msra.mxu0 0
    %8308 = vmatprep.subr.bf16.mxu0 0
    %8309 = vmatpush1.bf16.msra.mxu0 0
    %8310 = vmatprep.subr.bf16.mxu0 0
    %8311 = vmatpush1.bf16.msra.mxu0 0
    %8312 = vmatprep.mubr.bf16.mxu0 0
    %8313 = vmatmul.mubr.bf16.gmra.mrb[0].mxu0 %v8278
    %v8314 = vpop.f32.mrb[0].mxu0
    %v8315 = vadd.f32 0.0, %v8314
    %v8316 = vpop.f32.mrb[0].mxu0
    %v8317 = vpop.f32.mrb[0].mxu0
    %v8318 = vpop.f32.mrb[0].mxu0
    %8319 = vdwg.mxu0
    %8320 = vmatprep.subr.bf16.mxu0 0
    %8321 = vmatpush1.bf16.msra.mxu0 %v1135
    %8322 = vmatprep.subr.bf16.mxu0 0
    %8323 = vmatpush1.bf16.msra.mxu0 %v1136
    %8324 = vmatprep.subr.bf16.mxu0 0
    %8325 = vmatpush1.bf16.msra.mxu0 %v1137
    %8326 = vmatprep.subr.bf16.mxu0 0
    %8327 = vmatpush1.bf16.msra.mxu0 %v1138
    %8328 = vmatprep.subr.bf16.mxu0 0
    %8329 = vmatpush1.bf16.msra.mxu0 %v1139
    %8330 = vmatprep.subr.bf16.mxu0 0
    %8331 = vmatpush1.bf16.msra.mxu0 %v1140
    %8332 = vmatprep.subr.bf16.mxu0 0
    %8333 = vmatpush1.bf16.msra.mxu0 %v1141
    %8334 = vmatprep.subr.bf16.mxu0 0
    %8335 = vmatpush1.bf16.msra.mxu0 %v1142
    %8336 = vmatprep.subr.bf16.mxu0 0
    %8337 = vmatpush1.bf16.msra.mxu0 0
    %8338 = vmatprep.subr.bf16.mxu0 0
    %8339 = vmatpush1.bf16.msra.mxu0 0
    %8340 = vmatprep.subr.bf16.mxu0 0
    %8341 = vmatpush1.bf16.msra.mxu0 0
    %8342 = vmatprep.subr.bf16.mxu0 0
    %8343 = vmatpush1.bf16.msra.mxu0 0
    %8344 = vmatprep.subr.bf16.mxu0 0
    %8345 = vmatpush1.bf16.msra.mxu0 0
    %8346 = vmatprep.subr.bf16.mxu0 0
    %8347 = vmatpush1.bf16.msra.mxu0 0
    %8348 = vmatprep.subr.bf16.mxu0 0
    %8349 = vmatpush1.bf16.msra.mxu0 0
    %8350 = vmatprep.subr.bf16.mxu0 0
    %8351 = vmatpush1.bf16.msra.mxu0 0
    %8352 = vmatprep.mubr.bf16.mxu0 0
    %8353 = vmatmul.mubr.bf16.gmra.mrb[0].mxu0 %v8279
    %v8354 = vpop.f32.mrb[0].mxu0
    %v8355 = vadd.f32 0.0, %v8354
    %v8356 = vpop.f32.mrb[0].mxu0
    %v8357 = vpop.f32.mrb[0].mxu0
    %v8358 = vpop.f32.mrb[0].mxu0
    %8359 = vdwg.mxu0
    %v8360 = vpack.c.bf16 %v8315, %v8315
    %v8361 = vpack.c.bf16 %v8355, %v8355
    %s8362 = scalar_lea.vmem %s8, 480
    %v8363 = vld [vmem:[%s8362] sm:$0xf]
    %v8364 = vld [vmem:[%s8362 + $0x4] sm:$0xf]
    %v8365 = vld [vmem:[%s8362 + $0x8] sm:$0xf]
    %v8366 = vld [vmem:[%s8362 + $0xc] sm:$0xf]
    %v8367 = vld [vmem:[%s8362 + $0x10] sm:$0xf]
    %v8368 = vld [vmem:[%s8362 + $0x14] sm:$0xf]
    %v8369 = vld [vmem:[%s8362 + $0x18] sm:$0xf]
    %v8370 = vld [vmem:[%s8362 + $0x1c] sm:$0xf]
    %v8373 = vunpack.c.l.b16 %v8360
    %v8374 = vunpack.c.l.b16 %v8361
    %v8375 = vpack.c.b16 %v8374, %v8373
    %v8384 = vunpack.c.l.b16 %v8363
    %v8385 = vunpack.c.l.b16 %v8364
    %v8386 = vunpack.c.l.b16 %v8365
    %v8387 = vunpack.c.l.b16 %v8366
    %v8388 = vunpack.c.l.b16 %v8367
    %v8389 = vunpack.c.l.b16 %v8368
    %v8390 = vunpack.c.l.b16 %v8369
    %v8391 = vunpack.c.l.b16 %v8370
    %v8392 = vpack.c.b16 %v8385, %v8384
    %v8393 = vpack.c.b16 %v8387, %v8386
    %v8394 = vpack.c.b16 %v8389, %v8388
    %v8395 = vpack.c.b16 %v8391, %v8390
    %v8401 = vsel %vm46, %v8375, 0
    %8403 = vmatprep.subr.bf16.mxu0 0
    %8404 = vmatpush1.bf16.msra.mxu0 %v8392
    %8405 = vmatprep.subr.bf16.mxu0 0
    %8406 = vmatpush1.bf16.msra.mxu0 %v8393
    %8407 = vmatprep.subr.bf16.mxu0 0
    %8408 = vmatpush1.bf16.msra.mxu0 %v8394
    %8409 = vmatprep.subr.bf16.mxu0 0
    %8410 = vmatpush1.bf16.msra.mxu0 %v8395
    %8411 = vmatprep.subr.bf16.mxu0 0
    %8412 = vmatpush1.bf16.msra.mxu0 0
    %8413 = vmatprep.subr.bf16.mxu0 0
    %8414 = vmatpush1.bf16.msra.mxu0 0
    %8415 = vmatprep.subr.bf16.mxu0 0
    %8416 = vmatpush1.bf16.msra.mxu0 0
    %8417 = vmatprep.subr.bf16.mxu0 0
    %8418 = vmatpush1.bf16.msra.mxu0 0
    %8419 = vmatprep.subr.bf16.mxu0 0
    %8420 = vmatpush1.bf16.msra.mxu0 0
    %8421 = vmatprep.subr.bf16.mxu0 0
    %8422 = vmatpush1.bf16.msra.mxu0 0
    %8423 = vmatprep.subr.bf16.mxu0 0
    %8424 = vmatpush1.bf16.msra.mxu0 0
    %8425 = vmatprep.subr.bf16.mxu0 0
    %8426 = vmatpush1.bf16.msra.mxu0 0
    %8427 = vmatprep.subr.bf16.mxu0 0
    %8428 = vmatpush1.bf16.msra.mxu0 0
    %8429 = vmatprep.subr.bf16.mxu0 0
    %8430 = vmatpush1.bf16.msra.mxu0 0
    %8431 = vmatprep.subr.bf16.mxu0 0
    %8432 = vmatpush1.bf16.msra.mxu0 0
    %8433 = vmatprep.subr.bf16.mxu0 0
    %8434 = vmatpush1.bf16.msra.mxu0 0
    %8435 = vmatprep.mubr.bf16.mxu0 0
    %8436 = vmatmul.mubr.bf16.gmra.mrb[0].mxu0 %v8401
    %v8437 = vpop.f32.mrb[0].mxu0
    %v8438 = vadd.f32 0.0, %v8437
    %v8439 = vpop.f32.mrb[0].mxu0
    %v8440 = vpop.f32.mrb[0].mxu0
    %v8441 = vadd.f32 0.0, %v8440
    %v8442 = vpop.f32.mrb[0].mxu0
    %8443 = vdwg.mxu0
    %v8444 = vadd.f32 %v8026, %v8438
    %v8445 = vadd.f32 %v8027, %v8441
    %v8446 = vld [vmem:[%s6718 + $0x1] sm:$0x1]
    %v8447 = vlaneseq
    %v8448 = vshrl.u32 %v8447, 7
    %v8449 = vsub.s32 0, %v8448
    %v8450 = vrot.slane %v8446, %v8449
    %v8451 = vadd.f32 %v8444, %v8450
    %v8452 = vadd.f32 %v8445, %v8450
    %v8453 = vadd.f32 %v6766, %v8451
    %v8454 = vadd.f32 %v6767, %v8452
    %v8455 = vld [vmem:[%s6718 + $0x5] sm:$0x1]
    %v8456 = vld [vmem:[%s6718 + $0x9] sm:$0x1]
    %v8457 = vsel %vm46, %v8453, 0.0
    %8458 = vadd.xlane.f32.xlu0 %v8457
    %v8459 = vpop.xlane.xlu0 %8458
    %v8460 = vsel %vm46, %v8454, 0.0
    %8461 = vadd.xlane.f32.xlu0 %v8460
    %v8462 = vpop.xlane.xlu0 %8461
    %v8463 = vmul.f32 %v8459, %v702
    %v8464 = vmul.f32 %v8462, %v702
    %v8465 = vsub.f32 %v8453, %v8463
    %v8466 = vsub.f32 %v8454, %v8464
    %v8467 = vmul.f32 %v8465, %v8465
    %v8468 = vmul.f32 %v8466, %v8466
    %v8469 = vsel %vm46, %v8467, 0.0
    %8470 = vadd.xlane.f32.xlu0 %v8469
    %v8471 = vpop.xlane.xlu0 %8470
    %v8472 = vsel %vm46, %v8468, 0.0
    %8473 = vadd.xlane.f32.xlu0 %v8472
    %v8474 = vpop.xlane.xlu0 %8473
    %v8475 = vmul.f32 %v8471, %v702
    %v8476 = vmul.f32 %v8474, %v702
    %v8477 = vadd.f32 %v8475, 1e-05
    %v8478 = vadd.f32 %v8476, 1e-05
    %v8479 = vrsqrt.pop %v8477
    %v8480 = vrsqrt.pop %v8478
    %v8481 = vmul.f32 %v8465, %v8479
    %v8482 = vmul.f32 %v8466, %v8480
    %v8483 = vlaneseq
    %v8484 = vshrl.u32 %v8483, 7
    %v8485 = vsub.s32 0, %v8484
    %v8486 = vrot.slane %v8455, %v8485
    %v8487 = vmul.f32 %v8481, %v8486
    %v8488 = vmul.f32 %v8482, %v8486
    %v8489 = vlaneseq
    %v8490 = vshrl.u32 %v8489, 7
    %v8491 = vsub.s32 0, %v8490
    %v8492 = vrot.slane %v8456, %v8491
    %v8493 = vadd.f32 %v8487, %v8492
    %v8494 = vadd.f32 %v8488, %v8492
    %v8495 = vpack.c.bf16 %v8493, %v8493
    %v8496 = vpack.c.bf16 %v8494, %v8494
    %s8497 = scalar_lea.vmem %s9, 32
    %v8498 = vld [vmem:[%s8497] sm:$0xf]
    %v8499 = vld [vmem:[%s8497 + $0x4] sm:$0xf]
    %v8500 = vld [vmem:[%s8497 + $0x8] sm:$0xf]
    %v8501 = vld [vmem:[%s8497 + $0xc] sm:$0xf]
    %v8502 = vld [vmem:[%s8497 + $0x10] sm:$0xf]
    %v8503 = vld [vmem:[%s8497 + $0x14] sm:$0xf]
    %v8504 = vld [vmem:[%s8497 + $0x18] sm:$0xf]
    %v8505 = vld [vmem:[%s8497 + $0x1c] sm:$0xf]
    %v8506 = vld [vmem:[%s6718 + $0x2] sm:$0x1]
    %v8507 = vlaneseq
    %v8508 = vshrl.u32 %v8507, 7
    %v8509 = vsub.s32 0, %v8508
    %v8510 = vrot.slane %v8506, %v8509
    %v8513 = vunpack.c.l.b16 %v8495
    %v8514 = vunpack.c.l.b16 %v8496
    %v8515 = vpack.c.b16 %v8514, %v8513
    %v8524 = vunpack.c.l.b16 %v8498
    %v8525 = vunpack.c.l.b16 %v8499
    %v8526 = vunpack.c.l.b16 %v8500
    %v8527 = vunpack.c.l.b16 %v8501
    %v8528 = vunpack.c.l.b16 %v8502
    %v8529 = vunpack.c.l.b16 %v8503
    %v8530 = vunpack.c.l.b16 %v8504
    %v8531 = vunpack.c.l.b16 %v8505
    %v8532 = vpack.c.b16 %v8525, %v8524
    %v8533 = vpack.c.b16 %v8527, %v8526
    %v8534 = vpack.c.b16 %v8529, %v8528
    %v8535 = vpack.c.b16 %v8531, %v8530
    %v8541 = vsel %vm46, %v8515, 0
    %8543 = vmatprep.subr.bf16.mxu0 0
    %8544 = vmatpush1.bf16.msra.mxu0 %v8532
    %8545 = vmatprep.subr.bf16.mxu0 0
    %8546 = vmatpush1.bf16.msra.mxu0 %v8533
    %8547 = vmatprep.subr.bf16.mxu0 0
    %8548 = vmatpush1.bf16.msra.mxu0 %v8534
    %8549 = vmatprep.subr.bf16.mxu0 0
    %8550 = vmatpush1.bf16.msra.mxu0 %v8535
    %8551 = vmatprep.subr.bf16.mxu0 0
    %8552 = vmatpush1.bf16.msra.mxu0 0
    %8553 = vmatprep.subr.bf16.mxu0 0
    %8554 = vmatpush1.bf16.msra.mxu0 0
    %8555 = vmatprep.subr.bf16.mxu0 0
    %8556 = vmatpush1.bf16.msra.mxu0 0
    %8557 = vmatprep.subr.bf16.mxu0 0
    %8558 = vmatpush1.bf16.msra.mxu0 0
    %8559 = vmatprep.subr.bf16.mxu0 0
    %8560 = vmatpush1.bf16.msra.mxu0 0
    %8561 = vmatprep.subr.bf16.mxu0 0
    %8562 = vmatpush1.bf16.msra.mxu0 0
    %8563 = vmatprep.subr.bf16.mxu0 0
    %8564 = vmatpush1.bf16.msra.mxu0 0
    %8565 = vmatprep.subr.bf16.mxu0 0
    %8566 = vmatpush1.bf16.msra.mxu0 0
    %8567 = vmatprep.subr.bf16.mxu0 0
    %8568 = vmatpush1.bf16.msra.mxu0 0
    %8569 = vmatprep.subr.bf16.mxu0 0
    %8570 = vmatpush1.bf16.msra.mxu0 0
    %8571 = vmatprep.subr.bf16.mxu0 0
    %8572 = vmatpush1.bf16.msra.mxu0 0
    %8573 = vmatprep.subr.bf16.mxu0 0
    %8574 = vmatpush1.bf16.msra.mxu0 0
    %8575 = vmatprep.mubr.bf16.mxu0 0
    %8576 = vmatmul.mubr.bf16.gmra.mrb[0].mxu0 %v8541
    %v8577 = vpop.f32.mrb[0].mxu0
    %v8578 = vadd.f32 %v8510, %v8577
    %v8579 = vpop.f32.mrb[0].mxu0
    %v8580 = vpop.f32.mrb[0].mxu0
    %v8581 = vadd.f32 %v8510, %v8580
    %v8582 = vpop.f32.mrb[0].mxu0
    %8583 = vdwg.mxu0
    %v8584 = vmax.f32 %v8578, 0.0
    %v8585 = vmax.f32 %v8581, 0.0
    %v8586 = vpack.c.bf16 %v8584, %v8584
    %v8587 = vpack.c.bf16 %v8585, %v8585
    %s8588 = scalar_lea.vmem %s10, 64
    %v8589 = vld [vmem:[%s8588] sm:$0xf]
    %v8590 = vld [vmem:[%s8588 + $0x4] sm:$0xf]
    %v8591 = vld [vmem:[%s8588 + $0x8] sm:$0xf]
    %v8592 = vld [vmem:[%s8588 + $0xc] sm:$0xf]
    %v8593 = vld [vmem:[%s8588 + $0x10] sm:$0xf]
    %v8594 = vld [vmem:[%s8588 + $0x14] sm:$0xf]
    %v8595 = vld [vmem:[%s8588 + $0x18] sm:$0xf]
    %v8596 = vld [vmem:[%s8588 + $0x1c] sm:$0xf]
    %v8597 = vld [vmem:[%s8588 + $0x20] sm:$0xf]
    %v8598 = vld [vmem:[%s8588 + $0x24] sm:$0xf]
    %v8599 = vld [vmem:[%s8588 + $0x28] sm:$0xf]
    %v8600 = vld [vmem:[%s8588 + $0x2c] sm:$0xf]
    %v8601 = vld [vmem:[%s8588 + $0x30] sm:$0xf]
    %v8602 = vld [vmem:[%s8588 + $0x34] sm:$0xf]
    %v8603 = vld [vmem:[%s8588 + $0x38] sm:$0xf]
    %v8604 = vld [vmem:[%s8588 + $0x3c] sm:$0xf]
    %v8605 = vld [vmem:[%s6718 + $0x3] sm:$0x1]
    %v8606 = vlaneseq
    %v8607 = vshrl.u32 %v8606, 7
    %v8608 = vsub.s32 0, %v8607
    %v8609 = vrot.slane %v8605, %v8608
    %v8612 = vunpack.c.l.b16 %v8586
    %v8613 = vunpack.c.l.b16 %v8587
    %v8614 = vpack.c.b16 %v8613, %v8612
    %v8632 = vunpack.c.l.b16 %v8589
    %v8633 = vunpack.c.l.b16 %v8590
    %v8634 = vunpack.c.l.b16 %v8591
    %v8635 = vunpack.c.l.b16 %v8592
    %v8636 = vunpack.c.l.b16 %v8593
    %v8637 = vunpack.c.l.b16 %v8594
    %v8638 = vunpack.c.l.b16 %v8595
    %v8639 = vunpack.c.l.b16 %v8596
    %v8640 = vunpack.c.l.b16 %v8597
    %v8641 = vunpack.c.l.b16 %v8598
    %v8642 = vunpack.c.l.b16 %v8599
    %v8643 = vunpack.c.l.b16 %v8600
    %v8644 = vunpack.c.l.b16 %v8601
    %v8645 = vunpack.c.l.b16 %v8602
    %v8646 = vunpack.c.l.b16 %v8603
    %v8647 = vunpack.c.l.b16 %v8604
    %v8648 = vpack.c.b16 %v8633, %v8632
    %v8649 = vpack.c.b16 %v8635, %v8634
    %v8650 = vpack.c.b16 %v8637, %v8636
    %v8651 = vpack.c.b16 %v8639, %v8638
    %v8652 = vpack.c.b16 %v8641, %v8640
    %v8653 = vpack.c.b16 %v8643, %v8642
    %v8654 = vpack.c.b16 %v8645, %v8644
    %v8655 = vpack.c.b16 %v8647, %v8646
    %8664 = vmatprep.subr.bf16.mxu0 0
    %8665 = vmatpush1.bf16.msra.mxu0 %v8648
    %8666 = vmatprep.subr.bf16.mxu0 0
    %8667 = vmatpush1.bf16.msra.mxu0 %v8649
    %8668 = vmatprep.subr.bf16.mxu0 0
    %8669 = vmatpush1.bf16.msra.mxu0 %v8650
    %8670 = vmatprep.subr.bf16.mxu0 0
    %8671 = vmatpush1.bf16.msra.mxu0 %v8651
    %8672 = vmatprep.subr.bf16.mxu0 0
    %8673 = vmatpush1.bf16.msra.mxu0 %v8652
    %8674 = vmatprep.subr.bf16.mxu0 0
    %8675 = vmatpush1.bf16.msra.mxu0 %v8653
    %8676 = vmatprep.subr.bf16.mxu0 0
    %8677 = vmatpush1.bf16.msra.mxu0 %v8654
    %8678 = vmatprep.subr.bf16.mxu0 0
    %8679 = vmatpush1.bf16.msra.mxu0 %v8655
    %8680 = vmatprep.subr.bf16.mxu0 0
    %8681 = vmatpush1.bf16.msra.mxu0 0
    %8682 = vmatprep.subr.bf16.mxu0 0
    %8683 = vmatpush1.bf16.msra.mxu0 0
    %8684 = vmatprep.subr.bf16.mxu0 0
    %8685 = vmatpush1.bf16.msra.mxu0 0
    %8686 = vmatprep.subr.bf16.mxu0 0
    %8687 = vmatpush1.bf16.msra.mxu0 0
    %8688 = vmatprep.subr.bf16.mxu0 0
    %8689 = vmatpush1.bf16.msra.mxu0 0
    %8690 = vmatprep.subr.bf16.mxu0 0
    %8691 = vmatpush1.bf16.msra.mxu0 0
    %8692 = vmatprep.subr.bf16.mxu0 0
    %8693 = vmatpush1.bf16.msra.mxu0 0
    %8694 = vmatprep.subr.bf16.mxu0 0
    %8695 = vmatpush1.bf16.msra.mxu0 0
    %8696 = vmatprep.mubr.bf16.mxu0 0
    %8697 = vmatmul.mubr.bf16.gmra.mrb[0].mxu0 %v8614
    %v8698 = vpop.f32.mrb[0].mxu0
    %v8699 = vadd.f32 %v8609, %v8698
    %v8700 = vpop.f32.mrb[0].mxu0
    %v8701 = vpop.f32.mrb[0].mxu0
    %v8702 = vadd.f32 %v8609, %v8701
    %v8703 = vpop.f32.mrb[0].mxu0
    %8704 = vdwg.mxu0
    %v8705 = vadd.f32 %v8493, %v8699
    %v8706 = vadd.f32 %v8494, %v8702
    %v8707 = vld [vmem:[%s6718 + $0x6] sm:$0x1]
    %v8708 = vld [vmem:[%s6718 + $0xa] sm:$0x1]
    %v8709 = vsel %vm46, %v8705, 0.0
    %8710 = vadd.xlane.f32.xlu0 %v8709
    %v8711 = vpop.xlane.xlu0 %8710
    %v8712 = vsel %vm46, %v8706, 0.0
    %8713 = vadd.xlane.f32.xlu0 %v8712
    %v8714 = vpop.xlane.xlu0 %8713
    %v8715 = vmul.f32 %v8711, %v702
    %v8716 = vmul.f32 %v8714, %v702
    %v8717 = vsub.f32 %v8705, %v8715
    %v8718 = vsub.f32 %v8706, %v8716
    %v8719 = vmul.f32 %v8717, %v8717
    %v8720 = vmul.f32 %v8718, %v8718
    %v8721 = vsel %vm46, %v8719, 0.0
    %8722 = vadd.xlane.f32.xlu0 %v8721
    %v8723 = vpop.xlane.xlu0 %8722
    %v8724 = vsel %vm46, %v8720, 0.0
    %8725 = vadd.xlane.f32.xlu0 %v8724
    %v8726 = vpop.xlane.xlu0 %8725
    %v8727 = vmul.f32 %v8723, %v702
    %v8728 = vmul.f32 %v8726, %v702
    %v8729 = vadd.f32 %v8727, 1e-05
    %v8730 = vadd.f32 %v8728, 1e-05
    %v8731 = vrsqrt.pop %v8729
    %v8732 = vrsqrt.pop %v8730
    %v8733 = vmul.f32 %v8717, %v8731
    %v8734 = vmul.f32 %v8718, %v8732
    %v8735 = vlaneseq
    %v8736 = vshrl.u32 %v8735, 7
    %v8737 = vsub.s32 0, %v8736
    %v8738 = vrot.slane %v8707, %v8737
    %v8739 = vmul.f32 %v8733, %v8738
    %v8740 = vmul.f32 %v8734, %v8738
    %v8741 = vlaneseq
    %v8742 = vshrl.u32 %v8741, 7
    %v8743 = vsub.s32 0, %v8742
    %v8744 = vrot.slane %v8708, %v8743
    %v8745 = vadd.f32 %v8739, %v8744
    %v8746 = vadd.f32 %v8740, %v8744
    %v8747 = vld [vmem:[%s6718 + $0x7] sm:$0x1]
    %v8748 = vld [vmem:[%s6718 + $0xb] sm:$0x1]
    %v8749 = vsel %vm46, %v8745, 0.0
    %8750 = vadd.xlane.f32.xlu0 %v8749
    %v8751 = vpop.xlane.xlu0 %8750
    %v8752 = vsel %vm46, %v8746, 0.0
    %8753 = vadd.xlane.f32.xlu0 %v8752
    %v8754 = vpop.xlane.xlu0 %8753
    %v8755 = vmul.f32 %v8751, %v702
    %v8756 = vmul.f32 %v8754, %v702
    %v8757 = vsub.f32 %v8745, %v8755
    %v8758 = vsub.f32 %v8746, %v8756
    %v8759 = vmul.f32 %v8757, %v8757
    %v8760 = vmul.f32 %v8758, %v8758
    %v8761 = vsel %vm46, %v8759, 0.0
    %8762 = vadd.xlane.f32.xlu0 %v8761
    %v8763 = vpop.xlane.xlu0 %8762
    %v8764 = vsel %vm46, %v8760, 0.0
    %8765 = vadd.xlane.f32.xlu0 %v8764
    %v8766 = vpop.xlane.xlu0 %8765
    %v8767 = vmul.f32 %v8763, %v702
    %v8768 = vmul.f32 %v8766, %v702
    %v8769 = vadd.f32 %v8767, 1e-05
    %v8770 = vadd.f32 %v8768, 1e-05
    %v8771 = vrsqrt.pop %v8769
    %v8772 = vrsqrt.pop %v8770
    %v8773 = vmul.f32 %v8757, %v8771
    %v8774 = vmul.f32 %v8758, %v8772
    %v8775 = vlaneseq
    %v8776 = vshrl.u32 %v8775, 7
    %v8777 = vsub.s32 0, %v8776
    %v8778 = vrot.slane %v8747, %v8777
    %v8779 = vmul.f32 %v8773, %v8778
    %v8780 = vmul.f32 %v8774, %v8778
    %v8781 = vlaneseq
    %v8782 = vshrl.u32 %v8781, 7
    %v8783 = vsub.s32 0, %v8782
    %v8784 = vrot.slane %v8748, %v8783
    %v8785 = vadd.f32 %v8779, %v8784
    %v8786 = vadd.f32 %v8780, %v8784
    %8787 = vst.msk [vmem:[#allocation4] sm:$0xff] %vm46, %v8785
    %8788 = vst.msk [vmem:[#allocation4 + $0x8] sm:$0xff] %vm46, %v8786
    // Predicated region
    $region54: #{_lambda_.1} parent=1 // pred_check
      _
    $region55: #{_lambda_.1} parent=1 // pred_check_branch
      %8790 = sbr.rel (0) target = $region57
    $region56: #{_lambda_.1} parent=1 // pred_region
      %s8792 = ssub.s32 256, 256
      %8793 = vsyncadd [#allocation5], %s8792
      %s8794 = sshll.u32 [#allocation4], 4
      %s8795 = int_to_ptr.vmem [resolvable:$true] %s8794
      %8800 = dma.vmem_to_hbm [thread:$0]  %s8795, 256, %s13, [#allocation5], 128, 128, 8
    $region57: #{_lambda_.1} parent=1 // pred_fallthru
      _
    // Predicated region
    $region58: #{_lambda_.1} parent=1 // pred_check
      _
    $region59: #{_lambda_.1} parent=1 // pred_check_branch
      %8802 = sbr.rel (0) target = $region61
    $region60: #{_lambda_.1} parent=1 // pred_region
      %8803 = dma.done [#allocation5], 256
    $region61: #{_lambda_.1} parent=1 // pred_fallthru
      _
    %8804 = vsyncpa [#allocation5], 1

</llo_original>
